<compile_context>
chip_gen: v7x
topology: tpu7x:2x2x1
jax: 0.10.0
libtpu: 0.0.40
codegen_flags: <defaults>
</compile_context>

<pallas_src>
import functools

import numpy as np

import jax
import jax.numpy as jnp
from jax import lax
from jax.experimental import pallas as pl
from jax.experimental.pallas import tpu as pltpu

LANE = 128       # pad all feature dims to a multiple of the lane width
M_ALIGN = 8      # sublane alignment for the batch dimension
M_TILE_MAX = 256


def _round_up(n, m):
    return ((n + m - 1) // m) * m


def _pad2(a, rows, cols, dtype):
    """Place 2-D array `a` in the top-left corner of a zero (rows, cols) array."""
    a = jnp.asarray(a, jnp.float32)
    out = jnp.zeros((rows, cols), jnp.float32).at[: a.shape[0], : a.shape[1]].set(a)
    return out.astype(dtype)


# ----------------------------------------------------------------------------
# PyTorch-semantics conv helpers (init-time folding and the reference only)
# ----------------------------------------------------------------------------
def _conv2d(x, w, *, stride=2, pad=1):
    """nn.Conv2d(stride=2, padding=1).  x: NCHW, w: (OC, IC, K, K)."""
    return lax.conv_general_dilated(
        x, w,
        window_strides=(stride, stride),
        padding=((pad, pad), (pad, pad)),
        dimension_numbers=("NCHW", "OIHW", "NCHW"),
        precision=lax.Precision.HIGHEST,
    )


def _conv_transpose2d(x, w, *, stride=2, pad=1):
    """nn.ConvTranspose2d(stride=2, padding=1).  w: (IC, OC, K, K)."""
    k = w.shape[-1]
    w_flip = jnp.flip(w, axis=(-2, -1))
    w_oihw = jnp.transpose(w_flip, (1, 0, 2, 3))
    p = k - 1 - pad
    return lax.conv_general_dilated(
        x, w_oihw,
        window_strides=(1, 1),
        padding=((p, p), (p, p)),
        lhs_dilation=(stride, stride),
        dimension_numbers=("NCHW", "OIHW", "NCHW"),
        precision=lax.Precision.HIGHEST,
    )


def _dense_matrix(linear_fn, in_shape):
    """Fold a linear map (no bias) into an (in_features, out_features) matrix
    by pushing the canonical NCHW row-major basis through it."""
    n = int(np.prod(in_shape))
    basis = jnp.eye(n, dtype=jnp.float32).reshape((n,) + tuple(in_shape))
    out = linear_fn(basis)
    return out.reshape(n, -1)


# ----------------------------------------------------------------------------
# Parameters (PyTorch layouts) and one-time folding into kernel operands
# ----------------------------------------------------------------------------
def init_params(key, *, capacity, latent_dims):
    c = capacity

    def u(k, shape, fan_in):
        bound = 1.0 / float(np.sqrt(fan_in))
        return jax.random.uniform(k, shape, jnp.float32, -bound, bound)

    ks = jax.random.split(key, 12)
    p = {}
    p["enc_conv1_w"] = u(ks[0], (c, 1, 4, 4), 1 * 16)
    p["enc_conv1_b"] = u(ks[1], (c,), 1 * 16)
    p["enc_conv2_w"] = u(ks[2], (2 * c, c, 4, 4), c * 16)
    p["enc_conv2_b"] = u(ks[3], (2 * c,), c * 16)
    p["enc_fc_w"] = u(ks[4], (latent_dims, 2 * c * 49), 2 * c * 49)
    p["enc_fc_b"] = u(ks[5], (latent_dims,), 2 * c * 49)
    p["dec_fc_w"] = u(ks[6], (2 * c * 49, latent_dims), latent_dims)
    p["dec_fc_b"] = u(ks[7], (2 * c * 49,), latent_dims)
    p["dec_convT2_w"] = u(ks[8], (2 * c, c, 4, 4), 2 * c * 16)
    p["dec_convT2_b"] = u(ks[9], (c,), 2 * c * 16)
    p["dec_convT1_w"] = u(ks[10], (c, 1, 4, 4), c * 16)
    p["dec_convT1_b"] = u(ks[11], (1,), c * 16)
    return p


def prepare_operands(p, *, capacity, latent_dims):
    """One-time weight preparation (hoisted out of the hot path):
    fold convs/deconvs to dense matrices, compose the back-to-back FC pair,
    expand conv biases over spatial positions, zero-pad to 128-lane multiples,
    and cast weights to bf16 (biases stay f32)."""
    c = capacity
    del latent_dims  # absorbed into the composed FC matrix

    # feature sizes along the (composed) chain, NCHW flatten order
    d_real = [1 * 28 * 28,   # input
              c * 14 * 14,   # conv1 out
              2 * c * 7 * 7,  # conv2 out
              2 * c * 7 * 7,  # composed enc_fc @ dec_fc out
              c * 14 * 14,   # convT2 out
              1 * 28 * 28]   # convT1 out
    d_pad = [_round_up(d, LANE) for d in d_real]

    w1 = _dense_matrix(lambda z: _conv2d(z, p["enc_conv1_w"]), (1, 28, 28))
    b1 = jnp.repeat(p["enc_conv1_b"], 14 * 14)
    w2 = _dense_matrix(lambda z: _conv2d(z, p["enc_conv2_w"]), (c, 14, 14))
    b2 = jnp.repeat(p["enc_conv2_b"], 7 * 7)

    # encoder fc followed immediately by decoder fc (no activation in between):
    # (h @ W3 + b3) @ W4 + b4 == h @ (W3 @ W4) + (b3 @ W4 + b4)
    w3 = p["enc_fc_w"].T          # (2c*49, L)
    w4 = p["dec_fc_w"].T          # (L, 2c*49)
    w34 = jnp.dot(w3, w4, precision=lax.Precision.HIGHEST)
    b34 = jnp.dot(p["enc_fc_b"], w4, precision=lax.Precision.HIGHEST) + p["dec_fc_b"]

    w5 = _dense_matrix(lambda z: _conv_transpose2d(z, p["dec_convT2_w"]), (2 * c, 7, 7))
    b5 = jnp.repeat(p["dec_convT2_b"], 14 * 14)
    w6 = _dense_matrix(lambda z: _conv_transpose2d(z, p["dec_convT1_w"]), (c, 14, 14))
    b6 = jnp.repeat(p["dec_convT1_b"], 28 * 28)

    weights = [w1, w2, w34, w5, w6]
    biases = [b1, b2, b34, b5, b6]

    ops = []
    for i, (w, b) in enumerate(zip(weights, biases)):
        ops.append(_pad2(w, d_pad[i], d_pad[i + 1], jnp.bfloat16))          # (K_pad, N_pad) bf16
        ops.append(_pad2(b.reshape(1, -1), 1, d_pad[i + 1], jnp.float32))   # (1, N_pad) f32
    return ops, d_real, d_pad


# ----------------------------------------------------------------------------
# Fused Pallas kernel: whole forward pass, intermediates stay in VMEM
# ----------------------------------------------------------------------------
def _fused_autoencoder_kernel(x_ref,
                              w1_ref, b1_ref, w2_ref, b2_ref, w34_ref, b34_ref,
                              w5_ref, b5_ref, w6_ref, b6_ref,
                              o_ref):
    def affine(h, w_ref, b_ref):
        # bf16 inputs into the MXU, f32 accumulation, f32 bias epilogue
        return jnp.dot(h.astype(jnp.bfloat16), w_ref[...],
                       preferred_element_type=jnp.float32) + b_ref[...]

    h = x_ref[...]
    h = jnp.maximum(affine(h, w1_ref, b1_ref), 0.0)    # encoder conv1 + ReLU
    h = jnp.maximum(affine(h, w2_ref, b2_ref), 0.0)    # encoder conv2 + ReLU
    h = affine(h, w34_ref, b34_ref)                    # enc_fc o dec_fc (composed, no act)
    h = jnp.maximum(affine(h, w5_ref, b5_ref), 0.0)    # decoder convT2 + ReLU
    o_ref[...] = jnp.tanh(affine(h, w6_ref, b6_ref))   # decoder convT1 + tanh


def autoencoder_cnn_forward(x, operands, d_real, d_pad):
    """x: (B, 1, 28, 28) NCHW -> reconstruction (B, 1, 28, 28)."""
    B = x.shape[0]
    m_tile = min(M_TILE_MAX, _round_up(max(B, 1), M_ALIGN))
    Bp = _round_up(max(B, m_tile), m_tile)

    x_flat = x.reshape(B, -1)                               # NCHW flatten, like x.view(B,-1)
    x_pad = jnp.zeros((Bp, d_pad[0]), jnp.float32).at[:B, : d_real[0]].set(x_flat)

    grid = (Bp // m_tile,)
    in_specs = [pl.BlockSpec((m_tile, d_pad[0]), lambda i: (i, 0))]
    # grid-invariant weights & biases: whole-array VMEM residency, single-buffered
    for _ in range(len(operands)):
        in_specs.append(pl.BlockSpec(memory_space=pltpu.MemorySpace.VMEM))
    out_specs = pl.BlockSpec((m_tile, d_pad[-1]), lambda i: (i, 0))

    operand_bytes = int(sum(int(np.prod(o.shape)) * o.dtype.itemsize for o in operands))
    tile_bytes = m_tile * max(d_pad) * 4
    n_layers = len(d_pad) - 1
    flops = int(2 * Bp * sum(d_pad[i] * d_pad[i + 1] for i in range(n_layers)))
    bytes_accessed = int(operand_bytes + Bp * d_pad[0] * 4 + Bp * d_pad[-1] * 4)
    cost = pl.CostEstimate(flops=flops,
                           transcendentals=int(Bp * d_pad[-1]),
                           bytes_accessed=bytes_accessed)

    # single-buffered weights + double-buffered x/out tiles + in-kernel
    # intermediates, plus headroom (fits v7x's 64 MiB comfortably)
    vmem_limit = int(operand_bytes + 10 * tile_bytes + (8 << 20))

    out = pl.pallas_call(
        _fused_autoencoder_kernel,
        out_shape=jax.ShapeDtypeStruct((Bp, d_pad[-1]), jnp.float32),
        grid=grid,
        in_specs=in_specs,
        out_specs=out_specs,
        compiler_params=pltpu.CompilerParams(
            dimension_semantics=("parallel",),   # batch tiles are independent
            vmem_limit_bytes=vmem_limit,
        ),
        cost_estimate=cost,
    )(x_pad, *operands)

    return out[:B, : d_real[-1]].reshape(B, 1, 28, 28)


# ----------------------------------------------------------------------------
# Pure-XLA reference of the same PyTorch module (correctness check only)
# ----------------------------------------------------------------------------
def reference_forward(x, p, *, capacity, latent_dims):
    c = capacity
    h = jax.nn.relu(_conv2d(x, p["enc_conv1_w"]) + p["enc_conv1_b"].reshape(1, -1, 1, 1))
    h = jax.nn.relu(_conv2d(h, p["enc_conv2_w"]) + p["enc_conv2_b"].reshape(1, -1, 1, 1))
    lat = jnp.dot(h.reshape(h.shape[0], -1), p["enc_fc_w"].T,
                  precision=lax.Precision.HIGHEST) + p["enc_fc_b"]
    g = jnp.dot(lat, p["dec_fc_w"].T, precision=lax.Precision.HIGHEST) + p["dec_fc_b"]
    g = g.reshape(g.shape[0], 2 * c, 7, 7)
    g = jax.nn.relu(_conv_transpose2d(g, p["dec_convT2_w"])
                    + p["dec_convT2_b"].reshape(1, -1, 1, 1))
    out = jnp.tanh(_conv_transpose2d(g, p["dec_convT1_w"])
                   + p["dec_convT1_b"].reshape(1, -1, 1, 1))
    return out


if __name__ == "__main__":
    # Encoder hardcodes 1 input channel and a 7x7 map after two stride-2 convs
    # => 28x28 input.  `capacity` / `latent_dims` are module-level globals in
    # the original file; small values are chosen here.
    B, IC, H, W = 2, 1, 28, 28
    CAPACITY, LATENT = 4, 8

    key = jax.random.PRNGKey(0)
    kx, kp = jax.random.split(key)
    x = jax.random.normal(kx, (B, IC, H, W), dtype=jnp.float32)
    params = init_params(kp, capacity=CAPACITY, latent_dims=LATENT)

    # one-time weight folding / composition / padding (out of the hot path)
    operands, d_real, d_pad = prepare_operands(params, capacity=CAPACITY, latent_dims=LATENT)

    fwd = jax.jit(functools.partial(autoencoder_cnn_forward, d_real=d_real, d_pad=d_pad))
    recon = fwd(x, operands)
    recon = jax.block_until_ready(recon)
    assert recon.shape == (B, 1, 28, 28), recon.shape

    # numerical check of the fused bf16-weight kernel against a pure-f32 reference
    ref = reference_forward(x, params, capacity=CAPACITY, latent_dims=LATENT)
    err = float(jnp.max(jnp.abs(recon - ref)))
    assert err < 3e-2, f"max abs err vs reference: {err}"

    print("KERNEL_OK")
</pallas_src>

<mosaic_0001>
module attributes {stable_mosaic.version = 11 : i64} {
  func.func @_fused_autoencoder_kernel(%arg0: i32, %arg1: memref<8x896xf32, #tpu.memory_space<vmem>>, %arg2: memref<896x896xbf16, #tpu.memory_space<vmem>>, %arg3: memref<1x896xf32, #tpu.memory_space<vmem>>, %arg4: memref<896x512xbf16, #tpu.memory_space<vmem>>, %arg5: memref<1x512xf32, #tpu.memory_space<vmem>>, %arg6: memref<512x512xbf16, #tpu.memory_space<vmem>>, %arg7: memref<1x512xf32, #tpu.memory_space<vmem>>, %arg8: memref<512x896xbf16, #tpu.memory_space<vmem>>, %arg9: memref<1x896xf32, #tpu.memory_space<vmem>>, %arg10: memref<896x896xbf16, #tpu.memory_space<vmem>>, %arg11: memref<1x896xf32, #tpu.memory_space<vmem>>, %arg12: memref<8x896xf32, #tpu.memory_space<vmem>>) attributes {dimension_semantics = [#tpu.dimension_semantics<parallel>], iteration_bounds = array<i64: 1>, scalar_prefetch = 0 : i64, scratch_operands = 0 : i64, tpu.core_type = #tpu.core_type<tc>, window_params = [{transform_indices = @transform_0, window_bounds = array<i64: 8, 896>}, {pipeline_mode = #tpu.pipeline_mode<synchronous>, transform_indices = @transform_1, window_bounds = array<i64: 896, 896>}, {pipeline_mode = #tpu.pipeline_mode<synchronous>, transform_indices = @transform_2, window_bounds = array<i64: 1, 896>}, {pipeline_mode = #tpu.pipeline_mode<synchronous>, transform_indices = @transform_3, window_bounds = array<i64: 896, 512>}, {pipeline_mode = #tpu.pipeline_mode<synchronous>, transform_indices = @transform_4, window_bounds = array<i64: 1, 512>}, {pipeline_mode = #tpu.pipeline_mode<synchronous>, transform_indices = @transform_5, window_bounds = array<i64: 512, 512>}, {pipeline_mode = #tpu.pipeline_mode<synchronous>, transform_indices = @transform_6, window_bounds = array<i64: 1, 512>}, {pipeline_mode = #tpu.pipeline_mode<synchronous>, transform_indices = @transform_7, window_bounds = array<i64: 512, 896>}, {pipeline_mode = #tpu.pipeline_mode<synchronous>, transform_indices = @transform_8, window_bounds = array<i64: 1, 896>}, {pipeline_mode = #tpu.pipeline_mode<synchronous>, transform_indices = @transform_9, window_bounds = array<i64: 896, 896>}, {pipeline_mode = #tpu.pipeline_mode<synchronous>, transform_indices = @transform_10, window_bounds = array<i64: 1, 896>}, {transform_indices = @transform_11, window_bounds = array<i64: 8, 896>}]} {
    %c0 = arith.constant 0 : index
    %c0_0 = arith.constant 0 : index
    %0 = vector.load %arg1[%c0, %c0_0] : memref<8x896xf32, #tpu.memory_space<vmem>>, vector<8x896xf32>
    %1 = arith.truncf %0 : vector<8x896xf32> to vector<8x896xbf16>
    %c0_1 = arith.constant 0 : index
    %c0_2 = arith.constant 0 : index
    %2 = vector.load %arg2[%c0_1, %c0_2] : memref<896x896xbf16, #tpu.memory_space<vmem>>, vector<896x896xbf16>
    %cst = arith.constant dense<0.000000e+00> : vector<8x896xf32>
    %3 = tpu.matmul %1, %2, %cst {dimension_numbers = #tpu.dot_dimension_numbers<[1], [0], [0], [1], [0, 0, 1, 1], [], []>} : vector<8x896xbf16>, vector<896x896xbf16>, vector<8x896xf32> -> vector<8x896xf32>
    %c0_3 = arith.constant 0 : index
    %c0_4 = arith.constant 0 : index
    %4 = vector.load %arg3[%c0_3, %c0_4] : memref<1x896xf32, #tpu.memory_space<vmem>>, vector<1x896xf32>
    %5 = vector.broadcast %4 : vector<1x896xf32> to vector<8x896xf32>
    %6 = arith.addf %3, %5 : vector<8x896xf32>
    %cst_5 = arith.constant 0.000000e+00 : f32
    %7 = vector.broadcast %cst_5 : f32 to vector<8x896xf32>
    %8 = arith.maximumf %6, %7 : vector<8x896xf32>
    %9 = arith.truncf %8 : vector<8x896xf32> to vector<8x896xbf16>
    %c0_6 = arith.constant 0 : index
    %c0_7 = arith.constant 0 : index
    %10 = vector.load %arg4[%c0_6, %c0_7] : memref<896x512xbf16, #tpu.memory_space<vmem>>, vector<896x512xbf16>
    %cst_8 = arith.constant dense<0.000000e+00> : vector<8x512xf32>
    %11 = tpu.matmul %9, %10, %cst_8 {dimension_numbers = #tpu.dot_dimension_numbers<[1], [0], [0], [1], [0, 0, 1, 1], [], []>} : vector<8x896xbf16>, vector<896x512xbf16>, vector<8x512xf32> -> vector<8x512xf32>
    %c0_9 = arith.constant 0 : index
    %c0_10 = arith.constant 0 : index
    %12 = vector.load %arg5[%c0_9, %c0_10] : memref<1x512xf32, #tpu.memory_space<vmem>>, vector<1x512xf32>
    %13 = vector.broadcast %12 : vector<1x512xf32> to vector<8x512xf32>
    %14 = arith.addf %11, %13 : vector<8x512xf32>
    %cst_11 = arith.constant 0.000000e+00 : f32
    %15 = vector.broadcast %cst_11 : f32 to vector<8x512xf32>
    %16 = arith.maximumf %14, %15 : vector<8x512xf32>
    %17 = arith.truncf %16 : vector<8x512xf32> to vector<8x512xbf16>
    %c0_12 = arith.constant 0 : index
    %c0_13 = arith.constant 0 : index
    %18 = vector.load %arg6[%c0_12, %c0_13] : memref<512x512xbf16, #tpu.memory_space<vmem>>, vector<512x512xbf16>
    %cst_14 = arith.constant dense<0.000000e+00> : vector<8x512xf32>
    %19 = tpu.matmul %17, %18, %cst_14 {dimension_numbers = #tpu.dot_dimension_numbers<[1], [0], [0], [1], [0, 0, 1, 1], [], []>} : vector<8x512xbf16>, vector<512x512xbf16>, vector<8x512xf32> -> vector<8x512xf32>
    %c0_15 = arith.constant 0 : index
    %c0_16 = arith.constant 0 : index
    %20 = vector.load %arg7[%c0_15, %c0_16] : memref<1x512xf32, #tpu.memory_space<vmem>>, vector<1x512xf32>
    %21 = vector.broadcast %20 : vector<1x512xf32> to vector<8x512xf32>
    %22 = arith.addf %19, %21 : vector<8x512xf32>
    %23 = arith.truncf %22 : vector<8x512xf32> to vector<8x512xbf16>
    %c0_17 = arith.constant 0 : index
    %c0_18 = arith.constant 0 : index
    %24 = vector.load %arg8[%c0_17, %c0_18] : memref<512x896xbf16, #tpu.memory_space<vmem>>, vector<512x896xbf16>
    %cst_19 = arith.constant dense<0.000000e+00> : vector<8x896xf32>
    %25 = tpu.matmul %23, %24, %cst_19 {dimension_numbers = #tpu.dot_dimension_numbers<[1], [0], [0], [1], [0, 0, 1, 1], [], []>} : vector<8x512xbf16>, vector<512x896xbf16>, vector<8x896xf32> -> vector<8x896xf32>
    %c0_20 = arith.constant 0 : index
    %c0_21 = arith.constant 0 : index
    %26 = vector.load %arg9[%c0_20, %c0_21] : memref<1x896xf32, #tpu.memory_space<vmem>>, vector<1x896xf32>
    %27 = vector.broadcast %26 : vector<1x896xf32> to vector<8x896xf32>
    %28 = arith.addf %25, %27 : vector<8x896xf32>
    %cst_22 = arith.constant 0.000000e+00 : f32
    %29 = vector.broadcast %cst_22 : f32 to vector<8x896xf32>
    %30 = arith.maximumf %28, %29 : vector<8x896xf32>
    %31 = arith.truncf %30 : vector<8x896xf32> to vector<8x896xbf16>
    %c0_23 = arith.constant 0 : index
    %c0_24 = arith.constant 0 : index
    %32 = vector.load %arg10[%c0_23, %c0_24] : memref<896x896xbf16, #tpu.memory_space<vmem>>, vector<896x896xbf16>
    %cst_25 = arith.constant dense<0.000000e+00> : vector<8x896xf32>
    %33 = tpu.matmul %31, %32, %cst_25 {dimension_numbers = #tpu.dot_dimension_numbers<[1], [0], [0], [1], [0, 0, 1, 1], [], []>} : vector<8x896xbf16>, vector<896x896xbf16>, vector<8x896xf32> -> vector<8x896xf32>
    %c0_26 = arith.constant 0 : index
    %c0_27 = arith.constant 0 : index
    %34 = vector.load %arg11[%c0_26, %c0_27] : memref<1x896xf32, #tpu.memory_space<vmem>>, vector<1x896xf32>
    %35 = vector.broadcast %34 : vector<1x896xf32> to vector<8x896xf32>
    %36 = arith.addf %33, %35 : vector<8x896xf32>
    %37 = math.tanh %36 : vector<8x896xf32>
    %c0_28 = arith.constant 0 : index
    %c0_29 = arith.constant 0 : index
    %38 = vector.load %arg12[%c0_28, %c0_29] : memref<8x896xf32, #tpu.memory_space<vmem>>, vector<8x896xf32>
    tpu.vector_store %arg12[%c0_28, %c0_29], %37 {strides = array<i32>} : memref<8x896xf32, #tpu.memory_space<vmem>>, vector<8x896xf32>,
    return
  }
  func.func @transform_0(%arg0: i32) -> (i32, i32) {
    %c0_i32 = arith.constant 0 : i32
    %c0_i32_0 = arith.constant 0 : i32
    return %arg0, %c0_i32 : i32, i32
  }
  func.func @transform_1(%arg0: i32) -> (i32, i32) {
    %c0_i32 = arith.constant 0 : i32
    %c0_i32_0 = arith.constant 0 : i32
    %c0_i32_1 = arith.constant 0 : i32
    return %c0_i32, %c0_i32_0 : i32, i32
  }
  func.func @transform_2(%arg0: i32) -> (i32, i32) {
    %c0_i32 = arith.constant 0 : i32
    %c0_i32_0 = arith.constant 0 : i32
    %c0_i32_1 = arith.constant 0 : i32
    return %c0_i32, %c0_i32_0 : i32, i32
  }
  func.func @transform_3(%arg0: i32) -> (i32, i32) {
    %c0_i32 = arith.constant 0 : i32
    %c0_i32_0 = arith.constant 0 : i32
    %c0_i32_1 = arith.constant 0 : i32
    return %c0_i32, %c0_i32_0 : i32, i32
  }
  func.func @transform_4(%arg0: i32) -> (i32, i32) {
    %c0_i32 = arith.constant 0 : i32
    %c0_i32_0 = arith.constant 0 : i32
    %c0_i32_1 = arith.constant 0 : i32
    return %c0_i32, %c0_i32_0 : i32, i32
  }
  func.func @transform_5(%arg0: i32) -> (i32, i32) {
    %c0_i32 = arith.constant 0 : i32
    %c0_i32_0 = arith.constant 0 : i32
    %c0_i32_1 = arith.constant 0 : i32
    return %c0_i32, %c0_i32_0 : i32, i32
  }
  func.func @transform_6(%arg0: i32) -> (i32, i32) {
    %c0_i32 = arith.constant 0 : i32
    %c0_i32_0 = arith.constant 0 : i32
    %c0_i32_1 = arith.constant 0 : i32
    return %c0_i32, %c0_i32_0 : i32, i32
  }
  func.func @transform_7(%arg0: i32) -> (i32, i32) {
    %c0_i32 = arith.constant 0 : i32
    %c0_i32_0 = arith.constant 0 : i32
    %c0_i32_1 = arith.constant 0 : i32
    return %c0_i32, %c0_i32_0 : i32, i32
  }
  func.func @transform_8(%arg0: i32) -> (i32, i32) {
    %c0_i32 = arith.constant 0 : i32
    %c0_i32_0 = arith.constant 0 : i32
    %c0_i32_1 = arith.constant 0 : i32
    return %c0_i32, %c0_i32_0 : i32, i32
  }
  func.func @transform_9(%arg0: i32) -> (i32, i32) {
    %c0_i32 = arith.constant 0 : i32
    %c0_i32_0 = arith.constant 0 : i32
    %c0_i32_1 = arith.constant 0 : i32
    return %c0_i32, %c0_i32_0 : i32, i32
  }
  func.func @transform_10(%arg0: i32) -> (i32, i32) {
    %c0_i32 = arith.constant 0 : i32
    %c0_i32_0 = arith.constant 0 : i32
    %c0_i32_1 = arith.constant 0 : i32
    return %c0_i32, %c0_i32_0 : i32, i32
  }
  func.func @transform_11(%arg0: i32) -> (i32, i32) {
    %c0_i32 = arith.constant 0 : i32
    %c0_i32_0 = arith.constant 0 : i32
    return %arg0, %c0_i32 : i32, i32
  }
}

</mosaic_0001>

<llo_original>
// kernel: autoencoder_cnn_forward.1
$region0: #{autoencoder_cnn_forward.1}
  #allocation0 [shape = 'u32[]', space=smem, size = 0x4, offset = 0x4, fixed_abs, tag = 'smem constant byte address 0x4 - core index']
  #allocation1 [shape = 'u32[144,128]{1,0:T(1,128)}', space=vmem, size = 0x12000, scoped, tag = 'internal scratch']
  %s0 = inlined_call_operand.vmem [shape: f32[8,896], index: 0, kind: input, shape index: {}]
  %s1 = inlined_call_operand.hbm [shape: bf16[896,896], index: 1, kind: input, shape index: {}]
  %s2 = inlined_call_operand.hbm [shape: f32[1,896], index: 2, kind: input, shape index: {}]
  %s3 = inlined_call_operand.hbm [shape: bf16[896,512], index: 3, kind: input, shape index: {}]
  %s4 = inlined_call_operand.hbm [shape: f32[1,512], index: 4, kind: input, shape index: {}]
  %s5 = inlined_call_operand.hbm [shape: bf16[512,512], index: 5, kind: input, shape index: {}]
  %s6 = inlined_call_operand.hbm [shape: f32[1,512], index: 6, kind: input, shape index: {}]
  %s7 = inlined_call_operand.hbm [shape: bf16[512,896], index: 7, kind: input, shape index: {}]
  %s8 = inlined_call_operand.hbm [shape: f32[1,896], index: 8, kind: input, shape index: {}]
  %s9 = inlined_call_operand.hbm [shape: bf16[896,896], index: 9, kind: input, shape index: {}]
  %s10 = inlined_call_operand.hbm [shape: f32[1,896], index: 10, kind: input, shape index: {}]
  %s11 = inlined_call_operand.vmem [shape: f32[8,896], index: 11, kind: output, shape index: {}]
  %s12 = sld [smem:[#allocation0]]
  $region94: #{autoencoder_cnn_forward.1} parent=0
    _
  %s14 = ssub.s32 1, %s12
  %s15 = scalar_select 0, %s14, %s12
  $region1: #{autoencoder_cnn_forward.1} parent=0
    #allocation2 [shape = 'u8[1605632]{0}', space=vmem, size = 0x188000, scoped, tag = 'input window, operand 1, single buffered']
    #allocation3 [shape = 's32[1]{0}', space=sflag, size = 0x4, scoped, tag = 'scoped memory for autoencoder_cnn_forward.1']
    #allocation4 [shape = 'u8[3584]{0}', space=vmem, size = 0x1000, scoped, tag = 'input window, operand 2, single buffered']
    #allocation5 [shape = 's32[1]{0}', space=sflag, size = 0x4, scoped, tag = 'scoped memory for autoencoder_cnn_forward.1']
    #allocation6 [shape = 'u8[917504]{0}', space=vmem, size = 0xe0000, scoped, tag = 'input window, operand 3, single buffered']
    #allocation7 [shape = 'u8[2048]{0}', space=vmem, size = 0x800, scoped, tag = 'input window, operand 4, single buffered']
    #allocation8 [shape = 's32[1]{0}', space=sflag, size = 0x4, scoped, tag = 'scoped memory for autoencoder_cnn_forward.1']
    #allocation9 [shape = 'u8[524288]{0}', space=vmem, size = 0x80000, scoped, tag = 'input window, operand 5, single buffered']
    #allocation10 [shape = 'u8[2048]{0}', space=vmem, size = 0x800, scoped, tag = 'input window, operand 6, single buffered']
    #allocation11 [shape = 's32[1]{0}', space=sflag, size = 0x4, scoped, tag = 'scoped memory for autoencoder_cnn_forward.1']
    #allocation12 [shape = 'u8[917504]{0}', space=vmem, size = 0xe0000, scoped, tag = 'input window, operand 7, single buffered']
    #allocation13 [shape = 'u8[3584]{0}', space=vmem, size = 0x1000, scoped, tag = 'input window, operand 8, single buffered']
    #allocation14 [shape = 's32[1]{0}', space=sflag, size = 0x4, scoped, tag = 'scoped memory for autoencoder_cnn_forward.1']
    #allocation15 [shape = 'u8[1605632]{0}', space=vmem, size = 0x188000, scoped, tag = 'input window, operand 9, single buffered']
    #allocation16 [shape = 'u8[3584]{0}', space=vmem, size = 0x1000, scoped, tag = 'input window, operand 10, single buffered']
    #allocation17 [shape = 's32[1]{0}', space=sflag, size = 0x4, scoped, tag = 'scoped memory for autoencoder_cnn_forward.1']
    %16 = vsyncpa [#allocation3], 0
    %17 = vsyncpa [#allocation5], 0
    %18 = vsyncpa [#allocation8], 0
    %19 = vsyncpa [#allocation11], 0
    %20 = vsyncpa [#allocation14], 0
    %21 = vsyncpa [#allocation17], 0
    // Predicated region
    $region2: #{autoencoder_cnn_forward.1} parent=1 // pred_check
      _
    $region3: #{autoencoder_cnn_forward.1} parent=1 // pred_check_branch
      %23 = sbr.rel (0) target = $region5
    $region4: #{autoencoder_cnn_forward.1} parent=1 // pred_region
      _
    $region5: #{autoencoder_cnn_forward.1} parent=1 // pred_fallthru
      _
    // Predicated region
    $region6: #{autoencoder_cnn_forward.1} parent=1 // pred_check
      _
    $region7: #{autoencoder_cnn_forward.1} parent=1 // pred_check_branch
      %25 = sbr.rel (0) target = $region9
    $region8: #{autoencoder_cnn_forward.1} parent=1 // pred_region
      %s27 = ssub.s32 50176, 50176
      %28 = vsyncadd [#allocation3], %s27
      %s29 = sshll.u32 [#allocation2], 4
      %s30 = int_to_ptr.vmem [resolvable:$true] %s29
      %35 = dma.hbm_to_vmem [thread:$0]  %s1, 50176, %s30, [#allocation3], 448, 448, 28
    $region9: #{autoencoder_cnn_forward.1} parent=1 // pred_fallthru
      _
    // Predicated region
    $region10: #{autoencoder_cnn_forward.1} parent=1 // pred_check
      _
    $region11: #{autoencoder_cnn_forward.1} parent=1 // pred_check_branch
      %37 = sbr.rel (0) target = $region13
    $region12: #{autoencoder_cnn_forward.1} parent=1 // pred_region
      %s39 = ssub.s32 112, 112
      %40 = vsyncadd [#allocation5], %s39
      %s42 = sshll.u32 [#allocation4], 4
      %s43 = int_to_ptr.vmem [resolvable:$true] %s42
      %45 = dma.hbm_to_vmem [thread:$0]  %s2, 112, %s43, [#allocation5]
    $region13: #{autoencoder_cnn_forward.1} parent=1 // pred_fallthru
      _
    // Predicated region
    $region14: #{autoencoder_cnn_forward.1} parent=1 // pred_check
      _
    $region15: #{autoencoder_cnn_forward.1} parent=1 // pred_check_branch
      %47 = sbr.rel (0) target = $region17
    $region16: #{autoencoder_cnn_forward.1} parent=1 // pred_region
      %s49 = ssub.s32 28672, 28672
      %50 = vsyncadd [#allocation5], %s49
      %s51 = sshll.u32 [#allocation6], 4
      %s52 = int_to_ptr.vmem [resolvable:$true] %s51
      %57 = dma.hbm_to_vmem [thread:$0]  %s3, 28672, %s52, [#allocation5], 256, 256, 16
    $region17: #{autoencoder_cnn_forward.1} parent=1 // pred_fallthru
      _
    // Predicated region
    $region18: #{autoencoder_cnn_forward.1} parent=1 // pred_check
      _
    $region19: #{autoencoder_cnn_forward.1} parent=1 // pred_check_branch
      %59 = sbr.rel (0) target = $region21
    $region20: #{autoencoder_cnn_forward.1} parent=1 // pred_region
      %s61 = ssub.s32 64, 64
      %62 = vsyncadd [#allocation8], %s61
      %s64 = sshll.u32 [#allocation7], 4
      %s65 = int_to_ptr.vmem [resolvable:$true] %s64
      %67 = dma.hbm_to_vmem [thread:$0]  %s4, 64, %s65, [#allocation8]
    $region21: #{autoencoder_cnn_forward.1} parent=1 // pred_fallthru
      _
    // Predicated region
    $region22: #{autoencoder_cnn_forward.1} parent=1 // pred_check
      _
    $region23: #{autoencoder_cnn_forward.1} parent=1 // pred_check_branch
      %69 = sbr.rel (0) target = $region25
    $region24: #{autoencoder_cnn_forward.1} parent=1 // pred_region
      %s71 = ssub.s32 16384, 16384
      %72 = vsyncadd [#allocation8], %s71
      %s73 = sshll.u32 [#allocation9], 4
      %s74 = int_to_ptr.vmem [resolvable:$true] %s73
      %79 = dma.hbm_to_vmem [thread:$0]  %s5, 16384, %s74, [#allocation8], 256, 256, 16
    $region25: #{autoencoder_cnn_forward.1} parent=1 // pred_fallthru
      _
    // Predicated region
    $region26: #{autoencoder_cnn_forward.1} parent=1 // pred_check
      _
    $region27: #{autoencoder_cnn_forward.1} parent=1 // pred_check_branch
      %81 = sbr.rel (0) target = $region29
    $region28: #{autoencoder_cnn_forward.1} parent=1 // pred_region
      %s83 = ssub.s32 64, 64
      %84 = vsyncadd [#allocation11], %s83
      %s86 = sshll.u32 [#allocation10], 4
      %s87 = int_to_ptr.vmem [resolvable:$true] %s86
      %89 = dma.hbm_to_vmem [thread:$0]  %s6, 64, %s87, [#allocation11]
    $region29: #{autoencoder_cnn_forward.1} parent=1 // pred_fallthru
      _
    // Predicated region
    $region30: #{autoencoder_cnn_forward.1} parent=1 // pred_check
      _
    $region31: #{autoencoder_cnn_forward.1} parent=1 // pred_check_branch
      %91 = sbr.rel (0) target = $region33
    $region32: #{autoencoder_cnn_forward.1} parent=1 // pred_region
      %s93 = ssub.s32 28672, 28672
      %94 = vsyncadd [#allocation11], %s93
      %s95 = sshll.u32 [#allocation12], 4
      %s96 = int_to_ptr.vmem [resolvable:$true] %s95
      %101 = dma.hbm_to_vmem [thread:$0]  %s7, 28672, %s96, [#allocation11], 448, 448, 28
    $region33: #{autoencoder_cnn_forward.1} parent=1 // pred_fallthru
      _
    // Predicated region
    $region34: #{autoencoder_cnn_forward.1} parent=1 // pred_check
      _
    $region35: #{autoencoder_cnn_forward.1} parent=1 // pred_check_branch
      %103 = sbr.rel (0) target = $region37
    $region36: #{autoencoder_cnn_forward.1} parent=1 // pred_region
      %s105 = ssub.s32 112, 112
      %106 = vsyncadd [#allocation14], %s105
      %s108 = sshll.u32 [#allocation13], 4
      %s109 = int_to_ptr.vmem [resolvable:$true] %s108
      %111 = dma.hbm_to_vmem [thread:$0]  %s8, 112, %s109, [#allocation14]
    $region37: #{autoencoder_cnn_forward.1} parent=1 // pred_fallthru
      _
    // Predicated region
    $region38: #{autoencoder_cnn_forward.1} parent=1 // pred_check
      _
    $region39: #{autoencoder_cnn_forward.1} parent=1 // pred_check_branch
      %113 = sbr.rel (0) target = $region41
    $region40: #{autoencoder_cnn_forward.1} parent=1 // pred_region
      %s115 = ssub.s32 50176, 50176
      %116 = vsyncadd [#allocation14], %s115
      %s117 = sshll.u32 [#allocation15], 4
      %s118 = int_to_ptr.vmem [resolvable:$true] %s117
      %123 = dma.hbm_to_vmem [thread:$0]  %s9, 50176, %s118, [#allocation14], 448, 448, 28
    $region41: #{autoencoder_cnn_forward.1} parent=1 // pred_fallthru
      _
    // Predicated region
    $region42: #{autoencoder_cnn_forward.1} parent=1 // pred_check
      _
    $region43: #{autoencoder_cnn_forward.1} parent=1 // pred_check_branch
      %125 = sbr.rel (0) target = $region45
    $region44: #{autoencoder_cnn_forward.1} parent=1 // pred_region
      %s127 = ssub.s32 112, 112
      %128 = vsyncadd [#allocation17], %s127
      %s130 = sshll.u32 [#allocation16], 4
      %s131 = int_to_ptr.vmem [resolvable:$true] %s130
      %133 = dma.hbm_to_vmem [thread:$0]  %s10, 112, %s131, [#allocation17]
    $region45: #{autoencoder_cnn_forward.1} parent=1 // pred_fallthru
      _
    // Predicated region
    $region46: #{autoencoder_cnn_forward.1} parent=1 // pred_check
      _
    $region47: #{autoencoder_cnn_forward.1} parent=1 // pred_check_branch
      %135 = sbr.rel (0) target = $region49
    $region48: #{autoencoder_cnn_forward.1} parent=1 // pred_region
      %136 = dma.done [#allocation3], 50176
    $region49: #{autoencoder_cnn_forward.1} parent=1 // pred_fallthru
      _
    // Predicated region
    $region50: #{autoencoder_cnn_forward.1} parent=1 // pred_check
      _
    $region51: #{autoencoder_cnn_forward.1} parent=1 // pred_check_branch
      %138 = sbr.rel (0) target = $region53
    $region52: #{autoencoder_cnn_forward.1} parent=1 // pred_region
      %139 = dma.done [#allocation5], 112
    $region53: #{autoencoder_cnn_forward.1} parent=1 // pred_fallthru
      _
    // Predicated region
    $region54: #{autoencoder_cnn_forward.1} parent=1 // pred_check
      _
    $region55: #{autoencoder_cnn_forward.1} parent=1 // pred_check_branch
      %141 = sbr.rel (0) target = $region57
    $region56: #{autoencoder_cnn_forward.1} parent=1 // pred_region
      %142 = dma.done [#allocation5], 28672
    $region57: #{autoencoder_cnn_forward.1} parent=1 // pred_fallthru
      _
    // Predicated region
    $region58: #{autoencoder_cnn_forward.1} parent=1 // pred_check
      _
    $region59: #{autoencoder_cnn_forward.1} parent=1 // pred_check_branch
      %144 = sbr.rel (0) target = $region61
    $region60: #{autoencoder_cnn_forward.1} parent=1 // pred_region
      %145 = dma.done [#allocation8], 64
    $region61: #{autoencoder_cnn_forward.1} parent=1 // pred_fallthru
      _
    // Predicated region
    $region62: #{autoencoder_cnn_forward.1} parent=1 // pred_check
      _
    $region63: #{autoencoder_cnn_forward.1} parent=1 // pred_check_branch
      %147 = sbr.rel (0) target = $region65
    $region64: #{autoencoder_cnn_forward.1} parent=1 // pred_region
      %148 = dma.done [#allocation8], 16384
    $region65: #{autoencoder_cnn_forward.1} parent=1 // pred_fallthru
      _
    // Predicated region
    $region66: #{autoencoder_cnn_forward.1} parent=1 // pred_check
      _
    $region67: #{autoencoder_cnn_forward.1} parent=1 // pred_check_branch
      %150 = sbr.rel (0) target = $region69
    $region68: #{autoencoder_cnn_forward.1} parent=1 // pred_region
      %151 = dma.done [#allocation11], 64
    $region69: #{autoencoder_cnn_forward.1} parent=1 // pred_fallthru
      _
    // Predicated region
    $region70: #{autoencoder_cnn_forward.1} parent=1 // pred_check
      _
    $region71: #{autoencoder_cnn_forward.1} parent=1 // pred_check_branch
      %153 = sbr.rel (0) target = $region73
    $region72: #{autoencoder_cnn_forward.1} parent=1 // pred_region
      %154 = dma.done [#allocation11], 28672
    $region73: #{autoencoder_cnn_forward.1} parent=1 // pred_fallthru
      _
    // Predicated region
    $region74: #{autoencoder_cnn_forward.1} parent=1 // pred_check
      _
    $region75: #{autoencoder_cnn_forward.1} parent=1 // pred_check_branch
      %156 = sbr.rel (0) target = $region77
    $region76: #{autoencoder_cnn_forward.1} parent=1 // pred_region
      %157 = dma.done [#allocation14], 112
    $region77: #{autoencoder_cnn_forward.1} parent=1 // pred_fallthru
      _
    // Predicated region
    $region78: #{autoencoder_cnn_forward.1} parent=1 // pred_check
      _
    $region79: #{autoencoder_cnn_forward.1} parent=1 // pred_check_branch
      %159 = sbr.rel (0) target = $region81
    $region80: #{autoencoder_cnn_forward.1} parent=1 // pred_region
      %160 = dma.done [#allocation14], 50176
    $region81: #{autoencoder_cnn_forward.1} parent=1 // pred_fallthru
      _
    // Predicated region
    $region82: #{autoencoder_cnn_forward.1} parent=1 // pred_check
      _
    $region83: #{autoencoder_cnn_forward.1} parent=1 // pred_check_branch
      %162 = sbr.rel (0) target = $region85
    $region84: #{autoencoder_cnn_forward.1} parent=1 // pred_region
      %163 = dma.done [#allocation17], 112
    $region85: #{autoencoder_cnn_forward.1} parent=1 // pred_fallthru
      _
    %v165 = vld [vmem:[%s0] sm:$0xff]
    %v166 = vld [vmem:[%s0 + $0x8] sm:$0xff]
    %v167 = vld [vmem:[%s0 + $0x10] sm:$0xff]
    %v168 = vld [vmem:[%s0 + $0x18] sm:$0xff]
    %v169 = vld [vmem:[%s0 + $0x20] sm:$0xff]
    %v170 = vld [vmem:[%s0 + $0x28] sm:$0xff]
    %v171 = vld [vmem:[%s0 + $0x30] sm:$0xff]
    %v172 = vpack.c.bf16 %v165, %v165
    %v173 = vpack.c.bf16 %v166, %v166
    %v174 = vpack.c.bf16 %v167, %v167
    %v175 = vpack.c.bf16 %v168, %v168
    %v176 = vpack.c.bf16 %v169, %v169
    %v177 = vpack.c.bf16 %v170, %v170
    %v178 = vpack.c.bf16 %v171, %v171
    %v179 = vld [vmem:[#allocation2] sm:$0xff]
    %v180 = vld [vmem:[#allocation2 + $0x8] sm:$0xff]
    %v181 = vld [vmem:[#allocation2 + $0x10] sm:$0xff]
    %v182 = vld [vmem:[#allocation2 + $0x18] sm:$0xf]
    %v183 = vld [vmem:[#allocation2 + $0x1c] sm:$0xff]
    %v184 = vld [vmem:[#allocation2 + $0x24] sm:$0xff]
    %v185 = vld [vmem:[#allocation2 + $0x2c] sm:$0xff]
    %v186 = vld [vmem:[#allocation2 + $0x34] sm:$0xf]
    %v187 = vld [vmem:[#allocation2 + $0x38] sm:$0xff]
    %v188 = vld [vmem:[#allocation2 + $0x40] sm:$0xff]
    %v189 = vld [vmem:[#allocation2 + $0x48] sm:$0xff]
    %v190 = vld [vmem:[#allocation2 + $0x50] sm:$0xf]
    %v191 = vld [vmem:[#allocation2 + $0x54] sm:$0xff]
    %v192 = vld [vmem:[#allocation2 + $0x5c] sm:$0xff]
    %v193 = vld [vmem:[#allocation2 + $0x64] sm:$0xff]
    %v194 = vld [vmem:[#allocation2 + $0x6c] sm:$0xf]
    %v195 = vld [vmem:[#allocation2 + $0x70] sm:$0xff]
    %v196 = vld [vmem:[#allocation2 + $0x78] sm:$0xff]
    %v197 = vld [vmem:[#allocation2 + $0x80] sm:$0xff]
    %v198 = vld [vmem:[#allocation2 + $0x88] sm:$0xf]
    %v199 = vld [vmem:[#allocation2 + $0x8c] sm:$0xff]
    %v200 = vld [vmem:[#allocation2 + $0x94] sm:$0xff]
    %v201 = vld [vmem:[#allocation2 + $0x9c] sm:$0xff]
    %v202 = vld [vmem:[#allocation2 + $0xa4] sm:$0xf]
    %v203 = vld [vmem:[#allocation2 + $0xa8] sm:$0xff]
    %v204 = vld [vmem:[#allocation2 + $0xb0] sm:$0xff]
    %v205 = vld [vmem:[#allocation2 + $0xb8] sm:$0xff]
    %v206 = vld [vmem:[#allocation2 + $0xc0] sm:$0xf]
    %v207 = vld [vmem:[#allocation2 + $0xc4] sm:$0xff]
    %v208 = vld [vmem:[#allocation2 + $0xcc] sm:$0xff]
    %v209 = vld [vmem:[#allocation2 + $0xd4] sm:$0xff]
    %v210 = vld [vmem:[#allocation2 + $0xdc] sm:$0xf]
    %v211 = vld [vmem:[#allocation2 + $0xe0] sm:$0xff]
    %v212 = vld [vmem:[#allocation2 + $0xe8] sm:$0xff]
    %v213 = vld [vmem:[#allocation2 + $0xf0] sm:$0xff]
    %v214 = vld [vmem:[#allocation2 + $0xf8] sm:$0xf]
    %v215 = vld [vmem:[#allocation2 + $0xfc] sm:$0xff]
    %v216 = vld [vmem:[#allocation2 + $0x104] sm:$0xff]
    %v217 = vld [vmem:[#allocation2 + $0x10c] sm:$0xff]
    %v218 = vld [vmem:[#allocation2 + $0x114] sm:$0xf]
    %v219 = vld [vmem:[#allocation2 + $0x118] sm:$0xff]
    %v220 = vld [vmem:[#allocation2 + $0x120] sm:$0xff]
    %v221 = vld [vmem:[#allocation2 + $0x128] sm:$0xff]
    %v222 = vld [vmem:[#allocation2 + $0x130] sm:$0xf]
    %v223 = vld [vmem:[#allocation2 + $0x134] sm:$0xff]
    %v224 = vld [vmem:[#allocation2 + $0x13c] sm:$0xff]
    %v225 = vld [vmem:[#allocation2 + $0x144] sm:$0xff]
    %v226 = vld [vmem:[#allocation2 + $0x14c] sm:$0xf]
    %v227 = vld [vmem:[#allocation2 + $0x150] sm:$0xff]
    %v228 = vld [vmem:[#allocation2 + $0x158] sm:$0xff]
    %v229 = vld [vmem:[#allocation2 + $0x160] sm:$0xff]
    %v230 = vld [vmem:[#allocation2 + $0x168] sm:$0xf]
    %v231 = vld [vmem:[#allocation2 + $0x16c] sm:$0xff]
    %v232 = vld [vmem:[#allocation2 + $0x174] sm:$0xff]
    %v233 = vld [vmem:[#allocation2 + $0x17c] sm:$0xff]
    %v234 = vld [vmem:[#allocation2 + $0x184] sm:$0xf]
    %v235 = vld [vmem:[#allocation2 + $0x188] sm:$0xff]
    %v236 = vld [vmem:[#allocation2 + $0x190] sm:$0xff]
    %v237 = vld [vmem:[#allocation2 + $0x198] sm:$0xff]
    %v238 = vld [vmem:[#allocation2 + $0x1a0] sm:$0xf]
    %v239 = vld [vmem:[#allocation2 + $0x1a4] sm:$0xff]
    %v240 = vld [vmem:[#allocation2 + $0x1ac] sm:$0xff]
    %v241 = vld [vmem:[#allocation2 + $0x1b4] sm:$0xff]
    %v242 = vld [vmem:[#allocation2 + $0x1bc] sm:$0xf]
    %v243 = vld [vmem:[#allocation2 + $0x1c0] sm:$0xff]
    %v244 = vld [vmem:[#allocation2 + $0x1c8] sm:$0xff]
    %v245 = vld [vmem:[#allocation2 + $0x1d0] sm:$0xff]
    %v246 = vld [vmem:[#allocation2 + $0x1d8] sm:$0xf]
    %v247 = vld [vmem:[#allocation2 + $0x1dc] sm:$0xff]
    %v248 = vld [vmem:[#allocation2 + $0x1e4] sm:$0xff]
    %v249 = vld [vmem:[#allocation2 + $0x1ec] sm:$0xff]
    %v250 = vld [vmem:[#allocation2 + $0x1f4] sm:$0xf]
    %v251 = vld [vmem:[#allocation2 + $0x1f8] sm:$0xff]
    %v252 = vld [vmem:[#allocation2 + $0x200] sm:$0xff]
    %v253 = vld [vmem:[#allocation2 + $0x208] sm:$0xff]
    %v254 = vld [vmem:[#allocation2 + $0x210] sm:$0xf]
    %v255 = vld [vmem:[#allocation2 + $0x214] sm:$0xff]
    %v256 = vld [vmem:[#allocation2 + $0x21c] sm:$0xff]
    %v257 = vld [vmem:[#allocation2 + $0x224] sm:$0xff]
    %v258 = vld [vmem:[#allocation2 + $0x22c] sm:$0xf]
    %v259 = vld [vmem:[#allocation2 + $0x230] sm:$0xff]
    %v260 = vld [vmem:[#allocation2 + $0x238] sm:$0xff]
    %v261 = vld [vmem:[#allocation2 + $0x240] sm:$0xff]
    %v262 = vld [vmem:[#allocation2 + $0x248] sm:$0xf]
    %v263 = vld [vmem:[#allocation2 + $0x24c] sm:$0xff]
    %v264 = vld [vmem:[#allocation2 + $0x254] sm:$0xff]
    %v265 = vld [vmem:[#allocation2 + $0x25c] sm:$0xff]
    %v266 = vld [vmem:[#allocation2 + $0x264] sm:$0xf]
    %v267 = vld [vmem:[#allocation2 + $0x268] sm:$0xff]
    %v268 = vld [vmem:[#allocation2 + $0x270] sm:$0xff]
    %v269 = vld [vmem:[#allocation2 + $0x278] sm:$0xff]
    %v270 = vld [vmem:[#allocation2 + $0x280] sm:$0xf]
    %v271 = vld [vmem:[#allocation2 + $0x284] sm:$0xff]
    %v272 = vld [vmem:[#allocation2 + $0x28c] sm:$0xff]
    %v273 = vld [vmem:[#allocation2 + $0x294] sm:$0xff]
    %v274 = vld [vmem:[#allocation2 + $0x29c] sm:$0xf]
    %v275 = vld [vmem:[#allocation2 + $0x2a0] sm:$0xff]
    %v276 = vld [vmem:[#allocation2 + $0x2a8] sm:$0xff]
    %v277 = vld [vmem:[#allocation2 + $0x2b0] sm:$0xff]
    %v278 = vld [vmem:[#allocation2 + $0x2b8] sm:$0xf]
    %v279 = vld [vmem:[#allocation2 + $0x2bc] sm:$0xff]
    %v280 = vld [vmem:[#allocation2 + $0x2c4] sm:$0xff]
    %v281 = vld [vmem:[#allocation2 + $0x2cc] sm:$0xff]
    %v282 = vld [vmem:[#allocation2 + $0x2d4] sm:$0xf]
    %v283 = vld [vmem:[#allocation2 + $0x2d8] sm:$0xff]
    %v284 = vld [vmem:[#allocation2 + $0x2e0] sm:$0xff]
    %v285 = vld [vmem:[#allocation2 + $0x2e8] sm:$0xff]
    %v286 = vld [vmem:[#allocation2 + $0x2f0] sm:$0xf]
    %v287 = vld [vmem:[#allocation2 + $0x2f4] sm:$0xff]
    %v288 = vld [vmem:[#allocation2 + $0x2fc] sm:$0xff]
    %v289 = vld [vmem:[#allocation2 + $0x304] sm:$0xff]
    %v290 = vld [vmem:[#allocation2 + $0x30c] sm:$0xf]
    %v291 = vld [vmem:[#allocation2 + $0x310] sm:$0xff]
    %v292 = vld [vmem:[#allocation2 + $0x318] sm:$0xff]
    %v293 = vld [vmem:[#allocation2 + $0x320] sm:$0xff]
    %v294 = vld [vmem:[#allocation2 + $0x328] sm:$0xf]
    %v295 = vld [vmem:[#allocation2 + $0x32c] sm:$0xff]
    %v296 = vld [vmem:[#allocation2 + $0x334] sm:$0xff]
    %v297 = vld [vmem:[#allocation2 + $0x33c] sm:$0xff]
    %v298 = vld [vmem:[#allocation2 + $0x344] sm:$0xf]
    %v299 = vld [vmem:[#allocation2 + $0x348] sm:$0xff]
    %v300 = vld [vmem:[#allocation2 + $0x350] sm:$0xff]
    %v301 = vld [vmem:[#allocation2 + $0x358] sm:$0xff]
    %v302 = vld [vmem:[#allocation2 + $0x360] sm:$0xf]
    %v303 = vld [vmem:[#allocation2 + $0x364] sm:$0xff]
    %v304 = vld [vmem:[#allocation2 + $0x36c] sm:$0xff]
    %v305 = vld [vmem:[#allocation2 + $0x374] sm:$0xff]
    %v306 = vld [vmem:[#allocation2 + $0x37c] sm:$0xf]
    %v307 = vld [vmem:[#allocation2 + $0x380] sm:$0xff]
    %v308 = vld [vmem:[#allocation2 + $0x388] sm:$0xff]
    %v309 = vld [vmem:[#allocation2 + $0x390] sm:$0xff]
    %v310 = vld [vmem:[#allocation2 + $0x398] sm:$0xf]
    %v311 = vld [vmem:[#allocation2 + $0x39c] sm:$0xff]
    %v312 = vld [vmem:[#allocation2 + $0x3a4] sm:$0xff]
    %v313 = vld [vmem:[#allocation2 + $0x3ac] sm:$0xff]
    %v314 = vld [vmem:[#allocation2 + $0x3b4] sm:$0xf]
    %v315 = vld [vmem:[#allocation2 + $0x3b8] sm:$0xff]
    %v316 = vld [vmem:[#allocation2 + $0x3c0] sm:$0xff]
    %v317 = vld [vmem:[#allocation2 + $0x3c8] sm:$0xff]
    %v318 = vld [vmem:[#allocation2 + $0x3d0] sm:$0xf]
    %v319 = vld [vmem:[#allocation2 + $0x3d4] sm:$0xff]
    %v320 = vld [vmem:[#allocation2 + $0x3dc] sm:$0xff]
    %v321 = vld [vmem:[#allocation2 + $0x3e4] sm:$0xff]
    %v322 = vld [vmem:[#allocation2 + $0x3ec] sm:$0xf]
    %v323 = vld [vmem:[#allocation2 + $0x3f0] sm:$0xff]
    %v324 = vld [vmem:[#allocation2 + $0x3f8] sm:$0xff]
    %v325 = vld [vmem:[#allocation2 + $0x400] sm:$0xff]
    %v326 = vld [vmem:[#allocation2 + $0x408] sm:$0xf]
    %v327 = vld [vmem:[#allocation2 + $0x40c] sm:$0xff]
    %v328 = vld [vmem:[#allocation2 + $0x414] sm:$0xff]
    %v329 = vld [vmem:[#allocation2 + $0x41c] sm:$0xff]
    %v330 = vld [vmem:[#allocation2 + $0x424] sm:$0xf]
    %v331 = vld [vmem:[#allocation2 + $0x428] sm:$0xff]
    %v332 = vld [vmem:[#allocation2 + $0x430] sm:$0xff]
    %v333 = vld [vmem:[#allocation2 + $0x438] sm:$0xff]
    %v334 = vld [vmem:[#allocation2 + $0x440] sm:$0xf]
    %v335 = vld [vmem:[#allocation2 + $0x444] sm:$0xff]
    %v336 = vld [vmem:[#allocation2 + $0x44c] sm:$0xff]
    %v337 = vld [vmem:[#allocation2 + $0x454] sm:$0xff]
    %v338 = vld [vmem:[#allocation2 + $0x45c] sm:$0xf]
    %v339 = vld [vmem:[#allocation2 + $0x460] sm:$0xff]
    %v340 = vld [vmem:[#allocation2 + $0x468] sm:$0xff]
    %v341 = vld [vmem:[#allocation2 + $0x470] sm:$0xff]
    %v342 = vld [vmem:[#allocation2 + $0x478] sm:$0xf]
    %v343 = vld [vmem:[#allocation2 + $0x47c] sm:$0xff]
    %v344 = vld [vmem:[#allocation2 + $0x484] sm:$0xff]
    %v345 = vld [vmem:[#allocation2 + $0x48c] sm:$0xff]
    %v346 = vld [vmem:[#allocation2 + $0x494] sm:$0xf]
    %v347 = vld [vmem:[#allocation2 + $0x498] sm:$0xff]
    %v348 = vld [vmem:[#allocation2 + $0x4a0] sm:$0xff]
    %v349 = vld [vmem:[#allocation2 + $0x4a8] sm:$0xff]
    %v350 = vld [vmem:[#allocation2 + $0x4b0] sm:$0xf]
    %v351 = vld [vmem:[#allocation2 + $0x4b4] sm:$0xff]
    %v352 = vld [vmem:[#allocation2 + $0x4bc] sm:$0xff]
    %v353 = vld [vmem:[#allocation2 + $0x4c4] sm:$0xff]
    %v354 = vld [vmem:[#allocation2 + $0x4cc] sm:$0xf]
    %v355 = vld [vmem:[#allocation2 + $0x4d0] sm:$0xff]
    %v356 = vld [vmem:[#allocation2 + $0x4d8] sm:$0xff]
    %v357 = vld [vmem:[#allocation2 + $0x4e0] sm:$0xff]
    %v358 = vld [vmem:[#allocation2 + $0x4e8] sm:$0xf]
    %v359 = vld [vmem:[#allocation2 + $0x4ec] sm:$0xff]
    %v360 = vld [vmem:[#allocation2 + $0x4f4] sm:$0xff]
    %v361 = vld [vmem:[#allocation2 + $0x4fc] sm:$0xff]
    %v362 = vld [vmem:[#allocation2 + $0x504] sm:$0xf]
    %v363 = vld [vmem:[#allocation2 + $0x508] sm:$0xff]
    %v364 = vld [vmem:[#allocation2 + $0x510] sm:$0xff]
    %v365 = vld [vmem:[#allocation2 + $0x518] sm:$0xff]
    %v366 = vld [vmem:[#allocation2 + $0x520] sm:$0xf]
    %v367 = vld [vmem:[#allocation2 + $0x524] sm:$0xff]
    %v368 = vld [vmem:[#allocation2 + $0x52c] sm:$0xff]
    %v369 = vld [vmem:[#allocation2 + $0x534] sm:$0xff]
    %v370 = vld [vmem:[#allocation2 + $0x53c] sm:$0xf]
    %v371 = vld [vmem:[#allocation2 + $0x540] sm:$0xff]
    %v372 = vld [vmem:[#allocation2 + $0x548] sm:$0xff]
    %v373 = vld [vmem:[#allocation2 + $0x550] sm:$0xff]
    %v374 = vld [vmem:[#allocation2 + $0x558] sm:$0xf]
    %v375 = vld [vmem:[#allocation2 + $0x55c] sm:$0xff]
    %v376 = vld [vmem:[#allocation2 + $0x564] sm:$0xff]
    %v377 = vld [vmem:[#allocation2 + $0x56c] sm:$0xff]
    %v378 = vld [vmem:[#allocation2 + $0x574] sm:$0xf]
    %v379 = vld [vmem:[#allocation2 + $0x578] sm:$0xff]
    %v380 = vld [vmem:[#allocation2 + $0x580] sm:$0xff]
    %v381 = vld [vmem:[#allocation2 + $0x588] sm:$0xff]
    %v382 = vld [vmem:[#allocation2 + $0x590] sm:$0xf]
    %v383 = vld [vmem:[#allocation2 + $0x594] sm:$0xff]
    %v384 = vld [vmem:[#allocation2 + $0x59c] sm:$0xff]
    %v385 = vld [vmem:[#allocation2 + $0x5a4] sm:$0xff]
    %v386 = vld [vmem:[#allocation2 + $0x5ac] sm:$0xf]
    %v387 = vld [vmem:[#allocation2 + $0x5b0] sm:$0xff]
    %v388 = vld [vmem:[#allocation2 + $0x5b8] sm:$0xff]
    %v389 = vld [vmem:[#allocation2 + $0x5c0] sm:$0xff]
    %v390 = vld [vmem:[#allocation2 + $0x5c8] sm:$0xf]
    %v391 = vld [vmem:[#allocation2 + $0x5cc] sm:$0xff]
    %v392 = vld [vmem:[#allocation2 + $0x5d4] sm:$0xff]
    %v393 = vld [vmem:[#allocation2 + $0x5dc] sm:$0xff]
    %v394 = vld [vmem:[#allocation2 + $0x5e4] sm:$0xf]
    %v395 = vld [vmem:[#allocation2 + $0x5e8] sm:$0xff]
    %v396 = vld [vmem:[#allocation2 + $0x5f0] sm:$0xff]
    %v397 = vld [vmem:[#allocation2 + $0x5f8] sm:$0xff]
    %v398 = vld [vmem:[#allocation2 + $0x600] sm:$0xf]
    %v399 = vld [vmem:[#allocation2 + $0x604] sm:$0xff]
    %v400 = vld [vmem:[#allocation2 + $0x60c] sm:$0xff]
    %v401 = vld [vmem:[#allocation2 + $0x614] sm:$0xff]
    %v402 = vld [vmem:[#allocation2 + $0x61c] sm:$0xf]
    %v403 = vld [vmem:[#allocation2 + $0x620] sm:$0xff]
    %v404 = vld [vmem:[#allocation2 + $0x628] sm:$0xff]
    %v405 = vld [vmem:[#allocation2 + $0x630] sm:$0xff]
    %v406 = vld [vmem:[#allocation2 + $0x638] sm:$0xf]
    %v407 = vld [vmem:[#allocation2 + $0x63c] sm:$0xff]
    %v408 = vld [vmem:[#allocation2 + $0x644] sm:$0xff]
    %v409 = vld [vmem:[#allocation2 + $0x64c] sm:$0xff]
    %v410 = vld [vmem:[#allocation2 + $0x654] sm:$0xf]
    %v411 = vld [vmem:[#allocation2 + $0x658] sm:$0xff]
    %v412 = vld [vmem:[#allocation2 + $0x660] sm:$0xff]
    %v413 = vld [vmem:[#allocation2 + $0x668] sm:$0xff]
    %v414 = vld [vmem:[#allocation2 + $0x670] sm:$0xf]
    %v415 = vld [vmem:[#allocation2 + $0x674] sm:$0xff]
    %v416 = vld [vmem:[#allocation2 + $0x67c] sm:$0xff]
    %v417 = vld [vmem:[#allocation2 + $0x684] sm:$0xff]
    %v418 = vld [vmem:[#allocation2 + $0x68c] sm:$0xf]
    %v419 = vld [vmem:[#allocation2 + $0x690] sm:$0xff]
    %v420 = vld [vmem:[#allocation2 + $0x698] sm:$0xff]
    %v421 = vld [vmem:[#allocation2 + $0x6a0] sm:$0xff]
    %v422 = vld [vmem:[#allocation2 + $0x6a8] sm:$0xf]
    %v423 = vld [vmem:[#allocation2 + $0x6ac] sm:$0xff]
    %v424 = vld [vmem:[#allocation2 + $0x6b4] sm:$0xff]
    %v425 = vld [vmem:[#allocation2 + $0x6bc] sm:$0xff]
    %v426 = vld [vmem:[#allocation2 + $0x6c4] sm:$0xf]
    %v427 = vld [vmem:[#allocation2 + $0x6c8] sm:$0xff]
    %v428 = vld [vmem:[#allocation2 + $0x6d0] sm:$0xff]
    %v429 = vld [vmem:[#allocation2 + $0x6d8] sm:$0xff]
    %v430 = vld [vmem:[#allocation2 + $0x6e0] sm:$0xf]
    %v431 = vld [vmem:[#allocation2 + $0x6e4] sm:$0xff]
    %v432 = vld [vmem:[#allocation2 + $0x6ec] sm:$0xff]
    %v433 = vld [vmem:[#allocation2 + $0x6f4] sm:$0xff]
    %v434 = vld [vmem:[#allocation2 + $0x6fc] sm:$0xf]
    %v435 = vld [vmem:[#allocation2 + $0x700] sm:$0xff]
    %v436 = vld [vmem:[#allocation2 + $0x708] sm:$0xff]
    %v437 = vld [vmem:[#allocation2 + $0x710] sm:$0xff]
    %v438 = vld [vmem:[#allocation2 + $0x718] sm:$0xf]
    %v439 = vld [vmem:[#allocation2 + $0x71c] sm:$0xff]
    %v440 = vld [vmem:[#allocation2 + $0x724] sm:$0xff]
    %v441 = vld [vmem:[#allocation2 + $0x72c] sm:$0xff]
    %v442 = vld [vmem:[#allocation2 + $0x734] sm:$0xf]
    %v443 = vld [vmem:[#allocation2 + $0x738] sm:$0xff]
    %v444 = vld [vmem:[#allocation2 + $0x740] sm:$0xff]
    %v445 = vld [vmem:[#allocation2 + $0x748] sm:$0xff]
    %v446 = vld [vmem:[#allocation2 + $0x750] sm:$0xf]
    %v447 = vld [vmem:[#allocation2 + $0x754] sm:$0xff]
    %v448 = vld [vmem:[#allocation2 + $0x75c] sm:$0xff]
    %v449 = vld [vmem:[#allocation2 + $0x764] sm:$0xff]
    %v450 = vld [vmem:[#allocation2 + $0x76c] sm:$0xf]
    %v451 = vld [vmem:[#allocation2 + $0x770] sm:$0xff]
    %v452 = vld [vmem:[#allocation2 + $0x778] sm:$0xff]
    %v453 = vld [vmem:[#allocation2 + $0x780] sm:$0xff]
    %v454 = vld [vmem:[#allocation2 + $0x788] sm:$0xf]
    %v455 = vld [vmem:[#allocation2 + $0x78c] sm:$0xff]
    %v456 = vld [vmem:[#allocation2 + $0x794] sm:$0xff]
    %v457 = vld [vmem:[#allocation2 + $0x79c] sm:$0xff]
    %v458 = vld [vmem:[#allocation2 + $0x7a4] sm:$0xf]
    %v459 = vld [vmem:[#allocation2 + $0x7a8] sm:$0xff]
    %v460 = vld [vmem:[#allocation2 + $0x7b0] sm:$0xff]
    %v461 = vld [vmem:[#allocation2 + $0x7b8] sm:$0xff]
    %v462 = vld [vmem:[#allocation2 + $0x7c0] sm:$0xf]
    %v463 = vld [vmem:[#allocation2 + $0x7c4] sm:$0xff]
    %v464 = vld [vmem:[#allocation2 + $0x7cc] sm:$0xff]
    %v465 = vld [vmem:[#allocation2 + $0x7d4] sm:$0xff]
    %v466 = vld [vmem:[#allocation2 + $0x7dc] sm:$0xf]
    %v467 = vld [vmem:[#allocation2 + $0x7e0] sm:$0xff]
    %v468 = vld [vmem:[#allocation2 + $0x7e8] sm:$0xff]
    %v469 = vld [vmem:[#allocation2 + $0x7f0] sm:$0xff]
    %v470 = vld [vmem:[#allocation2 + $0x7f8] sm:$0xf]
    %v471 = vld [vmem:[#allocation2 + $0x7fc] sm:$0xff]
    %v472 = vld [vmem:[#allocation2 + $0x804] sm:$0xff]
    %v473 = vld [vmem:[#allocation2 + $0x80c] sm:$0xff]
    %v474 = vld [vmem:[#allocation2 + $0x814] sm:$0xf]
    %v475 = vld [vmem:[#allocation2 + $0x818] sm:$0xff]
    %v476 = vld [vmem:[#allocation2 + $0x820] sm:$0xff]
    %v477 = vld [vmem:[#allocation2 + $0x828] sm:$0xff]
    %v478 = vld [vmem:[#allocation2 + $0x830] sm:$0xf]
    %v479 = vld [vmem:[#allocation2 + $0x834] sm:$0xff]
    %v480 = vld [vmem:[#allocation2 + $0x83c] sm:$0xff]
    %v481 = vld [vmem:[#allocation2 + $0x844] sm:$0xff]
    %v482 = vld [vmem:[#allocation2 + $0x84c] sm:$0xf]
    %v483 = vld [vmem:[#allocation2 + $0x850] sm:$0xff]
    %v484 = vld [vmem:[#allocation2 + $0x858] sm:$0xff]
    %v485 = vld [vmem:[#allocation2 + $0x860] sm:$0xff]
    %v486 = vld [vmem:[#allocation2 + $0x868] sm:$0xf]
    %v487 = vld [vmem:[#allocation2 + $0x86c] sm:$0xff]
    %v488 = vld [vmem:[#allocation2 + $0x874] sm:$0xff]
    %v489 = vld [vmem:[#allocation2 + $0x87c] sm:$0xff]
    %v490 = vld [vmem:[#allocation2 + $0x884] sm:$0xf]
    %v491 = vld [vmem:[#allocation2 + $0x888] sm:$0xff]
    %v492 = vld [vmem:[#allocation2 + $0x890] sm:$0xff]
    %v493 = vld [vmem:[#allocation2 + $0x898] sm:$0xff]
    %v494 = vld [vmem:[#allocation2 + $0x8a0] sm:$0xf]
    %v495 = vld [vmem:[#allocation2 + $0x8a4] sm:$0xff]
    %v496 = vld [vmem:[#allocation2 + $0x8ac] sm:$0xff]
    %v497 = vld [vmem:[#allocation2 + $0x8b4] sm:$0xff]
    %v498 = vld [vmem:[#allocation2 + $0x8bc] sm:$0xf]
    %v499 = vld [vmem:[#allocation2 + $0x8c0] sm:$0xff]
    %v500 = vld [vmem:[#allocation2 + $0x8c8] sm:$0xff]
    %v501 = vld [vmem:[#allocation2 + $0x8d0] sm:$0xff]
    %v502 = vld [vmem:[#allocation2 + $0x8d8] sm:$0xf]
    %v503 = vld [vmem:[#allocation2 + $0x8dc] sm:$0xff]
    %v504 = vld [vmem:[#allocation2 + $0x8e4] sm:$0xff]
    %v505 = vld [vmem:[#allocation2 + $0x8ec] sm:$0xff]
    %v506 = vld [vmem:[#allocation2 + $0x8f4] sm:$0xf]
    %v507 = vld [vmem:[#allocation2 + $0x8f8] sm:$0xff]
    %v508 = vld [vmem:[#allocation2 + $0x900] sm:$0xff]
    %v509 = vld [vmem:[#allocation2 + $0x908] sm:$0xff]
    %v510 = vld [vmem:[#allocation2 + $0x910] sm:$0xf]
    %v511 = vld [vmem:[#allocation2 + $0x914] sm:$0xff]
    %v512 = vld [vmem:[#allocation2 + $0x91c] sm:$0xff]
    %v513 = vld [vmem:[#allocation2 + $0x924] sm:$0xff]
    %v514 = vld [vmem:[#allocation2 + $0x92c] sm:$0xf]
    %v515 = vld [vmem:[#allocation2 + $0x930] sm:$0xff]
    %v516 = vld [vmem:[#allocation2 + $0x938] sm:$0xff]
    %v517 = vld [vmem:[#allocation2 + $0x940] sm:$0xff]
    %v518 = vld [vmem:[#allocation2 + $0x948] sm:$0xf]
    %v519 = vld [vmem:[#allocation2 + $0x94c] sm:$0xff]
    %v520 = vld [vmem:[#allocation2 + $0x954] sm:$0xff]
    %v521 = vld [vmem:[#allocation2 + $0x95c] sm:$0xff]
    %v522 = vld [vmem:[#allocation2 + $0x964] sm:$0xf]
    %v523 = vld [vmem:[#allocation2 + $0x968] sm:$0xff]
    %v524 = vld [vmem:[#allocation2 + $0x970] sm:$0xff]
    %v525 = vld [vmem:[#allocation2 + $0x978] sm:$0xff]
    %v526 = vld [vmem:[#allocation2 + $0x980] sm:$0xf]
    %v527 = vld [vmem:[#allocation2 + $0x984] sm:$0xff]
    %v528 = vld [vmem:[#allocation2 + $0x98c] sm:$0xff]
    %v529 = vld [vmem:[#allocation2 + $0x994] sm:$0xff]
    %v530 = vld [vmem:[#allocation2 + $0x99c] sm:$0xf]
    %v531 = vld [vmem:[#allocation2 + $0x9a0] sm:$0xff]
    %v532 = vld [vmem:[#allocation2 + $0x9a8] sm:$0xff]
    %v533 = vld [vmem:[#allocation2 + $0x9b0] sm:$0xff]
    %v534 = vld [vmem:[#allocation2 + $0x9b8] sm:$0xf]
    %v535 = vld [vmem:[#allocation2 + $0x9bc] sm:$0xff]
    %v536 = vld [vmem:[#allocation2 + $0x9c4] sm:$0xff]
    %v537 = vld [vmem:[#allocation2 + $0x9cc] sm:$0xff]
    %v538 = vld [vmem:[#allocation2 + $0x9d4] sm:$0xf]
    %v539 = vld [vmem:[#allocation2 + $0x9d8] sm:$0xff]
    %v540 = vld [vmem:[#allocation2 + $0x9e0] sm:$0xff]
    %v541 = vld [vmem:[#allocation2 + $0x9e8] sm:$0xff]
    %v542 = vld [vmem:[#allocation2 + $0x9f0] sm:$0xf]
    %v543 = vld [vmem:[#allocation2 + $0x9f4] sm:$0xff]
    %v544 = vld [vmem:[#allocation2 + $0x9fc] sm:$0xff]
    %v545 = vld [vmem:[#allocation2 + $0xa04] sm:$0xff]
    %v546 = vld [vmem:[#allocation2 + $0xa0c] sm:$0xf]
    %v547 = vld [vmem:[#allocation2 + $0xa10] sm:$0xff]
    %v548 = vld [vmem:[#allocation2 + $0xa18] sm:$0xff]
    %v549 = vld [vmem:[#allocation2 + $0xa20] sm:$0xff]
    %v550 = vld [vmem:[#allocation2 + $0xa28] sm:$0xf]
    %v551 = vld [vmem:[#allocation2 + $0xa2c] sm:$0xff]
    %v552 = vld [vmem:[#allocation2 + $0xa34] sm:$0xff]
    %v553 = vld [vmem:[#allocation2 + $0xa3c] sm:$0xff]
    %v554 = vld [vmem:[#allocation2 + $0xa44] sm:$0xf]
    %v555 = vld [vmem:[#allocation2 + $0xa48] sm:$0xff]
    %v556 = vld [vmem:[#allocation2 + $0xa50] sm:$0xff]
    %v557 = vld [vmem:[#allocation2 + $0xa58] sm:$0xff]
    %v558 = vld [vmem:[#allocation2 + $0xa60] sm:$0xf]
    %v559 = vld [vmem:[#allocation2 + $0xa64] sm:$0xff]
    %v560 = vld [vmem:[#allocation2 + $0xa6c] sm:$0xff]
    %v561 = vld [vmem:[#allocation2 + $0xa74] sm:$0xff]
    %v562 = vld [vmem:[#allocation2 + $0xa7c] sm:$0xf]
    %v563 = vld [vmem:[#allocation2 + $0xa80] sm:$0xff]
    %v564 = vld [vmem:[#allocation2 + $0xa88] sm:$0xff]
    %v565 = vld [vmem:[#allocation2 + $0xa90] sm:$0xff]
    %v566 = vld [vmem:[#allocation2 + $0xa98] sm:$0xf]
    %v567 = vld [vmem:[#allocation2 + $0xa9c] sm:$0xff]
    %v568 = vld [vmem:[#allocation2 + $0xaa4] sm:$0xff]
    %v569 = vld [vmem:[#allocation2 + $0xaac] sm:$0xff]
    %v570 = vld [vmem:[#allocation2 + $0xab4] sm:$0xf]
    %v571 = vld [vmem:[#allocation2 + $0xab8] sm:$0xff]
    %v572 = vld [vmem:[#allocation2 + $0xac0] sm:$0xff]
    %v573 = vld [vmem:[#allocation2 + $0xac8] sm:$0xff]
    %v574 = vld [vmem:[#allocation2 + $0xad0] sm:$0xf]
    %v575 = vld [vmem:[#allocation2 + $0xad4] sm:$0xff]
    %v576 = vld [vmem:[#allocation2 + $0xadc] sm:$0xff]
    %v577 = vld [vmem:[#allocation2 + $0xae4] sm:$0xff]
    %v578 = vld [vmem:[#allocation2 + $0xaec] sm:$0xf]
    %v579 = vld [vmem:[#allocation2 + $0xaf0] sm:$0xff]
    %v580 = vld [vmem:[#allocation2 + $0xaf8] sm:$0xff]
    %v581 = vld [vmem:[#allocation2 + $0xb00] sm:$0xff]
    %v582 = vld [vmem:[#allocation2 + $0xb08] sm:$0xf]
    %v583 = vld [vmem:[#allocation2 + $0xb0c] sm:$0xff]
    %v584 = vld [vmem:[#allocation2 + $0xb14] sm:$0xff]
    %v585 = vld [vmem:[#allocation2 + $0xb1c] sm:$0xff]
    %v586 = vld [vmem:[#allocation2 + $0xb24] sm:$0xf]
    %v587 = vld [vmem:[#allocation2 + $0xb28] sm:$0xff]
    %v588 = vld [vmem:[#allocation2 + $0xb30] sm:$0xff]
    %v589 = vld [vmem:[#allocation2 + $0xb38] sm:$0xff]
    %v590 = vld [vmem:[#allocation2 + $0xb40] sm:$0xf]
    %v591 = vld [vmem:[#allocation2 + $0xb44] sm:$0xff]
    %v592 = vld [vmem:[#allocation2 + $0xb4c] sm:$0xff]
    %v593 = vld [vmem:[#allocation2 + $0xb54] sm:$0xff]
    %v594 = vld [vmem:[#allocation2 + $0xb5c] sm:$0xf]
    %v595 = vld [vmem:[#allocation2 + $0xb60] sm:$0xff]
    %v596 = vld [vmem:[#allocation2 + $0xb68] sm:$0xff]
    %v597 = vld [vmem:[#allocation2 + $0xb70] sm:$0xff]
    %v598 = vld [vmem:[#allocation2 + $0xb78] sm:$0xf]
    %v599 = vld [vmem:[#allocation2 + $0xb7c] sm:$0xff]
    %v600 = vld [vmem:[#allocation2 + $0xb84] sm:$0xff]
    %v601 = vld [vmem:[#allocation2 + $0xb8c] sm:$0xff]
    %v602 = vld [vmem:[#allocation2 + $0xb94] sm:$0xf]
    %v603 = vld [vmem:[#allocation2 + $0xb98] sm:$0xff]
    %v604 = vld [vmem:[#allocation2 + $0xba0] sm:$0xff]
    %v605 = vld [vmem:[#allocation2 + $0xba8] sm:$0xff]
    %v606 = vld [vmem:[#allocation2 + $0xbb0] sm:$0xf]
    %v607 = vld [vmem:[#allocation2 + $0xbb4] sm:$0xff]
    %v608 = vld [vmem:[#allocation2 + $0xbbc] sm:$0xff]
    %v609 = vld [vmem:[#allocation2 + $0xbc4] sm:$0xff]
    %v610 = vld [vmem:[#allocation2 + $0xbcc] sm:$0xf]
    %v611 = vld [vmem:[#allocation2 + $0xbd0] sm:$0xff]
    %v612 = vld [vmem:[#allocation2 + $0xbd8] sm:$0xff]
    %v613 = vld [vmem:[#allocation2 + $0xbe0] sm:$0xff]
    %v614 = vld [vmem:[#allocation2 + $0xbe8] sm:$0xf]
    %v615 = vld [vmem:[#allocation2 + $0xbec] sm:$0xff]
    %v616 = vld [vmem:[#allocation2 + $0xbf4] sm:$0xff]
    %v617 = vld [vmem:[#allocation2 + $0xbfc] sm:$0xff]
    %v618 = vld [vmem:[#allocation2 + $0xc04] sm:$0xf]
    %v619 = vld [vmem:[#allocation2 + $0xc08] sm:$0xff]
    %v620 = vld [vmem:[#allocation2 + $0xc10] sm:$0xff]
    %v621 = vld [vmem:[#allocation2 + $0xc18] sm:$0xff]
    %v622 = vld [vmem:[#allocation2 + $0xc20] sm:$0xf]
    %v623 = vld [vmem:[#allocation2 + $0xc24] sm:$0xff]
    %v624 = vld [vmem:[#allocation2 + $0xc2c] sm:$0xff]
    %v625 = vld [vmem:[#allocation2 + $0xc34] sm:$0xff]
    %v626 = vld [vmem:[#allocation2 + $0xc3c] sm:$0xf]
    %v627 = vld [vmem:[#allocation4] sm:$0xff]
    %v629 = vlaneseq
    %v630 = vshrl.u32 %v629, 7
    %v631 = vsub.s32 0, %v630
    %v632 = vrot.slane %v627, %v631
    %v633 = vlaneseq
    %v634 = vshrl.u32 %v633, 7
    %v635 = vsub.s32 1, %v634
    %v636 = vrot.slane %v627, %v635
    %v637 = vlaneseq
    %v638 = vshrl.u32 %v637, 7
    %v639 = vsub.s32 2, %v638
    %v640 = vrot.slane %v627, %v639
    %v641 = vlaneseq
    %v642 = vshrl.u32 %v641, 7
    %v643 = vsub.s32 3, %v642
    %v644 = vrot.slane %v627, %v643
    %v645 = vlaneseq
    %v646 = vshrl.u32 %v645, 7
    %v647 = vsub.s32 4, %v646
    %v648 = vrot.slane %v627, %v647
    %v649 = vlaneseq
    %v650 = vshrl.u32 %v649, 7
    %v651 = vsub.s32 5, %v650
    %v652 = vrot.slane %v627, %v651
    %v653 = vlaneseq
    %v654 = vshrl.u32 %v653, 7
    %v655 = vsub.s32 6, %v654
    %v656 = vrot.slane %v627, %v655
    %v1112 = vunpack.c.l.b16 %v179
    %v1113 = vunpack.c.h.b16 %v179
    %v1114 = vunpack.c.l.b16 %v180
    %v1115 = vunpack.c.h.b16 %v180
    %v1116 = vunpack.c.l.b16 %v181
    %v1117 = vunpack.c.h.b16 %v181
    %v1118 = vunpack.c.l.b16 %v182
    %v1119 = vunpack.c.l.b16 %v183
    %v1120 = vunpack.c.h.b16 %v183
    %v1121 = vunpack.c.l.b16 %v184
    %v1122 = vunpack.c.h.b16 %v184
    %v1123 = vunpack.c.l.b16 %v185
    %v1124 = vunpack.c.h.b16 %v185
    %v1125 = vunpack.c.l.b16 %v186
    %v1126 = vunpack.c.l.b16 %v187
    %v1127 = vunpack.c.h.b16 %v187
    %v1128 = vunpack.c.l.b16 %v188
    %v1129 = vunpack.c.h.b16 %v188
    %v1130 = vunpack.c.l.b16 %v189
    %v1131 = vunpack.c.h.b16 %v189
    %v1132 = vunpack.c.l.b16 %v190
    %v1133 = vunpack.c.l.b16 %v191
    %v1134 = vunpack.c.h.b16 %v191
    %v1135 = vunpack.c.l.b16 %v192
    %v1136 = vunpack.c.h.b16 %v192
    %v1137 = vunpack.c.l.b16 %v193
    %v1138 = vunpack.c.h.b16 %v193
    %v1139 = vunpack.c.l.b16 %v194
    %v1140 = vunpack.c.l.b16 %v195
    %v1141 = vunpack.c.h.b16 %v195
    %v1142 = vunpack.c.l.b16 %v196
    %v1143 = vunpack.c.h.b16 %v196
    %v1144 = vunpack.c.l.b16 %v197
    %v1145 = vunpack.c.h.b16 %v197
    %v1146 = vunpack.c.l.b16 %v198
    %v1147 = vunpack.c.l.b16 %v199
    %v1148 = vunpack.c.h.b16 %v199
    %v1149 = vunpack.c.l.b16 %v200
    %v1150 = vunpack.c.h.b16 %v200
    %v1151 = vunpack.c.l.b16 %v201
    %v1152 = vunpack.c.h.b16 %v201
    %v1153 = vunpack.c.l.b16 %v202
    %v1154 = vunpack.c.l.b16 %v203
    %v1155 = vunpack.c.h.b16 %v203
    %v1156 = vunpack.c.l.b16 %v204
    %v1157 = vunpack.c.h.b16 %v204
    %v1158 = vunpack.c.l.b16 %v205
    %v1159 = vunpack.c.h.b16 %v205
    %v1160 = vunpack.c.l.b16 %v206
    %v1161 = vunpack.c.l.b16 %v207
    %v1162 = vunpack.c.h.b16 %v207
    %v1163 = vunpack.c.l.b16 %v208
    %v1164 = vunpack.c.h.b16 %v208
    %v1165 = vunpack.c.l.b16 %v209
    %v1166 = vunpack.c.h.b16 %v209
    %v1167 = vunpack.c.l.b16 %v210
    %v1168 = vunpack.c.l.b16 %v211
    %v1169 = vunpack.c.h.b16 %v211
    %v1170 = vunpack.c.l.b16 %v212
    %v1171 = vunpack.c.h.b16 %v212
    %v1172 = vunpack.c.l.b16 %v213
    %v1173 = vunpack.c.h.b16 %v213
    %v1174 = vunpack.c.l.b16 %v214
    %v1175 = vunpack.c.l.b16 %v215
    %v1176 = vunpack.c.h.b16 %v215
    %v1177 = vunpack.c.l.b16 %v216
    %v1178 = vunpack.c.h.b16 %v216
    %v1179 = vunpack.c.l.b16 %v217
    %v1180 = vunpack.c.h.b16 %v217
    %v1181 = vunpack.c.l.b16 %v218
    %v1182 = vunpack.c.l.b16 %v219
    %v1183 = vunpack.c.h.b16 %v219
    %v1184 = vunpack.c.l.b16 %v220
    %v1185 = vunpack.c.h.b16 %v220
    %v1186 = vunpack.c.l.b16 %v221
    %v1187 = vunpack.c.h.b16 %v221
    %v1188 = vunpack.c.l.b16 %v222
    %v1189 = vunpack.c.l.b16 %v223
    %v1190 = vunpack.c.h.b16 %v223
    %v1191 = vunpack.c.l.b16 %v224
    %v1192 = vunpack.c.h.b16 %v224
    %v1193 = vunpack.c.l.b16 %v225
    %v1194 = vunpack.c.h.b16 %v225
    %v1195 = vunpack.c.l.b16 %v226
    %v1196 = vunpack.c.l.b16 %v227
    %v1197 = vunpack.c.h.b16 %v227
    %v1198 = vunpack.c.l.b16 %v228
    %v1199 = vunpack.c.h.b16 %v228
    %v1200 = vunpack.c.l.b16 %v229
    %v1201 = vunpack.c.h.b16 %v229
    %v1202 = vunpack.c.l.b16 %v230
    %v1203 = vunpack.c.l.b16 %v231
    %v1204 = vunpack.c.h.b16 %v231
    %v1205 = vunpack.c.l.b16 %v232
    %v1206 = vunpack.c.h.b16 %v232
    %v1207 = vunpack.c.l.b16 %v233
    %v1208 = vunpack.c.h.b16 %v233
    %v1209 = vunpack.c.l.b16 %v234
    %v1210 = vunpack.c.l.b16 %v235
    %v1211 = vunpack.c.h.b16 %v235
    %v1212 = vunpack.c.l.b16 %v236
    %v1213 = vunpack.c.h.b16 %v236
    %v1214 = vunpack.c.l.b16 %v237
    %v1215 = vunpack.c.h.b16 %v237
    %v1216 = vunpack.c.l.b16 %v238
    %v1217 = vunpack.c.l.b16 %v239
    %v1218 = vunpack.c.h.b16 %v239
    %v1219 = vunpack.c.l.b16 %v240
    %v1220 = vunpack.c.h.b16 %v240
    %v1221 = vunpack.c.l.b16 %v241
    %v1222 = vunpack.c.h.b16 %v241
    %v1223 = vunpack.c.l.b16 %v242
    %v1224 = vunpack.c.l.b16 %v243
    %v1225 = vunpack.c.h.b16 %v243
    %v1226 = vunpack.c.l.b16 %v244
    %v1227 = vunpack.c.h.b16 %v244
    %v1228 = vunpack.c.l.b16 %v245
    %v1229 = vunpack.c.h.b16 %v245
    %v1230 = vunpack.c.l.b16 %v246
    %v1231 = vunpack.c.l.b16 %v247
    %v1232 = vunpack.c.h.b16 %v247
    %v1233 = vunpack.c.l.b16 %v248
    %v1234 = vunpack.c.h.b16 %v248
    %v1235 = vunpack.c.l.b16 %v249
    %v1236 = vunpack.c.h.b16 %v249
    %v1237 = vunpack.c.l.b16 %v250
    %v1238 = vunpack.c.l.b16 %v251
    %v1239 = vunpack.c.h.b16 %v251
    %v1240 = vunpack.c.l.b16 %v252
    %v1241 = vunpack.c.h.b16 %v252
    %v1242 = vunpack.c.l.b16 %v253
    %v1243 = vunpack.c.h.b16 %v253
    %v1244 = vunpack.c.l.b16 %v254
    %v1245 = vunpack.c.l.b16 %v255
    %v1246 = vunpack.c.h.b16 %v255
    %v1247 = vunpack.c.l.b16 %v256
    %v1248 = vunpack.c.h.b16 %v256
    %v1249 = vunpack.c.l.b16 %v257
    %v1250 = vunpack.c.h.b16 %v257
    %v1251 = vunpack.c.l.b16 %v258
    %v1252 = vunpack.c.l.b16 %v259
    %v1253 = vunpack.c.h.b16 %v259
    %v1254 = vunpack.c.l.b16 %v260
    %v1255 = vunpack.c.h.b16 %v260
    %v1256 = vunpack.c.l.b16 %v261
    %v1257 = vunpack.c.h.b16 %v261
    %v1258 = vunpack.c.l.b16 %v262
    %v1259 = vunpack.c.l.b16 %v263
    %v1260 = vunpack.c.h.b16 %v263
    %v1261 = vunpack.c.l.b16 %v264
    %v1262 = vunpack.c.h.b16 %v264
    %v1263 = vunpack.c.l.b16 %v265
    %v1264 = vunpack.c.h.b16 %v265
    %v1265 = vunpack.c.l.b16 %v266
    %v1266 = vunpack.c.l.b16 %v267
    %v1267 = vunpack.c.h.b16 %v267
    %v1268 = vunpack.c.l.b16 %v268
    %v1269 = vunpack.c.h.b16 %v268
    %v1270 = vunpack.c.l.b16 %v269
    %v1271 = vunpack.c.h.b16 %v269
    %v1272 = vunpack.c.l.b16 %v270
    %v1273 = vunpack.c.l.b16 %v271
    %v1274 = vunpack.c.h.b16 %v271
    %v1275 = vunpack.c.l.b16 %v272
    %v1276 = vunpack.c.h.b16 %v272
    %v1277 = vunpack.c.l.b16 %v273
    %v1278 = vunpack.c.h.b16 %v273
    %v1279 = vunpack.c.l.b16 %v274
    %v1280 = vunpack.c.l.b16 %v275
    %v1281 = vunpack.c.h.b16 %v275
    %v1282 = vunpack.c.l.b16 %v276
    %v1283 = vunpack.c.h.b16 %v276
    %v1284 = vunpack.c.l.b16 %v277
    %v1285 = vunpack.c.h.b16 %v277
    %v1286 = vunpack.c.l.b16 %v278
    %v1287 = vunpack.c.l.b16 %v279
    %v1288 = vunpack.c.h.b16 %v279
    %v1289 = vunpack.c.l.b16 %v280
    %v1290 = vunpack.c.h.b16 %v280
    %v1291 = vunpack.c.l.b16 %v281
    %v1292 = vunpack.c.h.b16 %v281
    %v1293 = vunpack.c.l.b16 %v282
    %v1294 = vunpack.c.l.b16 %v283
    %v1295 = vunpack.c.h.b16 %v283
    %v1296 = vunpack.c.l.b16 %v284
    %v1297 = vunpack.c.h.b16 %v284
    %v1298 = vunpack.c.l.b16 %v285
    %v1299 = vunpack.c.h.b16 %v285
    %v1300 = vunpack.c.l.b16 %v286
    %v1301 = vunpack.c.l.b16 %v287
    %v1302 = vunpack.c.h.b16 %v287
    %v1303 = vunpack.c.l.b16 %v288
    %v1304 = vunpack.c.h.b16 %v288
    %v1305 = vunpack.c.l.b16 %v289
    %v1306 = vunpack.c.h.b16 %v289
    %v1307 = vunpack.c.l.b16 %v290
    %v1308 = vunpack.c.l.b16 %v291
    %v1309 = vunpack.c.h.b16 %v291
    %v1310 = vunpack.c.l.b16 %v292
    %v1311 = vunpack.c.h.b16 %v292
    %v1312 = vunpack.c.l.b16 %v293
    %v1313 = vunpack.c.h.b16 %v293
    %v1314 = vunpack.c.l.b16 %v294
    %v1315 = vunpack.c.l.b16 %v295
    %v1316 = vunpack.c.h.b16 %v295
    %v1317 = vunpack.c.l.b16 %v296
    %v1318 = vunpack.c.h.b16 %v296
    %v1319 = vunpack.c.l.b16 %v297
    %v1320 = vunpack.c.h.b16 %v297
    %v1321 = vunpack.c.l.b16 %v298
    %v1322 = vunpack.c.l.b16 %v299
    %v1323 = vunpack.c.h.b16 %v299
    %v1324 = vunpack.c.l.b16 %v300
    %v1325 = vunpack.c.h.b16 %v300
    %v1326 = vunpack.c.l.b16 %v301
    %v1327 = vunpack.c.h.b16 %v301
    %v1328 = vunpack.c.l.b16 %v302
    %v1329 = vunpack.c.l.b16 %v303
    %v1330 = vunpack.c.h.b16 %v303
    %v1331 = vunpack.c.l.b16 %v304
    %v1332 = vunpack.c.h.b16 %v304
    %v1333 = vunpack.c.l.b16 %v305
    %v1334 = vunpack.c.h.b16 %v305
    %v1335 = vunpack.c.l.b16 %v306
    %v1336 = vunpack.c.l.b16 %v307
    %v1337 = vunpack.c.h.b16 %v307
    %v1338 = vunpack.c.l.b16 %v308
    %v1339 = vunpack.c.h.b16 %v308
    %v1340 = vunpack.c.l.b16 %v309
    %v1341 = vunpack.c.h.b16 %v309
    %v1342 = vunpack.c.l.b16 %v310
    %v1343 = vunpack.c.l.b16 %v311
    %v1344 = vunpack.c.h.b16 %v311
    %v1345 = vunpack.c.l.b16 %v312
    %v1346 = vunpack.c.h.b16 %v312
    %v1347 = vunpack.c.l.b16 %v313
    %v1348 = vunpack.c.h.b16 %v313
    %v1349 = vunpack.c.l.b16 %v314
    %v1350 = vunpack.c.l.b16 %v315
    %v1351 = vunpack.c.h.b16 %v315
    %v1352 = vunpack.c.l.b16 %v316
    %v1353 = vunpack.c.h.b16 %v316
    %v1354 = vunpack.c.l.b16 %v317
    %v1355 = vunpack.c.h.b16 %v317
    %v1356 = vunpack.c.l.b16 %v318
    %v1357 = vunpack.c.l.b16 %v319
    %v1358 = vunpack.c.h.b16 %v319
    %v1359 = vunpack.c.l.b16 %v320
    %v1360 = vunpack.c.h.b16 %v320
    %v1361 = vunpack.c.l.b16 %v321
    %v1362 = vunpack.c.h.b16 %v321
    %v1363 = vunpack.c.l.b16 %v322
    %v1364 = vunpack.c.l.b16 %v323
    %v1365 = vunpack.c.h.b16 %v323
    %v1366 = vunpack.c.l.b16 %v324
    %v1367 = vunpack.c.h.b16 %v324
    %v1368 = vunpack.c.l.b16 %v325
    %v1369 = vunpack.c.h.b16 %v325
    %v1370 = vunpack.c.l.b16 %v326
    %v1371 = vunpack.c.l.b16 %v327
    %v1372 = vunpack.c.h.b16 %v327
    %v1373 = vunpack.c.l.b16 %v328
    %v1374 = vunpack.c.h.b16 %v328
    %v1375 = vunpack.c.l.b16 %v329
    %v1376 = vunpack.c.h.b16 %v329
    %v1377 = vunpack.c.l.b16 %v330
    %v1378 = vunpack.c.l.b16 %v331
    %v1379 = vunpack.c.h.b16 %v331
    %v1380 = vunpack.c.l.b16 %v332
    %v1381 = vunpack.c.h.b16 %v332
    %v1382 = vunpack.c.l.b16 %v333
    %v1383 = vunpack.c.h.b16 %v333
    %v1384 = vunpack.c.l.b16 %v334
    %v1385 = vunpack.c.l.b16 %v335
    %v1386 = vunpack.c.h.b16 %v335
    %v1387 = vunpack.c.l.b16 %v336
    %v1388 = vunpack.c.h.b16 %v336
    %v1389 = vunpack.c.l.b16 %v337
    %v1390 = vunpack.c.h.b16 %v337
    %v1391 = vunpack.c.l.b16 %v338
    %v1392 = vunpack.c.l.b16 %v339
    %v1393 = vunpack.c.h.b16 %v339
    %v1394 = vunpack.c.l.b16 %v340
    %v1395 = vunpack.c.h.b16 %v340
    %v1396 = vunpack.c.l.b16 %v341
    %v1397 = vunpack.c.h.b16 %v341
    %v1398 = vunpack.c.l.b16 %v342
    %v1399 = vunpack.c.l.b16 %v343
    %v1400 = vunpack.c.h.b16 %v343
    %v1401 = vunpack.c.l.b16 %v344
    %v1402 = vunpack.c.h.b16 %v344
    %v1403 = vunpack.c.l.b16 %v345
    %v1404 = vunpack.c.h.b16 %v345
    %v1405 = vunpack.c.l.b16 %v346
    %v1406 = vunpack.c.l.b16 %v347
    %v1407 = vunpack.c.h.b16 %v347
    %v1408 = vunpack.c.l.b16 %v348
    %v1409 = vunpack.c.h.b16 %v348
    %v1410 = vunpack.c.l.b16 %v349
    %v1411 = vunpack.c.h.b16 %v349
    %v1412 = vunpack.c.l.b16 %v350
    %v1413 = vunpack.c.l.b16 %v351
    %v1414 = vunpack.c.h.b16 %v351
    %v1415 = vunpack.c.l.b16 %v352
    %v1416 = vunpack.c.h.b16 %v352
    %v1417 = vunpack.c.l.b16 %v353
    %v1418 = vunpack.c.h.b16 %v353
    %v1419 = vunpack.c.l.b16 %v354
    %v1420 = vunpack.c.l.b16 %v355
    %v1421 = vunpack.c.h.b16 %v355
    %v1422 = vunpack.c.l.b16 %v356
    %v1423 = vunpack.c.h.b16 %v356
    %v1424 = vunpack.c.l.b16 %v357
    %v1425 = vunpack.c.h.b16 %v357
    %v1426 = vunpack.c.l.b16 %v358
    %v1427 = vunpack.c.l.b16 %v359
    %v1428 = vunpack.c.h.b16 %v359
    %v1429 = vunpack.c.l.b16 %v360
    %v1430 = vunpack.c.h.b16 %v360
    %v1431 = vunpack.c.l.b16 %v361
    %v1432 = vunpack.c.h.b16 %v361
    %v1433 = vunpack.c.l.b16 %v362
    %v1434 = vunpack.c.l.b16 %v363
    %v1435 = vunpack.c.h.b16 %v363
    %v1436 = vunpack.c.l.b16 %v364
    %v1437 = vunpack.c.h.b16 %v364
    %v1438 = vunpack.c.l.b16 %v365
    %v1439 = vunpack.c.h.b16 %v365
    %v1440 = vunpack.c.l.b16 %v366
    %v1441 = vunpack.c.l.b16 %v367
    %v1442 = vunpack.c.h.b16 %v367
    %v1443 = vunpack.c.l.b16 %v368
    %v1444 = vunpack.c.h.b16 %v368
    %v1445 = vunpack.c.l.b16 %v369
    %v1446 = vunpack.c.h.b16 %v369
    %v1447 = vunpack.c.l.b16 %v370
    %v1448 = vunpack.c.l.b16 %v371
    %v1449 = vunpack.c.h.b16 %v371
    %v1450 = vunpack.c.l.b16 %v372
    %v1451 = vunpack.c.h.b16 %v372
    %v1452 = vunpack.c.l.b16 %v373
    %v1453 = vunpack.c.h.b16 %v373
    %v1454 = vunpack.c.l.b16 %v374
    %v1455 = vunpack.c.l.b16 %v375
    %v1456 = vunpack.c.h.b16 %v375
    %v1457 = vunpack.c.l.b16 %v376
    %v1458 = vunpack.c.h.b16 %v376
    %v1459 = vunpack.c.l.b16 %v377
    %v1460 = vunpack.c.h.b16 %v377
    %v1461 = vunpack.c.l.b16 %v378
    %v1462 = vunpack.c.l.b16 %v379
    %v1463 = vunpack.c.h.b16 %v379
    %v1464 = vunpack.c.l.b16 %v380
    %v1465 = vunpack.c.h.b16 %v380
    %v1466 = vunpack.c.l.b16 %v381
    %v1467 = vunpack.c.h.b16 %v381
    %v1468 = vunpack.c.l.b16 %v382
    %v1469 = vunpack.c.l.b16 %v383
    %v1470 = vunpack.c.h.b16 %v383
    %v1471 = vunpack.c.l.b16 %v384
    %v1472 = vunpack.c.h.b16 %v384
    %v1473 = vunpack.c.l.b16 %v385
    %v1474 = vunpack.c.h.b16 %v385
    %v1475 = vunpack.c.l.b16 %v386
    %v1476 = vunpack.c.l.b16 %v387
    %v1477 = vunpack.c.h.b16 %v387
    %v1478 = vunpack.c.l.b16 %v388
    %v1479 = vunpack.c.h.b16 %v388
    %v1480 = vunpack.c.l.b16 %v389
    %v1481 = vunpack.c.h.b16 %v389
    %v1482 = vunpack.c.l.b16 %v390
    %v1483 = vunpack.c.l.b16 %v391
    %v1484 = vunpack.c.h.b16 %v391
    %v1485 = vunpack.c.l.b16 %v392
    %v1486 = vunpack.c.h.b16 %v392
    %v1487 = vunpack.c.l.b16 %v393
    %v1488 = vunpack.c.h.b16 %v393
    %v1489 = vunpack.c.l.b16 %v394
    %v1490 = vunpack.c.l.b16 %v395
    %v1491 = vunpack.c.h.b16 %v395
    %v1492 = vunpack.c.l.b16 %v396
    %v1493 = vunpack.c.h.b16 %v396
    %v1494 = vunpack.c.l.b16 %v397
    %v1495 = vunpack.c.h.b16 %v397
    %v1496 = vunpack.c.l.b16 %v398
    %v1497 = vunpack.c.l.b16 %v399
    %v1498 = vunpack.c.h.b16 %v399
    %v1499 = vunpack.c.l.b16 %v400
    %v1500 = vunpack.c.h.b16 %v400
    %v1501 = vunpack.c.l.b16 %v401
    %v1502 = vunpack.c.h.b16 %v401
    %v1503 = vunpack.c.l.b16 %v402
    %v1504 = vunpack.c.l.b16 %v403
    %v1505 = vunpack.c.h.b16 %v403
    %v1506 = vunpack.c.l.b16 %v404
    %v1507 = vunpack.c.h.b16 %v404
    %v1508 = vunpack.c.l.b16 %v405
    %v1509 = vunpack.c.h.b16 %v405
    %v1510 = vunpack.c.l.b16 %v406
    %v1511 = vunpack.c.l.b16 %v407
    %v1512 = vunpack.c.h.b16 %v407
    %v1513 = vunpack.c.l.b16 %v408
    %v1514 = vunpack.c.h.b16 %v408
    %v1515 = vunpack.c.l.b16 %v409
    %v1516 = vunpack.c.h.b16 %v409
    %v1517 = vunpack.c.l.b16 %v410
    %v1518 = vunpack.c.l.b16 %v411
    %v1519 = vunpack.c.h.b16 %v411
    %v1520 = vunpack.c.l.b16 %v412
    %v1521 = vunpack.c.h.b16 %v412
    %v1522 = vunpack.c.l.b16 %v413
    %v1523 = vunpack.c.h.b16 %v413
    %v1524 = vunpack.c.l.b16 %v414
    %v1525 = vunpack.c.l.b16 %v415
    %v1526 = vunpack.c.h.b16 %v415
    %v1527 = vunpack.c.l.b16 %v416
    %v1528 = vunpack.c.h.b16 %v416
    %v1529 = vunpack.c.l.b16 %v417
    %v1530 = vunpack.c.h.b16 %v417
    %v1531 = vunpack.c.l.b16 %v418
    %v1532 = vunpack.c.l.b16 %v419
    %v1533 = vunpack.c.h.b16 %v419
    %v1534 = vunpack.c.l.b16 %v420
    %v1535 = vunpack.c.h.b16 %v420
    %v1536 = vunpack.c.l.b16 %v421
    %v1537 = vunpack.c.h.b16 %v421
    %v1538 = vunpack.c.l.b16 %v422
    %v1539 = vunpack.c.l.b16 %v423
    %v1540 = vunpack.c.h.b16 %v423
    %v1541 = vunpack.c.l.b16 %v424
    %v1542 = vunpack.c.h.b16 %v424
    %v1543 = vunpack.c.l.b16 %v425
    %v1544 = vunpack.c.h.b16 %v425
    %v1545 = vunpack.c.l.b16 %v426
    %v1546 = vunpack.c.l.b16 %v427
    %v1547 = vunpack.c.h.b16 %v427
    %v1548 = vunpack.c.l.b16 %v428
    %v1549 = vunpack.c.h.b16 %v428
    %v1550 = vunpack.c.l.b16 %v429
    %v1551 = vunpack.c.h.b16 %v429
    %v1552 = vunpack.c.l.b16 %v430
    %v1553 = vunpack.c.l.b16 %v431
    %v1554 = vunpack.c.h.b16 %v431
    %v1555 = vunpack.c.l.b16 %v432
    %v1556 = vunpack.c.h.b16 %v432
    %v1557 = vunpack.c.l.b16 %v433
    %v1558 = vunpack.c.h.b16 %v433
    %v1559 = vunpack.c.l.b16 %v434
    %v1560 = vunpack.c.l.b16 %v435
    %v1561 = vunpack.c.h.b16 %v435
    %v1562 = vunpack.c.l.b16 %v436
    %v1563 = vunpack.c.h.b16 %v436
    %v1564 = vunpack.c.l.b16 %v437
    %v1565 = vunpack.c.h.b16 %v437
    %v1566 = vunpack.c.l.b16 %v438
    %v1567 = vunpack.c.l.b16 %v439
    %v1568 = vunpack.c.h.b16 %v439
    %v1569 = vunpack.c.l.b16 %v440
    %v1570 = vunpack.c.h.b16 %v440
    %v1571 = vunpack.c.l.b16 %v441
    %v1572 = vunpack.c.h.b16 %v441
    %v1573 = vunpack.c.l.b16 %v442
    %v1574 = vunpack.c.l.b16 %v443
    %v1575 = vunpack.c.h.b16 %v443
    %v1576 = vunpack.c.l.b16 %v444
    %v1577 = vunpack.c.h.b16 %v444
    %v1578 = vunpack.c.l.b16 %v445
    %v1579 = vunpack.c.h.b16 %v445
    %v1580 = vunpack.c.l.b16 %v446
    %v1581 = vunpack.c.l.b16 %v447
    %v1582 = vunpack.c.h.b16 %v447
    %v1583 = vunpack.c.l.b16 %v448
    %v1584 = vunpack.c.h.b16 %v448
    %v1585 = vunpack.c.l.b16 %v449
    %v1586 = vunpack.c.h.b16 %v449
    %v1587 = vunpack.c.l.b16 %v450
    %v1588 = vunpack.c.l.b16 %v451
    %v1589 = vunpack.c.h.b16 %v451
    %v1590 = vunpack.c.l.b16 %v452
    %v1591 = vunpack.c.h.b16 %v452
    %v1592 = vunpack.c.l.b16 %v453
    %v1593 = vunpack.c.h.b16 %v453
    %v1594 = vunpack.c.l.b16 %v454
    %v1595 = vunpack.c.l.b16 %v455
    %v1596 = vunpack.c.h.b16 %v455
    %v1597 = vunpack.c.l.b16 %v456
    %v1598 = vunpack.c.h.b16 %v456
    %v1599 = vunpack.c.l.b16 %v457
    %v1600 = vunpack.c.h.b16 %v457
    %v1601 = vunpack.c.l.b16 %v458
    %v1602 = vunpack.c.l.b16 %v459
    %v1603 = vunpack.c.h.b16 %v459
    %v1604 = vunpack.c.l.b16 %v460
    %v1605 = vunpack.c.h.b16 %v460
    %v1606 = vunpack.c.l.b16 %v461
    %v1607 = vunpack.c.h.b16 %v461
    %v1608 = vunpack.c.l.b16 %v462
    %v1609 = vunpack.c.l.b16 %v463
    %v1610 = vunpack.c.h.b16 %v463
    %v1611 = vunpack.c.l.b16 %v464
    %v1612 = vunpack.c.h.b16 %v464
    %v1613 = vunpack.c.l.b16 %v465
    %v1614 = vunpack.c.h.b16 %v465
    %v1615 = vunpack.c.l.b16 %v466
    %v1616 = vunpack.c.l.b16 %v467
    %v1617 = vunpack.c.h.b16 %v467
    %v1618 = vunpack.c.l.b16 %v468
    %v1619 = vunpack.c.h.b16 %v468
    %v1620 = vunpack.c.l.b16 %v469
    %v1621 = vunpack.c.h.b16 %v469
    %v1622 = vunpack.c.l.b16 %v470
    %v1623 = vunpack.c.l.b16 %v471
    %v1624 = vunpack.c.h.b16 %v471
    %v1625 = vunpack.c.l.b16 %v472
    %v1626 = vunpack.c.h.b16 %v472
    %v1627 = vunpack.c.l.b16 %v473
    %v1628 = vunpack.c.h.b16 %v473
    %v1629 = vunpack.c.l.b16 %v474
    %v1630 = vunpack.c.l.b16 %v475
    %v1631 = vunpack.c.h.b16 %v475
    %v1632 = vunpack.c.l.b16 %v476
    %v1633 = vunpack.c.h.b16 %v476
    %v1634 = vunpack.c.l.b16 %v477
    %v1635 = vunpack.c.h.b16 %v477
    %v1636 = vunpack.c.l.b16 %v478
    %v1637 = vunpack.c.l.b16 %v479
    %v1638 = vunpack.c.h.b16 %v479
    %v1639 = vunpack.c.l.b16 %v480
    %v1640 = vunpack.c.h.b16 %v480
    %v1641 = vunpack.c.l.b16 %v481
    %v1642 = vunpack.c.h.b16 %v481
    %v1643 = vunpack.c.l.b16 %v482
    %v1644 = vunpack.c.l.b16 %v483
    %v1645 = vunpack.c.h.b16 %v483
    %v1646 = vunpack.c.l.b16 %v484
    %v1647 = vunpack.c.h.b16 %v484
    %v1648 = vunpack.c.l.b16 %v485
    %v1649 = vunpack.c.h.b16 %v485
    %v1650 = vunpack.c.l.b16 %v486
    %v1651 = vunpack.c.l.b16 %v487
    %v1652 = vunpack.c.h.b16 %v487
    %v1653 = vunpack.c.l.b16 %v488
    %v1654 = vunpack.c.h.b16 %v488
    %v1655 = vunpack.c.l.b16 %v489
    %v1656 = vunpack.c.h.b16 %v489
    %v1657 = vunpack.c.l.b16 %v490
    %v1658 = vunpack.c.l.b16 %v491
    %v1659 = vunpack.c.h.b16 %v491
    %v1660 = vunpack.c.l.b16 %v492
    %v1661 = vunpack.c.h.b16 %v492
    %v1662 = vunpack.c.l.b16 %v493
    %v1663 = vunpack.c.h.b16 %v493
    %v1664 = vunpack.c.l.b16 %v494
    %v1665 = vunpack.c.l.b16 %v495
    %v1666 = vunpack.c.h.b16 %v495
    %v1667 = vunpack.c.l.b16 %v496
    %v1668 = vunpack.c.h.b16 %v496
    %v1669 = vunpack.c.l.b16 %v497
    %v1670 = vunpack.c.h.b16 %v497
    %v1671 = vunpack.c.l.b16 %v498
    %v1672 = vunpack.c.l.b16 %v499
    %v1673 = vunpack.c.h.b16 %v499
    %v1674 = vunpack.c.l.b16 %v500
    %v1675 = vunpack.c.h.b16 %v500
    %v1676 = vunpack.c.l.b16 %v501
    %v1677 = vunpack.c.h.b16 %v501
    %v1678 = vunpack.c.l.b16 %v502
    %v1679 = vunpack.c.l.b16 %v503
    %v1680 = vunpack.c.h.b16 %v503
    %v1681 = vunpack.c.l.b16 %v504
    %v1682 = vunpack.c.h.b16 %v504
    %v1683 = vunpack.c.l.b16 %v505
    %v1684 = vunpack.c.h.b16 %v505
    %v1685 = vunpack.c.l.b16 %v506
    %v1686 = vunpack.c.l.b16 %v507
    %v1687 = vunpack.c.h.b16 %v507
    %v1688 = vunpack.c.l.b16 %v508
    %v1689 = vunpack.c.h.b16 %v508
    %v1690 = vunpack.c.l.b16 %v509
    %v1691 = vunpack.c.h.b16 %v509
    %v1692 = vunpack.c.l.b16 %v510
    %v1693 = vunpack.c.l.b16 %v511
    %v1694 = vunpack.c.h.b16 %v511
    %v1695 = vunpack.c.l.b16 %v512
    %v1696 = vunpack.c.h.b16 %v512
    %v1697 = vunpack.c.l.b16 %v513
    %v1698 = vunpack.c.h.b16 %v513
    %v1699 = vunpack.c.l.b16 %v514
    %v1700 = vunpack.c.l.b16 %v515
    %v1701 = vunpack.c.h.b16 %v515
    %v1702 = vunpack.c.l.b16 %v516
    %v1703 = vunpack.c.h.b16 %v516
    %v1704 = vunpack.c.l.b16 %v517
    %v1705 = vunpack.c.h.b16 %v517
    %v1706 = vunpack.c.l.b16 %v518
    %v1707 = vunpack.c.l.b16 %v519
    %v1708 = vunpack.c.h.b16 %v519
    %v1709 = vunpack.c.l.b16 %v520
    %v1710 = vunpack.c.h.b16 %v520
    %v1711 = vunpack.c.l.b16 %v521
    %v1712 = vunpack.c.h.b16 %v521
    %v1713 = vunpack.c.l.b16 %v522
    %v1714 = vunpack.c.l.b16 %v523
    %v1715 = vunpack.c.h.b16 %v523
    %v1716 = vunpack.c.l.b16 %v524
    %v1717 = vunpack.c.h.b16 %v524
    %v1718 = vunpack.c.l.b16 %v525
    %v1719 = vunpack.c.h.b16 %v525
    %v1720 = vunpack.c.l.b16 %v526
    %v1721 = vunpack.c.l.b16 %v527
    %v1722 = vunpack.c.h.b16 %v527
    %v1723 = vunpack.c.l.b16 %v528
    %v1724 = vunpack.c.h.b16 %v528
    %v1725 = vunpack.c.l.b16 %v529
    %v1726 = vunpack.c.h.b16 %v529
    %v1727 = vunpack.c.l.b16 %v530
    %v1728 = vunpack.c.l.b16 %v531
    %v1729 = vunpack.c.h.b16 %v531
    %v1730 = vunpack.c.l.b16 %v532
    %v1731 = vunpack.c.h.b16 %v532
    %v1732 = vunpack.c.l.b16 %v533
    %v1733 = vunpack.c.h.b16 %v533
    %v1734 = vunpack.c.l.b16 %v534
    %v1735 = vunpack.c.l.b16 %v535
    %v1736 = vunpack.c.h.b16 %v535
    %v1737 = vunpack.c.l.b16 %v536
    %v1738 = vunpack.c.h.b16 %v536
    %v1739 = vunpack.c.l.b16 %v537
    %v1740 = vunpack.c.h.b16 %v537
    %v1741 = vunpack.c.l.b16 %v538
    %v1742 = vunpack.c.l.b16 %v539
    %v1743 = vunpack.c.h.b16 %v539
    %v1744 = vunpack.c.l.b16 %v540
    %v1745 = vunpack.c.h.b16 %v540
    %v1746 = vunpack.c.l.b16 %v541
    %v1747 = vunpack.c.h.b16 %v541
    %v1748 = vunpack.c.l.b16 %v542
    %v1749 = vunpack.c.l.b16 %v543
    %v1750 = vunpack.c.h.b16 %v543
    %v1751 = vunpack.c.l.b16 %v544
    %v1752 = vunpack.c.h.b16 %v544
    %v1753 = vunpack.c.l.b16 %v545
    %v1754 = vunpack.c.h.b16 %v545
    %v1755 = vunpack.c.l.b16 %v546
    %v1756 = vunpack.c.l.b16 %v547
    %v1757 = vunpack.c.h.b16 %v547
    %v1758 = vunpack.c.l.b16 %v548
    %v1759 = vunpack.c.h.b16 %v548
    %v1760 = vunpack.c.l.b16 %v549
    %v1761 = vunpack.c.h.b16 %v549
    %v1762 = vunpack.c.l.b16 %v550
    %v1763 = vunpack.c.l.b16 %v551
    %v1764 = vunpack.c.h.b16 %v551
    %v1765 = vunpack.c.l.b16 %v552
    %v1766 = vunpack.c.h.b16 %v552
    %v1767 = vunpack.c.l.b16 %v553
    %v1768 = vunpack.c.h.b16 %v553
    %v1769 = vunpack.c.l.b16 %v554
    %v1770 = vunpack.c.l.b16 %v555
    %v1771 = vunpack.c.h.b16 %v555
    %v1772 = vunpack.c.l.b16 %v556
    %v1773 = vunpack.c.h.b16 %v556
    %v1774 = vunpack.c.l.b16 %v557
    %v1775 = vunpack.c.h.b16 %v557
    %v1776 = vunpack.c.l.b16 %v558
    %v1777 = vunpack.c.l.b16 %v559
    %v1778 = vunpack.c.h.b16 %v559
    %v1779 = vunpack.c.l.b16 %v560
    %v1780 = vunpack.c.h.b16 %v560
    %v1781 = vunpack.c.l.b16 %v561
    %v1782 = vunpack.c.h.b16 %v561
    %v1783 = vunpack.c.l.b16 %v562
    %v1784 = vunpack.c.l.b16 %v563
    %v1785 = vunpack.c.h.b16 %v563
    %v1786 = vunpack.c.l.b16 %v564
    %v1787 = vunpack.c.h.b16 %v564
    %v1788 = vunpack.c.l.b16 %v565
    %v1789 = vunpack.c.h.b16 %v565
    %v1790 = vunpack.c.l.b16 %v566
    %v1791 = vunpack.c.l.b16 %v567
    %v1792 = vunpack.c.h.b16 %v567
    %v1793 = vunpack.c.l.b16 %v568
    %v1794 = vunpack.c.h.b16 %v568
    %v1795 = vunpack.c.l.b16 %v569
    %v1796 = vunpack.c.h.b16 %v569
    %v1797 = vunpack.c.l.b16 %v570
    %v1798 = vunpack.c.l.b16 %v571
    %v1799 = vunpack.c.h.b16 %v571
    %v1800 = vunpack.c.l.b16 %v572
    %v1801 = vunpack.c.h.b16 %v572
    %v1802 = vunpack.c.l.b16 %v573
    %v1803 = vunpack.c.h.b16 %v573
    %v1804 = vunpack.c.l.b16 %v574
    %v1805 = vunpack.c.l.b16 %v575
    %v1806 = vunpack.c.h.b16 %v575
    %v1807 = vunpack.c.l.b16 %v576
    %v1808 = vunpack.c.h.b16 %v576
    %v1809 = vunpack.c.l.b16 %v577
    %v1810 = vunpack.c.h.b16 %v577
    %v1811 = vunpack.c.l.b16 %v578
    %v1812 = vunpack.c.l.b16 %v579
    %v1813 = vunpack.c.h.b16 %v579
    %v1814 = vunpack.c.l.b16 %v580
    %v1815 = vunpack.c.h.b16 %v580
    %v1816 = vunpack.c.l.b16 %v581
    %v1817 = vunpack.c.h.b16 %v581
    %v1818 = vunpack.c.l.b16 %v582
    %v1819 = vunpack.c.l.b16 %v583
    %v1820 = vunpack.c.h.b16 %v583
    %v1821 = vunpack.c.l.b16 %v584
    %v1822 = vunpack.c.h.b16 %v584
    %v1823 = vunpack.c.l.b16 %v585
    %v1824 = vunpack.c.h.b16 %v585
    %v1825 = vunpack.c.l.b16 %v586
    %v1826 = vunpack.c.l.b16 %v587
    %v1827 = vunpack.c.h.b16 %v587
    %v1828 = vunpack.c.l.b16 %v588
    %v1829 = vunpack.c.h.b16 %v588
    %v1830 = vunpack.c.l.b16 %v589
    %v1831 = vunpack.c.h.b16 %v589
    %v1832 = vunpack.c.l.b16 %v590
    %v1833 = vunpack.c.l.b16 %v591
    %v1834 = vunpack.c.h.b16 %v591
    %v1835 = vunpack.c.l.b16 %v592
    %v1836 = vunpack.c.h.b16 %v592
    %v1837 = vunpack.c.l.b16 %v593
    %v1838 = vunpack.c.h.b16 %v593
    %v1839 = vunpack.c.l.b16 %v594
    %v1840 = vunpack.c.l.b16 %v595
    %v1841 = vunpack.c.h.b16 %v595
    %v1842 = vunpack.c.l.b16 %v596
    %v1843 = vunpack.c.h.b16 %v596
    %v1844 = vunpack.c.l.b16 %v597
    %v1845 = vunpack.c.h.b16 %v597
    %v1846 = vunpack.c.l.b16 %v598
    %v1847 = vunpack.c.l.b16 %v599
    %v1848 = vunpack.c.h.b16 %v599
    %v1849 = vunpack.c.l.b16 %v600
    %v1850 = vunpack.c.h.b16 %v600
    %v1851 = vunpack.c.l.b16 %v601
    %v1852 = vunpack.c.h.b16 %v601
    %v1853 = vunpack.c.l.b16 %v602
    %v1854 = vunpack.c.l.b16 %v603
    %v1855 = vunpack.c.h.b16 %v603
    %v1856 = vunpack.c.l.b16 %v604
    %v1857 = vunpack.c.h.b16 %v604
    %v1858 = vunpack.c.l.b16 %v605
    %v1859 = vunpack.c.h.b16 %v605
    %v1860 = vunpack.c.l.b16 %v606
    %v1861 = vunpack.c.l.b16 %v607
    %v1862 = vunpack.c.h.b16 %v607
    %v1863 = vunpack.c.l.b16 %v608
    %v1864 = vunpack.c.h.b16 %v608
    %v1865 = vunpack.c.l.b16 %v609
    %v1866 = vunpack.c.h.b16 %v609
    %v1867 = vunpack.c.l.b16 %v610
    %v1868 = vunpack.c.l.b16 %v611
    %v1869 = vunpack.c.h.b16 %v611
    %v1870 = vunpack.c.l.b16 %v612
    %v1871 = vunpack.c.h.b16 %v612
    %v1872 = vunpack.c.l.b16 %v613
    %v1873 = vunpack.c.h.b16 %v613
    %v1874 = vunpack.c.l.b16 %v614
    %v1875 = vunpack.c.l.b16 %v615
    %v1876 = vunpack.c.h.b16 %v615
    %v1877 = vunpack.c.l.b16 %v616
    %v1878 = vunpack.c.h.b16 %v616
    %v1879 = vunpack.c.l.b16 %v617
    %v1880 = vunpack.c.h.b16 %v617
    %v1881 = vunpack.c.l.b16 %v618
    %v1882 = vunpack.c.l.b16 %v619
    %v1883 = vunpack.c.h.b16 %v619
    %v1884 = vunpack.c.l.b16 %v620
    %v1885 = vunpack.c.h.b16 %v620
    %v1886 = vunpack.c.l.b16 %v621
    %v1887 = vunpack.c.h.b16 %v621
    %v1888 = vunpack.c.l.b16 %v622
    %v1889 = vunpack.c.l.b16 %v623
    %v1890 = vunpack.c.h.b16 %v623
    %v1891 = vunpack.c.l.b16 %v624
    %v1892 = vunpack.c.h.b16 %v624
    %v1893 = vunpack.c.l.b16 %v625
    %v1894 = vunpack.c.h.b16 %v625
    %v1895 = vunpack.c.l.b16 %v626
    %v1896 = vpack.c.b16 %v1119, %v1112
    %v1897 = vpack.c.b16 %v1120, %v1113
    %v1898 = vpack.c.b16 %v1121, %v1114
    %v1899 = vpack.c.b16 %v1122, %v1115
    %v1900 = vpack.c.b16 %v1123, %v1116
    %v1901 = vpack.c.b16 %v1124, %v1117
    %v1902 = vpack.c.b16 %v1125, %v1118
    %v1903 = vpack.c.b16 %v1133, %v1126
    %v1904 = vpack.c.b16 %v1134, %v1127
    %v1905 = vpack.c.b16 %v1135, %v1128
    %v1906 = vpack.c.b16 %v1136, %v1129
    %v1907 = vpack.c.b16 %v1137, %v1130
    %v1908 = vpack.c.b16 %v1138, %v1131
    %v1909 = vpack.c.b16 %v1139, %v1132
    %v1910 = vpack.c.b16 %v1147, %v1140
    %v1911 = vpack.c.b16 %v1148, %v1141
    %v1912 = vpack.c.b16 %v1149, %v1142
    %v1913 = vpack.c.b16 %v1150, %v1143
    %v1914 = vpack.c.b16 %v1151, %v1144
    %v1915 = vpack.c.b16 %v1152, %v1145
    %v1916 = vpack.c.b16 %v1153, %v1146
    %v1917 = vpack.c.b16 %v1161, %v1154
    %v1918 = vpack.c.b16 %v1162, %v1155
    %v1919 = vpack.c.b16 %v1163, %v1156
    %v1920 = vpack.c.b16 %v1164, %v1157
    %v1921 = vpack.c.b16 %v1165, %v1158
    %v1922 = vpack.c.b16 %v1166, %v1159
    %v1923 = vpack.c.b16 %v1167, %v1160
    %v1924 = vpack.c.b16 %v1175, %v1168
    %v1925 = vpack.c.b16 %v1176, %v1169
    %v1926 = vpack.c.b16 %v1177, %v1170
    %v1927 = vpack.c.b16 %v1178, %v1171
    %v1928 = vpack.c.b16 %v1179, %v1172
    %v1929 = vpack.c.b16 %v1180, %v1173
    %v1930 = vpack.c.b16 %v1181, %v1174
    %v1931 = vpack.c.b16 %v1189, %v1182
    %v1932 = vpack.c.b16 %v1190, %v1183
    %v1933 = vpack.c.b16 %v1191, %v1184
    %v1934 = vpack.c.b16 %v1192, %v1185
    %v1935 = vpack.c.b16 %v1193, %v1186
    %v1936 = vpack.c.b16 %v1194, %v1187
    %v1937 = vpack.c.b16 %v1195, %v1188
    %v1938 = vpack.c.b16 %v1203, %v1196
    %v1939 = vpack.c.b16 %v1204, %v1197
    %v1940 = vpack.c.b16 %v1205, %v1198
    %v1941 = vpack.c.b16 %v1206, %v1199
    %v1942 = vpack.c.b16 %v1207, %v1200
    %v1943 = vpack.c.b16 %v1208, %v1201
    %v1944 = vpack.c.b16 %v1209, %v1202
    %v1945 = vpack.c.b16 %v1217, %v1210
    %v1946 = vpack.c.b16 %v1218, %v1211
    %v1947 = vpack.c.b16 %v1219, %v1212
    %v1948 = vpack.c.b16 %v1220, %v1213
    %v1949 = vpack.c.b16 %v1221, %v1214
    %v1950 = vpack.c.b16 %v1222, %v1215
    %v1951 = vpack.c.b16 %v1223, %v1216
    %v1952 = vpack.c.b16 %v1231, %v1224
    %v1953 = vpack.c.b16 %v1232, %v1225
    %v1954 = vpack.c.b16 %v1233, %v1226
    %v1955 = vpack.c.b16 %v1234, %v1227
    %v1956 = vpack.c.b16 %v1235, %v1228
    %v1957 = vpack.c.b16 %v1236, %v1229
    %v1958 = vpack.c.b16 %v1237, %v1230
    %v1959 = vpack.c.b16 %v1245, %v1238
    %v1960 = vpack.c.b16 %v1246, %v1239
    %v1961 = vpack.c.b16 %v1247, %v1240
    %v1962 = vpack.c.b16 %v1248, %v1241
    %v1963 = vpack.c.b16 %v1249, %v1242
    %v1964 = vpack.c.b16 %v1250, %v1243
    %v1965 = vpack.c.b16 %v1251, %v1244
    %v1966 = vpack.c.b16 %v1259, %v1252
    %v1967 = vpack.c.b16 %v1260, %v1253
    %v1968 = vpack.c.b16 %v1261, %v1254
    %v1969 = vpack.c.b16 %v1262, %v1255
    %v1970 = vpack.c.b16 %v1263, %v1256
    %v1971 = vpack.c.b16 %v1264, %v1257
    %v1972 = vpack.c.b16 %v1265, %v1258
    %v1973 = vpack.c.b16 %v1273, %v1266
    %v1974 = vpack.c.b16 %v1274, %v1267
    %v1975 = vpack.c.b16 %v1275, %v1268
    %v1976 = vpack.c.b16 %v1276, %v1269
    %v1977 = vpack.c.b16 %v1277, %v1270
    %v1978 = vpack.c.b16 %v1278, %v1271
    %v1979 = vpack.c.b16 %v1279, %v1272
    %v1980 = vpack.c.b16 %v1287, %v1280
    %v1981 = vpack.c.b16 %v1288, %v1281
    %v1982 = vpack.c.b16 %v1289, %v1282
    %v1983 = vpack.c.b16 %v1290, %v1283
    %v1984 = vpack.c.b16 %v1291, %v1284
    %v1985 = vpack.c.b16 %v1292, %v1285
    %v1986 = vpack.c.b16 %v1293, %v1286
    %v1987 = vpack.c.b16 %v1301, %v1294
    %v1988 = vpack.c.b16 %v1302, %v1295
    %v1989 = vpack.c.b16 %v1303, %v1296
    %v1990 = vpack.c.b16 %v1304, %v1297
    %v1991 = vpack.c.b16 %v1305, %v1298
    %v1992 = vpack.c.b16 %v1306, %v1299
    %v1993 = vpack.c.b16 %v1307, %v1300
    %v1994 = vpack.c.b16 %v1315, %v1308
    %v1995 = vpack.c.b16 %v1316, %v1309
    %v1996 = vpack.c.b16 %v1317, %v1310
    %v1997 = vpack.c.b16 %v1318, %v1311
    %v1998 = vpack.c.b16 %v1319, %v1312
    %v1999 = vpack.c.b16 %v1320, %v1313
    %v2000 = vpack.c.b16 %v1321, %v1314
    %v2001 = vpack.c.b16 %v1329, %v1322
    %v2002 = vpack.c.b16 %v1330, %v1323
    %v2003 = vpack.c.b16 %v1331, %v1324
    %v2004 = vpack.c.b16 %v1332, %v1325
    %v2005 = vpack.c.b16 %v1333, %v1326
    %v2006 = vpack.c.b16 %v1334, %v1327
    %v2007 = vpack.c.b16 %v1335, %v1328
    %v2008 = vpack.c.b16 %v1343, %v1336
    %v2009 = vpack.c.b16 %v1344, %v1337
    %v2010 = vpack.c.b16 %v1345, %v1338
    %v2011 = vpack.c.b16 %v1346, %v1339
    %v2012 = vpack.c.b16 %v1347, %v1340
    %v2013 = vpack.c.b16 %v1348, %v1341
    %v2014 = vpack.c.b16 %v1349, %v1342
    %v2015 = vpack.c.b16 %v1357, %v1350
    %v2016 = vpack.c.b16 %v1358, %v1351
    %v2017 = vpack.c.b16 %v1359, %v1352
    %v2018 = vpack.c.b16 %v1360, %v1353
    %v2019 = vpack.c.b16 %v1361, %v1354
    %v2020 = vpack.c.b16 %v1362, %v1355
    %v2021 = vpack.c.b16 %v1363, %v1356
    %v2022 = vpack.c.b16 %v1371, %v1364
    %v2023 = vpack.c.b16 %v1372, %v1365
    %v2024 = vpack.c.b16 %v1373, %v1366
    %v2025 = vpack.c.b16 %v1374, %v1367
    %v2026 = vpack.c.b16 %v1375, %v1368
    %v2027 = vpack.c.b16 %v1376, %v1369
    %v2028 = vpack.c.b16 %v1377, %v1370
    %v2029 = vpack.c.b16 %v1385, %v1378
    %v2030 = vpack.c.b16 %v1386, %v1379
    %v2031 = vpack.c.b16 %v1387, %v1380
    %v2032 = vpack.c.b16 %v1388, %v1381
    %v2033 = vpack.c.b16 %v1389, %v1382
    %v2034 = vpack.c.b16 %v1390, %v1383
    %v2035 = vpack.c.b16 %v1391, %v1384
    %v2036 = vpack.c.b16 %v1399, %v1392
    %v2037 = vpack.c.b16 %v1400, %v1393
    %v2038 = vpack.c.b16 %v1401, %v1394
    %v2039 = vpack.c.b16 %v1402, %v1395
    %v2040 = vpack.c.b16 %v1403, %v1396
    %v2041 = vpack.c.b16 %v1404, %v1397
    %v2042 = vpack.c.b16 %v1405, %v1398
    %v2043 = vpack.c.b16 %v1413, %v1406
    %v2044 = vpack.c.b16 %v1414, %v1407
    %v2045 = vpack.c.b16 %v1415, %v1408
    %v2046 = vpack.c.b16 %v1416, %v1409
    %v2047 = vpack.c.b16 %v1417, %v1410
    %v2048 = vpack.c.b16 %v1418, %v1411
    %v2049 = vpack.c.b16 %v1419, %v1412
    %v2050 = vpack.c.b16 %v1427, %v1420
    %v2051 = vpack.c.b16 %v1428, %v1421
    %v2052 = vpack.c.b16 %v1429, %v1422
    %v2053 = vpack.c.b16 %v1430, %v1423
    %v2054 = vpack.c.b16 %v1431, %v1424
    %v2055 = vpack.c.b16 %v1432, %v1425
    %v2056 = vpack.c.b16 %v1433, %v1426
    %v2057 = vpack.c.b16 %v1441, %v1434
    %v2058 = vpack.c.b16 %v1442, %v1435
    %v2059 = vpack.c.b16 %v1443, %v1436
    %v2060 = vpack.c.b16 %v1444, %v1437
    %v2061 = vpack.c.b16 %v1445, %v1438
    %v2062 = vpack.c.b16 %v1446, %v1439
    %v2063 = vpack.c.b16 %v1447, %v1440
    %v2064 = vpack.c.b16 %v1455, %v1448
    %v2065 = vpack.c.b16 %v1456, %v1449
    %v2066 = vpack.c.b16 %v1457, %v1450
    %v2067 = vpack.c.b16 %v1458, %v1451
    %v2068 = vpack.c.b16 %v1459, %v1452
    %v2069 = vpack.c.b16 %v1460, %v1453
    %v2070 = vpack.c.b16 %v1461, %v1454
    %v2071 = vpack.c.b16 %v1469, %v1462
    %v2072 = vpack.c.b16 %v1470, %v1463
    %v2073 = vpack.c.b16 %v1471, %v1464
    %v2074 = vpack.c.b16 %v1472, %v1465
    %v2075 = vpack.c.b16 %v1473, %v1466
    %v2076 = vpack.c.b16 %v1474, %v1467
    %v2077 = vpack.c.b16 %v1475, %v1468
    %v2078 = vpack.c.b16 %v1483, %v1476
    %v2079 = vpack.c.b16 %v1484, %v1477
    %v2080 = vpack.c.b16 %v1485, %v1478
    %v2081 = vpack.c.b16 %v1486, %v1479
    %v2082 = vpack.c.b16 %v1487, %v1480
    %v2083 = vpack.c.b16 %v1488, %v1481
    %v2084 = vpack.c.b16 %v1489, %v1482
    %v2085 = vpack.c.b16 %v1497, %v1490
    %v2086 = vpack.c.b16 %v1498, %v1491
    %v2087 = vpack.c.b16 %v1499, %v1492
    %v2088 = vpack.c.b16 %v1500, %v1493
    %v2089 = vpack.c.b16 %v1501, %v1494
    %v2090 = vpack.c.b16 %v1502, %v1495
    %v2091 = vpack.c.b16 %v1503, %v1496
    %v2092 = vpack.c.b16 %v1511, %v1504
    %v2093 = vpack.c.b16 %v1512, %v1505
    %v2094 = vpack.c.b16 %v1513, %v1506
    %v2095 = vpack.c.b16 %v1514, %v1507
    %v2096 = vpack.c.b16 %v1515, %v1508
    %v2097 = vpack.c.b16 %v1516, %v1509
    %v2098 = vpack.c.b16 %v1517, %v1510
    %v2099 = vpack.c.b16 %v1525, %v1518
    %v2100 = vpack.c.b16 %v1526, %v1519
    %v2101 = vpack.c.b16 %v1527, %v1520
    %v2102 = vpack.c.b16 %v1528, %v1521
    %v2103 = vpack.c.b16 %v1529, %v1522
    %v2104 = vpack.c.b16 %v1530, %v1523
    %v2105 = vpack.c.b16 %v1531, %v1524
    %v2106 = vpack.c.b16 %v1539, %v1532
    %v2107 = vpack.c.b16 %v1540, %v1533
    %v2108 = vpack.c.b16 %v1541, %v1534
    %v2109 = vpack.c.b16 %v1542, %v1535
    %v2110 = vpack.c.b16 %v1543, %v1536
    %v2111 = vpack.c.b16 %v1544, %v1537
    %v2112 = vpack.c.b16 %v1545, %v1538
    %v2113 = vpack.c.b16 %v1553, %v1546
    %v2114 = vpack.c.b16 %v1554, %v1547
    %v2115 = vpack.c.b16 %v1555, %v1548
    %v2116 = vpack.c.b16 %v1556, %v1549
    %v2117 = vpack.c.b16 %v1557, %v1550
    %v2118 = vpack.c.b16 %v1558, %v1551
    %v2119 = vpack.c.b16 %v1559, %v1552
    %v2120 = vpack.c.b16 %v1567, %v1560
    %v2121 = vpack.c.b16 %v1568, %v1561
    %v2122 = vpack.c.b16 %v1569, %v1562
    %v2123 = vpack.c.b16 %v1570, %v1563
    %v2124 = vpack.c.b16 %v1571, %v1564
    %v2125 = vpack.c.b16 %v1572, %v1565
    %v2126 = vpack.c.b16 %v1573, %v1566
    %v2127 = vpack.c.b16 %v1581, %v1574
    %v2128 = vpack.c.b16 %v1582, %v1575
    %v2129 = vpack.c.b16 %v1583, %v1576
    %v2130 = vpack.c.b16 %v1584, %v1577
    %v2131 = vpack.c.b16 %v1585, %v1578
    %v2132 = vpack.c.b16 %v1586, %v1579
    %v2133 = vpack.c.b16 %v1587, %v1580
    %v2134 = vpack.c.b16 %v1595, %v1588
    %v2135 = vpack.c.b16 %v1596, %v1589
    %v2136 = vpack.c.b16 %v1597, %v1590
    %v2137 = vpack.c.b16 %v1598, %v1591
    %v2138 = vpack.c.b16 %v1599, %v1592
    %v2139 = vpack.c.b16 %v1600, %v1593
    %v2140 = vpack.c.b16 %v1601, %v1594
    %v2141 = vpack.c.b16 %v1609, %v1602
    %v2142 = vpack.c.b16 %v1610, %v1603
    %v2143 = vpack.c.b16 %v1611, %v1604
    %v2144 = vpack.c.b16 %v1612, %v1605
    %v2145 = vpack.c.b16 %v1613, %v1606
    %v2146 = vpack.c.b16 %v1614, %v1607
    %v2147 = vpack.c.b16 %v1615, %v1608
    %v2148 = vpack.c.b16 %v1623, %v1616
    %v2149 = vpack.c.b16 %v1624, %v1617
    %v2150 = vpack.c.b16 %v1625, %v1618
    %v2151 = vpack.c.b16 %v1626, %v1619
    %v2152 = vpack.c.b16 %v1627, %v1620
    %v2153 = vpack.c.b16 %v1628, %v1621
    %v2154 = vpack.c.b16 %v1629, %v1622
    %v2155 = vpack.c.b16 %v1637, %v1630
    %v2156 = vpack.c.b16 %v1638, %v1631
    %v2157 = vpack.c.b16 %v1639, %v1632
    %v2158 = vpack.c.b16 %v1640, %v1633
    %v2159 = vpack.c.b16 %v1641, %v1634
    %v2160 = vpack.c.b16 %v1642, %v1635
    %v2161 = vpack.c.b16 %v1643, %v1636
    %v2162 = vpack.c.b16 %v1651, %v1644
    %v2163 = vpack.c.b16 %v1652, %v1645
    %v2164 = vpack.c.b16 %v1653, %v1646
    %v2165 = vpack.c.b16 %v1654, %v1647
    %v2166 = vpack.c.b16 %v1655, %v1648
    %v2167 = vpack.c.b16 %v1656, %v1649
    %v2168 = vpack.c.b16 %v1657, %v1650
    %v2169 = vpack.c.b16 %v1665, %v1658
    %v2170 = vpack.c.b16 %v1666, %v1659
    %v2171 = vpack.c.b16 %v1667, %v1660
    %v2172 = vpack.c.b16 %v1668, %v1661
    %v2173 = vpack.c.b16 %v1669, %v1662
    %v2174 = vpack.c.b16 %v1670, %v1663
    %v2175 = vpack.c.b16 %v1671, %v1664
    %v2176 = vpack.c.b16 %v1679, %v1672
    %v2177 = vpack.c.b16 %v1680, %v1673
    %v2178 = vpack.c.b16 %v1681, %v1674
    %v2179 = vpack.c.b16 %v1682, %v1675
    %v2180 = vpack.c.b16 %v1683, %v1676
    %v2181 = vpack.c.b16 %v1684, %v1677
    %v2182 = vpack.c.b16 %v1685, %v1678
    %v2183 = vpack.c.b16 %v1693, %v1686
    %v2184 = vpack.c.b16 %v1694, %v1687
    %v2185 = vpack.c.b16 %v1695, %v1688
    %v2186 = vpack.c.b16 %v1696, %v1689
    %v2187 = vpack.c.b16 %v1697, %v1690
    %v2188 = vpack.c.b16 %v1698, %v1691
    %v2189 = vpack.c.b16 %v1699, %v1692
    %v2190 = vpack.c.b16 %v1707, %v1700
    %v2191 = vpack.c.b16 %v1708, %v1701
    %v2192 = vpack.c.b16 %v1709, %v1702
    %v2193 = vpack.c.b16 %v1710, %v1703
    %v2194 = vpack.c.b16 %v1711, %v1704
    %v2195 = vpack.c.b16 %v1712, %v1705
    %v2196 = vpack.c.b16 %v1713, %v1706
    %v2197 = vpack.c.b16 %v1721, %v1714
    %v2198 = vpack.c.b16 %v1722, %v1715
    %v2199 = vpack.c.b16 %v1723, %v1716
    %v2200 = vpack.c.b16 %v1724, %v1717
    %v2201 = vpack.c.b16 %v1725, %v1718
    %v2202 = vpack.c.b16 %v1726, %v1719
    %v2203 = vpack.c.b16 %v1727, %v1720
    %v2204 = vpack.c.b16 %v1735, %v1728
    %v2205 = vpack.c.b16 %v1736, %v1729
    %v2206 = vpack.c.b16 %v1737, %v1730
    %v2207 = vpack.c.b16 %v1738, %v1731
    %v2208 = vpack.c.b16 %v1739, %v1732
    %v2209 = vpack.c.b16 %v1740, %v1733
    %v2210 = vpack.c.b16 %v1741, %v1734
    %v2211 = vpack.c.b16 %v1749, %v1742
    %v2212 = vpack.c.b16 %v1750, %v1743
    %v2213 = vpack.c.b16 %v1751, %v1744
    %v2214 = vpack.c.b16 %v1752, %v1745
    %v2215 = vpack.c.b16 %v1753, %v1746
    %v2216 = vpack.c.b16 %v1754, %v1747
    %v2217 = vpack.c.b16 %v1755, %v1748
    %v2218 = vpack.c.b16 %v1763, %v1756
    %v2219 = vpack.c.b16 %v1764, %v1757
    %v2220 = vpack.c.b16 %v1765, %v1758
    %v2221 = vpack.c.b16 %v1766, %v1759
    %v2222 = vpack.c.b16 %v1767, %v1760
    %v2223 = vpack.c.b16 %v1768, %v1761
    %v2224 = vpack.c.b16 %v1769, %v1762
    %v2225 = vpack.c.b16 %v1777, %v1770
    %v2226 = vpack.c.b16 %v1778, %v1771
    %v2227 = vpack.c.b16 %v1779, %v1772
    %v2228 = vpack.c.b16 %v1780, %v1773
    %v2229 = vpack.c.b16 %v1781, %v1774
    %v2230 = vpack.c.b16 %v1782, %v1775
    %v2231 = vpack.c.b16 %v1783, %v1776
    %v2232 = vpack.c.b16 %v1791, %v1784
    %v2233 = vpack.c.b16 %v1792, %v1785
    %v2234 = vpack.c.b16 %v1793, %v1786
    %v2235 = vpack.c.b16 %v1794, %v1787
    %v2236 = vpack.c.b16 %v1795, %v1788
    %v2237 = vpack.c.b16 %v1796, %v1789
    %v2238 = vpack.c.b16 %v1797, %v1790
    %v2239 = vpack.c.b16 %v1805, %v1798
    %v2240 = vpack.c.b16 %v1806, %v1799
    %v2241 = vpack.c.b16 %v1807, %v1800
    %v2242 = vpack.c.b16 %v1808, %v1801
    %v2243 = vpack.c.b16 %v1809, %v1802
    %v2244 = vpack.c.b16 %v1810, %v1803
    %v2245 = vpack.c.b16 %v1811, %v1804
    %v2246 = vpack.c.b16 %v1819, %v1812
    %v2247 = vpack.c.b16 %v1820, %v1813
    %v2248 = vpack.c.b16 %v1821, %v1814
    %v2249 = vpack.c.b16 %v1822, %v1815
    %v2250 = vpack.c.b16 %v1823, %v1816
    %v2251 = vpack.c.b16 %v1824, %v1817
    %v2252 = vpack.c.b16 %v1825, %v1818
    %v2253 = vpack.c.b16 %v1833, %v1826
    %v2254 = vpack.c.b16 %v1834, %v1827
    %v2255 = vpack.c.b16 %v1835, %v1828
    %v2256 = vpack.c.b16 %v1836, %v1829
    %v2257 = vpack.c.b16 %v1837, %v1830
    %v2258 = vpack.c.b16 %v1838, %v1831
    %v2259 = vpack.c.b16 %v1839, %v1832
    %v2260 = vpack.c.b16 %v1847, %v1840
    %v2261 = vpack.c.b16 %v1848, %v1841
    %v2262 = vpack.c.b16 %v1849, %v1842
    %v2263 = vpack.c.b16 %v1850, %v1843
    %v2264 = vpack.c.b16 %v1851, %v1844
    %v2265 = vpack.c.b16 %v1852, %v1845
    %v2266 = vpack.c.b16 %v1853, %v1846
    %v2267 = vpack.c.b16 %v1861, %v1854
    %v2268 = vpack.c.b16 %v1862, %v1855
    %v2269 = vpack.c.b16 %v1863, %v1856
    %v2270 = vpack.c.b16 %v1864, %v1857
    %v2271 = vpack.c.b16 %v1865, %v1858
    %v2272 = vpack.c.b16 %v1866, %v1859
    %v2273 = vpack.c.b16 %v1867, %v1860
    %v2274 = vpack.c.b16 %v1875, %v1868
    %v2275 = vpack.c.b16 %v1876, %v1869
    %v2276 = vpack.c.b16 %v1877, %v1870
    %v2277 = vpack.c.b16 %v1878, %v1871
    %v2278 = vpack.c.b16 %v1879, %v1872
    %v2279 = vpack.c.b16 %v1880, %v1873
    %v2280 = vpack.c.b16 %v1881, %v1874
    %v2281 = vpack.c.b16 %v1889, %v1882
    %v2282 = vpack.c.b16 %v1890, %v1883
    %v2283 = vpack.c.b16 %v1891, %v1884
    %v2284 = vpack.c.b16 %v1892, %v1885
    %v2285 = vpack.c.b16 %v1893, %v1886
    %v2286 = vpack.c.b16 %v1894, %v1887
    %v2287 = vpack.c.b16 %v1895, %v1888
    %2680 = vmatprep.subr.bf16.mxu0 %v1897
    %2681 = vmatpush1.bf16.msra.mxu0 %v1896
    %2682 = vmatprep.subr.bf16.mxu0 %v1904
    %2683 = vmatpush1.bf16.msra.mxu0 %v1903
    %2684 = vmatprep.subr.bf16.mxu0 %v1911
    %2685 = vmatpush1.bf16.msra.mxu0 %v1910
    %2686 = vmatprep.subr.bf16.mxu0 %v1918
    %2687 = vmatpush1.bf16.msra.mxu0 %v1917
    %2688 = vmatprep.subr.bf16.mxu0 %v1925
    %2689 = vmatpush1.bf16.msra.mxu0 %v1924
    %2690 = vmatprep.subr.bf16.mxu0 %v1932
    %2691 = vmatpush1.bf16.msra.mxu0 %v1931
    %2692 = vmatprep.subr.bf16.mxu0 %v1939
    %2693 = vmatpush1.bf16.msra.mxu0 %v1938
    %2694 = vmatprep.subr.bf16.mxu0 %v1946
    %2695 = vmatpush1.bf16.msra.mxu0 %v1945
    %2696 = vmatprep.subr.bf16.mxu0 %v1953
    %2697 = vmatpush1.bf16.msra.mxu0 %v1952
    %2698 = vmatprep.subr.bf16.mxu0 %v1960
    %2699 = vmatpush1.bf16.msra.mxu0 %v1959
    %2700 = vmatprep.subr.bf16.mxu0 %v1967
    %2701 = vmatpush1.bf16.msra.mxu0 %v1966
    %2702 = vmatprep.subr.bf16.mxu0 %v1974
    %2703 = vmatpush1.bf16.msra.mxu0 %v1973
    %2704 = vmatprep.subr.bf16.mxu0 %v1981
    %2705 = vmatpush1.bf16.msra.mxu0 %v1980
    %2706 = vmatprep.subr.bf16.mxu0 %v1988
    %2707 = vmatpush1.bf16.msra.mxu0 %v1987
    %2708 = vmatprep.subr.bf16.mxu0 %v1995
    %2709 = vmatpush1.bf16.msra.mxu0 %v1994
    %2710 = vmatprep.subr.bf16.mxu0 %v2002
    %2711 = vmatpush1.bf16.msra.mxu0 %v2001
    %2712 = vmatprep.mubr.bf16.mxu0 %v173
    %2713 = vmatmul.mubr.bf16.gmra.mrb[0].mxu0 %v172
    %v2714 = vpop.f32.mrb[0].mxu0
    %v2715 = vadd.f32 %v632, %v2714
    %v2716 = vpop.f32.mrb[0].mxu0
    %v2717 = vadd.f32 %v636, %v2716
    %v2718 = vpop.f32.mrb[0].mxu0
    %v2719 = vpop.f32.mrb[0].mxu0
    %2720 = vdwg.mxu0
    %2721 = vmatprep.subr.bf16.mxu0 %v2009
    %2722 = vmatpush1.bf16.msra.mxu0 %v2008
    %2723 = vmatprep.subr.bf16.mxu0 %v2016
    %2724 = vmatpush1.bf16.msra.mxu0 %v2015
    %2725 = vmatprep.subr.bf16.mxu0 %v2023
    %2726 = vmatpush1.bf16.msra.mxu0 %v2022
    %2727 = vmatprep.subr.bf16.mxu0 %v2030
    %2728 = vmatpush1.bf16.msra.mxu0 %v2029
    %2729 = vmatprep.subr.bf16.mxu0 %v2037
    %2730 = vmatpush1.bf16.msra.mxu0 %v2036
    %2731 = vmatprep.subr.bf16.mxu0 %v2044
    %2732 = vmatpush1.bf16.msra.mxu0 %v2043
    %2733 = vmatprep.subr.bf16.mxu0 %v2051
    %2734 = vmatpush1.bf16.msra.mxu0 %v2050
    %2735 = vmatprep.subr.bf16.mxu0 %v2058
    %2736 = vmatpush1.bf16.msra.mxu0 %v2057
    %2737 = vmatprep.subr.bf16.mxu0 %v2065
    %2738 = vmatpush1.bf16.msra.mxu0 %v2064
    %2739 = vmatprep.subr.bf16.mxu0 %v2072
    %2740 = vmatpush1.bf16.msra.mxu0 %v2071
    %2741 = vmatprep.subr.bf16.mxu0 %v2079
    %2742 = vmatpush1.bf16.msra.mxu0 %v2078
    %2743 = vmatprep.subr.bf16.mxu0 %v2086
    %2744 = vmatpush1.bf16.msra.mxu0 %v2085
    %2745 = vmatprep.subr.bf16.mxu0 %v2093
    %2746 = vmatpush1.bf16.msra.mxu0 %v2092
    %2747 = vmatprep.subr.bf16.mxu0 %v2100
    %2748 = vmatpush1.bf16.msra.mxu0 %v2099
    %2749 = vmatprep.subr.bf16.mxu0 %v2107
    %2750 = vmatpush1.bf16.msra.mxu0 %v2106
    %2751 = vmatprep.subr.bf16.mxu0 %v2114
    %2752 = vmatpush1.bf16.msra.mxu0 %v2113
    %2753 = vmatprep.mubr.bf16.mxu0 %v175
    %2754 = vmatmul.mubr.bf16.gmra.mrb[0].mxu0 %v174
    %v2755 = vpop.f32.mrb[0].mxu0
    %v2756 = vadd.f32 %v2715, %v2755
    %v2757 = vpop.f32.mrb[0].mxu0
    %v2758 = vadd.f32 %v2717, %v2757
    %v2759 = vpop.f32.mrb[0].mxu0
    %v2760 = vpop.f32.mrb[0].mxu0
    %2761 = vdwg.mxu0
    %2762 = vmatprep.subr.bf16.mxu0 %v2121
    %2763 = vmatpush1.bf16.msra.mxu0 %v2120
    %2764 = vmatprep.subr.bf16.mxu0 %v2128
    %2765 = vmatpush1.bf16.msra.mxu0 %v2127
    %2766 = vmatprep.subr.bf16.mxu0 %v2135
    %2767 = vmatpush1.bf16.msra.mxu0 %v2134
    %2768 = vmatprep.subr.bf16.mxu0 %v2142
    %2769 = vmatpush1.bf16.msra.mxu0 %v2141
    %2770 = vmatprep.subr.bf16.mxu0 %v2149
    %2771 = vmatpush1.bf16.msra.mxu0 %v2148
    %2772 = vmatprep.subr.bf16.mxu0 %v2156
    %2773 = vmatpush1.bf16.msra.mxu0 %v2155
    %2774 = vmatprep.subr.bf16.mxu0 %v2163
    %2775 = vmatpush1.bf16.msra.mxu0 %v2162
    %2776 = vmatprep.subr.bf16.mxu0 %v2170
    %2777 = vmatpush1.bf16.msra.mxu0 %v2169
    %2778 = vmatprep.subr.bf16.mxu0 %v2177
    %2779 = vmatpush1.bf16.msra.mxu0 %v2176
    %2780 = vmatprep.subr.bf16.mxu0 %v2184
    %2781 = vmatpush1.bf16.msra.mxu0 %v2183
    %2782 = vmatprep.subr.bf16.mxu0 %v2191
    %2783 = vmatpush1.bf16.msra.mxu0 %v2190
    %2784 = vmatprep.subr.bf16.mxu0 %v2198
    %2785 = vmatpush1.bf16.msra.mxu0 %v2197
    %2786 = vmatprep.subr.bf16.mxu0 %v2205
    %2787 = vmatpush1.bf16.msra.mxu0 %v2204
    %2788 = vmatprep.subr.bf16.mxu0 %v2212
    %2789 = vmatpush1.bf16.msra.mxu0 %v2211
    %2790 = vmatprep.subr.bf16.mxu0 %v2219
    %2791 = vmatpush1.bf16.msra.mxu0 %v2218
    %2792 = vmatprep.subr.bf16.mxu0 %v2226
    %2793 = vmatpush1.bf16.msra.mxu0 %v2225
    %2794 = vmatprep.mubr.bf16.mxu0 %v177
    %2795 = vmatmul.mubr.bf16.gmra.mrb[0].mxu0 %v176
    %v2796 = vpop.f32.mrb[0].mxu0
    %v2797 = vadd.f32 %v2756, %v2796
    %v2798 = vpop.f32.mrb[0].mxu0
    %v2799 = vadd.f32 %v2758, %v2798
    %v2800 = vpop.f32.mrb[0].mxu0
    %v2801 = vpop.f32.mrb[0].mxu0
    %2802 = vdwg.mxu0
    %2803 = vmatprep.subr.bf16.mxu0 %v2233
    %2804 = vmatpush1.bf16.msra.mxu0 %v2232
    %2805 = vmatprep.subr.bf16.mxu0 %v2240
    %2806 = vmatpush1.bf16.msra.mxu0 %v2239
    %2807 = vmatprep.subr.bf16.mxu0 %v2247
    %2808 = vmatpush1.bf16.msra.mxu0 %v2246
    %2809 = vmatprep.subr.bf16.mxu0 %v2254
    %2810 = vmatpush1.bf16.msra.mxu0 %v2253
    %2811 = vmatprep.subr.bf16.mxu0 %v2261
    %2812 = vmatpush1.bf16.msra.mxu0 %v2260
    %2813 = vmatprep.subr.bf16.mxu0 %v2268
    %2814 = vmatpush1.bf16.msra.mxu0 %v2267
    %2815 = vmatprep.subr.bf16.mxu0 %v2275
    %2816 = vmatpush1.bf16.msra.mxu0 %v2274
    %2817 = vmatprep.subr.bf16.mxu0 %v2282
    %2818 = vmatpush1.bf16.msra.mxu0 %v2281
    %2819 = vmatprep.subr.bf16.mxu0 0
    %2820 = vmatpush1.bf16.msra.mxu0 0
    %2821 = vmatprep.subr.bf16.mxu0 0
    %2822 = vmatpush1.bf16.msra.mxu0 0
    %2823 = vmatprep.subr.bf16.mxu0 0
    %2824 = vmatpush1.bf16.msra.mxu0 0
    %2825 = vmatprep.subr.bf16.mxu0 0
    %2826 = vmatpush1.bf16.msra.mxu0 0
    %2827 = vmatprep.subr.bf16.mxu0 0
    %2828 = vmatpush1.bf16.msra.mxu0 0
    %2829 = vmatprep.subr.bf16.mxu0 0
    %2830 = vmatpush1.bf16.msra.mxu0 0
    %2831 = vmatprep.subr.bf16.mxu0 0
    %2832 = vmatpush1.bf16.msra.mxu0 0
    %2833 = vmatprep.subr.bf16.mxu0 0
    %2834 = vmatpush1.bf16.msra.mxu0 0
    %2835 = vmatprep.mubr.bf16.mxu0 0
    %2836 = vmatmul.mubr.bf16.gmra.mrb[0].mxu0 %v178
    %v2837 = vpop.f32.mrb[0].mxu0
    %v2838 = vadd.f32 %v2797, %v2837
    %v2839 = vpop.f32.mrb[0].mxu0
    %v2840 = vadd.f32 %v2799, %v2839
    %v2841 = vpop.f32.mrb[0].mxu0
    %v2842 = vpop.f32.mrb[0].mxu0
    %2843 = vdwg.mxu0
    %2844 = vmatprep.subr.bf16.mxu0 %v1899
    %2845 = vmatpush1.bf16.msra.mxu0 %v1898
    %2846 = vmatprep.subr.bf16.mxu0 %v1906
    %2847 = vmatpush1.bf16.msra.mxu0 %v1905
    %2848 = vmatprep.subr.bf16.mxu0 %v1913
    %2849 = vmatpush1.bf16.msra.mxu0 %v1912
    %2850 = vmatprep.subr.bf16.mxu0 %v1920
    %2851 = vmatpush1.bf16.msra.mxu0 %v1919
    %2852 = vmatprep.subr.bf16.mxu0 %v1927
    %2853 = vmatpush1.bf16.msra.mxu0 %v1926
    %2854 = vmatprep.subr.bf16.mxu0 %v1934
    %2855 = vmatpush1.bf16.msra.mxu0 %v1933
    %2856 = vmatprep.subr.bf16.mxu0 %v1941
    %2857 = vmatpush1.bf16.msra.mxu0 %v1940
    %2858 = vmatprep.subr.bf16.mxu0 %v1948
    %2859 = vmatpush1.bf16.msra.mxu0 %v1947
    %2860 = vmatprep.subr.bf16.mxu0 %v1955
    %2861 = vmatpush1.bf16.msra.mxu0 %v1954
    %2862 = vmatprep.subr.bf16.mxu0 %v1962
    %2863 = vmatpush1.bf16.msra.mxu0 %v1961
    %2864 = vmatprep.subr.bf16.mxu0 %v1969
    %2865 = vmatpush1.bf16.msra.mxu0 %v1968
    %2866 = vmatprep.subr.bf16.mxu0 %v1976
    %2867 = vmatpush1.bf16.msra.mxu0 %v1975
    %2868 = vmatprep.subr.bf16.mxu0 %v1983
    %2869 = vmatpush1.bf16.msra.mxu0 %v1982
    %2870 = vmatprep.subr.bf16.mxu0 %v1990
    %2871 = vmatpush1.bf16.msra.mxu0 %v1989
    %2872 = vmatprep.subr.bf16.mxu0 %v1997
    %2873 = vmatpush1.bf16.msra.mxu0 %v1996
    %2874 = vmatprep.subr.bf16.mxu0 %v2004
    %2875 = vmatpush1.bf16.msra.mxu0 %v2003
    %2876 = vmatprep.mubr.bf16.mxu0 %v173
    %2877 = vmatmul.mubr.bf16.gmra.mrb[0].mxu0 %v172
    %v2878 = vpop.f32.mrb[0].mxu0
    %v2879 = vadd.f32 %v640, %v2878
    %v2880 = vpop.f32.mrb[0].mxu0
    %v2881 = vadd.f32 %v644, %v2880
    %v2882 = vpop.f32.mrb[0].mxu0
    %v2883 = vpop.f32.mrb[0].mxu0
    %2884 = vdwg.mxu0
    %2885 = vmatprep.subr.bf16.mxu0 %v2011
    %2886 = vmatpush1.bf16.msra.mxu0 %v2010
    %2887 = vmatprep.subr.bf16.mxu0 %v2018
    %2888 = vmatpush1.bf16.msra.mxu0 %v2017
    %2889 = vmatprep.subr.bf16.mxu0 %v2025
    %2890 = vmatpush1.bf16.msra.mxu0 %v2024
    %2891 = vmatprep.subr.bf16.mxu0 %v2032
    %2892 = vmatpush1.bf16.msra.mxu0 %v2031
    %2893 = vmatprep.subr.bf16.mxu0 %v2039
    %2894 = vmatpush1.bf16.msra.mxu0 %v2038
    %2895 = vmatprep.subr.bf16.mxu0 %v2046
    %2896 = vmatpush1.bf16.msra.mxu0 %v2045
    %2897 = vmatprep.subr.bf16.mxu0 %v2053
    %2898 = vmatpush1.bf16.msra.mxu0 %v2052
    %2899 = vmatprep.subr.bf16.mxu0 %v2060
    %2900 = vmatpush1.bf16.msra.mxu0 %v2059
    %2901 = vmatprep.subr.bf16.mxu0 %v2067
    %2902 = vmatpush1.bf16.msra.mxu0 %v2066
    %2903 = vmatprep.subr.bf16.mxu0 %v2074
    %2904 = vmatpush1.bf16.msra.mxu0 %v2073
    %2905 = vmatprep.subr.bf16.mxu0 %v2081
    %2906 = vmatpush1.bf16.msra.mxu0 %v2080
    %2907 = vmatprep.subr.bf16.mxu0 %v2088
    %2908 = vmatpush1.bf16.msra.mxu0 %v2087
    %2909 = vmatprep.subr.bf16.mxu0 %v2095
    %2910 = vmatpush1.bf16.msra.mxu0 %v2094
    %2911 = vmatprep.subr.bf16.mxu0 %v2102
    %2912 = vmatpush1.bf16.msra.mxu0 %v2101
    %2913 = vmatprep.subr.bf16.mxu0 %v2109
    %2914 = vmatpush1.bf16.msra.mxu0 %v2108
    %2915 = vmatprep.subr.bf16.mxu0 %v2116
    %2916 = vmatpush1.bf16.msra.mxu0 %v2115
    %2917 = vmatprep.mubr.bf16.mxu0 %v175
    %2918 = vmatmul.mubr.bf16.gmra.mrb[0].mxu0 %v174
    %v2919 = vpop.f32.mrb[0].mxu0
    %v2920 = vadd.f32 %v2879, %v2919
    %v2921 = vpop.f32.mrb[0].mxu0
    %v2922 = vadd.f32 %v2881, %v2921
    %v2923 = vpop.f32.mrb[0].mxu0
    %v2924 = vpop.f32.mrb[0].mxu0
    %2925 = vdwg.mxu0
    %2926 = vmatprep.subr.bf16.mxu0 %v2123
    %2927 = vmatpush1.bf16.msra.mxu0 %v2122
    %2928 = vmatprep.subr.bf16.mxu0 %v2130
    %2929 = vmatpush1.bf16.msra.mxu0 %v2129
    %2930 = vmatprep.subr.bf16.mxu0 %v2137
    %2931 = vmatpush1.bf16.msra.mxu0 %v2136
    %2932 = vmatprep.subr.bf16.mxu0 %v2144
    %2933 = vmatpush1.bf16.msra.mxu0 %v2143
    %2934 = vmatprep.subr.bf16.mxu0 %v2151
    %2935 = vmatpush1.bf16.msra.mxu0 %v2150
    %2936 = vmatprep.subr.bf16.mxu0 %v2158
    %2937 = vmatpush1.bf16.msra.mxu0 %v2157
    %2938 = vmatprep.subr.bf16.mxu0 %v2165
    %2939 = vmatpush1.bf16.msra.mxu0 %v2164
    %2940 = vmatprep.subr.bf16.mxu0 %v2172
    %2941 = vmatpush1.bf16.msra.mxu0 %v2171
    %2942 = vmatprep.subr.bf16.mxu0 %v2179
    %2943 = vmatpush1.bf16.msra.mxu0 %v2178
    %2944 = vmatprep.subr.bf16.mxu0 %v2186
    %2945 = vmatpush1.bf16.msra.mxu0 %v2185
    %2946 = vmatprep.subr.bf16.mxu0 %v2193
    %2947 = vmatpush1.bf16.msra.mxu0 %v2192
    %2948 = vmatprep.subr.bf16.mxu0 %v2200
    %2949 = vmatpush1.bf16.msra.mxu0 %v2199
    %2950 = vmatprep.subr.bf16.mxu0 %v2207
    %2951 = vmatpush1.bf16.msra.mxu0 %v2206
    %2952 = vmatprep.subr.bf16.mxu0 %v2214
    %2953 = vmatpush1.bf16.msra.mxu0 %v2213
    %2954 = vmatprep.subr.bf16.mxu0 %v2221
    %2955 = vmatpush1.bf16.msra.mxu0 %v2220
    %2956 = vmatprep.subr.bf16.mxu0 %v2228
    %2957 = vmatpush1.bf16.msra.mxu0 %v2227
    %2958 = vmatprep.mubr.bf16.mxu0 %v177
    %2959 = vmatmul.mubr.bf16.gmra.mrb[0].mxu0 %v176
    %v2960 = vpop.f32.mrb[0].mxu0
    %v2961 = vadd.f32 %v2920, %v2960
    %v2962 = vpop.f32.mrb[0].mxu0
    %v2963 = vadd.f32 %v2922, %v2962
    %v2964 = vpop.f32.mrb[0].mxu0
    %v2965 = vpop.f32.mrb[0].mxu0
    %2966 = vdwg.mxu0
    %2967 = vmatprep.subr.bf16.mxu0 %v2235
    %2968 = vmatpush1.bf16.msra.mxu0 %v2234
    %2969 = vmatprep.subr.bf16.mxu0 %v2242
    %2970 = vmatpush1.bf16.msra.mxu0 %v2241
    %2971 = vmatprep.subr.bf16.mxu0 %v2249
    %2972 = vmatpush1.bf16.msra.mxu0 %v2248
    %2973 = vmatprep.subr.bf16.mxu0 %v2256
    %2974 = vmatpush1.bf16.msra.mxu0 %v2255
    %2975 = vmatprep.subr.bf16.mxu0 %v2263
    %2976 = vmatpush1.bf16.msra.mxu0 %v2262
    %2977 = vmatprep.subr.bf16.mxu0 %v2270
    %2978 = vmatpush1.bf16.msra.mxu0 %v2269
    %2979 = vmatprep.subr.bf16.mxu0 %v2277
    %2980 = vmatpush1.bf16.msra.mxu0 %v2276
    %2981 = vmatprep.subr.bf16.mxu0 %v2284
    %2982 = vmatpush1.bf16.msra.mxu0 %v2283
    %2983 = vmatprep.subr.bf16.mxu0 0
    %2984 = vmatpush1.bf16.msra.mxu0 0
    %2985 = vmatprep.subr.bf16.mxu0 0
    %2986 = vmatpush1.bf16.msra.mxu0 0
    %2987 = vmatprep.subr.bf16.mxu0 0
    %2988 = vmatpush1.bf16.msra.mxu0 0
    %2989 = vmatprep.subr.bf16.mxu0 0
    %2990 = vmatpush1.bf16.msra.mxu0 0
    %2991 = vmatprep.subr.bf16.mxu0 0
    %2992 = vmatpush1.bf16.msra.mxu0 0
    %2993 = vmatprep.subr.bf16.mxu0 0
    %2994 = vmatpush1.bf16.msra.mxu0 0
    %2995 = vmatprep.subr.bf16.mxu0 0
    %2996 = vmatpush1.bf16.msra.mxu0 0
    %2997 = vmatprep.subr.bf16.mxu0 0
    %2998 = vmatpush1.bf16.msra.mxu0 0
    %2999 = vmatprep.mubr.bf16.mxu0 0
    %3000 = vmatmul.mubr.bf16.gmra.mrb[0].mxu0 %v178
    %v3001 = vpop.f32.mrb[0].mxu0
    %v3002 = vadd.f32 %v2961, %v3001
    %v3003 = vpop.f32.mrb[0].mxu0
    %v3004 = vadd.f32 %v2963, %v3003
    %v3005 = vpop.f32.mrb[0].mxu0
    %v3006 = vpop.f32.mrb[0].mxu0
    %3007 = vdwg.mxu0
    %3008 = vmatprep.subr.bf16.mxu0 %v1901
    %3009 = vmatpush1.bf16.msra.mxu0 %v1900
    %3010 = vmatprep.subr.bf16.mxu0 %v1908
    %3011 = vmatpush1.bf16.msra.mxu0 %v1907
    %3012 = vmatprep.subr.bf16.mxu0 %v1915
    %3013 = vmatpush1.bf16.msra.mxu0 %v1914
    %3014 = vmatprep.subr.bf16.mxu0 %v1922
    %3015 = vmatpush1.bf16.msra.mxu0 %v1921
    %3016 = vmatprep.subr.bf16.mxu0 %v1929
    %3017 = vmatpush1.bf16.msra.mxu0 %v1928
    %3018 = vmatprep.subr.bf16.mxu0 %v1936
    %3019 = vmatpush1.bf16.msra.mxu0 %v1935
    %3020 = vmatprep.subr.bf16.mxu0 %v1943
    %3021 = vmatpush1.bf16.msra.mxu0 %v1942
    %3022 = vmatprep.subr.bf16.mxu0 %v1950
    %3023 = vmatpush1.bf16.msra.mxu0 %v1949
    %3024 = vmatprep.subr.bf16.mxu0 %v1957
    %3025 = vmatpush1.bf16.msra.mxu0 %v1956
    %3026 = vmatprep.subr.bf16.mxu0 %v1964
    %3027 = vmatpush1.bf16.msra.mxu0 %v1963
    %3028 = vmatprep.subr.bf16.mxu0 %v1971
    %3029 = vmatpush1.bf16.msra.mxu0 %v1970
    %3030 = vmatprep.subr.bf16.mxu0 %v1978
    %3031 = vmatpush1.bf16.msra.mxu0 %v1977
    %3032 = vmatprep.subr.bf16.mxu0 %v1985
    %3033 = vmatpush1.bf16.msra.mxu0 %v1984
    %3034 = vmatprep.subr.bf16.mxu0 %v1992
    %3035 = vmatpush1.bf16.msra.mxu0 %v1991
    %3036 = vmatprep.subr.bf16.mxu0 %v1999
    %3037 = vmatpush1.bf16.msra.mxu0 %v1998
    %3038 = vmatprep.subr.bf16.mxu0 %v2006
    %3039 = vmatpush1.bf16.msra.mxu0 %v2005
    %3040 = vmatprep.mubr.bf16.mxu0 %v173
    %3041 = vmatmul.mubr.bf16.gmra.mrb[0].mxu0 %v172
    %v3042 = vpop.f32.mrb[0].mxu0
    %v3043 = vadd.f32 %v648, %v3042
    %v3044 = vpop.f32.mrb[0].mxu0
    %v3045 = vadd.f32 %v652, %v3044
    %v3046 = vpop.f32.mrb[0].mxu0
    %v3047 = vpop.f32.mrb[0].mxu0
    %3048 = vdwg.mxu0
    %3049 = vmatprep.subr.bf16.mxu0 %v2013
    %3050 = vmatpush1.bf16.msra.mxu0 %v2012
    %3051 = vmatprep.subr.bf16.mxu0 %v2020
    %3052 = vmatpush1.bf16.msra.mxu0 %v2019
    %3053 = vmatprep.subr.bf16.mxu0 %v2027
    %3054 = vmatpush1.bf16.msra.mxu0 %v2026
    %3055 = vmatprep.subr.bf16.mxu0 %v2034
    %3056 = vmatpush1.bf16.msra.mxu0 %v2033
    %3057 = vmatprep.subr.bf16.mxu0 %v2041
    %3058 = vmatpush1.bf16.msra.mxu0 %v2040
    %3059 = vmatprep.subr.bf16.mxu0 %v2048
    %3060 = vmatpush1.bf16.msra.mxu0 %v2047
    %3061 = vmatprep.subr.bf16.mxu0 %v2055
    %3062 = vmatpush1.bf16.msra.mxu0 %v2054
    %3063 = vmatprep.subr.bf16.mxu0 %v2062
    %3064 = vmatpush1.bf16.msra.mxu0 %v2061
    %3065 = vmatprep.subr.bf16.mxu0 %v2069
    %3066 = vmatpush1.bf16.msra.mxu0 %v2068
    %3067 = vmatprep.subr.bf16.mxu0 %v2076
    %3068 = vmatpush1.bf16.msra.mxu0 %v2075
    %3069 = vmatprep.subr.bf16.mxu0 %v2083
    %3070 = vmatpush1.bf16.msra.mxu0 %v2082
    %3071 = vmatprep.subr.bf16.mxu0 %v2090
    %3072 = vmatpush1.bf16.msra.mxu0 %v2089
    %3073 = vmatprep.subr.bf16.mxu0 %v2097
    %3074 = vmatpush1.bf16.msra.mxu0 %v2096
    %3075 = vmatprep.subr.bf16.mxu0 %v2104
    %3076 = vmatpush1.bf16.msra.mxu0 %v2103
    %3077 = vmatprep.subr.bf16.mxu0 %v2111
    %3078 = vmatpush1.bf16.msra.mxu0 %v2110
    %3079 = vmatprep.subr.bf16.mxu0 %v2118
    %3080 = vmatpush1.bf16.msra.mxu0 %v2117
    %3081 = vmatprep.mubr.bf16.mxu0 %v175
    %3082 = vmatmul.mubr.bf16.gmra.mrb[0].mxu0 %v174
    %v3083 = vpop.f32.mrb[0].mxu0
    %v3084 = vadd.f32 %v3043, %v3083
    %v3085 = vpop.f32.mrb[0].mxu0
    %v3086 = vadd.f32 %v3045, %v3085
    %v3087 = vpop.f32.mrb[0].mxu0
    %v3088 = vpop.f32.mrb[0].mxu0
    %3089 = vdwg.mxu0
    %3090 = vmatprep.subr.bf16.mxu0 %v2125
    %3091 = vmatpush1.bf16.msra.mxu0 %v2124
    %3092 = vmatprep.subr.bf16.mxu0 %v2132
    %3093 = vmatpush1.bf16.msra.mxu0 %v2131
    %3094 = vmatprep.subr.bf16.mxu0 %v2139
    %3095 = vmatpush1.bf16.msra.mxu0 %v2138
    %3096 = vmatprep.subr.bf16.mxu0 %v2146
    %3097 = vmatpush1.bf16.msra.mxu0 %v2145
    %3098 = vmatprep.subr.bf16.mxu0 %v2153
    %3099 = vmatpush1.bf16.msra.mxu0 %v2152
    %3100 = vmatprep.subr.bf16.mxu0 %v2160
    %3101 = vmatpush1.bf16.msra.mxu0 %v2159
    %3102 = vmatprep.subr.bf16.mxu0 %v2167
    %3103 = vmatpush1.bf16.msra.mxu0 %v2166
    %3104 = vmatprep.subr.bf16.mxu0 %v2174
    %3105 = vmatpush1.bf16.msra.mxu0 %v2173
    %3106 = vmatprep.subr.bf16.mxu0 %v2181
    %3107 = vmatpush1.bf16.msra.mxu0 %v2180
    %3108 = vmatprep.subr.bf16.mxu0 %v2188
    %3109 = vmatpush1.bf16.msra.mxu0 %v2187
    %3110 = vmatprep.subr.bf16.mxu0 %v2195
    %3111 = vmatpush1.bf16.msra.mxu0 %v2194
    %3112 = vmatprep.subr.bf16.mxu0 %v2202
    %3113 = vmatpush1.bf16.msra.mxu0 %v2201
    %3114 = vmatprep.subr.bf16.mxu0 %v2209
    %3115 = vmatpush1.bf16.msra.mxu0 %v2208
    %3116 = vmatprep.subr.bf16.mxu0 %v2216
    %3117 = vmatpush1.bf16.msra.mxu0 %v2215
    %3118 = vmatprep.subr.bf16.mxu0 %v2223
    %3119 = vmatpush1.bf16.msra.mxu0 %v2222
    %3120 = vmatprep.subr.bf16.mxu0 %v2230
    %3121 = vmatpush1.bf16.msra.mxu0 %v2229
    %3122 = vmatprep.mubr.bf16.mxu0 %v177
    %3123 = vmatmul.mubr.bf16.gmra.mrb[0].mxu0 %v176
    %v3124 = vpop.f32.mrb[0].mxu0
    %v3125 = vadd.f32 %v3084, %v3124
    %v3126 = vpop.f32.mrb[0].mxu0
    %v3127 = vadd.f32 %v3086, %v3126
    %v3128 = vpop.f32.mrb[0].mxu0
    %v3129 = vpop.f32.mrb[0].mxu0
    %3130 = vdwg.mxu0
    %3131 = vmatprep.subr.bf16.mxu0 %v2237
    %3132 = vmatpush1.bf16.msra.mxu0 %v2236
    %3133 = vmatprep.subr.bf16.mxu0 %v2244
    %3134 = vmatpush1.bf16.msra.mxu0 %v2243
    %3135 = vmatprep.subr.bf16.mxu0 %v2251
    %3136 = vmatpush1.bf16.msra.mxu0 %v2250
    %3137 = vmatprep.subr.bf16.mxu0 %v2258
    %3138 = vmatpush1.bf16.msra.mxu0 %v2257
    %3139 = vmatprep.subr.bf16.mxu0 %v2265
    %3140 = vmatpush1.bf16.msra.mxu0 %v2264
    %3141 = vmatprep.subr.bf16.mxu0 %v2272
    %3142 = vmatpush1.bf16.msra.mxu0 %v2271
    %3143 = vmatprep.subr.bf16.mxu0 %v2279
    %3144 = vmatpush1.bf16.msra.mxu0 %v2278
    %3145 = vmatprep.subr.bf16.mxu0 %v2286
    %3146 = vmatpush1.bf16.msra.mxu0 %v2285
    %3147 = vmatprep.subr.bf16.mxu0 0
    %3148 = vmatpush1.bf16.msra.mxu0 0
    %3149 = vmatprep.subr.bf16.mxu0 0
    %3150 = vmatpush1.bf16.msra.mxu0 0
    %3151 = vmatprep.subr.bf16.mxu0 0
    %3152 = vmatpush1.bf16.msra.mxu0 0
    %3153 = vmatprep.subr.bf16.mxu0 0
    %3154 = vmatpush1.bf16.msra.mxu0 0
    %3155 = vmatprep.subr.bf16.mxu0 0
    %3156 = vmatpush1.bf16.msra.mxu0 0
    %3157 = vmatprep.subr.bf16.mxu0 0
    %3158 = vmatpush1.bf16.msra.mxu0 0
    %3159 = vmatprep.subr.bf16.mxu0 0
    %3160 = vmatpush1.bf16.msra.mxu0 0
    %3161 = vmatprep.subr.bf16.mxu0 0
    %3162 = vmatpush1.bf16.msra.mxu0 0
    %3163 = vmatprep.mubr.bf16.mxu0 0
    %3164 = vmatmul.mubr.bf16.gmra.mrb[0].mxu0 %v178
    %v3165 = vpop.f32.mrb[0].mxu0
    %v3166 = vadd.f32 %v3125, %v3165
    %v3167 = vpop.f32.mrb[0].mxu0
    %v3168 = vadd.f32 %v3127, %v3167
    %v3169 = vpop.f32.mrb[0].mxu0
    %v3170 = vpop.f32.mrb[0].mxu0
    %3171 = vdwg.mxu0
    %3172 = vmatprep.subr.bf16.mxu0 0
    %3173 = vmatpush1.bf16.msra.mxu0 %v1902
    %3174 = vmatprep.subr.bf16.mxu0 0
    %3175 = vmatpush1.bf16.msra.mxu0 %v1909
    %3176 = vmatprep.subr.bf16.mxu0 0
    %3177 = vmatpush1.bf16.msra.mxu0 %v1916
    %3178 = vmatprep.subr.bf16.mxu0 0
    %3179 = vmatpush1.bf16.msra.mxu0 %v1923
    %3180 = vmatprep.subr.bf16.mxu0 0
    %3181 = vmatpush1.bf16.msra.mxu0 %v1930
    %3182 = vmatprep.subr.bf16.mxu0 0
    %3183 = vmatpush1.bf16.msra.mxu0 %v1937
    %3184 = vmatprep.subr.bf16.mxu0 0
    %3185 = vmatpush1.bf16.msra.mxu0 %v1944
    %3186 = vmatprep.subr.bf16.mxu0 0
    %3187 = vmatpush1.bf16.msra.mxu0 %v1951
    %3188 = vmatprep.subr.bf16.mxu0 0
    %3189 = vmatpush1.bf16.msra.mxu0 %v1958
    %3190 = vmatprep.subr.bf16.mxu0 0
    %3191 = vmatpush1.bf16.msra.mxu0 %v1965
    %3192 = vmatprep.subr.bf16.mxu0 0
    %3193 = vmatpush1.bf16.msra.mxu0 %v1972
    %3194 = vmatprep.subr.bf16.mxu0 0
    %3195 = vmatpush1.bf16.msra.mxu0 %v1979
    %3196 = vmatprep.subr.bf16.mxu0 0
    %3197 = vmatpush1.bf16.msra.mxu0 %v1986
    %3198 = vmatprep.subr.bf16.mxu0 0
    %3199 = vmatpush1.bf16.msra.mxu0 %v1993
    %3200 = vmatprep.subr.bf16.mxu0 0
    %3201 = vmatpush1.bf16.msra.mxu0 %v2000
    %3202 = vmatprep.subr.bf16.mxu0 0
    %3203 = vmatpush1.bf16.msra.mxu0 %v2007
    %3204 = vmatprep.mubr.bf16.mxu0 %v173
    %3205 = vmatmul.mubr.bf16.gmra.mrb[0].mxu0 %v172
    %v3206 = vpop.f32.mrb[0].mxu0
    %v3207 = vadd.f32 %v656, %v3206
    %v3208 = vpop.f32.mrb[0].mxu0
    %v3209 = vpop.f32.mrb[0].mxu0
    %v3210 = vpop.f32.mrb[0].mxu0
    %3211 = vdwg.mxu0
    %3212 = vmatprep.subr.bf16.mxu0 0
    %3213 = vmatpush1.bf16.msra.mxu0 %v2014
    %3214 = vmatprep.subr.bf16.mxu0 0
    %3215 = vmatpush1.bf16.msra.mxu0 %v2021
    %3216 = vmatprep.subr.bf16.mxu0 0
    %3217 = vmatpush1.bf16.msra.mxu0 %v2028
    %3218 = vmatprep.subr.bf16.mxu0 0
    %3219 = vmatpush1.bf16.msra.mxu0 %v2035
    %3220 = vmatprep.subr.bf16.mxu0 0
    %3221 = vmatpush1.bf16.msra.mxu0 %v2042
    %3222 = vmatprep.subr.bf16.mxu0 0
    %3223 = vmatpush1.bf16.msra.mxu0 %v2049
    %3224 = vmatprep.subr.bf16.mxu0 0
    %3225 = vmatpush1.bf16.msra.mxu0 %v2056
    %3226 = vmatprep.subr.bf16.mxu0 0
    %3227 = vmatpush1.bf16.msra.mxu0 %v2063
    %3228 = vmatprep.subr.bf16.mxu0 0
    %3229 = vmatpush1.bf16.msra.mxu0 %v2070
    %3230 = vmatprep.subr.bf16.mxu0 0
    %3231 = vmatpush1.bf16.msra.mxu0 %v2077
    %3232 = vmatprep.subr.bf16.mxu0 0
    %3233 = vmatpush1.bf16.msra.mxu0 %v2084
    %3234 = vmatprep.subr.bf16.mxu0 0
    %3235 = vmatpush1.bf16.msra.mxu0 %v2091
    %3236 = vmatprep.subr.bf16.mxu0 0
    %3237 = vmatpush1.bf16.msra.mxu0 %v2098
    %3238 = vmatprep.subr.bf16.mxu0 0
    %3239 = vmatpush1.bf16.msra.mxu0 %v2105
    %3240 = vmatprep.subr.bf16.mxu0 0
    %3241 = vmatpush1.bf16.msra.mxu0 %v2112
    %3242 = vmatprep.subr.bf16.mxu0 0
    %3243 = vmatpush1.bf16.msra.mxu0 %v2119
    %3244 = vmatprep.mubr.bf16.mxu0 %v175
    %3245 = vmatmul.mubr.bf16.gmra.mrb[0].mxu0 %v174
    %v3246 = vpop.f32.mrb[0].mxu0
    %v3247 = vadd.f32 %v3207, %v3246
    %v3248 = vpop.f32.mrb[0].mxu0
    %v3249 = vpop.f32.mrb[0].mxu0
    %v3250 = vpop.f32.mrb[0].mxu0
    %3251 = vdwg.mxu0
    %3252 = vmatprep.subr.bf16.mxu0 0
    %3253 = vmatpush1.bf16.msra.mxu0 %v2126
    %3254 = vmatprep.subr.bf16.mxu0 0
    %3255 = vmatpush1.bf16.msra.mxu0 %v2133
    %3256 = vmatprep.subr.bf16.mxu0 0
    %3257 = vmatpush1.bf16.msra.mxu0 %v2140
    %3258 = vmatprep.subr.bf16.mxu0 0
    %3259 = vmatpush1.bf16.msra.mxu0 %v2147
    %3260 = vmatprep.subr.bf16.mxu0 0
    %3261 = vmatpush1.bf16.msra.mxu0 %v2154
    %3262 = vmatprep.subr.bf16.mxu0 0
    %3263 = vmatpush1.bf16.msra.mxu0 %v2161
    %3264 = vmatprep.subr.bf16.mxu0 0
    %3265 = vmatpush1.bf16.msra.mxu0 %v2168
    %3266 = vmatprep.subr.bf16.mxu0 0
    %3267 = vmatpush1.bf16.msra.mxu0 %v2175
    %3268 = vmatprep.subr.bf16.mxu0 0
    %3269 = vmatpush1.bf16.msra.mxu0 %v2182
    %3270 = vmatprep.subr.bf16.mxu0 0
    %3271 = vmatpush1.bf16.msra.mxu0 %v2189
    %3272 = vmatprep.subr.bf16.mxu0 0
    %3273 = vmatpush1.bf16.msra.mxu0 %v2196
    %3274 = vmatprep.subr.bf16.mxu0 0
    %3275 = vmatpush1.bf16.msra.mxu0 %v2203
    %3276 = vmatprep.subr.bf16.mxu0 0
    %3277 = vmatpush1.bf16.msra.mxu0 %v2210
    %3278 = vmatprep.subr.bf16.mxu0 0
    %3279 = vmatpush1.bf16.msra.mxu0 %v2217
    %3280 = vmatprep.subr.bf16.mxu0 0
    %3281 = vmatpush1.bf16.msra.mxu0 %v2224
    %3282 = vmatprep.subr.bf16.mxu0 0
    %3283 = vmatpush1.bf16.msra.mxu0 %v2231
    %3284 = vmatprep.mubr.bf16.mxu0 %v177
    %3285 = vmatmul.mubr.bf16.gmra.mrb[0].mxu0 %v176
    %v3286 = vpop.f32.mrb[0].mxu0
    %v3287 = vadd.f32 %v3247, %v3286
    %v3288 = vpop.f32.mrb[0].mxu0
    %v3289 = vpop.f32.mrb[0].mxu0
    %v3290 = vpop.f32.mrb[0].mxu0
    %3291 = vdwg.mxu0
    %3292 = vmatprep.subr.bf16.mxu0 0
    %3293 = vmatpush1.bf16.msra.mxu0 %v2238
    %3294 = vmatprep.subr.bf16.mxu0 0
    %3295 = vmatpush1.bf16.msra.mxu0 %v2245
    %3296 = vmatprep.subr.bf16.mxu0 0
    %3297 = vmatpush1.bf16.msra.mxu0 %v2252
    %3298 = vmatprep.subr.bf16.mxu0 0
    %3299 = vmatpush1.bf16.msra.mxu0 %v2259
    %3300 = vmatprep.subr.bf16.mxu0 0
    %3301 = vmatpush1.bf16.msra.mxu0 %v2266
    %3302 = vmatprep.subr.bf16.mxu0 0
    %3303 = vmatpush1.bf16.msra.mxu0 %v2273
    %3304 = vmatprep.subr.bf16.mxu0 0
    %3305 = vmatpush1.bf16.msra.mxu0 %v2280
    %3306 = vmatprep.subr.bf16.mxu0 0
    %3307 = vmatpush1.bf16.msra.mxu0 %v2287
    %3308 = vmatprep.subr.bf16.mxu0 0
    %3309 = vmatpush1.bf16.msra.mxu0 0
    %3310 = vmatprep.subr.bf16.mxu0 0
    %3311 = vmatpush1.bf16.msra.mxu0 0
    %3312 = vmatprep.subr.bf16.mxu0 0
    %3313 = vmatpush1.bf16.msra.mxu0 0
    %3314 = vmatprep.subr.bf16.mxu0 0
    %3315 = vmatpush1.bf16.msra.mxu0 0
    %3316 = vmatprep.subr.bf16.mxu0 0
    %3317 = vmatpush1.bf16.msra.mxu0 0
    %3318 = vmatprep.subr.bf16.mxu0 0
    %3319 = vmatpush1.bf16.msra.mxu0 0
    %3320 = vmatprep.subr.bf16.mxu0 0
    %3321 = vmatpush1.bf16.msra.mxu0 0
    %3322 = vmatprep.subr.bf16.mxu0 0
    %3323 = vmatpush1.bf16.msra.mxu0 0
    %3324 = vmatprep.mubr.bf16.mxu0 0
    %3325 = vmatmul.mubr.bf16.gmra.mrb[0].mxu0 %v178
    %v3326 = vpop.f32.mrb[0].mxu0
    %v3327 = vadd.f32 %v3287, %v3326
    %v3328 = vpop.f32.mrb[0].mxu0
    %v3329 = vpop.f32.mrb[0].mxu0
    %v3330 = vpop.f32.mrb[0].mxu0
    %3331 = vdwg.mxu0
    %v3332 = vmax.f32 %v2838, 0.0
    %v3333 = vmax.f32 %v2840, 0.0
    %v3334 = vmax.f32 %v3002, 0.0
    %v3335 = vmax.f32 %v3004, 0.0
    %v3336 = vmax.f32 %v3166, 0.0
    %v3337 = vmax.f32 %v3168, 0.0
    %v3338 = vmax.f32 %v3327, 0.0
    %v3339 = vpack.c.bf16 %v3332, %v3332
    %v3340 = vpack.c.bf16 %v3333, %v3333
    %v3341 = vpack.c.bf16 %v3334, %v3334
    %v3342 = vpack.c.bf16 %v3335, %v3335
    %v3343 = vpack.c.bf16 %v3336, %v3336
    %v3344 = vpack.c.bf16 %v3337, %v3337
    %v3345 = vpack.c.bf16 %v3338, %v3338
    %v3346 = vld [vmem:[#allocation6] sm:$0xff]
    %v3347 = vld [vmem:[#allocation6 + $0x8] sm:$0xff]
    %v3348 = vld [vmem:[#allocation6 + $0x10] sm:$0xff]
    %v3349 = vld [vmem:[#allocation6 + $0x18] sm:$0xff]
    %v3350 = vld [vmem:[#allocation6 + $0x20] sm:$0xff]
    %v3351 = vld [vmem:[#allocation6 + $0x28] sm:$0xff]
    %v3352 = vld [vmem:[#allocation6 + $0x30] sm:$0xff]
    %v3353 = vld [vmem:[#allocation6 + $0x38] sm:$0xff]
    %v3354 = vld [vmem:[#allocation6 + $0x40] sm:$0xff]
    %v3355 = vld [vmem:[#allocation6 + $0x48] sm:$0xff]
    %v3356 = vld [vmem:[#allocation6 + $0x50] sm:$0xff]
    %v3357 = vld [vmem:[#allocation6 + $0x58] sm:$0xff]
    %v3358 = vld [vmem:[#allocation6 + $0x60] sm:$0xff]
    %v3359 = vld [vmem:[#allocation6 + $0x68] sm:$0xff]
    %v3360 = vld [vmem:[#allocation6 + $0x70] sm:$0xff]
    %v3361 = vld [vmem:[#allocation6 + $0x78] sm:$0xff]
    %v3362 = vld [vmem:[#allocation6 + $0x80] sm:$0xff]
    %v3363 = vld [vmem:[#allocation6 + $0x88] sm:$0xff]
    %v3364 = vld [vmem:[#allocation6 + $0x90] sm:$0xff]
    %v3365 = vld [vmem:[#allocation6 + $0x98] sm:$0xff]
    %v3366 = vld [vmem:[#allocation6 + $0xa0] sm:$0xff]
    %v3367 = vld [vmem:[#allocation6 + $0xa8] sm:$0xff]
    %v3368 = vld [vmem:[#allocation6 + $0xb0] sm:$0xff]
    %v3369 = vld [vmem:[#allocation6 + $0xb8] sm:$0xff]
    %v3370 = vld [vmem:[#allocation6 + $0xc0] sm:$0xff]
    %v3371 = vld [vmem:[#allocation6 + $0xc8] sm:$0xff]
    %v3372 = vld [vmem:[#allocation6 + $0xd0] sm:$0xff]
    %v3373 = vld [vmem:[#allocation6 + $0xd8] sm:$0xff]
    %v3374 = vld [vmem:[#allocation6 + $0xe0] sm:$0xff]
    %v3375 = vld [vmem:[#allocation6 + $0xe8] sm:$0xff]
    %v3376 = vld [vmem:[#allocation6 + $0xf0] sm:$0xff]
    %v3377 = vld [vmem:[#allocation6 + $0xf8] sm:$0xff]
    %v3378 = vld [vmem:[#allocation6 + $0x100] sm:$0xff]
    %v3379 = vld [vmem:[#allocation6 + $0x108] sm:$0xff]
    %v3380 = vld [vmem:[#allocation6 + $0x110] sm:$0xff]
    %v3381 = vld [vmem:[#allocation6 + $0x118] sm:$0xff]
    %v3382 = vld [vmem:[#allocation6 + $0x120] sm:$0xff]
    %v3383 = vld [vmem:[#allocation6 + $0x128] sm:$0xff]
    %v3384 = vld [vmem:[#allocation6 + $0x130] sm:$0xff]
    %v3385 = vld [vmem:[#allocation6 + $0x138] sm:$0xff]
    %v3386 = vld [vmem:[#allocation6 + $0x140] sm:$0xff]
    %v3387 = vld [vmem:[#allocation6 + $0x148] sm:$0xff]
    %v3388 = vld [vmem:[#allocation6 + $0x150] sm:$0xff]
    %v3389 = vld [vmem:[#allocation6 + $0x158] sm:$0xff]
    %v3390 = vld [vmem:[#allocation6 + $0x160] sm:$0xff]
    %v3391 = vld [vmem:[#allocation6 + $0x168] sm:$0xff]
    %v3392 = vld [vmem:[#allocation6 + $0x170] sm:$0xff]
    %v3393 = vld [vmem:[#allocation6 + $0x178] sm:$0xff]
    %v3394 = vld [vmem:[#allocation6 + $0x180] sm:$0xff]
    %v3395 = vld [vmem:[#allocation6 + $0x188] sm:$0xff]
    %v3396 = vld [vmem:[#allocation6 + $0x190] sm:$0xff]
    %v3397 = vld [vmem:[#allocation6 + $0x198] sm:$0xff]
    %v3398 = vld [vmem:[#allocation6 + $0x1a0] sm:$0xff]
    %v3399 = vld [vmem:[#allocation6 + $0x1a8] sm:$0xff]
    %v3400 = vld [vmem:[#allocation6 + $0x1b0] sm:$0xff]
    %v3401 = vld [vmem:[#allocation6 + $0x1b8] sm:$0xff]
    %v3402 = vld [vmem:[#allocation6 + $0x1c0] sm:$0xff]
    %v3403 = vld [vmem:[#allocation6 + $0x1c8] sm:$0xff]
    %v3404 = vld [vmem:[#allocation6 + $0x1d0] sm:$0xff]
    %v3405 = vld [vmem:[#allocation6 + $0x1d8] sm:$0xff]
    %v3406 = vld [vmem:[#allocation6 + $0x1e0] sm:$0xff]
    %v3407 = vld [vmem:[#allocation6 + $0x1e8] sm:$0xff]
    %v3408 = vld [vmem:[#allocation6 + $0x1f0] sm:$0xff]
    %v3409 = vld [vmem:[#allocation6 + $0x1f8] sm:$0xff]
    %v3410 = vld [vmem:[#allocation6 + $0x200] sm:$0xff]
    %v3411 = vld [vmem:[#allocation6 + $0x208] sm:$0xff]
    %v3412 = vld [vmem:[#allocation6 + $0x210] sm:$0xff]
    %v3413 = vld [vmem:[#allocation6 + $0x218] sm:$0xff]
    %v3414 = vld [vmem:[#allocation6 + $0x220] sm:$0xff]
    %v3415 = vld [vmem:[#allocation6 + $0x228] sm:$0xff]
    %v3416 = vld [vmem:[#allocation6 + $0x230] sm:$0xff]
    %v3417 = vld [vmem:[#allocation6 + $0x238] sm:$0xff]
    %v3418 = vld [vmem:[#allocation6 + $0x240] sm:$0xff]
    %v3419 = vld [vmem:[#allocation6 + $0x248] sm:$0xff]
    %v3420 = vld [vmem:[#allocation6 + $0x250] sm:$0xff]
    %v3421 = vld [vmem:[#allocation6 + $0x258] sm:$0xff]
    %v3422 = vld [vmem:[#allocation6 + $0x260] sm:$0xff]
    %v3423 = vld [vmem:[#allocation6 + $0x268] sm:$0xff]
    %v3424 = vld [vmem:[#allocation6 + $0x270] sm:$0xff]
    %v3425 = vld [vmem:[#allocation6 + $0x278] sm:$0xff]
    %v3426 = vld [vmem:[#allocation6 + $0x280] sm:$0xff]
    %v3427 = vld [vmem:[#allocation6 + $0x288] sm:$0xff]
    %v3428 = vld [vmem:[#allocation6 + $0x290] sm:$0xff]
    %v3429 = vld [vmem:[#allocation6 + $0x298] sm:$0xff]
    %v3430 = vld [vmem:[#allocation6 + $0x2a0] sm:$0xff]
    %v3431 = vld [vmem:[#allocation6 + $0x2a8] sm:$0xff]
    %v3432 = vld [vmem:[#allocation6 + $0x2b0] sm:$0xff]
    %v3433 = vld [vmem:[#allocation6 + $0x2b8] sm:$0xff]
    %v3434 = vld [vmem:[#allocation6 + $0x2c0] sm:$0xff]
    %v3435 = vld [vmem:[#allocation6 + $0x2c8] sm:$0xff]
    %v3436 = vld [vmem:[#allocation6 + $0x2d0] sm:$0xff]
    %v3437 = vld [vmem:[#allocation6 + $0x2d8] sm:$0xff]
    %v3438 = vld [vmem:[#allocation6 + $0x2e0] sm:$0xff]
    %v3439 = vld [vmem:[#allocation6 + $0x2e8] sm:$0xff]
    %v3440 = vld [vmem:[#allocation6 + $0x2f0] sm:$0xff]
    %v3441 = vld [vmem:[#allocation6 + $0x2f8] sm:$0xff]
    %v3442 = vld [vmem:[#allocation6 + $0x300] sm:$0xff]
    %v3443 = vld [vmem:[#allocation6 + $0x308] sm:$0xff]
    %v3444 = vld [vmem:[#allocation6 + $0x310] sm:$0xff]
    %v3445 = vld [vmem:[#allocation6 + $0x318] sm:$0xff]
    %v3446 = vld [vmem:[#allocation6 + $0x320] sm:$0xff]
    %v3447 = vld [vmem:[#allocation6 + $0x328] sm:$0xff]
    %v3448 = vld [vmem:[#allocation6 + $0x330] sm:$0xff]
    %v3449 = vld [vmem:[#allocation6 + $0x338] sm:$0xff]
    %v3450 = vld [vmem:[#allocation6 + $0x340] sm:$0xff]
    %v3451 = vld [vmem:[#allocation6 + $0x348] sm:$0xff]
    %v3452 = vld [vmem:[#allocation6 + $0x350] sm:$0xff]
    %v3453 = vld [vmem:[#allocation6 + $0x358] sm:$0xff]
    %v3454 = vld [vmem:[#allocation6 + $0x360] sm:$0xff]
    %v3455 = vld [vmem:[#allocation6 + $0x368] sm:$0xff]
    %v3456 = vld [vmem:[#allocation6 + $0x370] sm:$0xff]
    %v3457 = vld [vmem:[#allocation6 + $0x378] sm:$0xff]
    %v3458 = vld [vmem:[#allocation6 + $0x380] sm:$0xff]
    %v3459 = vld [vmem:[#allocation6 + $0x388] sm:$0xff]
    %v3460 = vld [vmem:[#allocation6 + $0x390] sm:$0xff]
    %v3461 = vld [vmem:[#allocation6 + $0x398] sm:$0xff]
    %v3462 = vld [vmem:[#allocation6 + $0x3a0] sm:$0xff]
    %v3463 = vld [vmem:[#allocation6 + $0x3a8] sm:$0xff]
    %v3464 = vld [vmem:[#allocation6 + $0x3b0] sm:$0xff]
    %v3465 = vld [vmem:[#allocation6 + $0x3b8] sm:$0xff]
    %v3466 = vld [vmem:[#allocation6 + $0x3c0] sm:$0xff]
    %v3467 = vld [vmem:[#allocation6 + $0x3c8] sm:$0xff]
    %v3468 = vld [vmem:[#allocation6 + $0x3d0] sm:$0xff]
    %v3469 = vld [vmem:[#allocation6 + $0x3d8] sm:$0xff]
    %v3470 = vld [vmem:[#allocation6 + $0x3e0] sm:$0xff]
    %v3471 = vld [vmem:[#allocation6 + $0x3e8] sm:$0xff]
    %v3472 = vld [vmem:[#allocation6 + $0x3f0] sm:$0xff]
    %v3473 = vld [vmem:[#allocation6 + $0x3f8] sm:$0xff]
    %v3474 = vld [vmem:[#allocation6 + $0x400] sm:$0xff]
    %v3475 = vld [vmem:[#allocation6 + $0x408] sm:$0xff]
    %v3476 = vld [vmem:[#allocation6 + $0x410] sm:$0xff]
    %v3477 = vld [vmem:[#allocation6 + $0x418] sm:$0xff]
    %v3478 = vld [vmem:[#allocation6 + $0x420] sm:$0xff]
    %v3479 = vld [vmem:[#allocation6 + $0x428] sm:$0xff]
    %v3480 = vld [vmem:[#allocation6 + $0x430] sm:$0xff]
    %v3481 = vld [vmem:[#allocation6 + $0x438] sm:$0xff]
    %v3482 = vld [vmem:[#allocation6 + $0x440] sm:$0xff]
    %v3483 = vld [vmem:[#allocation6 + $0x448] sm:$0xff]
    %v3484 = vld [vmem:[#allocation6 + $0x450] sm:$0xff]
    %v3485 = vld [vmem:[#allocation6 + $0x458] sm:$0xff]
    %v3486 = vld [vmem:[#allocation6 + $0x460] sm:$0xff]
    %v3487 = vld [vmem:[#allocation6 + $0x468] sm:$0xff]
    %v3488 = vld [vmem:[#allocation6 + $0x470] sm:$0xff]
    %v3489 = vld [vmem:[#allocation6 + $0x478] sm:$0xff]
    %v3490 = vld [vmem:[#allocation6 + $0x480] sm:$0xff]
    %v3491 = vld [vmem:[#allocation6 + $0x488] sm:$0xff]
    %v3492 = vld [vmem:[#allocation6 + $0x490] sm:$0xff]
    %v3493 = vld [vmem:[#allocation6 + $0x498] sm:$0xff]
    %v3494 = vld [vmem:[#allocation6 + $0x4a0] sm:$0xff]
    %v3495 = vld [vmem:[#allocation6 + $0x4a8] sm:$0xff]
    %v3496 = vld [vmem:[#allocation6 + $0x4b0] sm:$0xff]
    %v3497 = vld [vmem:[#allocation6 + $0x4b8] sm:$0xff]
    %v3498 = vld [vmem:[#allocation6 + $0x4c0] sm:$0xff]
    %v3499 = vld [vmem:[#allocation6 + $0x4c8] sm:$0xff]
    %v3500 = vld [vmem:[#allocation6 + $0x4d0] sm:$0xff]
    %v3501 = vld [vmem:[#allocation6 + $0x4d8] sm:$0xff]
    %v3502 = vld [vmem:[#allocation6 + $0x4e0] sm:$0xff]
    %v3503 = vld [vmem:[#allocation6 + $0x4e8] sm:$0xff]
    %v3504 = vld [vmem:[#allocation6 + $0x4f0] sm:$0xff]
    %v3505 = vld [vmem:[#allocation6 + $0x4f8] sm:$0xff]
    %v3506 = vld [vmem:[#allocation6 + $0x500] sm:$0xff]
    %v3507 = vld [vmem:[#allocation6 + $0x508] sm:$0xff]
    %v3508 = vld [vmem:[#allocation6 + $0x510] sm:$0xff]
    %v3509 = vld [vmem:[#allocation6 + $0x518] sm:$0xff]
    %v3510 = vld [vmem:[#allocation6 + $0x520] sm:$0xff]
    %v3511 = vld [vmem:[#allocation6 + $0x528] sm:$0xff]
    %v3512 = vld [vmem:[#allocation6 + $0x530] sm:$0xff]
    %v3513 = vld [vmem:[#allocation6 + $0x538] sm:$0xff]
    %v3514 = vld [vmem:[#allocation6 + $0x540] sm:$0xff]
    %v3515 = vld [vmem:[#allocation6 + $0x548] sm:$0xff]
    %v3516 = vld [vmem:[#allocation6 + $0x550] sm:$0xff]
    %v3517 = vld [vmem:[#allocation6 + $0x558] sm:$0xff]
    %v3518 = vld [vmem:[#allocation6 + $0x560] sm:$0xff]
    %v3519 = vld [vmem:[#allocation6 + $0x568] sm:$0xff]
    %v3520 = vld [vmem:[#allocation6 + $0x570] sm:$0xff]
    %v3521 = vld [vmem:[#allocation6 + $0x578] sm:$0xff]
    %v3522 = vld [vmem:[#allocation6 + $0x580] sm:$0xff]
    %v3523 = vld [vmem:[#allocation6 + $0x588] sm:$0xff]
    %v3524 = vld [vmem:[#allocation6 + $0x590] sm:$0xff]
    %v3525 = vld [vmem:[#allocation6 + $0x598] sm:$0xff]
    %v3526 = vld [vmem:[#allocation6 + $0x5a0] sm:$0xff]
    %v3527 = vld [vmem:[#allocation6 + $0x5a8] sm:$0xff]
    %v3528 = vld [vmem:[#allocation6 + $0x5b0] sm:$0xff]
    %v3529 = vld [vmem:[#allocation6 + $0x5b8] sm:$0xff]
    %v3530 = vld [vmem:[#allocation6 + $0x5c0] sm:$0xff]
    %v3531 = vld [vmem:[#allocation6 + $0x5c8] sm:$0xff]
    %v3532 = vld [vmem:[#allocation6 + $0x5d0] sm:$0xff]
    %v3533 = vld [vmem:[#allocation6 + $0x5d8] sm:$0xff]
    %v3534 = vld [vmem:[#allocation6 + $0x5e0] sm:$0xff]
    %v3535 = vld [vmem:[#allocation6 + $0x5e8] sm:$0xff]
    %v3536 = vld [vmem:[#allocation6 + $0x5f0] sm:$0xff]
    %v3537 = vld [vmem:[#allocation6 + $0x5f8] sm:$0xff]
    %v3538 = vld [vmem:[#allocation6 + $0x600] sm:$0xff]
    %v3539 = vld [vmem:[#allocation6 + $0x608] sm:$0xff]
    %v3540 = vld [vmem:[#allocation6 + $0x610] sm:$0xff]
    %v3541 = vld [vmem:[#allocation6 + $0x618] sm:$0xff]
    %v3542 = vld [vmem:[#allocation6 + $0x620] sm:$0xff]
    %v3543 = vld [vmem:[#allocation6 + $0x628] sm:$0xff]
    %v3544 = vld [vmem:[#allocation6 + $0x630] sm:$0xff]
    %v3545 = vld [vmem:[#allocation6 + $0x638] sm:$0xff]
    %v3546 = vld [vmem:[#allocation6 + $0x640] sm:$0xff]
    %v3547 = vld [vmem:[#allocation6 + $0x648] sm:$0xff]
    %v3548 = vld [vmem:[#allocation6 + $0x650] sm:$0xff]
    %v3549 = vld [vmem:[#allocation6 + $0x658] sm:$0xff]
    %v3550 = vld [vmem:[#allocation6 + $0x660] sm:$0xff]
    %v3551 = vld [vmem:[#allocation6 + $0x668] sm:$0xff]
    %v3552 = vld [vmem:[#allocation6 + $0x670] sm:$0xff]
    %v3553 = vld [vmem:[#allocation6 + $0x678] sm:$0xff]
    %v3554 = vld [vmem:[#allocation6 + $0x680] sm:$0xff]
    %v3555 = vld [vmem:[#allocation6 + $0x688] sm:$0xff]
    %v3556 = vld [vmem:[#allocation6 + $0x690] sm:$0xff]
    %v3557 = vld [vmem:[#allocation6 + $0x698] sm:$0xff]
    %v3558 = vld [vmem:[#allocation6 + $0x6a0] sm:$0xff]
    %v3559 = vld [vmem:[#allocation6 + $0x6a8] sm:$0xff]
    %v3560 = vld [vmem:[#allocation6 + $0x6b0] sm:$0xff]
    %v3561 = vld [vmem:[#allocation6 + $0x6b8] sm:$0xff]
    %v3562 = vld [vmem:[#allocation6 + $0x6c0] sm:$0xff]
    %v3563 = vld [vmem:[#allocation6 + $0x6c8] sm:$0xff]
    %v3564 = vld [vmem:[#allocation6 + $0x6d0] sm:$0xff]
    %v3565 = vld [vmem:[#allocation6 + $0x6d8] sm:$0xff]
    %v3566 = vld [vmem:[#allocation6 + $0x6e0] sm:$0xff]
    %v3567 = vld [vmem:[#allocation6 + $0x6e8] sm:$0xff]
    %v3568 = vld [vmem:[#allocation6 + $0x6f0] sm:$0xff]
    %v3569 = vld [vmem:[#allocation6 + $0x6f8] sm:$0xff]
    %v3570 = vld [vmem:[#allocation7] sm:$0xf]
    %v3572 = vlaneseq
    %v3573 = vshrl.u32 %v3572, 7
    %v3574 = vsub.s32 0, %v3573
    %v3575 = vrot.slane %v3570, %v3574
    %v3576 = vlaneseq
    %v3577 = vshrl.u32 %v3576, 7
    %v3578 = vsub.s32 1, %v3577
    %v3579 = vrot.slane %v3570, %v3578
    %v3580 = vlaneseq
    %v3581 = vshrl.u32 %v3580, 7
    %v3582 = vsub.s32 2, %v3581
    %v3583 = vrot.slane %v3570, %v3582
    %v3584 = vlaneseq
    %v3585 = vshrl.u32 %v3584, 7
    %v3586 = vsub.s32 3, %v3585
    %v3587 = vrot.slane %v3570, %v3586
    %v3816 = vunpack.c.l.b16 %v3346
    %v3817 = vunpack.c.h.b16 %v3346
    %v3818 = vunpack.c.l.b16 %v3347
    %v3819 = vunpack.c.h.b16 %v3347
    %v3820 = vunpack.c.l.b16 %v3348
    %v3821 = vunpack.c.h.b16 %v3348
    %v3822 = vunpack.c.l.b16 %v3349
    %v3823 = vunpack.c.h.b16 %v3349
    %v3824 = vunpack.c.l.b16 %v3350
    %v3825 = vunpack.c.h.b16 %v3350
    %v3826 = vunpack.c.l.b16 %v3351
    %v3827 = vunpack.c.h.b16 %v3351
    %v3828 = vunpack.c.l.b16 %v3352
    %v3829 = vunpack.c.h.b16 %v3352
    %v3830 = vunpack.c.l.b16 %v3353
    %v3831 = vunpack.c.h.b16 %v3353
    %v3832 = vunpack.c.l.b16 %v3354
    %v3833 = vunpack.c.h.b16 %v3354
    %v3834 = vunpack.c.l.b16 %v3355
    %v3835 = vunpack.c.h.b16 %v3355
    %v3836 = vunpack.c.l.b16 %v3356
    %v3837 = vunpack.c.h.b16 %v3356
    %v3838 = vunpack.c.l.b16 %v3357
    %v3839 = vunpack.c.h.b16 %v3357
    %v3840 = vunpack.c.l.b16 %v3358
    %v3841 = vunpack.c.h.b16 %v3358
    %v3842 = vunpack.c.l.b16 %v3359
    %v3843 = vunpack.c.h.b16 %v3359
    %v3844 = vunpack.c.l.b16 %v3360
    %v3845 = vunpack.c.h.b16 %v3360
    %v3846 = vunpack.c.l.b16 %v3361
    %v3847 = vunpack.c.h.b16 %v3361
    %v3848 = vunpack.c.l.b16 %v3362
    %v3849 = vunpack.c.h.b16 %v3362
    %v3850 = vunpack.c.l.b16 %v3363
    %v3851 = vunpack.c.h.b16 %v3363
    %v3852 = vunpack.c.l.b16 %v3364
    %v3853 = vunpack.c.h.b16 %v3364
    %v3854 = vunpack.c.l.b16 %v3365
    %v3855 = vunpack.c.h.b16 %v3365
    %v3856 = vunpack.c.l.b16 %v3366
    %v3857 = vunpack.c.h.b16 %v3366
    %v3858 = vunpack.c.l.b16 %v3367
    %v3859 = vunpack.c.h.b16 %v3367
    %v3860 = vunpack.c.l.b16 %v3368
    %v3861 = vunpack.c.h.b16 %v3368
    %v3862 = vunpack.c.l.b16 %v3369
    %v3863 = vunpack.c.h.b16 %v3369
    %v3864 = vunpack.c.l.b16 %v3370
    %v3865 = vunpack.c.h.b16 %v3370
    %v3866 = vunpack.c.l.b16 %v3371
    %v3867 = vunpack.c.h.b16 %v3371
    %v3868 = vunpack.c.l.b16 %v3372
    %v3869 = vunpack.c.h.b16 %v3372
    %v3870 = vunpack.c.l.b16 %v3373
    %v3871 = vunpack.c.h.b16 %v3373
    %v3872 = vunpack.c.l.b16 %v3374
    %v3873 = vunpack.c.h.b16 %v3374
    %v3874 = vunpack.c.l.b16 %v3375
    %v3875 = vunpack.c.h.b16 %v3375
    %v3876 = vunpack.c.l.b16 %v3376
    %v3877 = vunpack.c.h.b16 %v3376
    %v3878 = vunpack.c.l.b16 %v3377
    %v3879 = vunpack.c.h.b16 %v3377
    %v3880 = vunpack.c.l.b16 %v3378
    %v3881 = vunpack.c.h.b16 %v3378
    %v3882 = vunpack.c.l.b16 %v3379
    %v3883 = vunpack.c.h.b16 %v3379
    %v3884 = vunpack.c.l.b16 %v3380
    %v3885 = vunpack.c.h.b16 %v3380
    %v3886 = vunpack.c.l.b16 %v3381
    %v3887 = vunpack.c.h.b16 %v3381
    %v3888 = vunpack.c.l.b16 %v3382
    %v3889 = vunpack.c.h.b16 %v3382
    %v3890 = vunpack.c.l.b16 %v3383
    %v3891 = vunpack.c.h.b16 %v3383
    %v3892 = vunpack.c.l.b16 %v3384
    %v3893 = vunpack.c.h.b16 %v3384
    %v3894 = vunpack.c.l.b16 %v3385
    %v3895 = vunpack.c.h.b16 %v3385
    %v3896 = vunpack.c.l.b16 %v3386
    %v3897 = vunpack.c.h.b16 %v3386
    %v3898 = vunpack.c.l.b16 %v3387
    %v3899 = vunpack.c.h.b16 %v3387
    %v3900 = vunpack.c.l.b16 %v3388
    %v3901 = vunpack.c.h.b16 %v3388
    %v3902 = vunpack.c.l.b16 %v3389
    %v3903 = vunpack.c.h.b16 %v3389
    %v3904 = vunpack.c.l.b16 %v3390
    %v3905 = vunpack.c.h.b16 %v3390
    %v3906 = vunpack.c.l.b16 %v3391
    %v3907 = vunpack.c.h.b16 %v3391
    %v3908 = vunpack.c.l.b16 %v3392
    %v3909 = vunpack.c.h.b16 %v3392
    %v3910 = vunpack.c.l.b16 %v3393
    %v3911 = vunpack.c.h.b16 %v3393
    %v3912 = vunpack.c.l.b16 %v3394
    %v3913 = vunpack.c.h.b16 %v3394
    %v3914 = vunpack.c.l.b16 %v3395
    %v3915 = vunpack.c.h.b16 %v3395
    %v3916 = vunpack.c.l.b16 %v3396
    %v3917 = vunpack.c.h.b16 %v3396
    %v3918 = vunpack.c.l.b16 %v3397
    %v3919 = vunpack.c.h.b16 %v3397
    %v3920 = vunpack.c.l.b16 %v3398
    %v3921 = vunpack.c.h.b16 %v3398
    %v3922 = vunpack.c.l.b16 %v3399
    %v3923 = vunpack.c.h.b16 %v3399
    %v3924 = vunpack.c.l.b16 %v3400
    %v3925 = vunpack.c.h.b16 %v3400
    %v3926 = vunpack.c.l.b16 %v3401
    %v3927 = vunpack.c.h.b16 %v3401
    %v3928 = vunpack.c.l.b16 %v3402
    %v3929 = vunpack.c.h.b16 %v3402
    %v3930 = vunpack.c.l.b16 %v3403
    %v3931 = vunpack.c.h.b16 %v3403
    %v3932 = vunpack.c.l.b16 %v3404
    %v3933 = vunpack.c.h.b16 %v3404
    %v3934 = vunpack.c.l.b16 %v3405
    %v3935 = vunpack.c.h.b16 %v3405
    %v3936 = vunpack.c.l.b16 %v3406
    %v3937 = vunpack.c.h.b16 %v3406
    %v3938 = vunpack.c.l.b16 %v3407
    %v3939 = vunpack.c.h.b16 %v3407
    %v3940 = vunpack.c.l.b16 %v3408
    %v3941 = vunpack.c.h.b16 %v3408
    %v3942 = vunpack.c.l.b16 %v3409
    %v3943 = vunpack.c.h.b16 %v3409
    %v3944 = vunpack.c.l.b16 %v3410
    %v3945 = vunpack.c.h.b16 %v3410
    %v3946 = vunpack.c.l.b16 %v3411
    %v3947 = vunpack.c.h.b16 %v3411
    %v3948 = vunpack.c.l.b16 %v3412
    %v3949 = vunpack.c.h.b16 %v3412
    %v3950 = vunpack.c.l.b16 %v3413
    %v3951 = vunpack.c.h.b16 %v3413
    %v3952 = vunpack.c.l.b16 %v3414
    %v3953 = vunpack.c.h.b16 %v3414
    %v3954 = vunpack.c.l.b16 %v3415
    %v3955 = vunpack.c.h.b16 %v3415
    %v3956 = vunpack.c.l.b16 %v3416
    %v3957 = vunpack.c.h.b16 %v3416
    %v3958 = vunpack.c.l.b16 %v3417
    %v3959 = vunpack.c.h.b16 %v3417
    %v3960 = vunpack.c.l.b16 %v3418
    %v3961 = vunpack.c.h.b16 %v3418
    %v3962 = vunpack.c.l.b16 %v3419
    %v3963 = vunpack.c.h.b16 %v3419
    %v3964 = vunpack.c.l.b16 %v3420
    %v3965 = vunpack.c.h.b16 %v3420
    %v3966 = vunpack.c.l.b16 %v3421
    %v3967 = vunpack.c.h.b16 %v3421
    %v3968 = vunpack.c.l.b16 %v3422
    %v3969 = vunpack.c.h.b16 %v3422
    %v3970 = vunpack.c.l.b16 %v3423
    %v3971 = vunpack.c.h.b16 %v3423
    %v3972 = vunpack.c.l.b16 %v3424
    %v3973 = vunpack.c.h.b16 %v3424
    %v3974 = vunpack.c.l.b16 %v3425
    %v3975 = vunpack.c.h.b16 %v3425
    %v3976 = vunpack.c.l.b16 %v3426
    %v3977 = vunpack.c.h.b16 %v3426
    %v3978 = vunpack.c.l.b16 %v3427
    %v3979 = vunpack.c.h.b16 %v3427
    %v3980 = vunpack.c.l.b16 %v3428
    %v3981 = vunpack.c.h.b16 %v3428
    %v3982 = vunpack.c.l.b16 %v3429
    %v3983 = vunpack.c.h.b16 %v3429
    %v3984 = vunpack.c.l.b16 %v3430
    %v3985 = vunpack.c.h.b16 %v3430
    %v3986 = vunpack.c.l.b16 %v3431
    %v3987 = vunpack.c.h.b16 %v3431
    %v3988 = vunpack.c.l.b16 %v3432
    %v3989 = vunpack.c.h.b16 %v3432
    %v3990 = vunpack.c.l.b16 %v3433
    %v3991 = vunpack.c.h.b16 %v3433
    %v3992 = vunpack.c.l.b16 %v3434
    %v3993 = vunpack.c.h.b16 %v3434
    %v3994 = vunpack.c.l.b16 %v3435
    %v3995 = vunpack.c.h.b16 %v3435
    %v3996 = vunpack.c.l.b16 %v3436
    %v3997 = vunpack.c.h.b16 %v3436
    %v3998 = vunpack.c.l.b16 %v3437
    %v3999 = vunpack.c.h.b16 %v3437
    %v4000 = vunpack.c.l.b16 %v3438
    %v4001 = vunpack.c.h.b16 %v3438
    %v4002 = vunpack.c.l.b16 %v3439
    %v4003 = vunpack.c.h.b16 %v3439
    %v4004 = vunpack.c.l.b16 %v3440
    %v4005 = vunpack.c.h.b16 %v3440
    %v4006 = vunpack.c.l.b16 %v3441
    %v4007 = vunpack.c.h.b16 %v3441
    %v4008 = vunpack.c.l.b16 %v3442
    %v4009 = vunpack.c.h.b16 %v3442
    %v4010 = vunpack.c.l.b16 %v3443
    %v4011 = vunpack.c.h.b16 %v3443
    %v4012 = vunpack.c.l.b16 %v3444
    %v4013 = vunpack.c.h.b16 %v3444
    %v4014 = vunpack.c.l.b16 %v3445
    %v4015 = vunpack.c.h.b16 %v3445
    %v4016 = vunpack.c.l.b16 %v3446
    %v4017 = vunpack.c.h.b16 %v3446
    %v4018 = vunpack.c.l.b16 %v3447
    %v4019 = vunpack.c.h.b16 %v3447
    %v4020 = vunpack.c.l.b16 %v3448
    %v4021 = vunpack.c.h.b16 %v3448
    %v4022 = vunpack.c.l.b16 %v3449
    %v4023 = vunpack.c.h.b16 %v3449
    %v4024 = vunpack.c.l.b16 %v3450
    %v4025 = vunpack.c.h.b16 %v3450
    %v4026 = vunpack.c.l.b16 %v3451
    %v4027 = vunpack.c.h.b16 %v3451
    %v4028 = vunpack.c.l.b16 %v3452
    %v4029 = vunpack.c.h.b16 %v3452
    %v4030 = vunpack.c.l.b16 %v3453
    %v4031 = vunpack.c.h.b16 %v3453
    %v4032 = vunpack.c.l.b16 %v3454
    %v4033 = vunpack.c.h.b16 %v3454
    %v4034 = vunpack.c.l.b16 %v3455
    %v4035 = vunpack.c.h.b16 %v3455
    %v4036 = vunpack.c.l.b16 %v3456
    %v4037 = vunpack.c.h.b16 %v3456
    %v4038 = vunpack.c.l.b16 %v3457
    %v4039 = vunpack.c.h.b16 %v3457
    %v4040 = vunpack.c.l.b16 %v3458
    %v4041 = vunpack.c.h.b16 %v3458
    %v4042 = vunpack.c.l.b16 %v3459
    %v4043 = vunpack.c.h.b16 %v3459
    %v4044 = vunpack.c.l.b16 %v3460
    %v4045 = vunpack.c.h.b16 %v3460
    %v4046 = vunpack.c.l.b16 %v3461
    %v4047 = vunpack.c.h.b16 %v3461
    %v4048 = vunpack.c.l.b16 %v3462
    %v4049 = vunpack.c.h.b16 %v3462
    %v4050 = vunpack.c.l.b16 %v3463
    %v4051 = vunpack.c.h.b16 %v3463
    %v4052 = vunpack.c.l.b16 %v3464
    %v4053 = vunpack.c.h.b16 %v3464
    %v4054 = vunpack.c.l.b16 %v3465
    %v4055 = vunpack.c.h.b16 %v3465
    %v4056 = vunpack.c.l.b16 %v3466
    %v4057 = vunpack.c.h.b16 %v3466
    %v4058 = vunpack.c.l.b16 %v3467
    %v4059 = vunpack.c.h.b16 %v3467
    %v4060 = vunpack.c.l.b16 %v3468
    %v4061 = vunpack.c.h.b16 %v3468
    %v4062 = vunpack.c.l.b16 %v3469
    %v4063 = vunpack.c.h.b16 %v3469
    %v4064 = vunpack.c.l.b16 %v3470
    %v4065 = vunpack.c.h.b16 %v3470
    %v4066 = vunpack.c.l.b16 %v3471
    %v4067 = vunpack.c.h.b16 %v3471
    %v4068 = vunpack.c.l.b16 %v3472
    %v4069 = vunpack.c.h.b16 %v3472
    %v4070 = vunpack.c.l.b16 %v3473
    %v4071 = vunpack.c.h.b16 %v3473
    %v4072 = vunpack.c.l.b16 %v3474
    %v4073 = vunpack.c.h.b16 %v3474
    %v4074 = vunpack.c.l.b16 %v3475
    %v4075 = vunpack.c.h.b16 %v3475
    %v4076 = vunpack.c.l.b16 %v3476
    %v4077 = vunpack.c.h.b16 %v3476
    %v4078 = vunpack.c.l.b16 %v3477
    %v4079 = vunpack.c.h.b16 %v3477
    %v4080 = vunpack.c.l.b16 %v3478
    %v4081 = vunpack.c.h.b16 %v3478
    %v4082 = vunpack.c.l.b16 %v3479
    %v4083 = vunpack.c.h.b16 %v3479
    %v4084 = vunpack.c.l.b16 %v3480
    %v4085 = vunpack.c.h.b16 %v3480
    %v4086 = vunpack.c.l.b16 %v3481
    %v4087 = vunpack.c.h.b16 %v3481
    %v4088 = vunpack.c.l.b16 %v3482
    %v4089 = vunpack.c.h.b16 %v3482
    %v4090 = vunpack.c.l.b16 %v3483
    %v4091 = vunpack.c.h.b16 %v3483
    %v4092 = vunpack.c.l.b16 %v3484
    %v4093 = vunpack.c.h.b16 %v3484
    %v4094 = vunpack.c.l.b16 %v3485
    %v4095 = vunpack.c.h.b16 %v3485
    %v4096 = vunpack.c.l.b16 %v3486
    %v4097 = vunpack.c.h.b16 %v3486
    %v4098 = vunpack.c.l.b16 %v3487
    %v4099 = vunpack.c.h.b16 %v3487
    %v4100 = vunpack.c.l.b16 %v3488
    %v4101 = vunpack.c.h.b16 %v3488
    %v4102 = vunpack.c.l.b16 %v3489
    %v4103 = vunpack.c.h.b16 %v3489
    %v4104 = vunpack.c.l.b16 %v3490
    %v4105 = vunpack.c.h.b16 %v3490
    %v4106 = vunpack.c.l.b16 %v3491
    %v4107 = vunpack.c.h.b16 %v3491
    %v4108 = vunpack.c.l.b16 %v3492
    %v4109 = vunpack.c.h.b16 %v3492
    %v4110 = vunpack.c.l.b16 %v3493
    %v4111 = vunpack.c.h.b16 %v3493
    %v4112 = vunpack.c.l.b16 %v3494
    %v4113 = vunpack.c.h.b16 %v3494
    %v4114 = vunpack.c.l.b16 %v3495
    %v4115 = vunpack.c.h.b16 %v3495
    %v4116 = vunpack.c.l.b16 %v3496
    %v4117 = vunpack.c.h.b16 %v3496
    %v4118 = vunpack.c.l.b16 %v3497
    %v4119 = vunpack.c.h.b16 %v3497
    %v4120 = vunpack.c.l.b16 %v3498
    %v4121 = vunpack.c.h.b16 %v3498
    %v4122 = vunpack.c.l.b16 %v3499
    %v4123 = vunpack.c.h.b16 %v3499
    %v4124 = vunpack.c.l.b16 %v3500
    %v4125 = vunpack.c.h.b16 %v3500
    %v4126 = vunpack.c.l.b16 %v3501
    %v4127 = vunpack.c.h.b16 %v3501
    %v4128 = vunpack.c.l.b16 %v3502
    %v4129 = vunpack.c.h.b16 %v3502
    %v4130 = vunpack.c.l.b16 %v3503
    %v4131 = vunpack.c.h.b16 %v3503
    %v4132 = vunpack.c.l.b16 %v3504
    %v4133 = vunpack.c.h.b16 %v3504
    %v4134 = vunpack.c.l.b16 %v3505
    %v4135 = vunpack.c.h.b16 %v3505
    %v4136 = vunpack.c.l.b16 %v3506
    %v4137 = vunpack.c.h.b16 %v3506
    %v4138 = vunpack.c.l.b16 %v3507
    %v4139 = vunpack.c.h.b16 %v3507
    %v4140 = vunpack.c.l.b16 %v3508
    %v4141 = vunpack.c.h.b16 %v3508
    %v4142 = vunpack.c.l.b16 %v3509
    %v4143 = vunpack.c.h.b16 %v3509
    %v4144 = vunpack.c.l.b16 %v3510
    %v4145 = vunpack.c.h.b16 %v3510
    %v4146 = vunpack.c.l.b16 %v3511
    %v4147 = vunpack.c.h.b16 %v3511
    %v4148 = vunpack.c.l.b16 %v3512
    %v4149 = vunpack.c.h.b16 %v3512
    %v4150 = vunpack.c.l.b16 %v3513
    %v4151 = vunpack.c.h.b16 %v3513
    %v4152 = vunpack.c.l.b16 %v3514
    %v4153 = vunpack.c.h.b16 %v3514
    %v4154 = vunpack.c.l.b16 %v3515
    %v4155 = vunpack.c.h.b16 %v3515
    %v4156 = vunpack.c.l.b16 %v3516
    %v4157 = vunpack.c.h.b16 %v3516
    %v4158 = vunpack.c.l.b16 %v3517
    %v4159 = vunpack.c.h.b16 %v3517
    %v4160 = vunpack.c.l.b16 %v3518
    %v4161 = vunpack.c.h.b16 %v3518
    %v4162 = vunpack.c.l.b16 %v3519
    %v4163 = vunpack.c.h.b16 %v3519
    %v4164 = vunpack.c.l.b16 %v3520
    %v4165 = vunpack.c.h.b16 %v3520
    %v4166 = vunpack.c.l.b16 %v3521
    %v4167 = vunpack.c.h.b16 %v3521
    %v4168 = vunpack.c.l.b16 %v3522
    %v4169 = vunpack.c.h.b16 %v3522
    %v4170 = vunpack.c.l.b16 %v3523
    %v4171 = vunpack.c.h.b16 %v3523
    %v4172 = vunpack.c.l.b16 %v3524
    %v4173 = vunpack.c.h.b16 %v3524
    %v4174 = vunpack.c.l.b16 %v3525
    %v4175 = vunpack.c.h.b16 %v3525
    %v4176 = vunpack.c.l.b16 %v3526
    %v4177 = vunpack.c.h.b16 %v3526
    %v4178 = vunpack.c.l.b16 %v3527
    %v4179 = vunpack.c.h.b16 %v3527
    %v4180 = vunpack.c.l.b16 %v3528
    %v4181 = vunpack.c.h.b16 %v3528
    %v4182 = vunpack.c.l.b16 %v3529
    %v4183 = vunpack.c.h.b16 %v3529
    %v4184 = vunpack.c.l.b16 %v3530
    %v4185 = vunpack.c.h.b16 %v3530
    %v4186 = vunpack.c.l.b16 %v3531
    %v4187 = vunpack.c.h.b16 %v3531
    %v4188 = vunpack.c.l.b16 %v3532
    %v4189 = vunpack.c.h.b16 %v3532
    %v4190 = vunpack.c.l.b16 %v3533
    %v4191 = vunpack.c.h.b16 %v3533
    %v4192 = vunpack.c.l.b16 %v3534
    %v4193 = vunpack.c.h.b16 %v3534
    %v4194 = vunpack.c.l.b16 %v3535
    %v4195 = vunpack.c.h.b16 %v3535
    %v4196 = vunpack.c.l.b16 %v3536
    %v4197 = vunpack.c.h.b16 %v3536
    %v4198 = vunpack.c.l.b16 %v3537
    %v4199 = vunpack.c.h.b16 %v3537
    %v4200 = vunpack.c.l.b16 %v3538
    %v4201 = vunpack.c.h.b16 %v3538
    %v4202 = vunpack.c.l.b16 %v3539
    %v4203 = vunpack.c.h.b16 %v3539
    %v4204 = vunpack.c.l.b16 %v3540
    %v4205 = vunpack.c.h.b16 %v3540
    %v4206 = vunpack.c.l.b16 %v3541
    %v4207 = vunpack.c.h.b16 %v3541
    %v4208 = vunpack.c.l.b16 %v3542
    %v4209 = vunpack.c.h.b16 %v3542
    %v4210 = vunpack.c.l.b16 %v3543
    %v4211 = vunpack.c.h.b16 %v3543
    %v4212 = vunpack.c.l.b16 %v3544
    %v4213 = vunpack.c.h.b16 %v3544
    %v4214 = vunpack.c.l.b16 %v3545
    %v4215 = vunpack.c.h.b16 %v3545
    %v4216 = vunpack.c.l.b16 %v3546
    %v4217 = vunpack.c.h.b16 %v3546
    %v4218 = vunpack.c.l.b16 %v3547
    %v4219 = vunpack.c.h.b16 %v3547
    %v4220 = vunpack.c.l.b16 %v3548
    %v4221 = vunpack.c.h.b16 %v3548
    %v4222 = vunpack.c.l.b16 %v3549
    %v4223 = vunpack.c.h.b16 %v3549
    %v4224 = vunpack.c.l.b16 %v3550
    %v4225 = vunpack.c.h.b16 %v3550
    %v4226 = vunpack.c.l.b16 %v3551
    %v4227 = vunpack.c.h.b16 %v3551
    %v4228 = vunpack.c.l.b16 %v3552
    %v4229 = vunpack.c.h.b16 %v3552
    %v4230 = vunpack.c.l.b16 %v3553
    %v4231 = vunpack.c.h.b16 %v3553
    %v4232 = vunpack.c.l.b16 %v3554
    %v4233 = vunpack.c.h.b16 %v3554
    %v4234 = vunpack.c.l.b16 %v3555
    %v4235 = vunpack.c.h.b16 %v3555
    %v4236 = vunpack.c.l.b16 %v3556
    %v4237 = vunpack.c.h.b16 %v3556
    %v4238 = vunpack.c.l.b16 %v3557
    %v4239 = vunpack.c.h.b16 %v3557
    %v4240 = vunpack.c.l.b16 %v3558
    %v4241 = vunpack.c.h.b16 %v3558
    %v4242 = vunpack.c.l.b16 %v3559
    %v4243 = vunpack.c.h.b16 %v3559
    %v4244 = vunpack.c.l.b16 %v3560
    %v4245 = vunpack.c.h.b16 %v3560
    %v4246 = vunpack.c.l.b16 %v3561
    %v4247 = vunpack.c.h.b16 %v3561
    %v4248 = vunpack.c.l.b16 %v3562
    %v4249 = vunpack.c.h.b16 %v3562
    %v4250 = vunpack.c.l.b16 %v3563
    %v4251 = vunpack.c.h.b16 %v3563
    %v4252 = vunpack.c.l.b16 %v3564
    %v4253 = vunpack.c.h.b16 %v3564
    %v4254 = vunpack.c.l.b16 %v3565
    %v4255 = vunpack.c.h.b16 %v3565
    %v4256 = vunpack.c.l.b16 %v3566
    %v4257 = vunpack.c.h.b16 %v3566
    %v4258 = vunpack.c.l.b16 %v3567
    %v4259 = vunpack.c.h.b16 %v3567
    %v4260 = vunpack.c.l.b16 %v3568
    %v4261 = vunpack.c.h.b16 %v3568
    %v4262 = vunpack.c.l.b16 %v3569
    %v4263 = vunpack.c.h.b16 %v3569
    %v4264 = vpack.c.b16 %v3820, %v3816
    %v4265 = vpack.c.b16 %v3821, %v3817
    %v4266 = vpack.c.b16 %v3822, %v3818
    %v4267 = vpack.c.b16 %v3823, %v3819
    %v4268 = vpack.c.b16 %v3828, %v3824
    %v4269 = vpack.c.b16 %v3829, %v3825
    %v4270 = vpack.c.b16 %v3830, %v3826
    %v4271 = vpack.c.b16 %v3831, %v3827
    %v4272 = vpack.c.b16 %v3836, %v3832
    %v4273 = vpack.c.b16 %v3837, %v3833
    %v4274 = vpack.c.b16 %v3838, %v3834
    %v4275 = vpack.c.b16 %v3839, %v3835
    %v4276 = vpack.c.b16 %v3844, %v3840
    %v4277 = vpack.c.b16 %v3845, %v3841
    %v4278 = vpack.c.b16 %v3846, %v3842
    %v4279 = vpack.c.b16 %v3847, %v3843
    %v4280 = vpack.c.b16 %v3852, %v3848
    %v4281 = vpack.c.b16 %v3853, %v3849
    %v4282 = vpack.c.b16 %v3854, %v3850
    %v4283 = vpack.c.b16 %v3855, %v3851
    %v4284 = vpack.c.b16 %v3860, %v3856
    %v4285 = vpack.c.b16 %v3861, %v3857
    %v4286 = vpack.c.b16 %v3862, %v3858
    %v4287 = vpack.c.b16 %v3863, %v3859
    %v4288 = vpack.c.b16 %v3868, %v3864
    %v4289 = vpack.c.b16 %v3869, %v3865
    %v4290 = vpack.c.b16 %v3870, %v3866
    %v4291 = vpack.c.b16 %v3871, %v3867
    %v4292 = vpack.c.b16 %v3876, %v3872
    %v4293 = vpack.c.b16 %v3877, %v3873
    %v4294 = vpack.c.b16 %v3878, %v3874
    %v4295 = vpack.c.b16 %v3879, %v3875
    %v4296 = vpack.c.b16 %v3884, %v3880
    %v4297 = vpack.c.b16 %v3885, %v3881
    %v4298 = vpack.c.b16 %v3886, %v3882
    %v4299 = vpack.c.b16 %v3887, %v3883
    %v4300 = vpack.c.b16 %v3892, %v3888
    %v4301 = vpack.c.b16 %v3893, %v3889
    %v4302 = vpack.c.b16 %v3894, %v3890
    %v4303 = vpack.c.b16 %v3895, %v3891
    %v4304 = vpack.c.b16 %v3900, %v3896
    %v4305 = vpack.c.b16 %v3901, %v3897
    %v4306 = vpack.c.b16 %v3902, %v3898
    %v4307 = vpack.c.b16 %v3903, %v3899
    %v4308 = vpack.c.b16 %v3908, %v3904
    %v4309 = vpack.c.b16 %v3909, %v3905
    %v4310 = vpack.c.b16 %v3910, %v3906
    %v4311 = vpack.c.b16 %v3911, %v3907
    %v4312 = vpack.c.b16 %v3916, %v3912
    %v4313 = vpack.c.b16 %v3917, %v3913
    %v4314 = vpack.c.b16 %v3918, %v3914
    %v4315 = vpack.c.b16 %v3919, %v3915
    %v4316 = vpack.c.b16 %v3924, %v3920
    %v4317 = vpack.c.b16 %v3925, %v3921
    %v4318 = vpack.c.b16 %v3926, %v3922
    %v4319 = vpack.c.b16 %v3927, %v3923
    %v4320 = vpack.c.b16 %v3932, %v3928
    %v4321 = vpack.c.b16 %v3933, %v3929
    %v4322 = vpack.c.b16 %v3934, %v3930
    %v4323 = vpack.c.b16 %v3935, %v3931
    %v4324 = vpack.c.b16 %v3940, %v3936
    %v4325 = vpack.c.b16 %v3941, %v3937
    %v4326 = vpack.c.b16 %v3942, %v3938
    %v4327 = vpack.c.b16 %v3943, %v3939
    %v4328 = vpack.c.b16 %v3948, %v3944
    %v4329 = vpack.c.b16 %v3949, %v3945
    %v4330 = vpack.c.b16 %v3950, %v3946
    %v4331 = vpack.c.b16 %v3951, %v3947
    %v4332 = vpack.c.b16 %v3956, %v3952
    %v4333 = vpack.c.b16 %v3957, %v3953
    %v4334 = vpack.c.b16 %v3958, %v3954
    %v4335 = vpack.c.b16 %v3959, %v3955
    %v4336 = vpack.c.b16 %v3964, %v3960
    %v4337 = vpack.c.b16 %v3965, %v3961
    %v4338 = vpack.c.b16 %v3966, %v3962
    %v4339 = vpack.c.b16 %v3967, %v3963
    %v4340 = vpack.c.b16 %v3972, %v3968
    %v4341 = vpack.c.b16 %v3973, %v3969
    %v4342 = vpack.c.b16 %v3974, %v3970
    %v4343 = vpack.c.b16 %v3975, %v3971
    %v4344 = vpack.c.b16 %v3980, %v3976
    %v4345 = vpack.c.b16 %v3981, %v3977
    %v4346 = vpack.c.b16 %v3982, %v3978
    %v4347 = vpack.c.b16 %v3983, %v3979
    %v4348 = vpack.c.b16 %v3988, %v3984
    %v4349 = vpack.c.b16 %v3989, %v3985
    %v4350 = vpack.c.b16 %v3990, %v3986
    %v4351 = vpack.c.b16 %v3991, %v3987
    %v4352 = vpack.c.b16 %v3996, %v3992
    %v4353 = vpack.c.b16 %v3997, %v3993
    %v4354 = vpack.c.b16 %v3998, %v3994
    %v4355 = vpack.c.b16 %v3999, %v3995
    %v4356 = vpack.c.b16 %v4004, %v4000
    %v4357 = vpack.c.b16 %v4005, %v4001
    %v4358 = vpack.c.b16 %v4006, %v4002
    %v4359 = vpack.c.b16 %v4007, %v4003
    %v4360 = vpack.c.b16 %v4012, %v4008
    %v4361 = vpack.c.b16 %v4013, %v4009
    %v4362 = vpack.c.b16 %v4014, %v4010
    %v4363 = vpack.c.b16 %v4015, %v4011
    %v4364 = vpack.c.b16 %v4020, %v4016
    %v4365 = vpack.c.b16 %v4021, %v4017
    %v4366 = vpack.c.b16 %v4022, %v4018
    %v4367 = vpack.c.b16 %v4023, %v4019
    %v4368 = vpack.c.b16 %v4028, %v4024
    %v4369 = vpack.c.b16 %v4029, %v4025
    %v4370 = vpack.c.b16 %v4030, %v4026
    %v4371 = vpack.c.b16 %v4031, %v4027
    %v4372 = vpack.c.b16 %v4036, %v4032
    %v4373 = vpack.c.b16 %v4037, %v4033
    %v4374 = vpack.c.b16 %v4038, %v4034
    %v4375 = vpack.c.b16 %v4039, %v4035
    %v4376 = vpack.c.b16 %v4044, %v4040
    %v4377 = vpack.c.b16 %v4045, %v4041
    %v4378 = vpack.c.b16 %v4046, %v4042
    %v4379 = vpack.c.b16 %v4047, %v4043
    %v4380 = vpack.c.b16 %v4052, %v4048
    %v4381 = vpack.c.b16 %v4053, %v4049
    %v4382 = vpack.c.b16 %v4054, %v4050
    %v4383 = vpack.c.b16 %v4055, %v4051
    %v4384 = vpack.c.b16 %v4060, %v4056
    %v4385 = vpack.c.b16 %v4061, %v4057
    %v4386 = vpack.c.b16 %v4062, %v4058
    %v4387 = vpack.c.b16 %v4063, %v4059
    %v4388 = vpack.c.b16 %v4068, %v4064
    %v4389 = vpack.c.b16 %v4069, %v4065
    %v4390 = vpack.c.b16 %v4070, %v4066
    %v4391 = vpack.c.b16 %v4071, %v4067
    %v4392 = vpack.c.b16 %v4076, %v4072
    %v4393 = vpack.c.b16 %v4077, %v4073
    %v4394 = vpack.c.b16 %v4078, %v4074
    %v4395 = vpack.c.b16 %v4079, %v4075
    %v4396 = vpack.c.b16 %v4084, %v4080
    %v4397 = vpack.c.b16 %v4085, %v4081
    %v4398 = vpack.c.b16 %v4086, %v4082
    %v4399 = vpack.c.b16 %v4087, %v4083
    %v4400 = vpack.c.b16 %v4092, %v4088
    %v4401 = vpack.c.b16 %v4093, %v4089
    %v4402 = vpack.c.b16 %v4094, %v4090
    %v4403 = vpack.c.b16 %v4095, %v4091
    %v4404 = vpack.c.b16 %v4100, %v4096
    %v4405 = vpack.c.b16 %v4101, %v4097
    %v4406 = vpack.c.b16 %v4102, %v4098
    %v4407 = vpack.c.b16 %v4103, %v4099
    %v4408 = vpack.c.b16 %v4108, %v4104
    %v4409 = vpack.c.b16 %v4109, %v4105
    %v4410 = vpack.c.b16 %v4110, %v4106
    %v4411 = vpack.c.b16 %v4111, %v4107
    %v4412 = vpack.c.b16 %v4116, %v4112
    %v4413 = vpack.c.b16 %v4117, %v4113
    %v4414 = vpack.c.b16 %v4118, %v4114
    %v4415 = vpack.c.b16 %v4119, %v4115
    %v4416 = vpack.c.b16 %v4124, %v4120
    %v4417 = vpack.c.b16 %v4125, %v4121
    %v4418 = vpack.c.b16 %v4126, %v4122
    %v4419 = vpack.c.b16 %v4127, %v4123
    %v4420 = vpack.c.b16 %v4132, %v4128
    %v4421 = vpack.c.b16 %v4133, %v4129
    %v4422 = vpack.c.b16 %v4134, %v4130
    %v4423 = vpack.c.b16 %v4135, %v4131
    %v4424 = vpack.c.b16 %v4140, %v4136
    %v4425 = vpack.c.b16 %v4141, %v4137
    %v4426 = vpack.c.b16 %v4142, %v4138
    %v4427 = vpack.c.b16 %v4143, %v4139
    %v4428 = vpack.c.b16 %v4148, %v4144
    %v4429 = vpack.c.b16 %v4149, %v4145
    %v4430 = vpack.c.b16 %v4150, %v4146
    %v4431 = vpack.c.b16 %v4151, %v4147
    %v4432 = vpack.c.b16 %v4156, %v4152
    %v4433 = vpack.c.b16 %v4157, %v4153
    %v4434 = vpack.c.b16 %v4158, %v4154
    %v4435 = vpack.c.b16 %v4159, %v4155
    %v4436 = vpack.c.b16 %v4164, %v4160
    %v4437 = vpack.c.b16 %v4165, %v4161
    %v4438 = vpack.c.b16 %v4166, %v4162
    %v4439 = vpack.c.b16 %v4167, %v4163
    %v4440 = vpack.c.b16 %v4172, %v4168
    %v4441 = vpack.c.b16 %v4173, %v4169
    %v4442 = vpack.c.b16 %v4174, %v4170
    %v4443 = vpack.c.b16 %v4175, %v4171
    %v4444 = vpack.c.b16 %v4180, %v4176
    %v4445 = vpack.c.b16 %v4181, %v4177
    %v4446 = vpack.c.b16 %v4182, %v4178
    %v4447 = vpack.c.b16 %v4183, %v4179
    %v4448 = vpack.c.b16 %v4188, %v4184
    %v4449 = vpack.c.b16 %v4189, %v4185
    %v4450 = vpack.c.b16 %v4190, %v4186
    %v4451 = vpack.c.b16 %v4191, %v4187
    %v4452 = vpack.c.b16 %v4196, %v4192
    %v4453 = vpack.c.b16 %v4197, %v4193
    %v4454 = vpack.c.b16 %v4198, %v4194
    %v4455 = vpack.c.b16 %v4199, %v4195
    %v4456 = vpack.c.b16 %v4204, %v4200
    %v4457 = vpack.c.b16 %v4205, %v4201
    %v4458 = vpack.c.b16 %v4206, %v4202
    %v4459 = vpack.c.b16 %v4207, %v4203
    %v4460 = vpack.c.b16 %v4212, %v4208
    %v4461 = vpack.c.b16 %v4213, %v4209
    %v4462 = vpack.c.b16 %v4214, %v4210
    %v4463 = vpack.c.b16 %v4215, %v4211
    %v4464 = vpack.c.b16 %v4220, %v4216
    %v4465 = vpack.c.b16 %v4221, %v4217
    %v4466 = vpack.c.b16 %v4222, %v4218
    %v4467 = vpack.c.b16 %v4223, %v4219
    %v4468 = vpack.c.b16 %v4228, %v4224
    %v4469 = vpack.c.b16 %v4229, %v4225
    %v4470 = vpack.c.b16 %v4230, %v4226
    %v4471 = vpack.c.b16 %v4231, %v4227
    %v4472 = vpack.c.b16 %v4236, %v4232
    %v4473 = vpack.c.b16 %v4237, %v4233
    %v4474 = vpack.c.b16 %v4238, %v4234
    %v4475 = vpack.c.b16 %v4239, %v4235
    %v4476 = vpack.c.b16 %v4244, %v4240
    %v4477 = vpack.c.b16 %v4245, %v4241
    %v4478 = vpack.c.b16 %v4246, %v4242
    %v4479 = vpack.c.b16 %v4247, %v4243
    %v4480 = vpack.c.b16 %v4252, %v4248
    %v4481 = vpack.c.b16 %v4253, %v4249
    %v4482 = vpack.c.b16 %v4254, %v4250
    %v4483 = vpack.c.b16 %v4255, %v4251
    %v4484 = vpack.c.b16 %v4260, %v4256
    %v4485 = vpack.c.b16 %v4261, %v4257
    %v4486 = vpack.c.b16 %v4262, %v4258
    %v4487 = vpack.c.b16 %v4263, %v4259
    %4712 = vmatprep.subr.bf16.mxu0 %v4265
    %4713 = vmatpush1.bf16.msra.mxu0 %v4264
    %4714 = vmatprep.subr.bf16.mxu0 %v4269
    %4715 = vmatpush1.bf16.msra.mxu0 %v4268
    %4716 = vmatprep.subr.bf16.mxu0 %v4273
    %4717 = vmatpush1.bf16.msra.mxu0 %v4272
    %4718 = vmatprep.subr.bf16.mxu0 %v4277
    %4719 = vmatpush1.bf16.msra.mxu0 %v4276
    %4720 = vmatprep.subr.bf16.mxu0 %v4281
    %4721 = vmatpush1.bf16.msra.mxu0 %v4280
    %4722 = vmatprep.subr.bf16.mxu0 %v4285
    %4723 = vmatpush1.bf16.msra.mxu0 %v4284
    %4724 = vmatprep.subr.bf16.mxu0 %v4289
    %4725 = vmatpush1.bf16.msra.mxu0 %v4288
    %4726 = vmatprep.subr.bf16.mxu0 %v4293
    %4727 = vmatpush1.bf16.msra.mxu0 %v4292
    %4728 = vmatprep.subr.bf16.mxu0 %v4297
    %4729 = vmatpush1.bf16.msra.mxu0 %v4296
    %4730 = vmatprep.subr.bf16.mxu0 %v4301
    %4731 = vmatpush1.bf16.msra.mxu0 %v4300
    %4732 = vmatprep.subr.bf16.mxu0 %v4305
    %4733 = vmatpush1.bf16.msra.mxu0 %v4304
    %4734 = vmatprep.subr.bf16.mxu0 %v4309
    %4735 = vmatpush1.bf16.msra.mxu0 %v4308
    %4736 = vmatprep.subr.bf16.mxu0 %v4313
    %4737 = vmatpush1.bf16.msra.mxu0 %v4312
    %4738 = vmatprep.subr.bf16.mxu0 %v4317
    %4739 = vmatpush1.bf16.msra.mxu0 %v4316
    %4740 = vmatprep.subr.bf16.mxu0 %v4321
    %4741 = vmatpush1.bf16.msra.mxu0 %v4320
    %4742 = vmatprep.subr.bf16.mxu0 %v4325
    %4743 = vmatpush1.bf16.msra.mxu0 %v4324
    %4744 = vmatprep.mubr.bf16.mxu0 %v3340
    %4745 = vmatmul.mubr.bf16.gmra.mrb[0].mxu0 %v3339
    %v4746 = vpop.f32.mrb[0].mxu0
    %v4747 = vadd.f32 %v3575, %v4746
    %v4748 = vpop.f32.mrb[0].mxu0
    %v4749 = vadd.f32 %v3579, %v4748
    %v4750 = vpop.f32.mrb[0].mxu0
    %v4751 = vpop.f32.mrb[0].mxu0
    %4752 = vdwg.mxu0
    %4753 = vmatprep.subr.bf16.mxu0 %v4329
    %4754 = vmatpush1.bf16.msra.mxu0 %v4328
    %4755 = vmatprep.subr.bf16.mxu0 %v4333
    %4756 = vmatpush1.bf16.msra.mxu0 %v4332
    %4757 = vmatprep.subr.bf16.mxu0 %v4337
    %4758 = vmatpush1.bf16.msra.mxu0 %v4336
    %4759 = vmatprep.subr.bf16.mxu0 %v4341
    %4760 = vmatpush1.bf16.msra.mxu0 %v4340
    %4761 = vmatprep.subr.bf16.mxu0 %v4345
    %4762 = vmatpush1.bf16.msra.mxu0 %v4344
    %4763 = vmatprep.subr.bf16.mxu0 %v4349
    %4764 = vmatpush1.bf16.msra.mxu0 %v4348
    %4765 = vmatprep.subr.bf16.mxu0 %v4353
    %4766 = vmatpush1.bf16.msra.mxu0 %v4352
    %4767 = vmatprep.subr.bf16.mxu0 %v4357
    %4768 = vmatpush1.bf16.msra.mxu0 %v4356
    %4769 = vmatprep.subr.bf16.mxu0 %v4361
    %4770 = vmatpush1.bf16.msra.mxu0 %v4360
    %4771 = vmatprep.subr.bf16.mxu0 %v4365
    %4772 = vmatpush1.bf16.msra.mxu0 %v4364
    %4773 = vmatprep.subr.bf16.mxu0 %v4369
    %4774 = vmatpush1.bf16.msra.mxu0 %v4368
    %4775 = vmatprep.subr.bf16.mxu0 %v4373
    %4776 = vmatpush1.bf16.msra.mxu0 %v4372
    %4777 = vmatprep.subr.bf16.mxu0 %v4377
    %4778 = vmatpush1.bf16.msra.mxu0 %v4376
    %4779 = vmatprep.subr.bf16.mxu0 %v4381
    %4780 = vmatpush1.bf16.msra.mxu0 %v4380
    %4781 = vmatprep.subr.bf16.mxu0 %v4385
    %4782 = vmatpush1.bf16.msra.mxu0 %v4384
    %4783 = vmatprep.subr.bf16.mxu0 %v4389
    %4784 = vmatpush1.bf16.msra.mxu0 %v4388
    %4785 = vmatprep.mubr.bf16.mxu0 %v3342
    %4786 = vmatmul.mubr.bf16.gmra.mrb[0].mxu0 %v3341
    %v4787 = vpop.f32.mrb[0].mxu0
    %v4788 = vadd.f32 %v4747, %v4787
    %v4789 = vpop.f32.mrb[0].mxu0
    %v4790 = vadd.f32 %v4749, %v4789
    %v4791 = vpop.f32.mrb[0].mxu0
    %v4792 = vpop.f32.mrb[0].mxu0
    %4793 = vdwg.mxu0
    %4794 = vmatprep.subr.bf16.mxu0 %v4393
    %4795 = vmatpush1.bf16.msra.mxu0 %v4392
    %4796 = vmatprep.subr.bf16.mxu0 %v4397
    %4797 = vmatpush1.bf16.msra.mxu0 %v4396
    %4798 = vmatprep.subr.bf16.mxu0 %v4401
    %4799 = vmatpush1.bf16.msra.mxu0 %v4400
    %4800 = vmatprep.subr.bf16.mxu0 %v4405
    %4801 = vmatpush1.bf16.msra.mxu0 %v4404
    %4802 = vmatprep.subr.bf16.mxu0 %v4409
    %4803 = vmatpush1.bf16.msra.mxu0 %v4408
    %4804 = vmatprep.subr.bf16.mxu0 %v4413
    %4805 = vmatpush1.bf16.msra.mxu0 %v4412
    %4806 = vmatprep.subr.bf16.mxu0 %v4417
    %4807 = vmatpush1.bf16.msra.mxu0 %v4416
    %4808 = vmatprep.subr.bf16.mxu0 %v4421
    %4809 = vmatpush1.bf16.msra.mxu0 %v4420
    %4810 = vmatprep.subr.bf16.mxu0 %v4425
    %4811 = vmatpush1.bf16.msra.mxu0 %v4424
    %4812 = vmatprep.subr.bf16.mxu0 %v4429
    %4813 = vmatpush1.bf16.msra.mxu0 %v4428
    %4814 = vmatprep.subr.bf16.mxu0 %v4433
    %4815 = vmatpush1.bf16.msra.mxu0 %v4432
    %4816 = vmatprep.subr.bf16.mxu0 %v4437
    %4817 = vmatpush1.bf16.msra.mxu0 %v4436
    %4818 = vmatprep.subr.bf16.mxu0 %v4441
    %4819 = vmatpush1.bf16.msra.mxu0 %v4440
    %4820 = vmatprep.subr.bf16.mxu0 %v4445
    %4821 = vmatpush1.bf16.msra.mxu0 %v4444
    %4822 = vmatprep.subr.bf16.mxu0 %v4449
    %4823 = vmatpush1.bf16.msra.mxu0 %v4448
    %4824 = vmatprep.subr.bf16.mxu0 %v4453
    %4825 = vmatpush1.bf16.msra.mxu0 %v4452
    %4826 = vmatprep.mubr.bf16.mxu0 %v3344
    %4827 = vmatmul.mubr.bf16.gmra.mrb[0].mxu0 %v3343
    %v4828 = vpop.f32.mrb[0].mxu0
    %v4829 = vadd.f32 %v4788, %v4828
    %v4830 = vpop.f32.mrb[0].mxu0
    %v4831 = vadd.f32 %v4790, %v4830
    %v4832 = vpop.f32.mrb[0].mxu0
    %v4833 = vpop.f32.mrb[0].mxu0
    %4834 = vdwg.mxu0
    %4835 = vmatprep.subr.bf16.mxu0 %v4457
    %4836 = vmatpush1.bf16.msra.mxu0 %v4456
    %4837 = vmatprep.subr.bf16.mxu0 %v4461
    %4838 = vmatpush1.bf16.msra.mxu0 %v4460
    %4839 = vmatprep.subr.bf16.mxu0 %v4465
    %4840 = vmatpush1.bf16.msra.mxu0 %v4464
    %4841 = vmatprep.subr.bf16.mxu0 %v4469
    %4842 = vmatpush1.bf16.msra.mxu0 %v4468
    %4843 = vmatprep.subr.bf16.mxu0 %v4473
    %4844 = vmatpush1.bf16.msra.mxu0 %v4472
    %4845 = vmatprep.subr.bf16.mxu0 %v4477
    %4846 = vmatpush1.bf16.msra.mxu0 %v4476
    %4847 = vmatprep.subr.bf16.mxu0 %v4481
    %4848 = vmatpush1.bf16.msra.mxu0 %v4480
    %4849 = vmatprep.subr.bf16.mxu0 %v4485
    %4850 = vmatpush1.bf16.msra.mxu0 %v4484
    %4851 = vmatprep.subr.bf16.mxu0 0
    %4852 = vmatpush1.bf16.msra.mxu0 0
    %4853 = vmatprep.subr.bf16.mxu0 0
    %4854 = vmatpush1.bf16.msra.mxu0 0
    %4855 = vmatprep.subr.bf16.mxu0 0
    %4856 = vmatpush1.bf16.msra.mxu0 0
    %4857 = vmatprep.subr.bf16.mxu0 0
    %4858 = vmatpush1.bf16.msra.mxu0 0
    %4859 = vmatprep.subr.bf16.mxu0 0
    %4860 = vmatpush1.bf16.msra.mxu0 0
    %4861 = vmatprep.subr.bf16.mxu0 0
    %4862 = vmatpush1.bf16.msra.mxu0 0
    %4863 = vmatprep.subr.bf16.mxu0 0
    %4864 = vmatpush1.bf16.msra.mxu0 0
    %4865 = vmatprep.subr.bf16.mxu0 0
    %4866 = vmatpush1.bf16.msra.mxu0 0
    %4867 = vmatprep.mubr.bf16.mxu0 0
    %4868 = vmatmul.mubr.bf16.gmra.mrb[0].mxu0 %v3345
    %v4869 = vpop.f32.mrb[0].mxu0
    %v4870 = vadd.f32 %v4829, %v4869
    %v4871 = vpop.f32.mrb[0].mxu0
    %v4872 = vadd.f32 %v4831, %v4871
    %v4873 = vpop.f32.mrb[0].mxu0
    %v4874 = vpop.f32.mrb[0].mxu0
    %4875 = vdwg.mxu0
    %4876 = vmatprep.subr.bf16.mxu0 %v4267
    %4877 = vmatpush1.bf16.msra.mxu0 %v4266
    %4878 = vmatprep.subr.bf16.mxu0 %v4271
    %4879 = vmatpush1.bf16.msra.mxu0 %v4270
    %4880 = vmatprep.subr.bf16.mxu0 %v4275
    %4881 = vmatpush1.bf16.msra.mxu0 %v4274
    %4882 = vmatprep.subr.bf16.mxu0 %v4279
    %4883 = vmatpush1.bf16.msra.mxu0 %v4278
    %4884 = vmatprep.subr.bf16.mxu0 %v4283
    %4885 = vmatpush1.bf16.msra.mxu0 %v4282
    %4886 = vmatprep.subr.bf16.mxu0 %v4287
    %4887 = vmatpush1.bf16.msra.mxu0 %v4286
    %4888 = vmatprep.subr.bf16.mxu0 %v4291
    %4889 = vmatpush1.bf16.msra.mxu0 %v4290
    %4890 = vmatprep.subr.bf16.mxu0 %v4295
    %4891 = vmatpush1.bf16.msra.mxu0 %v4294
    %4892 = vmatprep.subr.bf16.mxu0 %v4299
    %4893 = vmatpush1.bf16.msra.mxu0 %v4298
    %4894 = vmatprep.subr.bf16.mxu0 %v4303
    %4895 = vmatpush1.bf16.msra.mxu0 %v4302
    %4896 = vmatprep.subr.bf16.mxu0 %v4307
    %4897 = vmatpush1.bf16.msra.mxu0 %v4306
    %4898 = vmatprep.subr.bf16.mxu0 %v4311
    %4899 = vmatpush1.bf16.msra.mxu0 %v4310
    %4900 = vmatprep.subr.bf16.mxu0 %v4315
    %4901 = vmatpush1.bf16.msra.mxu0 %v4314
    %4902 = vmatprep.subr.bf16.mxu0 %v4319
    %4903 = vmatpush1.bf16.msra.mxu0 %v4318
    %4904 = vmatprep.subr.bf16.mxu0 %v4323
    %4905 = vmatpush1.bf16.msra.mxu0 %v4322
    %4906 = vmatprep.subr.bf16.mxu0 %v4327
    %4907 = vmatpush1.bf16.msra.mxu0 %v4326
    %4908 = vmatprep.mubr.bf16.mxu0 %v3340
    %4909 = vmatmul.mubr.bf16.gmra.mrb[0].mxu0 %v3339
    %v4910 = vpop.f32.mrb[0].mxu0
    %v4911 = vadd.f32 %v3583, %v4910
    %v4912 = vpop.f32.mrb[0].mxu0
    %v4913 = vadd.f32 %v3587, %v4912
    %v4914 = vpop.f32.mrb[0].mxu0
    %v4915 = vpop.f32.mrb[0].mxu0
    %4916 = vdwg.mxu0
    %4917 = vmatprep.subr.bf16.mxu0 %v4331
    %4918 = vmatpush1.bf16.msra.mxu0 %v4330
    %4919 = vmatprep.subr.bf16.mxu0 %v4335
    %4920 = vmatpush1.bf16.msra.mxu0 %v4334
    %4921 = vmatprep.subr.bf16.mxu0 %v4339
    %4922 = vmatpush1.bf16.msra.mxu0 %v4338
    %4923 = vmatprep.subr.bf16.mxu0 %v4343
    %4924 = vmatpush1.bf16.msra.mxu0 %v4342
    %4925 = vmatprep.subr.bf16.mxu0 %v4347
    %4926 = vmatpush1.bf16.msra.mxu0 %v4346
    %4927 = vmatprep.subr.bf16.mxu0 %v4351
    %4928 = vmatpush1.bf16.msra.mxu0 %v4350
    %4929 = vmatprep.subr.bf16.mxu0 %v4355
    %4930 = vmatpush1.bf16.msra.mxu0 %v4354
    %4931 = vmatprep.subr.bf16.mxu0 %v4359
    %4932 = vmatpush1.bf16.msra.mxu0 %v4358
    %4933 = vmatprep.subr.bf16.mxu0 %v4363
    %4934 = vmatpush1.bf16.msra.mxu0 %v4362
    %4935 = vmatprep.subr.bf16.mxu0 %v4367
    %4936 = vmatpush1.bf16.msra.mxu0 %v4366
    %4937 = vmatprep.subr.bf16.mxu0 %v4371
    %4938 = vmatpush1.bf16.msra.mxu0 %v4370
    %4939 = vmatprep.subr.bf16.mxu0 %v4375
    %4940 = vmatpush1.bf16.msra.mxu0 %v4374
    %4941 = vmatprep.subr.bf16.mxu0 %v4379
    %4942 = vmatpush1.bf16.msra.mxu0 %v4378
    %4943 = vmatprep.subr.bf16.mxu0 %v4383
    %4944 = vmatpush1.bf16.msra.mxu0 %v4382
    %4945 = vmatprep.subr.bf16.mxu0 %v4387
    %4946 = vmatpush1.bf16.msra.mxu0 %v4386
    %4947 = vmatprep.subr.bf16.mxu0 %v4391
    %4948 = vmatpush1.bf16.msra.mxu0 %v4390
    %4949 = vmatprep.mubr.bf16.mxu0 %v3342
    %4950 = vmatmul.mubr.bf16.gmra.mrb[0].mxu0 %v3341
    %v4951 = vpop.f32.mrb[0].mxu0
    %v4952 = vadd.f32 %v4911, %v4951
    %v4953 = vpop.f32.mrb[0].mxu0
    %v4954 = vadd.f32 %v4913, %v4953
    %v4955 = vpop.f32.mrb[0].mxu0
    %v4956 = vpop.f32.mrb[0].mxu0
    %4957 = vdwg.mxu0
    %4958 = vmatprep.subr.bf16.mxu0 %v4395
    %4959 = vmatpush1.bf16.msra.mxu0 %v4394
    %4960 = vmatprep.subr.bf16.mxu0 %v4399
    %4961 = vmatpush1.bf16.msra.mxu0 %v4398
    %4962 = vmatprep.subr.bf16.mxu0 %v4403
    %4963 = vmatpush1.bf16.msra.mxu0 %v4402
    %4964 = vmatprep.subr.bf16.mxu0 %v4407
    %4965 = vmatpush1.bf16.msra.mxu0 %v4406
    %4966 = vmatprep.subr.bf16.mxu0 %v4411
    %4967 = vmatpush1.bf16.msra.mxu0 %v4410
    %4968 = vmatprep.subr.bf16.mxu0 %v4415
    %4969 = vmatpush1.bf16.msra.mxu0 %v4414
    %4970 = vmatprep.subr.bf16.mxu0 %v4419
    %4971 = vmatpush1.bf16.msra.mxu0 %v4418
    %4972 = vmatprep.subr.bf16.mxu0 %v4423
    %4973 = vmatpush1.bf16.msra.mxu0 %v4422
    %4974 = vmatprep.subr.bf16.mxu0 %v4427
    %4975 = vmatpush1.bf16.msra.mxu0 %v4426
    %4976 = vmatprep.subr.bf16.mxu0 %v4431
    %4977 = vmatpush1.bf16.msra.mxu0 %v4430
    %4978 = vmatprep.subr.bf16.mxu0 %v4435
    %4979 = vmatpush1.bf16.msra.mxu0 %v4434
    %4980 = vmatprep.subr.bf16.mxu0 %v4439
    %4981 = vmatpush1.bf16.msra.mxu0 %v4438
    %4982 = vmatprep.subr.bf16.mxu0 %v4443
    %4983 = vmatpush1.bf16.msra.mxu0 %v4442
    %4984 = vmatprep.subr.bf16.mxu0 %v4447
    %4985 = vmatpush1.bf16.msra.mxu0 %v4446
    %4986 = vmatprep.subr.bf16.mxu0 %v4451
    %4987 = vmatpush1.bf16.msra.mxu0 %v4450
    %4988 = vmatprep.subr.bf16.mxu0 %v4455
    %4989 = vmatpush1.bf16.msra.mxu0 %v4454
    %4990 = vmatprep.mubr.bf16.mxu0 %v3344
    %4991 = vmatmul.mubr.bf16.gmra.mrb[0].mxu0 %v3343
    %v4992 = vpop.f32.mrb[0].mxu0
    %v4993 = vadd.f32 %v4952, %v4992
    %v4994 = vpop.f32.mrb[0].mxu0
    %v4995 = vadd.f32 %v4954, %v4994
    %v4996 = vpop.f32.mrb[0].mxu0
    %v4997 = vpop.f32.mrb[0].mxu0
    %4998 = vdwg.mxu0
    %4999 = vmatprep.subr.bf16.mxu0 %v4459
    %5000 = vmatpush1.bf16.msra.mxu0 %v4458
    %5001 = vmatprep.subr.bf16.mxu0 %v4463
    %5002 = vmatpush1.bf16.msra.mxu0 %v4462
    %5003 = vmatprep.subr.bf16.mxu0 %v4467
    %5004 = vmatpush1.bf16.msra.mxu0 %v4466
    %5005 = vmatprep.subr.bf16.mxu0 %v4471
    %5006 = vmatpush1.bf16.msra.mxu0 %v4470
    %5007 = vmatprep.subr.bf16.mxu0 %v4475
    %5008 = vmatpush1.bf16.msra.mxu0 %v4474
    %5009 = vmatprep.subr.bf16.mxu0 %v4479
    %5010 = vmatpush1.bf16.msra.mxu0 %v4478
    %5011 = vmatprep.subr.bf16.mxu0 %v4483
    %5012 = vmatpush1.bf16.msra.mxu0 %v4482
    %5013 = vmatprep.subr.bf16.mxu0 %v4487
    %5014 = vmatpush1.bf16.msra.mxu0 %v4486
    %5015 = vmatprep.subr.bf16.mxu0 0
    %5016 = vmatpush1.bf16.msra.mxu0 0
    %5017 = vmatprep.subr.bf16.mxu0 0
    %5018 = vmatpush1.bf16.msra.mxu0 0
    %5019 = vmatprep.subr.bf16.mxu0 0
    %5020 = vmatpush1.bf16.msra.mxu0 0
    %5021 = vmatprep.subr.bf16.mxu0 0
    %5022 = vmatpush1.bf16.msra.mxu0 0
    %5023 = vmatprep.subr.bf16.mxu0 0
    %5024 = vmatpush1.bf16.msra.mxu0 0
    %5025 = vmatprep.subr.bf16.mxu0 0
    %5026 = vmatpush1.bf16.msra.mxu0 0
    %5027 = vmatprep.subr.bf16.mxu0 0
    %5028 = vmatpush1.bf16.msra.mxu0 0
    %5029 = vmatprep.subr.bf16.mxu0 0
    %5030 = vmatpush1.bf16.msra.mxu0 0
    %5031 = vmatprep.mubr.bf16.mxu0 0
    %5032 = vmatmul.mubr.bf16.gmra.mrb[0].mxu0 %v3345
    %v5033 = vpop.f32.mrb[0].mxu0
    %v5034 = vadd.f32 %v4993, %v5033
    %v5035 = vpop.f32.mrb[0].mxu0
    %v5036 = vadd.f32 %v4995, %v5035
    %v5037 = vpop.f32.mrb[0].mxu0
    %v5038 = vpop.f32.mrb[0].mxu0
    %5039 = vdwg.mxu0
    %v5040 = vmax.f32 %v4870, 0.0
    %v5041 = vmax.f32 %v4872, 0.0
    %v5042 = vmax.f32 %v5034, 0.0
    %v5043 = vmax.f32 %v5036, 0.0
    %v5044 = vpack.c.bf16 %v5040, %v5040
    %v5045 = vpack.c.bf16 %v5041, %v5041
    %v5046 = vpack.c.bf16 %v5042, %v5042
    %v5047 = vpack.c.bf16 %v5043, %v5043
    %v5048 = vld [vmem:[#allocation9] sm:$0xff]
    %v5049 = vld [vmem:[#allocation9 + $0x8] sm:$0xff]
    %v5050 = vld [vmem:[#allocation9 + $0x10] sm:$0xff]
    %v5051 = vld [vmem:[#allocation9 + $0x18] sm:$0xff]
    %v5052 = vld [vmem:[#allocation9 + $0x20] sm:$0xff]
    %v5053 = vld [vmem:[#allocation9 + $0x28] sm:$0xff]
    %v5054 = vld [vmem:[#allocation9 + $0x30] sm:$0xff]
    %v5055 = vld [vmem:[#allocation9 + $0x38] sm:$0xff]
    %v5056 = vld [vmem:[#allocation9 + $0x40] sm:$0xff]
    %v5057 = vld [vmem:[#allocation9 + $0x48] sm:$0xff]
    %v5058 = vld [vmem:[#allocation9 + $0x50] sm:$0xff]
    %v5059 = vld [vmem:[#allocation9 + $0x58] sm:$0xff]
    %v5060 = vld [vmem:[#allocation9 + $0x60] sm:$0xff]
    %v5061 = vld [vmem:[#allocation9 + $0x68] sm:$0xff]
    %v5062 = vld [vmem:[#allocation9 + $0x70] sm:$0xff]
    %v5063 = vld [vmem:[#allocation9 + $0x78] sm:$0xff]
    %v5064 = vld [vmem:[#allocation9 + $0x80] sm:$0xff]
    %v5065 = vld [vmem:[#allocation9 + $0x88] sm:$0xff]
    %v5066 = vld [vmem:[#allocation9 + $0x90] sm:$0xff]
    %v5067 = vld [vmem:[#allocation9 + $0x98] sm:$0xff]
    %v5068 = vld [vmem:[#allocation9 + $0xa0] sm:$0xff]
    %v5069 = vld [vmem:[#allocation9 + $0xa8] sm:$0xff]
    %v5070 = vld [vmem:[#allocation9 + $0xb0] sm:$0xff]
    %v5071 = vld [vmem:[#allocation9 + $0xb8] sm:$0xff]
    %v5072 = vld [vmem:[#allocation9 + $0xc0] sm:$0xff]
    %v5073 = vld [vmem:[#allocation9 + $0xc8] sm:$0xff]
    %v5074 = vld [vmem:[#allocation9 + $0xd0] sm:$0xff]
    %v5075 = vld [vmem:[#allocation9 + $0xd8] sm:$0xff]
    %v5076 = vld [vmem:[#allocation9 + $0xe0] sm:$0xff]
    %v5077 = vld [vmem:[#allocation9 + $0xe8] sm:$0xff]
    %v5078 = vld [vmem:[#allocation9 + $0xf0] sm:$0xff]
    %v5079 = vld [vmem:[#allocation9 + $0xf8] sm:$0xff]
    %v5080 = vld [vmem:[#allocation9 + $0x100] sm:$0xff]
    %v5081 = vld [vmem:[#allocation9 + $0x108] sm:$0xff]
    %v5082 = vld [vmem:[#allocation9 + $0x110] sm:$0xff]
    %v5083 = vld [vmem:[#allocation9 + $0x118] sm:$0xff]
    %v5084 = vld [vmem:[#allocation9 + $0x120] sm:$0xff]
    %v5085 = vld [vmem:[#allocation9 + $0x128] sm:$0xff]
    %v5086 = vld [vmem:[#allocation9 + $0x130] sm:$0xff]
    %v5087 = vld [vmem:[#allocation9 + $0x138] sm:$0xff]
    %v5088 = vld [vmem:[#allocation9 + $0x140] sm:$0xff]
    %v5089 = vld [vmem:[#allocation9 + $0x148] sm:$0xff]
    %v5090 = vld [vmem:[#allocation9 + $0x150] sm:$0xff]
    %v5091 = vld [vmem:[#allocation9 + $0x158] sm:$0xff]
    %v5092 = vld [vmem:[#allocation9 + $0x160] sm:$0xff]
    %v5093 = vld [vmem:[#allocation9 + $0x168] sm:$0xff]
    %v5094 = vld [vmem:[#allocation9 + $0x170] sm:$0xff]
    %v5095 = vld [vmem:[#allocation9 + $0x178] sm:$0xff]
    %v5096 = vld [vmem:[#allocation9 + $0x180] sm:$0xff]
    %v5097 = vld [vmem:[#allocation9 + $0x188] sm:$0xff]
    %v5098 = vld [vmem:[#allocation9 + $0x190] sm:$0xff]
    %v5099 = vld [vmem:[#allocation9 + $0x198] sm:$0xff]
    %v5100 = vld [vmem:[#allocation9 + $0x1a0] sm:$0xff]
    %v5101 = vld [vmem:[#allocation9 + $0x1a8] sm:$0xff]
    %v5102 = vld [vmem:[#allocation9 + $0x1b0] sm:$0xff]
    %v5103 = vld [vmem:[#allocation9 + $0x1b8] sm:$0xff]
    %v5104 = vld [vmem:[#allocation9 + $0x1c0] sm:$0xff]
    %v5105 = vld [vmem:[#allocation9 + $0x1c8] sm:$0xff]
    %v5106 = vld [vmem:[#allocation9 + $0x1d0] sm:$0xff]
    %v5107 = vld [vmem:[#allocation9 + $0x1d8] sm:$0xff]
    %v5108 = vld [vmem:[#allocation9 + $0x1e0] sm:$0xff]
    %v5109 = vld [vmem:[#allocation9 + $0x1e8] sm:$0xff]
    %v5110 = vld [vmem:[#allocation9 + $0x1f0] sm:$0xff]
    %v5111 = vld [vmem:[#allocation9 + $0x1f8] sm:$0xff]
    %v5112 = vld [vmem:[#allocation9 + $0x200] sm:$0xff]
    %v5113 = vld [vmem:[#allocation9 + $0x208] sm:$0xff]
    %v5114 = vld [vmem:[#allocation9 + $0x210] sm:$0xff]
    %v5115 = vld [vmem:[#allocation9 + $0x218] sm:$0xff]
    %v5116 = vld [vmem:[#allocation9 + $0x220] sm:$0xff]
    %v5117 = vld [vmem:[#allocation9 + $0x228] sm:$0xff]
    %v5118 = vld [vmem:[#allocation9 + $0x230] sm:$0xff]
    %v5119 = vld [vmem:[#allocation9 + $0x238] sm:$0xff]
    %v5120 = vld [vmem:[#allocation9 + $0x240] sm:$0xff]
    %v5121 = vld [vmem:[#allocation9 + $0x248] sm:$0xff]
    %v5122 = vld [vmem:[#allocation9 + $0x250] sm:$0xff]
    %v5123 = vld [vmem:[#allocation9 + $0x258] sm:$0xff]
    %v5124 = vld [vmem:[#allocation9 + $0x260] sm:$0xff]
    %v5125 = vld [vmem:[#allocation9 + $0x268] sm:$0xff]
    %v5126 = vld [vmem:[#allocation9 + $0x270] sm:$0xff]
    %v5127 = vld [vmem:[#allocation9 + $0x278] sm:$0xff]
    %v5128 = vld [vmem:[#allocation9 + $0x280] sm:$0xff]
    %v5129 = vld [vmem:[#allocation9 + $0x288] sm:$0xff]
    %v5130 = vld [vmem:[#allocation9 + $0x290] sm:$0xff]
    %v5131 = vld [vmem:[#allocation9 + $0x298] sm:$0xff]
    %v5132 = vld [vmem:[#allocation9 + $0x2a0] sm:$0xff]
    %v5133 = vld [vmem:[#allocation9 + $0x2a8] sm:$0xff]
    %v5134 = vld [vmem:[#allocation9 + $0x2b0] sm:$0xff]
    %v5135 = vld [vmem:[#allocation9 + $0x2b8] sm:$0xff]
    %v5136 = vld [vmem:[#allocation9 + $0x2c0] sm:$0xff]
    %v5137 = vld [vmem:[#allocation9 + $0x2c8] sm:$0xff]
    %v5138 = vld [vmem:[#allocation9 + $0x2d0] sm:$0xff]
    %v5139 = vld [vmem:[#allocation9 + $0x2d8] sm:$0xff]
    %v5140 = vld [vmem:[#allocation9 + $0x2e0] sm:$0xff]
    %v5141 = vld [vmem:[#allocation9 + $0x2e8] sm:$0xff]
    %v5142 = vld [vmem:[#allocation9 + $0x2f0] sm:$0xff]
    %v5143 = vld [vmem:[#allocation9 + $0x2f8] sm:$0xff]
    %v5144 = vld [vmem:[#allocation9 + $0x300] sm:$0xff]
    %v5145 = vld [vmem:[#allocation9 + $0x308] sm:$0xff]
    %v5146 = vld [vmem:[#allocation9 + $0x310] sm:$0xff]
    %v5147 = vld [vmem:[#allocation9 + $0x318] sm:$0xff]
    %v5148 = vld [vmem:[#allocation9 + $0x320] sm:$0xff]
    %v5149 = vld [vmem:[#allocation9 + $0x328] sm:$0xff]
    %v5150 = vld [vmem:[#allocation9 + $0x330] sm:$0xff]
    %v5151 = vld [vmem:[#allocation9 + $0x338] sm:$0xff]
    %v5152 = vld [vmem:[#allocation9 + $0x340] sm:$0xff]
    %v5153 = vld [vmem:[#allocation9 + $0x348] sm:$0xff]
    %v5154 = vld [vmem:[#allocation9 + $0x350] sm:$0xff]
    %v5155 = vld [vmem:[#allocation9 + $0x358] sm:$0xff]
    %v5156 = vld [vmem:[#allocation9 + $0x360] sm:$0xff]
    %v5157 = vld [vmem:[#allocation9 + $0x368] sm:$0xff]
    %v5158 = vld [vmem:[#allocation9 + $0x370] sm:$0xff]
    %v5159 = vld [vmem:[#allocation9 + $0x378] sm:$0xff]
    %v5160 = vld [vmem:[#allocation9 + $0x380] sm:$0xff]
    %v5161 = vld [vmem:[#allocation9 + $0x388] sm:$0xff]
    %v5162 = vld [vmem:[#allocation9 + $0x390] sm:$0xff]
    %v5163 = vld [vmem:[#allocation9 + $0x398] sm:$0xff]
    %v5164 = vld [vmem:[#allocation9 + $0x3a0] sm:$0xff]
    %v5165 = vld [vmem:[#allocation9 + $0x3a8] sm:$0xff]
    %v5166 = vld [vmem:[#allocation9 + $0x3b0] sm:$0xff]
    %v5167 = vld [vmem:[#allocation9 + $0x3b8] sm:$0xff]
    %v5168 = vld [vmem:[#allocation9 + $0x3c0] sm:$0xff]
    %v5169 = vld [vmem:[#allocation9 + $0x3c8] sm:$0xff]
    %v5170 = vld [vmem:[#allocation9 + $0x3d0] sm:$0xff]
    %v5171 = vld [vmem:[#allocation9 + $0x3d8] sm:$0xff]
    %v5172 = vld [vmem:[#allocation9 + $0x3e0] sm:$0xff]
    %v5173 = vld [vmem:[#allocation9 + $0x3e8] sm:$0xff]
    %v5174 = vld [vmem:[#allocation9 + $0x3f0] sm:$0xff]
    %v5175 = vld [vmem:[#allocation9 + $0x3f8] sm:$0xff]
    %v5176 = vld [vmem:[#allocation10] sm:$0xf]
    %v5178 = vlaneseq
    %v5179 = vshrl.u32 %v5178, 7
    %v5180 = vsub.s32 0, %v5179
    %v5181 = vrot.slane %v5176, %v5180
    %v5182 = vlaneseq
    %v5183 = vshrl.u32 %v5182, 7
    %v5184 = vsub.s32 1, %v5183
    %v5185 = vrot.slane %v5176, %v5184
    %v5186 = vlaneseq
    %v5187 = vshrl.u32 %v5186, 7
    %v5188 = vsub.s32 2, %v5187
    %v5189 = vrot.slane %v5176, %v5188
    %v5190 = vlaneseq
    %v5191 = vshrl.u32 %v5190, 7
    %v5192 = vsub.s32 3, %v5191
    %v5193 = vrot.slane %v5176, %v5192
    %v5326 = vunpack.c.l.b16 %v5048
    %v5327 = vunpack.c.h.b16 %v5048
    %v5328 = vunpack.c.l.b16 %v5049
    %v5329 = vunpack.c.h.b16 %v5049
    %v5330 = vunpack.c.l.b16 %v5050
    %v5331 = vunpack.c.h.b16 %v5050
    %v5332 = vunpack.c.l.b16 %v5051
    %v5333 = vunpack.c.h.b16 %v5051
    %v5334 = vunpack.c.l.b16 %v5052
    %v5335 = vunpack.c.h.b16 %v5052
    %v5336 = vunpack.c.l.b16 %v5053
    %v5337 = vunpack.c.h.b16 %v5053
    %v5338 = vunpack.c.l.b16 %v5054
    %v5339 = vunpack.c.h.b16 %v5054
    %v5340 = vunpack.c.l.b16 %v5055
    %v5341 = vunpack.c.h.b16 %v5055
    %v5342 = vunpack.c.l.b16 %v5056
    %v5343 = vunpack.c.h.b16 %v5056
    %v5344 = vunpack.c.l.b16 %v5057
    %v5345 = vunpack.c.h.b16 %v5057
    %v5346 = vunpack.c.l.b16 %v5058
    %v5347 = vunpack.c.h.b16 %v5058
    %v5348 = vunpack.c.l.b16 %v5059
    %v5349 = vunpack.c.h.b16 %v5059
    %v5350 = vunpack.c.l.b16 %v5060
    %v5351 = vunpack.c.h.b16 %v5060
    %v5352 = vunpack.c.l.b16 %v5061
    %v5353 = vunpack.c.h.b16 %v5061
    %v5354 = vunpack.c.l.b16 %v5062
    %v5355 = vunpack.c.h.b16 %v5062
    %v5356 = vunpack.c.l.b16 %v5063
    %v5357 = vunpack.c.h.b16 %v5063
    %v5358 = vunpack.c.l.b16 %v5064
    %v5359 = vunpack.c.h.b16 %v5064
    %v5360 = vunpack.c.l.b16 %v5065
    %v5361 = vunpack.c.h.b16 %v5065
    %v5362 = vunpack.c.l.b16 %v5066
    %v5363 = vunpack.c.h.b16 %v5066
    %v5364 = vunpack.c.l.b16 %v5067
    %v5365 = vunpack.c.h.b16 %v5067
    %v5366 = vunpack.c.l.b16 %v5068
    %v5367 = vunpack.c.h.b16 %v5068
    %v5368 = vunpack.c.l.b16 %v5069
    %v5369 = vunpack.c.h.b16 %v5069
    %v5370 = vunpack.c.l.b16 %v5070
    %v5371 = vunpack.c.h.b16 %v5070
    %v5372 = vunpack.c.l.b16 %v5071
    %v5373 = vunpack.c.h.b16 %v5071
    %v5374 = vunpack.c.l.b16 %v5072
    %v5375 = vunpack.c.h.b16 %v5072
    %v5376 = vunpack.c.l.b16 %v5073
    %v5377 = vunpack.c.h.b16 %v5073
    %v5378 = vunpack.c.l.b16 %v5074
    %v5379 = vunpack.c.h.b16 %v5074
    %v5380 = vunpack.c.l.b16 %v5075
    %v5381 = vunpack.c.h.b16 %v5075
    %v5382 = vunpack.c.l.b16 %v5076
    %v5383 = vunpack.c.h.b16 %v5076
    %v5384 = vunpack.c.l.b16 %v5077
    %v5385 = vunpack.c.h.b16 %v5077
    %v5386 = vunpack.c.l.b16 %v5078
    %v5387 = vunpack.c.h.b16 %v5078
    %v5388 = vunpack.c.l.b16 %v5079
    %v5389 = vunpack.c.h.b16 %v5079
    %v5390 = vunpack.c.l.b16 %v5080
    %v5391 = vunpack.c.h.b16 %v5080
    %v5392 = vunpack.c.l.b16 %v5081
    %v5393 = vunpack.c.h.b16 %v5081
    %v5394 = vunpack.c.l.b16 %v5082
    %v5395 = vunpack.c.h.b16 %v5082
    %v5396 = vunpack.c.l.b16 %v5083
    %v5397 = vunpack.c.h.b16 %v5083
    %v5398 = vunpack.c.l.b16 %v5084
    %v5399 = vunpack.c.h.b16 %v5084
    %v5400 = vunpack.c.l.b16 %v5085
    %v5401 = vunpack.c.h.b16 %v5085
    %v5402 = vunpack.c.l.b16 %v5086
    %v5403 = vunpack.c.h.b16 %v5086
    %v5404 = vunpack.c.l.b16 %v5087
    %v5405 = vunpack.c.h.b16 %v5087
    %v5406 = vunpack.c.l.b16 %v5088
    %v5407 = vunpack.c.h.b16 %v5088
    %v5408 = vunpack.c.l.b16 %v5089
    %v5409 = vunpack.c.h.b16 %v5089
    %v5410 = vunpack.c.l.b16 %v5090
    %v5411 = vunpack.c.h.b16 %v5090
    %v5412 = vunpack.c.l.b16 %v5091
    %v5413 = vunpack.c.h.b16 %v5091
    %v5414 = vunpack.c.l.b16 %v5092
    %v5415 = vunpack.c.h.b16 %v5092
    %v5416 = vunpack.c.l.b16 %v5093
    %v5417 = vunpack.c.h.b16 %v5093
    %v5418 = vunpack.c.l.b16 %v5094
    %v5419 = vunpack.c.h.b16 %v5094
    %v5420 = vunpack.c.l.b16 %v5095
    %v5421 = vunpack.c.h.b16 %v5095
    %v5422 = vunpack.c.l.b16 %v5096
    %v5423 = vunpack.c.h.b16 %v5096
    %v5424 = vunpack.c.l.b16 %v5097
    %v5425 = vunpack.c.h.b16 %v5097
    %v5426 = vunpack.c.l.b16 %v5098
    %v5427 = vunpack.c.h.b16 %v5098
    %v5428 = vunpack.c.l.b16 %v5099
    %v5429 = vunpack.c.h.b16 %v5099
    %v5430 = vunpack.c.l.b16 %v5100
    %v5431 = vunpack.c.h.b16 %v5100
    %v5432 = vunpack.c.l.b16 %v5101
    %v5433 = vunpack.c.h.b16 %v5101
    %v5434 = vunpack.c.l.b16 %v5102
    %v5435 = vunpack.c.h.b16 %v5102
    %v5436 = vunpack.c.l.b16 %v5103
    %v5437 = vunpack.c.h.b16 %v5103
    %v5438 = vunpack.c.l.b16 %v5104
    %v5439 = vunpack.c.h.b16 %v5104
    %v5440 = vunpack.c.l.b16 %v5105
    %v5441 = vunpack.c.h.b16 %v5105
    %v5442 = vunpack.c.l.b16 %v5106
    %v5443 = vunpack.c.h.b16 %v5106
    %v5444 = vunpack.c.l.b16 %v5107
    %v5445 = vunpack.c.h.b16 %v5107
    %v5446 = vunpack.c.l.b16 %v5108
    %v5447 = vunpack.c.h.b16 %v5108
    %v5448 = vunpack.c.l.b16 %v5109
    %v5449 = vunpack.c.h.b16 %v5109
    %v5450 = vunpack.c.l.b16 %v5110
    %v5451 = vunpack.c.h.b16 %v5110
    %v5452 = vunpack.c.l.b16 %v5111
    %v5453 = vunpack.c.h.b16 %v5111
    %v5454 = vunpack.c.l.b16 %v5112
    %v5455 = vunpack.c.h.b16 %v5112
    %v5456 = vunpack.c.l.b16 %v5113
    %v5457 = vunpack.c.h.b16 %v5113
    %v5458 = vunpack.c.l.b16 %v5114
    %v5459 = vunpack.c.h.b16 %v5114
    %v5460 = vunpack.c.l.b16 %v5115
    %v5461 = vunpack.c.h.b16 %v5115
    %v5462 = vunpack.c.l.b16 %v5116
    %v5463 = vunpack.c.h.b16 %v5116
    %v5464 = vunpack.c.l.b16 %v5117
    %v5465 = vunpack.c.h.b16 %v5117
    %v5466 = vunpack.c.l.b16 %v5118
    %v5467 = vunpack.c.h.b16 %v5118
    %v5468 = vunpack.c.l.b16 %v5119
    %v5469 = vunpack.c.h.b16 %v5119
    %v5470 = vunpack.c.l.b16 %v5120
    %v5471 = vunpack.c.h.b16 %v5120
    %v5472 = vunpack.c.l.b16 %v5121
    %v5473 = vunpack.c.h.b16 %v5121
    %v5474 = vunpack.c.l.b16 %v5122
    %v5475 = vunpack.c.h.b16 %v5122
    %v5476 = vunpack.c.l.b16 %v5123
    %v5477 = vunpack.c.h.b16 %v5123
    %v5478 = vunpack.c.l.b16 %v5124
    %v5479 = vunpack.c.h.b16 %v5124
    %v5480 = vunpack.c.l.b16 %v5125
    %v5481 = vunpack.c.h.b16 %v5125
    %v5482 = vunpack.c.l.b16 %v5126
    %v5483 = vunpack.c.h.b16 %v5126
    %v5484 = vunpack.c.l.b16 %v5127
    %v5485 = vunpack.c.h.b16 %v5127
    %v5486 = vunpack.c.l.b16 %v5128
    %v5487 = vunpack.c.h.b16 %v5128
    %v5488 = vunpack.c.l.b16 %v5129
    %v5489 = vunpack.c.h.b16 %v5129
    %v5490 = vunpack.c.l.b16 %v5130
    %v5491 = vunpack.c.h.b16 %v5130
    %v5492 = vunpack.c.l.b16 %v5131
    %v5493 = vunpack.c.h.b16 %v5131
    %v5494 = vunpack.c.l.b16 %v5132
    %v5495 = vunpack.c.h.b16 %v5132
    %v5496 = vunpack.c.l.b16 %v5133
    %v5497 = vunpack.c.h.b16 %v5133
    %v5498 = vunpack.c.l.b16 %v5134
    %v5499 = vunpack.c.h.b16 %v5134
    %v5500 = vunpack.c.l.b16 %v5135
    %v5501 = vunpack.c.h.b16 %v5135
    %v5502 = vunpack.c.l.b16 %v5136
    %v5503 = vunpack.c.h.b16 %v5136
    %v5504 = vunpack.c.l.b16 %v5137
    %v5505 = vunpack.c.h.b16 %v5137
    %v5506 = vunpack.c.l.b16 %v5138
    %v5507 = vunpack.c.h.b16 %v5138
    %v5508 = vunpack.c.l.b16 %v5139
    %v5509 = vunpack.c.h.b16 %v5139
    %v5510 = vunpack.c.l.b16 %v5140
    %v5511 = vunpack.c.h.b16 %v5140
    %v5512 = vunpack.c.l.b16 %v5141
    %v5513 = vunpack.c.h.b16 %v5141
    %v5514 = vunpack.c.l.b16 %v5142
    %v5515 = vunpack.c.h.b16 %v5142
    %v5516 = vunpack.c.l.b16 %v5143
    %v5517 = vunpack.c.h.b16 %v5143
    %v5518 = vunpack.c.l.b16 %v5144
    %v5519 = vunpack.c.h.b16 %v5144
    %v5520 = vunpack.c.l.b16 %v5145
    %v5521 = vunpack.c.h.b16 %v5145
    %v5522 = vunpack.c.l.b16 %v5146
    %v5523 = vunpack.c.h.b16 %v5146
    %v5524 = vunpack.c.l.b16 %v5147
    %v5525 = vunpack.c.h.b16 %v5147
    %v5526 = vunpack.c.l.b16 %v5148
    %v5527 = vunpack.c.h.b16 %v5148
    %v5528 = vunpack.c.l.b16 %v5149
    %v5529 = vunpack.c.h.b16 %v5149
    %v5530 = vunpack.c.l.b16 %v5150
    %v5531 = vunpack.c.h.b16 %v5150
    %v5532 = vunpack.c.l.b16 %v5151
    %v5533 = vunpack.c.h.b16 %v5151
    %v5534 = vunpack.c.l.b16 %v5152
    %v5535 = vunpack.c.h.b16 %v5152
    %v5536 = vunpack.c.l.b16 %v5153
    %v5537 = vunpack.c.h.b16 %v5153
    %v5538 = vunpack.c.l.b16 %v5154
    %v5539 = vunpack.c.h.b16 %v5154
    %v5540 = vunpack.c.l.b16 %v5155
    %v5541 = vunpack.c.h.b16 %v5155
    %v5542 = vunpack.c.l.b16 %v5156
    %v5543 = vunpack.c.h.b16 %v5156
    %v5544 = vunpack.c.l.b16 %v5157
    %v5545 = vunpack.c.h.b16 %v5157
    %v5546 = vunpack.c.l.b16 %v5158
    %v5547 = vunpack.c.h.b16 %v5158
    %v5548 = vunpack.c.l.b16 %v5159
    %v5549 = vunpack.c.h.b16 %v5159
    %v5550 = vunpack.c.l.b16 %v5160
    %v5551 = vunpack.c.h.b16 %v5160
    %v5552 = vunpack.c.l.b16 %v5161
    %v5553 = vunpack.c.h.b16 %v5161
    %v5554 = vunpack.c.l.b16 %v5162
    %v5555 = vunpack.c.h.b16 %v5162
    %v5556 = vunpack.c.l.b16 %v5163
    %v5557 = vunpack.c.h.b16 %v5163
    %v5558 = vunpack.c.l.b16 %v5164
    %v5559 = vunpack.c.h.b16 %v5164
    %v5560 = vunpack.c.l.b16 %v5165
    %v5561 = vunpack.c.h.b16 %v5165
    %v5562 = vunpack.c.l.b16 %v5166
    %v5563 = vunpack.c.h.b16 %v5166
    %v5564 = vunpack.c.l.b16 %v5167
    %v5565 = vunpack.c.h.b16 %v5167
    %v5566 = vunpack.c.l.b16 %v5168
    %v5567 = vunpack.c.h.b16 %v5168
    %v5568 = vunpack.c.l.b16 %v5169
    %v5569 = vunpack.c.h.b16 %v5169
    %v5570 = vunpack.c.l.b16 %v5170
    %v5571 = vunpack.c.h.b16 %v5170
    %v5572 = vunpack.c.l.b16 %v5171
    %v5573 = vunpack.c.h.b16 %v5171
    %v5574 = vunpack.c.l.b16 %v5172
    %v5575 = vunpack.c.h.b16 %v5172
    %v5576 = vunpack.c.l.b16 %v5173
    %v5577 = vunpack.c.h.b16 %v5173
    %v5578 = vunpack.c.l.b16 %v5174
    %v5579 = vunpack.c.h.b16 %v5174
    %v5580 = vunpack.c.l.b16 %v5175
    %v5581 = vunpack.c.h.b16 %v5175
    %v5582 = vpack.c.b16 %v5330, %v5326
    %v5583 = vpack.c.b16 %v5331, %v5327
    %v5584 = vpack.c.b16 %v5332, %v5328
    %v5585 = vpack.c.b16 %v5333, %v5329
    %v5586 = vpack.c.b16 %v5338, %v5334
    %v5587 = vpack.c.b16 %v5339, %v5335
    %v5588 = vpack.c.b16 %v5340, %v5336
    %v5589 = vpack.c.b16 %v5341, %v5337
    %v5590 = vpack.c.b16 %v5346, %v5342
    %v5591 = vpack.c.b16 %v5347, %v5343
    %v5592 = vpack.c.b16 %v5348, %v5344
    %v5593 = vpack.c.b16 %v5349, %v5345
    %v5594 = vpack.c.b16 %v5354, %v5350
    %v5595 = vpack.c.b16 %v5355, %v5351
    %v5596 = vpack.c.b16 %v5356, %v5352
    %v5597 = vpack.c.b16 %v5357, %v5353
    %v5598 = vpack.c.b16 %v5362, %v5358
    %v5599 = vpack.c.b16 %v5363, %v5359
    %v5600 = vpack.c.b16 %v5364, %v5360
    %v5601 = vpack.c.b16 %v5365, %v5361
    %v5602 = vpack.c.b16 %v5370, %v5366
    %v5603 = vpack.c.b16 %v5371, %v5367
    %v5604 = vpack.c.b16 %v5372, %v5368
    %v5605 = vpack.c.b16 %v5373, %v5369
    %v5606 = vpack.c.b16 %v5378, %v5374
    %v5607 = vpack.c.b16 %v5379, %v5375
    %v5608 = vpack.c.b16 %v5380, %v5376
    %v5609 = vpack.c.b16 %v5381, %v5377
    %v5610 = vpack.c.b16 %v5386, %v5382
    %v5611 = vpack.c.b16 %v5387, %v5383
    %v5612 = vpack.c.b16 %v5388, %v5384
    %v5613 = vpack.c.b16 %v5389, %v5385
    %v5614 = vpack.c.b16 %v5394, %v5390
    %v5615 = vpack.c.b16 %v5395, %v5391
    %v5616 = vpack.c.b16 %v5396, %v5392
    %v5617 = vpack.c.b16 %v5397, %v5393
    %v5618 = vpack.c.b16 %v5402, %v5398
    %v5619 = vpack.c.b16 %v5403, %v5399
    %v5620 = vpack.c.b16 %v5404, %v5400
    %v5621 = vpack.c.b16 %v5405, %v5401
    %v5622 = vpack.c.b16 %v5410, %v5406
    %v5623 = vpack.c.b16 %v5411, %v5407
    %v5624 = vpack.c.b16 %v5412, %v5408
    %v5625 = vpack.c.b16 %v5413, %v5409
    %v5626 = vpack.c.b16 %v5418, %v5414
    %v5627 = vpack.c.b16 %v5419, %v5415
    %v5628 = vpack.c.b16 %v5420, %v5416
    %v5629 = vpack.c.b16 %v5421, %v5417
    %v5630 = vpack.c.b16 %v5426, %v5422
    %v5631 = vpack.c.b16 %v5427, %v5423
    %v5632 = vpack.c.b16 %v5428, %v5424
    %v5633 = vpack.c.b16 %v5429, %v5425
    %v5634 = vpack.c.b16 %v5434, %v5430
    %v5635 = vpack.c.b16 %v5435, %v5431
    %v5636 = vpack.c.b16 %v5436, %v5432
    %v5637 = vpack.c.b16 %v5437, %v5433
    %v5638 = vpack.c.b16 %v5442, %v5438
    %v5639 = vpack.c.b16 %v5443, %v5439
    %v5640 = vpack.c.b16 %v5444, %v5440
    %v5641 = vpack.c.b16 %v5445, %v5441
    %v5642 = vpack.c.b16 %v5450, %v5446
    %v5643 = vpack.c.b16 %v5451, %v5447
    %v5644 = vpack.c.b16 %v5452, %v5448
    %v5645 = vpack.c.b16 %v5453, %v5449
    %v5646 = vpack.c.b16 %v5458, %v5454
    %v5647 = vpack.c.b16 %v5459, %v5455
    %v5648 = vpack.c.b16 %v5460, %v5456
    %v5649 = vpack.c.b16 %v5461, %v5457
    %v5650 = vpack.c.b16 %v5466, %v5462
    %v5651 = vpack.c.b16 %v5467, %v5463
    %v5652 = vpack.c.b16 %v5468, %v5464
    %v5653 = vpack.c.b16 %v5469, %v5465
    %v5654 = vpack.c.b16 %v5474, %v5470
    %v5655 = vpack.c.b16 %v5475, %v5471
    %v5656 = vpack.c.b16 %v5476, %v5472
    %v5657 = vpack.c.b16 %v5477, %v5473
    %v5658 = vpack.c.b16 %v5482, %v5478
    %v5659 = vpack.c.b16 %v5483, %v5479
    %v5660 = vpack.c.b16 %v5484, %v5480
    %v5661 = vpack.c.b16 %v5485, %v5481
    %v5662 = vpack.c.b16 %v5490, %v5486
    %v5663 = vpack.c.b16 %v5491, %v5487
    %v5664 = vpack.c.b16 %v5492, %v5488
    %v5665 = vpack.c.b16 %v5493, %v5489
    %v5666 = vpack.c.b16 %v5498, %v5494
    %v5667 = vpack.c.b16 %v5499, %v5495
    %v5668 = vpack.c.b16 %v5500, %v5496
    %v5669 = vpack.c.b16 %v5501, %v5497
    %v5670 = vpack.c.b16 %v5506, %v5502
    %v5671 = vpack.c.b16 %v5507, %v5503
    %v5672 = vpack.c.b16 %v5508, %v5504
    %v5673 = vpack.c.b16 %v5509, %v5505
    %v5674 = vpack.c.b16 %v5514, %v5510
    %v5675 = vpack.c.b16 %v5515, %v5511
    %v5676 = vpack.c.b16 %v5516, %v5512
    %v5677 = vpack.c.b16 %v5517, %v5513
    %v5678 = vpack.c.b16 %v5522, %v5518
    %v5679 = vpack.c.b16 %v5523, %v5519
    %v5680 = vpack.c.b16 %v5524, %v5520
    %v5681 = vpack.c.b16 %v5525, %v5521
    %v5682 = vpack.c.b16 %v5530, %v5526
    %v5683 = vpack.c.b16 %v5531, %v5527
    %v5684 = vpack.c.b16 %v5532, %v5528
    %v5685 = vpack.c.b16 %v5533, %v5529
    %v5686 = vpack.c.b16 %v5538, %v5534
    %v5687 = vpack.c.b16 %v5539, %v5535
    %v5688 = vpack.c.b16 %v5540, %v5536
    %v5689 = vpack.c.b16 %v5541, %v5537
    %v5690 = vpack.c.b16 %v5546, %v5542
    %v5691 = vpack.c.b16 %v5547, %v5543
    %v5692 = vpack.c.b16 %v5548, %v5544
    %v5693 = vpack.c.b16 %v5549, %v5545
    %v5694 = vpack.c.b16 %v5554, %v5550
    %v5695 = vpack.c.b16 %v5555, %v5551
    %v5696 = vpack.c.b16 %v5556, %v5552
    %v5697 = vpack.c.b16 %v5557, %v5553
    %v5698 = vpack.c.b16 %v5562, %v5558
    %v5699 = vpack.c.b16 %v5563, %v5559
    %v5700 = vpack.c.b16 %v5564, %v5560
    %v5701 = vpack.c.b16 %v5565, %v5561
    %v5702 = vpack.c.b16 %v5570, %v5566
    %v5703 = vpack.c.b16 %v5571, %v5567
    %v5704 = vpack.c.b16 %v5572, %v5568
    %v5705 = vpack.c.b16 %v5573, %v5569
    %v5706 = vpack.c.b16 %v5578, %v5574
    %v5707 = vpack.c.b16 %v5579, %v5575
    %v5708 = vpack.c.b16 %v5580, %v5576
    %v5709 = vpack.c.b16 %v5581, %v5577
    %5838 = vmatprep.subr.bf16.mxu0 %v5583
    %5839 = vmatpush1.bf16.msra.mxu0 %v5582
    %5840 = vmatprep.subr.bf16.mxu0 %v5587
    %5841 = vmatpush1.bf16.msra.mxu0 %v5586
    %5842 = vmatprep.subr.bf16.mxu0 %v5591
    %5843 = vmatpush1.bf16.msra.mxu0 %v5590
    %5844 = vmatprep.subr.bf16.mxu0 %v5595
    %5845 = vmatpush1.bf16.msra.mxu0 %v5594
    %5846 = vmatprep.subr.bf16.mxu0 %v5599
    %5847 = vmatpush1.bf16.msra.mxu0 %v5598
    %5848 = vmatprep.subr.bf16.mxu0 %v5603
    %5849 = vmatpush1.bf16.msra.mxu0 %v5602
    %5850 = vmatprep.subr.bf16.mxu0 %v5607
    %5851 = vmatpush1.bf16.msra.mxu0 %v5606
    %5852 = vmatprep.subr.bf16.mxu0 %v5611
    %5853 = vmatpush1.bf16.msra.mxu0 %v5610
    %5854 = vmatprep.subr.bf16.mxu0 %v5615
    %5855 = vmatpush1.bf16.msra.mxu0 %v5614
    %5856 = vmatprep.subr.bf16.mxu0 %v5619
    %5857 = vmatpush1.bf16.msra.mxu0 %v5618
    %5858 = vmatprep.subr.bf16.mxu0 %v5623
    %5859 = vmatpush1.bf16.msra.mxu0 %v5622
    %5860 = vmatprep.subr.bf16.mxu0 %v5627
    %5861 = vmatpush1.bf16.msra.mxu0 %v5626
    %5862 = vmatprep.subr.bf16.mxu0 %v5631
    %5863 = vmatpush1.bf16.msra.mxu0 %v5630
    %5864 = vmatprep.subr.bf16.mxu0 %v5635
    %5865 = vmatpush1.bf16.msra.mxu0 %v5634
    %5866 = vmatprep.subr.bf16.mxu0 %v5639
    %5867 = vmatpush1.bf16.msra.mxu0 %v5638
    %5868 = vmatprep.subr.bf16.mxu0 %v5643
    %5869 = vmatpush1.bf16.msra.mxu0 %v5642
    %5870 = vmatprep.mubr.bf16.mxu0 %v5045
    %5871 = vmatmul.mubr.bf16.gmra.mrb[0].mxu0 %v5044
    %v5872 = vpop.f32.mrb[0].mxu0
    %v5873 = vadd.f32 %v5181, %v5872
    %v5874 = vpop.f32.mrb[0].mxu0
    %v5875 = vadd.f32 %v5185, %v5874
    %v5876 = vpop.f32.mrb[0].mxu0
    %v5877 = vpop.f32.mrb[0].mxu0
    %5878 = vdwg.mxu0
    %5879 = vmatprep.subr.bf16.mxu0 %v5647
    %5880 = vmatpush1.bf16.msra.mxu0 %v5646
    %5881 = vmatprep.subr.bf16.mxu0 %v5651
    %5882 = vmatpush1.bf16.msra.mxu0 %v5650
    %5883 = vmatprep.subr.bf16.mxu0 %v5655
    %5884 = vmatpush1.bf16.msra.mxu0 %v5654
    %5885 = vmatprep.subr.bf16.mxu0 %v5659
    %5886 = vmatpush1.bf16.msra.mxu0 %v5658
    %5887 = vmatprep.subr.bf16.mxu0 %v5663
    %5888 = vmatpush1.bf16.msra.mxu0 %v5662
    %5889 = vmatprep.subr.bf16.mxu0 %v5667
    %5890 = vmatpush1.bf16.msra.mxu0 %v5666
    %5891 = vmatprep.subr.bf16.mxu0 %v5671
    %5892 = vmatpush1.bf16.msra.mxu0 %v5670
    %5893 = vmatprep.subr.bf16.mxu0 %v5675
    %5894 = vmatpush1.bf16.msra.mxu0 %v5674
    %5895 = vmatprep.subr.bf16.mxu0 %v5679
    %5896 = vmatpush1.bf16.msra.mxu0 %v5678
    %5897 = vmatprep.subr.bf16.mxu0 %v5683
    %5898 = vmatpush1.bf16.msra.mxu0 %v5682
    %5899 = vmatprep.subr.bf16.mxu0 %v5687
    %5900 = vmatpush1.bf16.msra.mxu0 %v5686
    %5901 = vmatprep.subr.bf16.mxu0 %v5691
    %5902 = vmatpush1.bf16.msra.mxu0 %v5690
    %5903 = vmatprep.subr.bf16.mxu0 %v5695
    %5904 = vmatpush1.bf16.msra.mxu0 %v5694
    %5905 = vmatprep.subr.bf16.mxu0 %v5699
    %5906 = vmatpush1.bf16.msra.mxu0 %v5698
    %5907 = vmatprep.subr.bf16.mxu0 %v5703
    %5908 = vmatpush1.bf16.msra.mxu0 %v5702
    %5909 = vmatprep.subr.bf16.mxu0 %v5707
    %5910 = vmatpush1.bf16.msra.mxu0 %v5706
    %5911 = vmatprep.mubr.bf16.mxu0 %v5047
    %5912 = vmatmul.mubr.bf16.gmra.mrb[0].mxu0 %v5046
    %v5913 = vpop.f32.mrb[0].mxu0
    %v5914 = vadd.f32 %v5873, %v5913
    %v5915 = vpop.f32.mrb[0].mxu0
    %v5916 = vadd.f32 %v5875, %v5915
    %v5917 = vpop.f32.mrb[0].mxu0
    %v5918 = vpop.f32.mrb[0].mxu0
    %5919 = vdwg.mxu0
    %5920 = vmatprep.subr.bf16.mxu0 %v5585
    %5921 = vmatpush1.bf16.msra.mxu0 %v5584
    %5922 = vmatprep.subr.bf16.mxu0 %v5589
    %5923 = vmatpush1.bf16.msra.mxu0 %v5588
    %5924 = vmatprep.subr.bf16.mxu0 %v5593
    %5925 = vmatpush1.bf16.msra.mxu0 %v5592
    %5926 = vmatprep.subr.bf16.mxu0 %v5597
    %5927 = vmatpush1.bf16.msra.mxu0 %v5596
    %5928 = vmatprep.subr.bf16.mxu0 %v5601
    %5929 = vmatpush1.bf16.msra.mxu0 %v5600
    %5930 = vmatprep.subr.bf16.mxu0 %v5605
    %5931 = vmatpush1.bf16.msra.mxu0 %v5604
    %5932 = vmatprep.subr.bf16.mxu0 %v5609
    %5933 = vmatpush1.bf16.msra.mxu0 %v5608
    %5934 = vmatprep.subr.bf16.mxu0 %v5613
    %5935 = vmatpush1.bf16.msra.mxu0 %v5612
    %5936 = vmatprep.subr.bf16.mxu0 %v5617
    %5937 = vmatpush1.bf16.msra.mxu0 %v5616
    %5938 = vmatprep.subr.bf16.mxu0 %v5621
    %5939 = vmatpush1.bf16.msra.mxu0 %v5620
    %5940 = vmatprep.subr.bf16.mxu0 %v5625
    %5941 = vmatpush1.bf16.msra.mxu0 %v5624
    %5942 = vmatprep.subr.bf16.mxu0 %v5629
    %5943 = vmatpush1.bf16.msra.mxu0 %v5628
    %5944 = vmatprep.subr.bf16.mxu0 %v5633
    %5945 = vmatpush1.bf16.msra.mxu0 %v5632
    %5946 = vmatprep.subr.bf16.mxu0 %v5637
    %5947 = vmatpush1.bf16.msra.mxu0 %v5636
    %5948 = vmatprep.subr.bf16.mxu0 %v5641
    %5949 = vmatpush1.bf16.msra.mxu0 %v5640
    %5950 = vmatprep.subr.bf16.mxu0 %v5645
    %5951 = vmatpush1.bf16.msra.mxu0 %v5644
    %5952 = vmatprep.mubr.bf16.mxu0 %v5045
    %5953 = vmatmul.mubr.bf16.gmra.mrb[0].mxu0 %v5044
    %v5954 = vpop.f32.mrb[0].mxu0
    %v5955 = vadd.f32 %v5189, %v5954
    %v5956 = vpop.f32.mrb[0].mxu0
    %v5957 = vadd.f32 %v5193, %v5956
    %v5958 = vpop.f32.mrb[0].mxu0
    %v5959 = vpop.f32.mrb[0].mxu0
    %5960 = vdwg.mxu0
    %5961 = vmatprep.subr.bf16.mxu0 %v5649
    %5962 = vmatpush1.bf16.msra.mxu0 %v5648
    %5963 = vmatprep.subr.bf16.mxu0 %v5653
    %5964 = vmatpush1.bf16.msra.mxu0 %v5652
    %5965 = vmatprep.subr.bf16.mxu0 %v5657
    %5966 = vmatpush1.bf16.msra.mxu0 %v5656
    %5967 = vmatprep.subr.bf16.mxu0 %v5661
    %5968 = vmatpush1.bf16.msra.mxu0 %v5660
    %5969 = vmatprep.subr.bf16.mxu0 %v5665
    %5970 = vmatpush1.bf16.msra.mxu0 %v5664
    %5971 = vmatprep.subr.bf16.mxu0 %v5669
    %5972 = vmatpush1.bf16.msra.mxu0 %v5668
    %5973 = vmatprep.subr.bf16.mxu0 %v5673
    %5974 = vmatpush1.bf16.msra.mxu0 %v5672
    %5975 = vmatprep.subr.bf16.mxu0 %v5677
    %5976 = vmatpush1.bf16.msra.mxu0 %v5676
    %5977 = vmatprep.subr.bf16.mxu0 %v5681
    %5978 = vmatpush1.bf16.msra.mxu0 %v5680
    %5979 = vmatprep.subr.bf16.mxu0 %v5685
    %5980 = vmatpush1.bf16.msra.mxu0 %v5684
    %5981 = vmatprep.subr.bf16.mxu0 %v5689
    %5982 = vmatpush1.bf16.msra.mxu0 %v5688
    %5983 = vmatprep.subr.bf16.mxu0 %v5693
    %5984 = vmatpush1.bf16.msra.mxu0 %v5692
    %5985 = vmatprep.subr.bf16.mxu0 %v5697
    %5986 = vmatpush1.bf16.msra.mxu0 %v5696
    %5987 = vmatprep.subr.bf16.mxu0 %v5701
    %5988 = vmatpush1.bf16.msra.mxu0 %v5700
    %5989 = vmatprep.subr.bf16.mxu0 %v5705
    %5990 = vmatpush1.bf16.msra.mxu0 %v5704
    %5991 = vmatprep.subr.bf16.mxu0 %v5709
    %5992 = vmatpush1.bf16.msra.mxu0 %v5708
    %5993 = vmatprep.mubr.bf16.mxu0 %v5047
    %5994 = vmatmul.mubr.bf16.gmra.mrb[0].mxu0 %v5046
    %v5995 = vpop.f32.mrb[0].mxu0
    %v5996 = vadd.f32 %v5955, %v5995
    %v5997 = vpop.f32.mrb[0].mxu0
    %v5998 = vadd.f32 %v5957, %v5997
    %v5999 = vpop.f32.mrb[0].mxu0
    %v6000 = vpop.f32.mrb[0].mxu0
    %6001 = vdwg.mxu0
    %v6002 = vpack.c.bf16 %v5914, %v5914
    %v6003 = vpack.c.bf16 %v5916, %v5916
    %v6004 = vpack.c.bf16 %v5996, %v5996
    %v6005 = vpack.c.bf16 %v5998, %v5998
    %v6006 = vld [vmem:[#allocation12] sm:$0xff]
    %v6007 = vld [vmem:[#allocation12 + $0x8] sm:$0xff]
    %v6008 = vld [vmem:[#allocation12 + $0x10] sm:$0xff]
    %v6009 = vld [vmem:[#allocation12 + $0x18] sm:$0xf]
    %v6010 = vld [vmem:[#allocation12 + $0x1c] sm:$0xff]
    %v6011 = vld [vmem:[#allocation12 + $0x24] sm:$0xff]
    %v6012 = vld [vmem:[#allocation12 + $0x2c] sm:$0xff]
    %v6013 = vld [vmem:[#allocation12 + $0x34] sm:$0xf]
    %v6014 = vld [vmem:[#allocation12 + $0x38] sm:$0xff]
    %v6015 = vld [vmem:[#allocation12 + $0x40] sm:$0xff]
    %v6016 = vld [vmem:[#allocation12 + $0x48] sm:$0xff]
    %v6017 = vld [vmem:[#allocation12 + $0x50] sm:$0xf]
    %v6018 = vld [vmem:[#allocation12 + $0x54] sm:$0xff]
    %v6019 = vld [vmem:[#allocation12 + $0x5c] sm:$0xff]
    %v6020 = vld [vmem:[#allocation12 + $0x64] sm:$0xff]
    %v6021 = vld [vmem:[#allocation12 + $0x6c] sm:$0xf]
    %v6022 = vld [vmem:[#allocation12 + $0x70] sm:$0xff]
    %v6023 = vld [vmem:[#allocation12 + $0x78] sm:$0xff]
    %v6024 = vld [vmem:[#allocation12 + $0x80] sm:$0xff]
    %v6025 = vld [vmem:[#allocation12 + $0x88] sm:$0xf]
    %v6026 = vld [vmem:[#allocation12 + $0x8c] sm:$0xff]
    %v6027 = vld [vmem:[#allocation12 + $0x94] sm:$0xff]
    %v6028 = vld [vmem:[#allocation12 + $0x9c] sm:$0xff]
    %v6029 = vld [vmem:[#allocation12 + $0xa4] sm:$0xf]
    %v6030 = vld [vmem:[#allocation12 + $0xa8] sm:$0xff]
    %v6031 = vld [vmem:[#allocation12 + $0xb0] sm:$0xff]
    %v6032 = vld [vmem:[#allocation12 + $0xb8] sm:$0xff]
    %v6033 = vld [vmem:[#allocation12 + $0xc0] sm:$0xf]
    %v6034 = vld [vmem:[#allocation12 + $0xc4] sm:$0xff]
    %v6035 = vld [vmem:[#allocation12 + $0xcc] sm:$0xff]
    %v6036 = vld [vmem:[#allocation12 + $0xd4] sm:$0xff]
    %v6037 = vld [vmem:[#allocation12 + $0xdc] sm:$0xf]
    %v6038 = vld [vmem:[#allocation12 + $0xe0] sm:$0xff]
    %v6039 = vld [vmem:[#allocation12 + $0xe8] sm:$0xff]
    %v6040 = vld [vmem:[#allocation12 + $0xf0] sm:$0xff]
    %v6041 = vld [vmem:[#allocation12 + $0xf8] sm:$0xf]
    %v6042 = vld [vmem:[#allocation12 + $0xfc] sm:$0xff]
    %v6043 = vld [vmem:[#allocation12 + $0x104] sm:$0xff]
    %v6044 = vld [vmem:[#allocation12 + $0x10c] sm:$0xff]
    %v6045 = vld [vmem:[#allocation12 + $0x114] sm:$0xf]
    %v6046 = vld [vmem:[#allocation12 + $0x118] sm:$0xff]
    %v6047 = vld [vmem:[#allocation12 + $0x120] sm:$0xff]
    %v6048 = vld [vmem:[#allocation12 + $0x128] sm:$0xff]
    %v6049 = vld [vmem:[#allocation12 + $0x130] sm:$0xf]
    %v6050 = vld [vmem:[#allocation12 + $0x134] sm:$0xff]
    %v6051 = vld [vmem:[#allocation12 + $0x13c] sm:$0xff]
    %v6052 = vld [vmem:[#allocation12 + $0x144] sm:$0xff]
    %v6053 = vld [vmem:[#allocation12 + $0x14c] sm:$0xf]
    %v6054 = vld [vmem:[#allocation12 + $0x150] sm:$0xff]
    %v6055 = vld [vmem:[#allocation12 + $0x158] sm:$0xff]
    %v6056 = vld [vmem:[#allocation12 + $0x160] sm:$0xff]
    %v6057 = vld [vmem:[#allocation12 + $0x168] sm:$0xf]
    %v6058 = vld [vmem:[#allocation12 + $0x16c] sm:$0xff]
    %v6059 = vld [vmem:[#allocation12 + $0x174] sm:$0xff]
    %v6060 = vld [vmem:[#allocation12 + $0x17c] sm:$0xff]
    %v6061 = vld [vmem:[#allocation12 + $0x184] sm:$0xf]
    %v6062 = vld [vmem:[#allocation12 + $0x188] sm:$0xff]
    %v6063 = vld [vmem:[#allocation12 + $0x190] sm:$0xff]
    %v6064 = vld [vmem:[#allocation12 + $0x198] sm:$0xff]
    %v6065 = vld [vmem:[#allocation12 + $0x1a0] sm:$0xf]
    %v6066 = vld [vmem:[#allocation12 + $0x1a4] sm:$0xff]
    %v6067 = vld [vmem:[#allocation12 + $0x1ac] sm:$0xff]
    %v6068 = vld [vmem:[#allocation12 + $0x1b4] sm:$0xff]
    %v6069 = vld [vmem:[#allocation12 + $0x1bc] sm:$0xf]
    %v6070 = vld [vmem:[#allocation12 + $0x1c0] sm:$0xff]
    %v6071 = vld [vmem:[#allocation12 + $0x1c8] sm:$0xff]
    %v6072 = vld [vmem:[#allocation12 + $0x1d0] sm:$0xff]
    %v6073 = vld [vmem:[#allocation12 + $0x1d8] sm:$0xf]
    %v6074 = vld [vmem:[#allocation12 + $0x1dc] sm:$0xff]
    %v6075 = vld [vmem:[#allocation12 + $0x1e4] sm:$0xff]
    %v6076 = vld [vmem:[#allocation12 + $0x1ec] sm:$0xff]
    %v6077 = vld [vmem:[#allocation12 + $0x1f4] sm:$0xf]
    %v6078 = vld [vmem:[#allocation12 + $0x1f8] sm:$0xff]
    %v6079 = vld [vmem:[#allocation12 + $0x200] sm:$0xff]
    %v6080 = vld [vmem:[#allocation12 + $0x208] sm:$0xff]
    %v6081 = vld [vmem:[#allocation12 + $0x210] sm:$0xf]
    %v6082 = vld [vmem:[#allocation12 + $0x214] sm:$0xff]
    %v6083 = vld [vmem:[#allocation12 + $0x21c] sm:$0xff]
    %v6084 = vld [vmem:[#allocation12 + $0x224] sm:$0xff]
    %v6085 = vld [vmem:[#allocation12 + $0x22c] sm:$0xf]
    %v6086 = vld [vmem:[#allocation12 + $0x230] sm:$0xff]
    %v6087 = vld [vmem:[#allocation12 + $0x238] sm:$0xff]
    %v6088 = vld [vmem:[#allocation12 + $0x240] sm:$0xff]
    %v6089 = vld [vmem:[#allocation12 + $0x248] sm:$0xf]
    %v6090 = vld [vmem:[#allocation12 + $0x24c] sm:$0xff]
    %v6091 = vld [vmem:[#allocation12 + $0x254] sm:$0xff]
    %v6092 = vld [vmem:[#allocation12 + $0x25c] sm:$0xff]
    %v6093 = vld [vmem:[#allocation12 + $0x264] sm:$0xf]
    %v6094 = vld [vmem:[#allocation12 + $0x268] sm:$0xff]
    %v6095 = vld [vmem:[#allocation12 + $0x270] sm:$0xff]
    %v6096 = vld [vmem:[#allocation12 + $0x278] sm:$0xff]
    %v6097 = vld [vmem:[#allocation12 + $0x280] sm:$0xf]
    %v6098 = vld [vmem:[#allocation12 + $0x284] sm:$0xff]
    %v6099 = vld [vmem:[#allocation12 + $0x28c] sm:$0xff]
    %v6100 = vld [vmem:[#allocation12 + $0x294] sm:$0xff]
    %v6101 = vld [vmem:[#allocation12 + $0x29c] sm:$0xf]
    %v6102 = vld [vmem:[#allocation12 + $0x2a0] sm:$0xff]
    %v6103 = vld [vmem:[#allocation12 + $0x2a8] sm:$0xff]
    %v6104 = vld [vmem:[#allocation12 + $0x2b0] sm:$0xff]
    %v6105 = vld [vmem:[#allocation12 + $0x2b8] sm:$0xf]
    %v6106 = vld [vmem:[#allocation12 + $0x2bc] sm:$0xff]
    %v6107 = vld [vmem:[#allocation12 + $0x2c4] sm:$0xff]
    %v6108 = vld [vmem:[#allocation12 + $0x2cc] sm:$0xff]
    %v6109 = vld [vmem:[#allocation12 + $0x2d4] sm:$0xf]
    %v6110 = vld [vmem:[#allocation12 + $0x2d8] sm:$0xff]
    %v6111 = vld [vmem:[#allocation12 + $0x2e0] sm:$0xff]
    %v6112 = vld [vmem:[#allocation12 + $0x2e8] sm:$0xff]
    %v6113 = vld [vmem:[#allocation12 + $0x2f0] sm:$0xf]
    %v6114 = vld [vmem:[#allocation12 + $0x2f4] sm:$0xff]
    %v6115 = vld [vmem:[#allocation12 + $0x2fc] sm:$0xff]
    %v6116 = vld [vmem:[#allocation12 + $0x304] sm:$0xff]
    %v6117 = vld [vmem:[#allocation12 + $0x30c] sm:$0xf]
    %v6118 = vld [vmem:[#allocation12 + $0x310] sm:$0xff]
    %v6119 = vld [vmem:[#allocation12 + $0x318] sm:$0xff]
    %v6120 = vld [vmem:[#allocation12 + $0x320] sm:$0xff]
    %v6121 = vld [vmem:[#allocation12 + $0x328] sm:$0xf]
    %v6122 = vld [vmem:[#allocation12 + $0x32c] sm:$0xff]
    %v6123 = vld [vmem:[#allocation12 + $0x334] sm:$0xff]
    %v6124 = vld [vmem:[#allocation12 + $0x33c] sm:$0xff]
    %v6125 = vld [vmem:[#allocation12 + $0x344] sm:$0xf]
    %v6126 = vld [vmem:[#allocation12 + $0x348] sm:$0xff]
    %v6127 = vld [vmem:[#allocation12 + $0x350] sm:$0xff]
    %v6128 = vld [vmem:[#allocation12 + $0x358] sm:$0xff]
    %v6129 = vld [vmem:[#allocation12 + $0x360] sm:$0xf]
    %v6130 = vld [vmem:[#allocation12 + $0x364] sm:$0xff]
    %v6131 = vld [vmem:[#allocation12 + $0x36c] sm:$0xff]
    %v6132 = vld [vmem:[#allocation12 + $0x374] sm:$0xff]
    %v6133 = vld [vmem:[#allocation12 + $0x37c] sm:$0xf]
    %v6134 = vld [vmem:[#allocation12 + $0x380] sm:$0xff]
    %v6135 = vld [vmem:[#allocation12 + $0x388] sm:$0xff]
    %v6136 = vld [vmem:[#allocation12 + $0x390] sm:$0xff]
    %v6137 = vld [vmem:[#allocation12 + $0x398] sm:$0xf]
    %v6138 = vld [vmem:[#allocation12 + $0x39c] sm:$0xff]
    %v6139 = vld [vmem:[#allocation12 + $0x3a4] sm:$0xff]
    %v6140 = vld [vmem:[#allocation12 + $0x3ac] sm:$0xff]
    %v6141 = vld [vmem:[#allocation12 + $0x3b4] sm:$0xf]
    %v6142 = vld [vmem:[#allocation12 + $0x3b8] sm:$0xff]
    %v6143 = vld [vmem:[#allocation12 + $0x3c0] sm:$0xff]
    %v6144 = vld [vmem:[#allocation12 + $0x3c8] sm:$0xff]
    %v6145 = vld [vmem:[#allocation12 + $0x3d0] sm:$0xf]
    %v6146 = vld [vmem:[#allocation12 + $0x3d4] sm:$0xff]
    %v6147 = vld [vmem:[#allocation12 + $0x3dc] sm:$0xff]
    %v6148 = vld [vmem:[#allocation12 + $0x3e4] sm:$0xff]
    %v6149 = vld [vmem:[#allocation12 + $0x3ec] sm:$0xf]
    %v6150 = vld [vmem:[#allocation12 + $0x3f0] sm:$0xff]
    %v6151 = vld [vmem:[#allocation12 + $0x3f8] sm:$0xff]
    %v6152 = vld [vmem:[#allocation12 + $0x400] sm:$0xff]
    %v6153 = vld [vmem:[#allocation12 + $0x408] sm:$0xf]
    %v6154 = vld [vmem:[#allocation12 + $0x40c] sm:$0xff]
    %v6155 = vld [vmem:[#allocation12 + $0x414] sm:$0xff]
    %v6156 = vld [vmem:[#allocation12 + $0x41c] sm:$0xff]
    %v6157 = vld [vmem:[#allocation12 + $0x424] sm:$0xf]
    %v6158 = vld [vmem:[#allocation12 + $0x428] sm:$0xff]
    %v6159 = vld [vmem:[#allocation12 + $0x430] sm:$0xff]
    %v6160 = vld [vmem:[#allocation12 + $0x438] sm:$0xff]
    %v6161 = vld [vmem:[#allocation12 + $0x440] sm:$0xf]
    %v6162 = vld [vmem:[#allocation12 + $0x444] sm:$0xff]
    %v6163 = vld [vmem:[#allocation12 + $0x44c] sm:$0xff]
    %v6164 = vld [vmem:[#allocation12 + $0x454] sm:$0xff]
    %v6165 = vld [vmem:[#allocation12 + $0x45c] sm:$0xf]
    %v6166 = vld [vmem:[#allocation12 + $0x460] sm:$0xff]
    %v6167 = vld [vmem:[#allocation12 + $0x468] sm:$0xff]
    %v6168 = vld [vmem:[#allocation12 + $0x470] sm:$0xff]
    %v6169 = vld [vmem:[#allocation12 + $0x478] sm:$0xf]
    %v6170 = vld [vmem:[#allocation12 + $0x47c] sm:$0xff]
    %v6171 = vld [vmem:[#allocation12 + $0x484] sm:$0xff]
    %v6172 = vld [vmem:[#allocation12 + $0x48c] sm:$0xff]
    %v6173 = vld [vmem:[#allocation12 + $0x494] sm:$0xf]
    %v6174 = vld [vmem:[#allocation12 + $0x498] sm:$0xff]
    %v6175 = vld [vmem:[#allocation12 + $0x4a0] sm:$0xff]
    %v6176 = vld [vmem:[#allocation12 + $0x4a8] sm:$0xff]
    %v6177 = vld [vmem:[#allocation12 + $0x4b0] sm:$0xf]
    %v6178 = vld [vmem:[#allocation12 + $0x4b4] sm:$0xff]
    %v6179 = vld [vmem:[#allocation12 + $0x4bc] sm:$0xff]
    %v6180 = vld [vmem:[#allocation12 + $0x4c4] sm:$0xff]
    %v6181 = vld [vmem:[#allocation12 + $0x4cc] sm:$0xf]
    %v6182 = vld [vmem:[#allocation12 + $0x4d0] sm:$0xff]
    %v6183 = vld [vmem:[#allocation12 + $0x4d8] sm:$0xff]
    %v6184 = vld [vmem:[#allocation12 + $0x4e0] sm:$0xff]
    %v6185 = vld [vmem:[#allocation12 + $0x4e8] sm:$0xf]
    %v6186 = vld [vmem:[#allocation12 + $0x4ec] sm:$0xff]
    %v6187 = vld [vmem:[#allocation12 + $0x4f4] sm:$0xff]
    %v6188 = vld [vmem:[#allocation12 + $0x4fc] sm:$0xff]
    %v6189 = vld [vmem:[#allocation12 + $0x504] sm:$0xf]
    %v6190 = vld [vmem:[#allocation12 + $0x508] sm:$0xff]
    %v6191 = vld [vmem:[#allocation12 + $0x510] sm:$0xff]
    %v6192 = vld [vmem:[#allocation12 + $0x518] sm:$0xff]
    %v6193 = vld [vmem:[#allocation12 + $0x520] sm:$0xf]
    %v6194 = vld [vmem:[#allocation12 + $0x524] sm:$0xff]
    %v6195 = vld [vmem:[#allocation12 + $0x52c] sm:$0xff]
    %v6196 = vld [vmem:[#allocation12 + $0x534] sm:$0xff]
    %v6197 = vld [vmem:[#allocation12 + $0x53c] sm:$0xf]
    %v6198 = vld [vmem:[#allocation12 + $0x540] sm:$0xff]
    %v6199 = vld [vmem:[#allocation12 + $0x548] sm:$0xff]
    %v6200 = vld [vmem:[#allocation12 + $0x550] sm:$0xff]
    %v6201 = vld [vmem:[#allocation12 + $0x558] sm:$0xf]
    %v6202 = vld [vmem:[#allocation12 + $0x55c] sm:$0xff]
    %v6203 = vld [vmem:[#allocation12 + $0x564] sm:$0xff]
    %v6204 = vld [vmem:[#allocation12 + $0x56c] sm:$0xff]
    %v6205 = vld [vmem:[#allocation12 + $0x574] sm:$0xf]
    %v6206 = vld [vmem:[#allocation12 + $0x578] sm:$0xff]
    %v6207 = vld [vmem:[#allocation12 + $0x580] sm:$0xff]
    %v6208 = vld [vmem:[#allocation12 + $0x588] sm:$0xff]
    %v6209 = vld [vmem:[#allocation12 + $0x590] sm:$0xf]
    %v6210 = vld [vmem:[#allocation12 + $0x594] sm:$0xff]
    %v6211 = vld [vmem:[#allocation12 + $0x59c] sm:$0xff]
    %v6212 = vld [vmem:[#allocation12 + $0x5a4] sm:$0xff]
    %v6213 = vld [vmem:[#allocation12 + $0x5ac] sm:$0xf]
    %v6214 = vld [vmem:[#allocation12 + $0x5b0] sm:$0xff]
    %v6215 = vld [vmem:[#allocation12 + $0x5b8] sm:$0xff]
    %v6216 = vld [vmem:[#allocation12 + $0x5c0] sm:$0xff]
    %v6217 = vld [vmem:[#allocation12 + $0x5c8] sm:$0xf]
    %v6218 = vld [vmem:[#allocation12 + $0x5cc] sm:$0xff]
    %v6219 = vld [vmem:[#allocation12 + $0x5d4] sm:$0xff]
    %v6220 = vld [vmem:[#allocation12 + $0x5dc] sm:$0xff]
    %v6221 = vld [vmem:[#allocation12 + $0x5e4] sm:$0xf]
    %v6222 = vld [vmem:[#allocation12 + $0x5e8] sm:$0xff]
    %v6223 = vld [vmem:[#allocation12 + $0x5f0] sm:$0xff]
    %v6224 = vld [vmem:[#allocation12 + $0x5f8] sm:$0xff]
    %v6225 = vld [vmem:[#allocation12 + $0x600] sm:$0xf]
    %v6226 = vld [vmem:[#allocation12 + $0x604] sm:$0xff]
    %v6227 = vld [vmem:[#allocation12 + $0x60c] sm:$0xff]
    %v6228 = vld [vmem:[#allocation12 + $0x614] sm:$0xff]
    %v6229 = vld [vmem:[#allocation12 + $0x61c] sm:$0xf]
    %v6230 = vld [vmem:[#allocation12 + $0x620] sm:$0xff]
    %v6231 = vld [vmem:[#allocation12 + $0x628] sm:$0xff]
    %v6232 = vld [vmem:[#allocation12 + $0x630] sm:$0xff]
    %v6233 = vld [vmem:[#allocation12 + $0x638] sm:$0xf]
    %v6234 = vld [vmem:[#allocation12 + $0x63c] sm:$0xff]
    %v6235 = vld [vmem:[#allocation12 + $0x644] sm:$0xff]
    %v6236 = vld [vmem:[#allocation12 + $0x64c] sm:$0xff]
    %v6237 = vld [vmem:[#allocation12 + $0x654] sm:$0xf]
    %v6238 = vld [vmem:[#allocation12 + $0x658] sm:$0xff]
    %v6239 = vld [vmem:[#allocation12 + $0x660] sm:$0xff]
    %v6240 = vld [vmem:[#allocation12 + $0x668] sm:$0xff]
    %v6241 = vld [vmem:[#allocation12 + $0x670] sm:$0xf]
    %v6242 = vld [vmem:[#allocation12 + $0x674] sm:$0xff]
    %v6243 = vld [vmem:[#allocation12 + $0x67c] sm:$0xff]
    %v6244 = vld [vmem:[#allocation12 + $0x684] sm:$0xff]
    %v6245 = vld [vmem:[#allocation12 + $0x68c] sm:$0xf]
    %v6246 = vld [vmem:[#allocation12 + $0x690] sm:$0xff]
    %v6247 = vld [vmem:[#allocation12 + $0x698] sm:$0xff]
    %v6248 = vld [vmem:[#allocation12 + $0x6a0] sm:$0xff]
    %v6249 = vld [vmem:[#allocation12 + $0x6a8] sm:$0xf]
    %v6250 = vld [vmem:[#allocation12 + $0x6ac] sm:$0xff]
    %v6251 = vld [vmem:[#allocation12 + $0x6b4] sm:$0xff]
    %v6252 = vld [vmem:[#allocation12 + $0x6bc] sm:$0xff]
    %v6253 = vld [vmem:[#allocation12 + $0x6c4] sm:$0xf]
    %v6254 = vld [vmem:[#allocation12 + $0x6c8] sm:$0xff]
    %v6255 = vld [vmem:[#allocation12 + $0x6d0] sm:$0xff]
    %v6256 = vld [vmem:[#allocation12 + $0x6d8] sm:$0xff]
    %v6257 = vld [vmem:[#allocation12 + $0x6e0] sm:$0xf]
    %v6258 = vld [vmem:[#allocation12 + $0x6e4] sm:$0xff]
    %v6259 = vld [vmem:[#allocation12 + $0x6ec] sm:$0xff]
    %v6260 = vld [vmem:[#allocation12 + $0x6f4] sm:$0xff]
    %v6261 = vld [vmem:[#allocation12 + $0x6fc] sm:$0xf]
    %v6262 = vld [vmem:[#allocation13] sm:$0xff]
    %v6264 = vlaneseq
    %v6265 = vshrl.u32 %v6264, 7
    %v6266 = vsub.s32 0, %v6265
    %v6267 = vrot.slane %v6262, %v6266
    %v6268 = vlaneseq
    %v6269 = vshrl.u32 %v6268, 7
    %v6270 = vsub.s32 1, %v6269
    %v6271 = vrot.slane %v6262, %v6270
    %v6272 = vlaneseq
    %v6273 = vshrl.u32 %v6272, 7
    %v6274 = vsub.s32 2, %v6273
    %v6275 = vrot.slane %v6262, %v6274
    %v6276 = vlaneseq
    %v6277 = vshrl.u32 %v6276, 7
    %v6278 = vsub.s32 3, %v6277
    %v6279 = vrot.slane %v6262, %v6278
    %v6280 = vlaneseq
    %v6281 = vshrl.u32 %v6280, 7
    %v6282 = vsub.s32 4, %v6281
    %v6283 = vrot.slane %v6262, %v6282
    %v6284 = vlaneseq
    %v6285 = vshrl.u32 %v6284, 7
    %v6286 = vsub.s32 5, %v6285
    %v6287 = vrot.slane %v6262, %v6286
    %v6288 = vlaneseq
    %v6289 = vshrl.u32 %v6288, 7
    %v6290 = vsub.s32 6, %v6289
    %v6291 = vrot.slane %v6262, %v6290
    %v6555 = vunpack.c.l.b16 %v6006
    %v6556 = vunpack.c.h.b16 %v6006
    %v6557 = vunpack.c.l.b16 %v6007
    %v6558 = vunpack.c.h.b16 %v6007
    %v6559 = vunpack.c.l.b16 %v6008
    %v6560 = vunpack.c.h.b16 %v6008
    %v6561 = vunpack.c.l.b16 %v6009
    %v6562 = vunpack.c.l.b16 %v6010
    %v6563 = vunpack.c.h.b16 %v6010
    %v6564 = vunpack.c.l.b16 %v6011
    %v6565 = vunpack.c.h.b16 %v6011
    %v6566 = vunpack.c.l.b16 %v6012
    %v6567 = vunpack.c.h.b16 %v6012
    %v6568 = vunpack.c.l.b16 %v6013
    %v6569 = vunpack.c.l.b16 %v6014
    %v6570 = vunpack.c.h.b16 %v6014
    %v6571 = vunpack.c.l.b16 %v6015
    %v6572 = vunpack.c.h.b16 %v6015
    %v6573 = vunpack.c.l.b16 %v6016
    %v6574 = vunpack.c.h.b16 %v6016
    %v6575 = vunpack.c.l.b16 %v6017
    %v6576 = vunpack.c.l.b16 %v6018
    %v6577 = vunpack.c.h.b16 %v6018
    %v6578 = vunpack.c.l.b16 %v6019
    %v6579 = vunpack.c.h.b16 %v6019
    %v6580 = vunpack.c.l.b16 %v6020
    %v6581 = vunpack.c.h.b16 %v6020
    %v6582 = vunpack.c.l.b16 %v6021
    %v6583 = vunpack.c.l.b16 %v6022
    %v6584 = vunpack.c.h.b16 %v6022
    %v6585 = vunpack.c.l.b16 %v6023
    %v6586 = vunpack.c.h.b16 %v6023
    %v6587 = vunpack.c.l.b16 %v6024
    %v6588 = vunpack.c.h.b16 %v6024
    %v6589 = vunpack.c.l.b16 %v6025
    %v6590 = vunpack.c.l.b16 %v6026
    %v6591 = vunpack.c.h.b16 %v6026
    %v6592 = vunpack.c.l.b16 %v6027
    %v6593 = vunpack.c.h.b16 %v6027
    %v6594 = vunpack.c.l.b16 %v6028
    %v6595 = vunpack.c.h.b16 %v6028
    %v6596 = vunpack.c.l.b16 %v6029
    %v6597 = vunpack.c.l.b16 %v6030
    %v6598 = vunpack.c.h.b16 %v6030
    %v6599 = vunpack.c.l.b16 %v6031
    %v6600 = vunpack.c.h.b16 %v6031
    %v6601 = vunpack.c.l.b16 %v6032
    %v6602 = vunpack.c.h.b16 %v6032
    %v6603 = vunpack.c.l.b16 %v6033
    %v6604 = vunpack.c.l.b16 %v6034
    %v6605 = vunpack.c.h.b16 %v6034
    %v6606 = vunpack.c.l.b16 %v6035
    %v6607 = vunpack.c.h.b16 %v6035
    %v6608 = vunpack.c.l.b16 %v6036
    %v6609 = vunpack.c.h.b16 %v6036
    %v6610 = vunpack.c.l.b16 %v6037
    %v6611 = vunpack.c.l.b16 %v6038
    %v6612 = vunpack.c.h.b16 %v6038
    %v6613 = vunpack.c.l.b16 %v6039
    %v6614 = vunpack.c.h.b16 %v6039
    %v6615 = vunpack.c.l.b16 %v6040
    %v6616 = vunpack.c.h.b16 %v6040
    %v6617 = vunpack.c.l.b16 %v6041
    %v6618 = vunpack.c.l.b16 %v6042
    %v6619 = vunpack.c.h.b16 %v6042
    %v6620 = vunpack.c.l.b16 %v6043
    %v6621 = vunpack.c.h.b16 %v6043
    %v6622 = vunpack.c.l.b16 %v6044
    %v6623 = vunpack.c.h.b16 %v6044
    %v6624 = vunpack.c.l.b16 %v6045
    %v6625 = vunpack.c.l.b16 %v6046
    %v6626 = vunpack.c.h.b16 %v6046
    %v6627 = vunpack.c.l.b16 %v6047
    %v6628 = vunpack.c.h.b16 %v6047
    %v6629 = vunpack.c.l.b16 %v6048
    %v6630 = vunpack.c.h.b16 %v6048
    %v6631 = vunpack.c.l.b16 %v6049
    %v6632 = vunpack.c.l.b16 %v6050
    %v6633 = vunpack.c.h.b16 %v6050
    %v6634 = vunpack.c.l.b16 %v6051
    %v6635 = vunpack.c.h.b16 %v6051
    %v6636 = vunpack.c.l.b16 %v6052
    %v6637 = vunpack.c.h.b16 %v6052
    %v6638 = vunpack.c.l.b16 %v6053
    %v6639 = vunpack.c.l.b16 %v6054
    %v6640 = vunpack.c.h.b16 %v6054
    %v6641 = vunpack.c.l.b16 %v6055
    %v6642 = vunpack.c.h.b16 %v6055
    %v6643 = vunpack.c.l.b16 %v6056
    %v6644 = vunpack.c.h.b16 %v6056
    %v6645 = vunpack.c.l.b16 %v6057
    %v6646 = vunpack.c.l.b16 %v6058
    %v6647 = vunpack.c.h.b16 %v6058
    %v6648 = vunpack.c.l.b16 %v6059
    %v6649 = vunpack.c.h.b16 %v6059
    %v6650 = vunpack.c.l.b16 %v6060
    %v6651 = vunpack.c.h.b16 %v6060
    %v6652 = vunpack.c.l.b16 %v6061
    %v6653 = vunpack.c.l.b16 %v6062
    %v6654 = vunpack.c.h.b16 %v6062
    %v6655 = vunpack.c.l.b16 %v6063
    %v6656 = vunpack.c.h.b16 %v6063
    %v6657 = vunpack.c.l.b16 %v6064
    %v6658 = vunpack.c.h.b16 %v6064
    %v6659 = vunpack.c.l.b16 %v6065
    %v6660 = vunpack.c.l.b16 %v6066
    %v6661 = vunpack.c.h.b16 %v6066
    %v6662 = vunpack.c.l.b16 %v6067
    %v6663 = vunpack.c.h.b16 %v6067
    %v6664 = vunpack.c.l.b16 %v6068
    %v6665 = vunpack.c.h.b16 %v6068
    %v6666 = vunpack.c.l.b16 %v6069
    %v6667 = vunpack.c.l.b16 %v6070
    %v6668 = vunpack.c.h.b16 %v6070
    %v6669 = vunpack.c.l.b16 %v6071
    %v6670 = vunpack.c.h.b16 %v6071
    %v6671 = vunpack.c.l.b16 %v6072
    %v6672 = vunpack.c.h.b16 %v6072
    %v6673 = vunpack.c.l.b16 %v6073
    %v6674 = vunpack.c.l.b16 %v6074
    %v6675 = vunpack.c.h.b16 %v6074
    %v6676 = vunpack.c.l.b16 %v6075
    %v6677 = vunpack.c.h.b16 %v6075
    %v6678 = vunpack.c.l.b16 %v6076
    %v6679 = vunpack.c.h.b16 %v6076
    %v6680 = vunpack.c.l.b16 %v6077
    %v6681 = vunpack.c.l.b16 %v6078
    %v6682 = vunpack.c.h.b16 %v6078
    %v6683 = vunpack.c.l.b16 %v6079
    %v6684 = vunpack.c.h.b16 %v6079
    %v6685 = vunpack.c.l.b16 %v6080
    %v6686 = vunpack.c.h.b16 %v6080
    %v6687 = vunpack.c.l.b16 %v6081
    %v6688 = vunpack.c.l.b16 %v6082
    %v6689 = vunpack.c.h.b16 %v6082
    %v6690 = vunpack.c.l.b16 %v6083
    %v6691 = vunpack.c.h.b16 %v6083
    %v6692 = vunpack.c.l.b16 %v6084
    %v6693 = vunpack.c.h.b16 %v6084
    %v6694 = vunpack.c.l.b16 %v6085
    %v6695 = vunpack.c.l.b16 %v6086
    %v6696 = vunpack.c.h.b16 %v6086
    %v6697 = vunpack.c.l.b16 %v6087
    %v6698 = vunpack.c.h.b16 %v6087
    %v6699 = vunpack.c.l.b16 %v6088
    %v6700 = vunpack.c.h.b16 %v6088
    %v6701 = vunpack.c.l.b16 %v6089
    %v6702 = vunpack.c.l.b16 %v6090
    %v6703 = vunpack.c.h.b16 %v6090
    %v6704 = vunpack.c.l.b16 %v6091
    %v6705 = vunpack.c.h.b16 %v6091
    %v6706 = vunpack.c.l.b16 %v6092
    %v6707 = vunpack.c.h.b16 %v6092
    %v6708 = vunpack.c.l.b16 %v6093
    %v6709 = vunpack.c.l.b16 %v6094
    %v6710 = vunpack.c.h.b16 %v6094
    %v6711 = vunpack.c.l.b16 %v6095
    %v6712 = vunpack.c.h.b16 %v6095
    %v6713 = vunpack.c.l.b16 %v6096
    %v6714 = vunpack.c.h.b16 %v6096
    %v6715 = vunpack.c.l.b16 %v6097
    %v6716 = vunpack.c.l.b16 %v6098
    %v6717 = vunpack.c.h.b16 %v6098
    %v6718 = vunpack.c.l.b16 %v6099
    %v6719 = vunpack.c.h.b16 %v6099
    %v6720 = vunpack.c.l.b16 %v6100
    %v6721 = vunpack.c.h.b16 %v6100
    %v6722 = vunpack.c.l.b16 %v6101
    %v6723 = vunpack.c.l.b16 %v6102
    %v6724 = vunpack.c.h.b16 %v6102
    %v6725 = vunpack.c.l.b16 %v6103
    %v6726 = vunpack.c.h.b16 %v6103
    %v6727 = vunpack.c.l.b16 %v6104
    %v6728 = vunpack.c.h.b16 %v6104
    %v6729 = vunpack.c.l.b16 %v6105
    %v6730 = vunpack.c.l.b16 %v6106
    %v6731 = vunpack.c.h.b16 %v6106
    %v6732 = vunpack.c.l.b16 %v6107
    %v6733 = vunpack.c.h.b16 %v6107
    %v6734 = vunpack.c.l.b16 %v6108
    %v6735 = vunpack.c.h.b16 %v6108
    %v6736 = vunpack.c.l.b16 %v6109
    %v6737 = vunpack.c.l.b16 %v6110
    %v6738 = vunpack.c.h.b16 %v6110
    %v6739 = vunpack.c.l.b16 %v6111
    %v6740 = vunpack.c.h.b16 %v6111
    %v6741 = vunpack.c.l.b16 %v6112
    %v6742 = vunpack.c.h.b16 %v6112
    %v6743 = vunpack.c.l.b16 %v6113
    %v6744 = vunpack.c.l.b16 %v6114
    %v6745 = vunpack.c.h.b16 %v6114
    %v6746 = vunpack.c.l.b16 %v6115
    %v6747 = vunpack.c.h.b16 %v6115
    %v6748 = vunpack.c.l.b16 %v6116
    %v6749 = vunpack.c.h.b16 %v6116
    %v6750 = vunpack.c.l.b16 %v6117
    %v6751 = vunpack.c.l.b16 %v6118
    %v6752 = vunpack.c.h.b16 %v6118
    %v6753 = vunpack.c.l.b16 %v6119
    %v6754 = vunpack.c.h.b16 %v6119
    %v6755 = vunpack.c.l.b16 %v6120
    %v6756 = vunpack.c.h.b16 %v6120
    %v6757 = vunpack.c.l.b16 %v6121
    %v6758 = vunpack.c.l.b16 %v6122
    %v6759 = vunpack.c.h.b16 %v6122
    %v6760 = vunpack.c.l.b16 %v6123
    %v6761 = vunpack.c.h.b16 %v6123
    %v6762 = vunpack.c.l.b16 %v6124
    %v6763 = vunpack.c.h.b16 %v6124
    %v6764 = vunpack.c.l.b16 %v6125
    %v6765 = vunpack.c.l.b16 %v6126
    %v6766 = vunpack.c.h.b16 %v6126
    %v6767 = vunpack.c.l.b16 %v6127
    %v6768 = vunpack.c.h.b16 %v6127
    %v6769 = vunpack.c.l.b16 %v6128
    %v6770 = vunpack.c.h.b16 %v6128
    %v6771 = vunpack.c.l.b16 %v6129
    %v6772 = vunpack.c.l.b16 %v6130
    %v6773 = vunpack.c.h.b16 %v6130
    %v6774 = vunpack.c.l.b16 %v6131
    %v6775 = vunpack.c.h.b16 %v6131
    %v6776 = vunpack.c.l.b16 %v6132
    %v6777 = vunpack.c.h.b16 %v6132
    %v6778 = vunpack.c.l.b16 %v6133
    %v6779 = vunpack.c.l.b16 %v6134
    %v6780 = vunpack.c.h.b16 %v6134
    %v6781 = vunpack.c.l.b16 %v6135
    %v6782 = vunpack.c.h.b16 %v6135
    %v6783 = vunpack.c.l.b16 %v6136
    %v6784 = vunpack.c.h.b16 %v6136
    %v6785 = vunpack.c.l.b16 %v6137
    %v6786 = vunpack.c.l.b16 %v6138
    %v6787 = vunpack.c.h.b16 %v6138
    %v6788 = vunpack.c.l.b16 %v6139
    %v6789 = vunpack.c.h.b16 %v6139
    %v6790 = vunpack.c.l.b16 %v6140
    %v6791 = vunpack.c.h.b16 %v6140
    %v6792 = vunpack.c.l.b16 %v6141
    %v6793 = vunpack.c.l.b16 %v6142
    %v6794 = vunpack.c.h.b16 %v6142
    %v6795 = vunpack.c.l.b16 %v6143
    %v6796 = vunpack.c.h.b16 %v6143
    %v6797 = vunpack.c.l.b16 %v6144
    %v6798 = vunpack.c.h.b16 %v6144
    %v6799 = vunpack.c.l.b16 %v6145
    %v6800 = vunpack.c.l.b16 %v6146
    %v6801 = vunpack.c.h.b16 %v6146
    %v6802 = vunpack.c.l.b16 %v6147
    %v6803 = vunpack.c.h.b16 %v6147
    %v6804 = vunpack.c.l.b16 %v6148
    %v6805 = vunpack.c.h.b16 %v6148
    %v6806 = vunpack.c.l.b16 %v6149
    %v6807 = vunpack.c.l.b16 %v6150
    %v6808 = vunpack.c.h.b16 %v6150
    %v6809 = vunpack.c.l.b16 %v6151
    %v6810 = vunpack.c.h.b16 %v6151
    %v6811 = vunpack.c.l.b16 %v6152
    %v6812 = vunpack.c.h.b16 %v6152
    %v6813 = vunpack.c.l.b16 %v6153
    %v6814 = vunpack.c.l.b16 %v6154
    %v6815 = vunpack.c.h.b16 %v6154
    %v6816 = vunpack.c.l.b16 %v6155
    %v6817 = vunpack.c.h.b16 %v6155
    %v6818 = vunpack.c.l.b16 %v6156
    %v6819 = vunpack.c.h.b16 %v6156
    %v6820 = vunpack.c.l.b16 %v6157
    %v6821 = vunpack.c.l.b16 %v6158
    %v6822 = vunpack.c.h.b16 %v6158
    %v6823 = vunpack.c.l.b16 %v6159
    %v6824 = vunpack.c.h.b16 %v6159
    %v6825 = vunpack.c.l.b16 %v6160
    %v6826 = vunpack.c.h.b16 %v6160
    %v6827 = vunpack.c.l.b16 %v6161
    %v6828 = vunpack.c.l.b16 %v6162
    %v6829 = vunpack.c.h.b16 %v6162
    %v6830 = vunpack.c.l.b16 %v6163
    %v6831 = vunpack.c.h.b16 %v6163
    %v6832 = vunpack.c.l.b16 %v6164
    %v6833 = vunpack.c.h.b16 %v6164
    %v6834 = vunpack.c.l.b16 %v6165
    %v6835 = vunpack.c.l.b16 %v6166
    %v6836 = vunpack.c.h.b16 %v6166
    %v6837 = vunpack.c.l.b16 %v6167
    %v6838 = vunpack.c.h.b16 %v6167
    %v6839 = vunpack.c.l.b16 %v6168
    %v6840 = vunpack.c.h.b16 %v6168
    %v6841 = vunpack.c.l.b16 %v6169
    %v6842 = vunpack.c.l.b16 %v6170
    %v6843 = vunpack.c.h.b16 %v6170
    %v6844 = vunpack.c.l.b16 %v6171
    %v6845 = vunpack.c.h.b16 %v6171
    %v6846 = vunpack.c.l.b16 %v6172
    %v6847 = vunpack.c.h.b16 %v6172
    %v6848 = vunpack.c.l.b16 %v6173
    %v6849 = vunpack.c.l.b16 %v6174
    %v6850 = vunpack.c.h.b16 %v6174
    %v6851 = vunpack.c.l.b16 %v6175
    %v6852 = vunpack.c.h.b16 %v6175
    %v6853 = vunpack.c.l.b16 %v6176
    %v6854 = vunpack.c.h.b16 %v6176
    %v6855 = vunpack.c.l.b16 %v6177
    %v6856 = vunpack.c.l.b16 %v6178
    %v6857 = vunpack.c.h.b16 %v6178
    %v6858 = vunpack.c.l.b16 %v6179
    %v6859 = vunpack.c.h.b16 %v6179
    %v6860 = vunpack.c.l.b16 %v6180
    %v6861 = vunpack.c.h.b16 %v6180
    %v6862 = vunpack.c.l.b16 %v6181
    %v6863 = vunpack.c.l.b16 %v6182
    %v6864 = vunpack.c.h.b16 %v6182
    %v6865 = vunpack.c.l.b16 %v6183
    %v6866 = vunpack.c.h.b16 %v6183
    %v6867 = vunpack.c.l.b16 %v6184
    %v6868 = vunpack.c.h.b16 %v6184
    %v6869 = vunpack.c.l.b16 %v6185
    %v6870 = vunpack.c.l.b16 %v6186
    %v6871 = vunpack.c.h.b16 %v6186
    %v6872 = vunpack.c.l.b16 %v6187
    %v6873 = vunpack.c.h.b16 %v6187
    %v6874 = vunpack.c.l.b16 %v6188
    %v6875 = vunpack.c.h.b16 %v6188
    %v6876 = vunpack.c.l.b16 %v6189
    %v6877 = vunpack.c.l.b16 %v6190
    %v6878 = vunpack.c.h.b16 %v6190
    %v6879 = vunpack.c.l.b16 %v6191
    %v6880 = vunpack.c.h.b16 %v6191
    %v6881 = vunpack.c.l.b16 %v6192
    %v6882 = vunpack.c.h.b16 %v6192
    %v6883 = vunpack.c.l.b16 %v6193
    %v6884 = vunpack.c.l.b16 %v6194
    %v6885 = vunpack.c.h.b16 %v6194
    %v6886 = vunpack.c.l.b16 %v6195
    %v6887 = vunpack.c.h.b16 %v6195
    %v6888 = vunpack.c.l.b16 %v6196
    %v6889 = vunpack.c.h.b16 %v6196
    %v6890 = vunpack.c.l.b16 %v6197
    %v6891 = vunpack.c.l.b16 %v6198
    %v6892 = vunpack.c.h.b16 %v6198
    %v6893 = vunpack.c.l.b16 %v6199
    %v6894 = vunpack.c.h.b16 %v6199
    %v6895 = vunpack.c.l.b16 %v6200
    %v6896 = vunpack.c.h.b16 %v6200
    %v6897 = vunpack.c.l.b16 %v6201
    %v6898 = vunpack.c.l.b16 %v6202
    %v6899 = vunpack.c.h.b16 %v6202
    %v6900 = vunpack.c.l.b16 %v6203
    %v6901 = vunpack.c.h.b16 %v6203
    %v6902 = vunpack.c.l.b16 %v6204
    %v6903 = vunpack.c.h.b16 %v6204
    %v6904 = vunpack.c.l.b16 %v6205
    %v6905 = vunpack.c.l.b16 %v6206
    %v6906 = vunpack.c.h.b16 %v6206
    %v6907 = vunpack.c.l.b16 %v6207
    %v6908 = vunpack.c.h.b16 %v6207
    %v6909 = vunpack.c.l.b16 %v6208
    %v6910 = vunpack.c.h.b16 %v6208
    %v6911 = vunpack.c.l.b16 %v6209
    %v6912 = vunpack.c.l.b16 %v6210
    %v6913 = vunpack.c.h.b16 %v6210
    %v6914 = vunpack.c.l.b16 %v6211
    %v6915 = vunpack.c.h.b16 %v6211
    %v6916 = vunpack.c.l.b16 %v6212
    %v6917 = vunpack.c.h.b16 %v6212
    %v6918 = vunpack.c.l.b16 %v6213
    %v6919 = vunpack.c.l.b16 %v6214
    %v6920 = vunpack.c.h.b16 %v6214
    %v6921 = vunpack.c.l.b16 %v6215
    %v6922 = vunpack.c.h.b16 %v6215
    %v6923 = vunpack.c.l.b16 %v6216
    %v6924 = vunpack.c.h.b16 %v6216
    %v6925 = vunpack.c.l.b16 %v6217
    %v6926 = vunpack.c.l.b16 %v6218
    %v6927 = vunpack.c.h.b16 %v6218
    %v6928 = vunpack.c.l.b16 %v6219
    %v6929 = vunpack.c.h.b16 %v6219
    %v6930 = vunpack.c.l.b16 %v6220
    %v6931 = vunpack.c.h.b16 %v6220
    %v6932 = vunpack.c.l.b16 %v6221
    %v6933 = vunpack.c.l.b16 %v6222
    %v6934 = vunpack.c.h.b16 %v6222
    %v6935 = vunpack.c.l.b16 %v6223
    %v6936 = vunpack.c.h.b16 %v6223
    %v6937 = vunpack.c.l.b16 %v6224
    %v6938 = vunpack.c.h.b16 %v6224
    %v6939 = vunpack.c.l.b16 %v6225
    %v6940 = vunpack.c.l.b16 %v6226
    %v6941 = vunpack.c.h.b16 %v6226
    %v6942 = vunpack.c.l.b16 %v6227
    %v6943 = vunpack.c.h.b16 %v6227
    %v6944 = vunpack.c.l.b16 %v6228
    %v6945 = vunpack.c.h.b16 %v6228
    %v6946 = vunpack.c.l.b16 %v6229
    %v6947 = vunpack.c.l.b16 %v6230
    %v6948 = vunpack.c.h.b16 %v6230
    %v6949 = vunpack.c.l.b16 %v6231
    %v6950 = vunpack.c.h.b16 %v6231
    %v6951 = vunpack.c.l.b16 %v6232
    %v6952 = vunpack.c.h.b16 %v6232
    %v6953 = vunpack.c.l.b16 %v6233
    %v6954 = vunpack.c.l.b16 %v6234
    %v6955 = vunpack.c.h.b16 %v6234
    %v6956 = vunpack.c.l.b16 %v6235
    %v6957 = vunpack.c.h.b16 %v6235
    %v6958 = vunpack.c.l.b16 %v6236
    %v6959 = vunpack.c.h.b16 %v6236
    %v6960 = vunpack.c.l.b16 %v6237
    %v6961 = vunpack.c.l.b16 %v6238
    %v6962 = vunpack.c.h.b16 %v6238
    %v6963 = vunpack.c.l.b16 %v6239
    %v6964 = vunpack.c.h.b16 %v6239
    %v6965 = vunpack.c.l.b16 %v6240
    %v6966 = vunpack.c.h.b16 %v6240
    %v6967 = vunpack.c.l.b16 %v6241
    %v6968 = vunpack.c.l.b16 %v6242
    %v6969 = vunpack.c.h.b16 %v6242
    %v6970 = vunpack.c.l.b16 %v6243
    %v6971 = vunpack.c.h.b16 %v6243
    %v6972 = vunpack.c.l.b16 %v6244
    %v6973 = vunpack.c.h.b16 %v6244
    %v6974 = vunpack.c.l.b16 %v6245
    %v6975 = vunpack.c.l.b16 %v6246
    %v6976 = vunpack.c.h.b16 %v6246
    %v6977 = vunpack.c.l.b16 %v6247
    %v6978 = vunpack.c.h.b16 %v6247
    %v6979 = vunpack.c.l.b16 %v6248
    %v6980 = vunpack.c.h.b16 %v6248
    %v6981 = vunpack.c.l.b16 %v6249
    %v6982 = vunpack.c.l.b16 %v6250
    %v6983 = vunpack.c.h.b16 %v6250
    %v6984 = vunpack.c.l.b16 %v6251
    %v6985 = vunpack.c.h.b16 %v6251
    %v6986 = vunpack.c.l.b16 %v6252
    %v6987 = vunpack.c.h.b16 %v6252
    %v6988 = vunpack.c.l.b16 %v6253
    %v6989 = vunpack.c.l.b16 %v6254
    %v6990 = vunpack.c.h.b16 %v6254
    %v6991 = vunpack.c.l.b16 %v6255
    %v6992 = vunpack.c.h.b16 %v6255
    %v6993 = vunpack.c.l.b16 %v6256
    %v6994 = vunpack.c.h.b16 %v6256
    %v6995 = vunpack.c.l.b16 %v6257
    %v6996 = vunpack.c.l.b16 %v6258
    %v6997 = vunpack.c.h.b16 %v6258
    %v6998 = vunpack.c.l.b16 %v6259
    %v6999 = vunpack.c.h.b16 %v6259
    %v7000 = vunpack.c.l.b16 %v6260
    %v7001 = vunpack.c.h.b16 %v6260
    %v7002 = vunpack.c.l.b16 %v6261
    %v7003 = vpack.c.b16 %v6562, %v6555
    %v7004 = vpack.c.b16 %v6563, %v6556
    %v7005 = vpack.c.b16 %v6564, %v6557
    %v7006 = vpack.c.b16 %v6565, %v6558
    %v7007 = vpack.c.b16 %v6566, %v6559
    %v7008 = vpack.c.b16 %v6567, %v6560
    %v7009 = vpack.c.b16 %v6568, %v6561
    %v7010 = vpack.c.b16 %v6576, %v6569
    %v7011 = vpack.c.b16 %v6577, %v6570
    %v7012 = vpack.c.b16 %v6578, %v6571
    %v7013 = vpack.c.b16 %v6579, %v6572
    %v7014 = vpack.c.b16 %v6580, %v6573
    %v7015 = vpack.c.b16 %v6581, %v6574
    %v7016 = vpack.c.b16 %v6582, %v6575
    %v7017 = vpack.c.b16 %v6590, %v6583
    %v7018 = vpack.c.b16 %v6591, %v6584
    %v7019 = vpack.c.b16 %v6592, %v6585
    %v7020 = vpack.c.b16 %v6593, %v6586
    %v7021 = vpack.c.b16 %v6594, %v6587
    %v7022 = vpack.c.b16 %v6595, %v6588
    %v7023 = vpack.c.b16 %v6596, %v6589
    %v7024 = vpack.c.b16 %v6604, %v6597
    %v7025 = vpack.c.b16 %v6605, %v6598
    %v7026 = vpack.c.b16 %v6606, %v6599
    %v7027 = vpack.c.b16 %v6607, %v6600
    %v7028 = vpack.c.b16 %v6608, %v6601
    %v7029 = vpack.c.b16 %v6609, %v6602
    %v7030 = vpack.c.b16 %v6610, %v6603
    %v7031 = vpack.c.b16 %v6618, %v6611
    %v7032 = vpack.c.b16 %v6619, %v6612
    %v7033 = vpack.c.b16 %v6620, %v6613
    %v7034 = vpack.c.b16 %v6621, %v6614
    %v7035 = vpack.c.b16 %v6622, %v6615
    %v7036 = vpack.c.b16 %v6623, %v6616
    %v7037 = vpack.c.b16 %v6624, %v6617
    %v7038 = vpack.c.b16 %v6632, %v6625
    %v7039 = vpack.c.b16 %v6633, %v6626
    %v7040 = vpack.c.b16 %v6634, %v6627
    %v7041 = vpack.c.b16 %v6635, %v6628
    %v7042 = vpack.c.b16 %v6636, %v6629
    %v7043 = vpack.c.b16 %v6637, %v6630
    %v7044 = vpack.c.b16 %v6638, %v6631
    %v7045 = vpack.c.b16 %v6646, %v6639
    %v7046 = vpack.c.b16 %v6647, %v6640
    %v7047 = vpack.c.b16 %v6648, %v6641
    %v7048 = vpack.c.b16 %v6649, %v6642
    %v7049 = vpack.c.b16 %v6650, %v6643
    %v7050 = vpack.c.b16 %v6651, %v6644
    %v7051 = vpack.c.b16 %v6652, %v6645
    %v7052 = vpack.c.b16 %v6660, %v6653
    %v7053 = vpack.c.b16 %v6661, %v6654
    %v7054 = vpack.c.b16 %v6662, %v6655
    %v7055 = vpack.c.b16 %v6663, %v6656
    %v7056 = vpack.c.b16 %v6664, %v6657
    %v7057 = vpack.c.b16 %v6665, %v6658
    %v7058 = vpack.c.b16 %v6666, %v6659
    %v7059 = vpack.c.b16 %v6674, %v6667
    %v7060 = vpack.c.b16 %v6675, %v6668
    %v7061 = vpack.c.b16 %v6676, %v6669
    %v7062 = vpack.c.b16 %v6677, %v6670
    %v7063 = vpack.c.b16 %v6678, %v6671
    %v7064 = vpack.c.b16 %v6679, %v6672
    %v7065 = vpack.c.b16 %v6680, %v6673
    %v7066 = vpack.c.b16 %v6688, %v6681
    %v7067 = vpack.c.b16 %v6689, %v6682
    %v7068 = vpack.c.b16 %v6690, %v6683
    %v7069 = vpack.c.b16 %v6691, %v6684
    %v7070 = vpack.c.b16 %v6692, %v6685
    %v7071 = vpack.c.b16 %v6693, %v6686
    %v7072 = vpack.c.b16 %v6694, %v6687
    %v7073 = vpack.c.b16 %v6702, %v6695
    %v7074 = vpack.c.b16 %v6703, %v6696
    %v7075 = vpack.c.b16 %v6704, %v6697
    %v7076 = vpack.c.b16 %v6705, %v6698
    %v7077 = vpack.c.b16 %v6706, %v6699
    %v7078 = vpack.c.b16 %v6707, %v6700
    %v7079 = vpack.c.b16 %v6708, %v6701
    %v7080 = vpack.c.b16 %v6716, %v6709
    %v7081 = vpack.c.b16 %v6717, %v6710
    %v7082 = vpack.c.b16 %v6718, %v6711
    %v7083 = vpack.c.b16 %v6719, %v6712
    %v7084 = vpack.c.b16 %v6720, %v6713
    %v7085 = vpack.c.b16 %v6721, %v6714
    %v7086 = vpack.c.b16 %v6722, %v6715
    %v7087 = vpack.c.b16 %v6730, %v6723
    %v7088 = vpack.c.b16 %v6731, %v6724
    %v7089 = vpack.c.b16 %v6732, %v6725
    %v7090 = vpack.c.b16 %v6733, %v6726
    %v7091 = vpack.c.b16 %v6734, %v6727
    %v7092 = vpack.c.b16 %v6735, %v6728
    %v7093 = vpack.c.b16 %v6736, %v6729
    %v7094 = vpack.c.b16 %v6744, %v6737
    %v7095 = vpack.c.b16 %v6745, %v6738
    %v7096 = vpack.c.b16 %v6746, %v6739
    %v7097 = vpack.c.b16 %v6747, %v6740
    %v7098 = vpack.c.b16 %v6748, %v6741
    %v7099 = vpack.c.b16 %v6749, %v6742
    %v7100 = vpack.c.b16 %v6750, %v6743
    %v7101 = vpack.c.b16 %v6758, %v6751
    %v7102 = vpack.c.b16 %v6759, %v6752
    %v7103 = vpack.c.b16 %v6760, %v6753
    %v7104 = vpack.c.b16 %v6761, %v6754
    %v7105 = vpack.c.b16 %v6762, %v6755
    %v7106 = vpack.c.b16 %v6763, %v6756
    %v7107 = vpack.c.b16 %v6764, %v6757
    %v7108 = vpack.c.b16 %v6772, %v6765
    %v7109 = vpack.c.b16 %v6773, %v6766
    %v7110 = vpack.c.b16 %v6774, %v6767
    %v7111 = vpack.c.b16 %v6775, %v6768
    %v7112 = vpack.c.b16 %v6776, %v6769
    %v7113 = vpack.c.b16 %v6777, %v6770
    %v7114 = vpack.c.b16 %v6778, %v6771
    %v7115 = vpack.c.b16 %v6786, %v6779
    %v7116 = vpack.c.b16 %v6787, %v6780
    %v7117 = vpack.c.b16 %v6788, %v6781
    %v7118 = vpack.c.b16 %v6789, %v6782
    %v7119 = vpack.c.b16 %v6790, %v6783
    %v7120 = vpack.c.b16 %v6791, %v6784
    %v7121 = vpack.c.b16 %v6792, %v6785
    %v7122 = vpack.c.b16 %v6800, %v6793
    %v7123 = vpack.c.b16 %v6801, %v6794
    %v7124 = vpack.c.b16 %v6802, %v6795
    %v7125 = vpack.c.b16 %v6803, %v6796
    %v7126 = vpack.c.b16 %v6804, %v6797
    %v7127 = vpack.c.b16 %v6805, %v6798
    %v7128 = vpack.c.b16 %v6806, %v6799
    %v7129 = vpack.c.b16 %v6814, %v6807
    %v7130 = vpack.c.b16 %v6815, %v6808
    %v7131 = vpack.c.b16 %v6816, %v6809
    %v7132 = vpack.c.b16 %v6817, %v6810
    %v7133 = vpack.c.b16 %v6818, %v6811
    %v7134 = vpack.c.b16 %v6819, %v6812
    %v7135 = vpack.c.b16 %v6820, %v6813
    %v7136 = vpack.c.b16 %v6828, %v6821
    %v7137 = vpack.c.b16 %v6829, %v6822
    %v7138 = vpack.c.b16 %v6830, %v6823
    %v7139 = vpack.c.b16 %v6831, %v6824
    %v7140 = vpack.c.b16 %v6832, %v6825
    %v7141 = vpack.c.b16 %v6833, %v6826
    %v7142 = vpack.c.b16 %v6834, %v6827
    %v7143 = vpack.c.b16 %v6842, %v6835
    %v7144 = vpack.c.b16 %v6843, %v6836
    %v7145 = vpack.c.b16 %v6844, %v6837
    %v7146 = vpack.c.b16 %v6845, %v6838
    %v7147 = vpack.c.b16 %v6846, %v6839
    %v7148 = vpack.c.b16 %v6847, %v6840
    %v7149 = vpack.c.b16 %v6848, %v6841
    %v7150 = vpack.c.b16 %v6856, %v6849
    %v7151 = vpack.c.b16 %v6857, %v6850
    %v7152 = vpack.c.b16 %v6858, %v6851
    %v7153 = vpack.c.b16 %v6859, %v6852
    %v7154 = vpack.c.b16 %v6860, %v6853
    %v7155 = vpack.c.b16 %v6861, %v6854
    %v7156 = vpack.c.b16 %v6862, %v6855
    %v7157 = vpack.c.b16 %v6870, %v6863
    %v7158 = vpack.c.b16 %v6871, %v6864
    %v7159 = vpack.c.b16 %v6872, %v6865
    %v7160 = vpack.c.b16 %v6873, %v6866
    %v7161 = vpack.c.b16 %v6874, %v6867
    %v7162 = vpack.c.b16 %v6875, %v6868
    %v7163 = vpack.c.b16 %v6876, %v6869
    %v7164 = vpack.c.b16 %v6884, %v6877
    %v7165 = vpack.c.b16 %v6885, %v6878
    %v7166 = vpack.c.b16 %v6886, %v6879
    %v7167 = vpack.c.b16 %v6887, %v6880
    %v7168 = vpack.c.b16 %v6888, %v6881
    %v7169 = vpack.c.b16 %v6889, %v6882
    %v7170 = vpack.c.b16 %v6890, %v6883
    %v7171 = vpack.c.b16 %v6898, %v6891
    %v7172 = vpack.c.b16 %v6899, %v6892
    %v7173 = vpack.c.b16 %v6900, %v6893
    %v7174 = vpack.c.b16 %v6901, %v6894
    %v7175 = vpack.c.b16 %v6902, %v6895
    %v7176 = vpack.c.b16 %v6903, %v6896
    %v7177 = vpack.c.b16 %v6904, %v6897
    %v7178 = vpack.c.b16 %v6912, %v6905
    %v7179 = vpack.c.b16 %v6913, %v6906
    %v7180 = vpack.c.b16 %v6914, %v6907
    %v7181 = vpack.c.b16 %v6915, %v6908
    %v7182 = vpack.c.b16 %v6916, %v6909
    %v7183 = vpack.c.b16 %v6917, %v6910
    %v7184 = vpack.c.b16 %v6918, %v6911
    %v7185 = vpack.c.b16 %v6926, %v6919
    %v7186 = vpack.c.b16 %v6927, %v6920
    %v7187 = vpack.c.b16 %v6928, %v6921
    %v7188 = vpack.c.b16 %v6929, %v6922
    %v7189 = vpack.c.b16 %v6930, %v6923
    %v7190 = vpack.c.b16 %v6931, %v6924
    %v7191 = vpack.c.b16 %v6932, %v6925
    %v7192 = vpack.c.b16 %v6940, %v6933
    %v7193 = vpack.c.b16 %v6941, %v6934
    %v7194 = vpack.c.b16 %v6942, %v6935
    %v7195 = vpack.c.b16 %v6943, %v6936
    %v7196 = vpack.c.b16 %v6944, %v6937
    %v7197 = vpack.c.b16 %v6945, %v6938
    %v7198 = vpack.c.b16 %v6946, %v6939
    %v7199 = vpack.c.b16 %v6954, %v6947
    %v7200 = vpack.c.b16 %v6955, %v6948
    %v7201 = vpack.c.b16 %v6956, %v6949
    %v7202 = vpack.c.b16 %v6957, %v6950
    %v7203 = vpack.c.b16 %v6958, %v6951
    %v7204 = vpack.c.b16 %v6959, %v6952
    %v7205 = vpack.c.b16 %v6960, %v6953
    %v7206 = vpack.c.b16 %v6968, %v6961
    %v7207 = vpack.c.b16 %v6969, %v6962
    %v7208 = vpack.c.b16 %v6970, %v6963
    %v7209 = vpack.c.b16 %v6971, %v6964
    %v7210 = vpack.c.b16 %v6972, %v6965
    %v7211 = vpack.c.b16 %v6973, %v6966
    %v7212 = vpack.c.b16 %v6974, %v6967
    %v7213 = vpack.c.b16 %v6982, %v6975
    %v7214 = vpack.c.b16 %v6983, %v6976
    %v7215 = vpack.c.b16 %v6984, %v6977
    %v7216 = vpack.c.b16 %v6985, %v6978
    %v7217 = vpack.c.b16 %v6986, %v6979
    %v7218 = vpack.c.b16 %v6987, %v6980
    %v7219 = vpack.c.b16 %v6988, %v6981
    %v7220 = vpack.c.b16 %v6996, %v6989
    %v7221 = vpack.c.b16 %v6997, %v6990
    %v7222 = vpack.c.b16 %v6998, %v6991
    %v7223 = vpack.c.b16 %v6999, %v6992
    %v7224 = vpack.c.b16 %v7000, %v6993
    %v7225 = vpack.c.b16 %v7001, %v6994
    %v7226 = vpack.c.b16 %v7002, %v6995
    %7451 = vmatprep.subr.bf16.mxu0 %v7004
    %7452 = vmatpush1.bf16.msra.mxu0 %v7003
    %7453 = vmatprep.subr.bf16.mxu0 %v7011
    %7454 = vmatpush1.bf16.msra.mxu0 %v7010
    %7455 = vmatprep.subr.bf16.mxu0 %v7018
    %7456 = vmatpush1.bf16.msra.mxu0 %v7017
    %7457 = vmatprep.subr.bf16.mxu0 %v7025
    %7458 = vmatpush1.bf16.msra.mxu0 %v7024
    %7459 = vmatprep.subr.bf16.mxu0 %v7032
    %7460 = vmatpush1.bf16.msra.mxu0 %v7031
    %7461 = vmatprep.subr.bf16.mxu0 %v7039
    %7462 = vmatpush1.bf16.msra.mxu0 %v7038
    %7463 = vmatprep.subr.bf16.mxu0 %v7046
    %7464 = vmatpush1.bf16.msra.mxu0 %v7045
    %7465 = vmatprep.subr.bf16.mxu0 %v7053
    %7466 = vmatpush1.bf16.msra.mxu0 %v7052
    %7467 = vmatprep.subr.bf16.mxu0 %v7060
    %7468 = vmatpush1.bf16.msra.mxu0 %v7059
    %7469 = vmatprep.subr.bf16.mxu0 %v7067
    %7470 = vmatpush1.bf16.msra.mxu0 %v7066
    %7471 = vmatprep.subr.bf16.mxu0 %v7074
    %7472 = vmatpush1.bf16.msra.mxu0 %v7073
    %7473 = vmatprep.subr.bf16.mxu0 %v7081
    %7474 = vmatpush1.bf16.msra.mxu0 %v7080
    %7475 = vmatprep.subr.bf16.mxu0 %v7088
    %7476 = vmatpush1.bf16.msra.mxu0 %v7087
    %7477 = vmatprep.subr.bf16.mxu0 %v7095
    %7478 = vmatpush1.bf16.msra.mxu0 %v7094
    %7479 = vmatprep.subr.bf16.mxu0 %v7102
    %7480 = vmatpush1.bf16.msra.mxu0 %v7101
    %7481 = vmatprep.subr.bf16.mxu0 %v7109
    %7482 = vmatpush1.bf16.msra.mxu0 %v7108
    %7483 = vmatprep.mubr.bf16.mxu0 %v6003
    %7484 = vmatmul.mubr.bf16.gmra.mrb[0].mxu0 %v6002
    %v7485 = vpop.f32.mrb[0].mxu0
    %v7486 = vadd.f32 %v6267, %v7485
    %v7487 = vpop.f32.mrb[0].mxu0
    %v7488 = vadd.f32 %v6271, %v7487
    %v7489 = vpop.f32.mrb[0].mxu0
    %v7490 = vpop.f32.mrb[0].mxu0
    %7491 = vdwg.mxu0
    %7492 = vmatprep.subr.bf16.mxu0 %v7116
    %7493 = vmatpush1.bf16.msra.mxu0 %v7115
    %7494 = vmatprep.subr.bf16.mxu0 %v7123
    %7495 = vmatpush1.bf16.msra.mxu0 %v7122
    %7496 = vmatprep.subr.bf16.mxu0 %v7130
    %7497 = vmatpush1.bf16.msra.mxu0 %v7129
    %7498 = vmatprep.subr.bf16.mxu0 %v7137
    %7499 = vmatpush1.bf16.msra.mxu0 %v7136
    %7500 = vmatprep.subr.bf16.mxu0 %v7144
    %7501 = vmatpush1.bf16.msra.mxu0 %v7143
    %7502 = vmatprep.subr.bf16.mxu0 %v7151
    %7503 = vmatpush1.bf16.msra.mxu0 %v7150
    %7504 = vmatprep.subr.bf16.mxu0 %v7158
    %7505 = vmatpush1.bf16.msra.mxu0 %v7157
    %7506 = vmatprep.subr.bf16.mxu0 %v7165
    %7507 = vmatpush1.bf16.msra.mxu0 %v7164
    %7508 = vmatprep.subr.bf16.mxu0 %v7172
    %7509 = vmatpush1.bf16.msra.mxu0 %v7171
    %7510 = vmatprep.subr.bf16.mxu0 %v7179
    %7511 = vmatpush1.bf16.msra.mxu0 %v7178
    %7512 = vmatprep.subr.bf16.mxu0 %v7186
    %7513 = vmatpush1.bf16.msra.mxu0 %v7185
    %7514 = vmatprep.subr.bf16.mxu0 %v7193
    %7515 = vmatpush1.bf16.msra.mxu0 %v7192
    %7516 = vmatprep.subr.bf16.mxu0 %v7200
    %7517 = vmatpush1.bf16.msra.mxu0 %v7199
    %7518 = vmatprep.subr.bf16.mxu0 %v7207
    %7519 = vmatpush1.bf16.msra.mxu0 %v7206
    %7520 = vmatprep.subr.bf16.mxu0 %v7214
    %7521 = vmatpush1.bf16.msra.mxu0 %v7213
    %7522 = vmatprep.subr.bf16.mxu0 %v7221
    %7523 = vmatpush1.bf16.msra.mxu0 %v7220
    %7524 = vmatprep.mubr.bf16.mxu0 %v6005
    %7525 = vmatmul.mubr.bf16.gmra.mrb[0].mxu0 %v6004
    %v7526 = vpop.f32.mrb[0].mxu0
    %v7527 = vadd.f32 %v7486, %v7526
    %v7528 = vpop.f32.mrb[0].mxu0
    %v7529 = vadd.f32 %v7488, %v7528
    %v7530 = vpop.f32.mrb[0].mxu0
    %v7531 = vpop.f32.mrb[0].mxu0
    %7532 = vdwg.mxu0
    %7533 = vmatprep.subr.bf16.mxu0 %v7006
    %7534 = vmatpush1.bf16.msra.mxu0 %v7005
    %7535 = vmatprep.subr.bf16.mxu0 %v7013
    %7536 = vmatpush1.bf16.msra.mxu0 %v7012
    %7537 = vmatprep.subr.bf16.mxu0 %v7020
    %7538 = vmatpush1.bf16.msra.mxu0 %v7019
    %7539 = vmatprep.subr.bf16.mxu0 %v7027
    %7540 = vmatpush1.bf16.msra.mxu0 %v7026
    %7541 = vmatprep.subr.bf16.mxu0 %v7034
    %7542 = vmatpush1.bf16.msra.mxu0 %v7033
    %7543 = vmatprep.subr.bf16.mxu0 %v7041
    %7544 = vmatpush1.bf16.msra.mxu0 %v7040
    %7545 = vmatprep.subr.bf16.mxu0 %v7048
    %7546 = vmatpush1.bf16.msra.mxu0 %v7047
    %7547 = vmatprep.subr.bf16.mxu0 %v7055
    %7548 = vmatpush1.bf16.msra.mxu0 %v7054
    %7549 = vmatprep.subr.bf16.mxu0 %v7062
    %7550 = vmatpush1.bf16.msra.mxu0 %v7061
    %7551 = vmatprep.subr.bf16.mxu0 %v7069
    %7552 = vmatpush1.bf16.msra.mxu0 %v7068
    %7553 = vmatprep.subr.bf16.mxu0 %v7076
    %7554 = vmatpush1.bf16.msra.mxu0 %v7075
    %7555 = vmatprep.subr.bf16.mxu0 %v7083
    %7556 = vmatpush1.bf16.msra.mxu0 %v7082
    %7557 = vmatprep.subr.bf16.mxu0 %v7090
    %7558 = vmatpush1.bf16.msra.mxu0 %v7089
    %7559 = vmatprep.subr.bf16.mxu0 %v7097
    %7560 = vmatpush1.bf16.msra.mxu0 %v7096
    %7561 = vmatprep.subr.bf16.mxu0 %v7104
    %7562 = vmatpush1.bf16.msra.mxu0 %v7103
    %7563 = vmatprep.subr.bf16.mxu0 %v7111
    %7564 = vmatpush1.bf16.msra.mxu0 %v7110
    %7565 = vmatprep.mubr.bf16.mxu0 %v6003
    %7566 = vmatmul.mubr.bf16.gmra.mrb[0].mxu0 %v6002
    %v7567 = vpop.f32.mrb[0].mxu0
    %v7568 = vadd.f32 %v6275, %v7567
    %v7569 = vpop.f32.mrb[0].mxu0
    %v7570 = vadd.f32 %v6279, %v7569
    %v7571 = vpop.f32.mrb[0].mxu0
    %v7572 = vpop.f32.mrb[0].mxu0
    %7573 = vdwg.mxu0
    %7574 = vmatprep.subr.bf16.mxu0 %v7118
    %7575 = vmatpush1.bf16.msra.mxu0 %v7117
    %7576 = vmatprep.subr.bf16.mxu0 %v7125
    %7577 = vmatpush1.bf16.msra.mxu0 %v7124
    %7578 = vmatprep.subr.bf16.mxu0 %v7132
    %7579 = vmatpush1.bf16.msra.mxu0 %v7131
    %7580 = vmatprep.subr.bf16.mxu0 %v7139
    %7581 = vmatpush1.bf16.msra.mxu0 %v7138
    %7582 = vmatprep.subr.bf16.mxu0 %v7146
    %7583 = vmatpush1.bf16.msra.mxu0 %v7145
    %7584 = vmatprep.subr.bf16.mxu0 %v7153
    %7585 = vmatpush1.bf16.msra.mxu0 %v7152
    %7586 = vmatprep.subr.bf16.mxu0 %v7160
    %7587 = vmatpush1.bf16.msra.mxu0 %v7159
    %7588 = vmatprep.subr.bf16.mxu0 %v7167
    %7589 = vmatpush1.bf16.msra.mxu0 %v7166
    %7590 = vmatprep.subr.bf16.mxu0 %v7174
    %7591 = vmatpush1.bf16.msra.mxu0 %v7173
    %7592 = vmatprep.subr.bf16.mxu0 %v7181
    %7593 = vmatpush1.bf16.msra.mxu0 %v7180
    %7594 = vmatprep.subr.bf16.mxu0 %v7188
    %7595 = vmatpush1.bf16.msra.mxu0 %v7187
    %7596 = vmatprep.subr.bf16.mxu0 %v7195
    %7597 = vmatpush1.bf16.msra.mxu0 %v7194
    %7598 = vmatprep.subr.bf16.mxu0 %v7202
    %7599 = vmatpush1.bf16.msra.mxu0 %v7201
    %7600 = vmatprep.subr.bf16.mxu0 %v7209
    %7601 = vmatpush1.bf16.msra.mxu0 %v7208
    %7602 = vmatprep.subr.bf16.mxu0 %v7216
    %7603 = vmatpush1.bf16.msra.mxu0 %v7215
    %7604 = vmatprep.subr.bf16.mxu0 %v7223
    %7605 = vmatpush1.bf16.msra.mxu0 %v7222
    %7606 = vmatprep.mubr.bf16.mxu0 %v6005
    %7607 = vmatmul.mubr.bf16.gmra.mrb[0].mxu0 %v6004
    %v7608 = vpop.f32.mrb[0].mxu0
    %v7609 = vadd.f32 %v7568, %v7608
    %v7610 = vpop.f32.mrb[0].mxu0
    %v7611 = vadd.f32 %v7570, %v7610
    %v7612 = vpop.f32.mrb[0].mxu0
    %v7613 = vpop.f32.mrb[0].mxu0
    %7614 = vdwg.mxu0
    %7615 = vmatprep.subr.bf16.mxu0 %v7008
    %7616 = vmatpush1.bf16.msra.mxu0 %v7007
    %7617 = vmatprep.subr.bf16.mxu0 %v7015
    %7618 = vmatpush1.bf16.msra.mxu0 %v7014
    %7619 = vmatprep.subr.bf16.mxu0 %v7022
    %7620 = vmatpush1.bf16.msra.mxu0 %v7021
    %7621 = vmatprep.subr.bf16.mxu0 %v7029
    %7622 = vmatpush1.bf16.msra.mxu0 %v7028
    %7623 = vmatprep.subr.bf16.mxu0 %v7036
    %7624 = vmatpush1.bf16.msra.mxu0 %v7035
    %7625 = vmatprep.subr.bf16.mxu0 %v7043
    %7626 = vmatpush1.bf16.msra.mxu0 %v7042
    %7627 = vmatprep.subr.bf16.mxu0 %v7050
    %7628 = vmatpush1.bf16.msra.mxu0 %v7049
    %7629 = vmatprep.subr.bf16.mxu0 %v7057
    %7630 = vmatpush1.bf16.msra.mxu0 %v7056
    %7631 = vmatprep.subr.bf16.mxu0 %v7064
    %7632 = vmatpush1.bf16.msra.mxu0 %v7063
    %7633 = vmatprep.subr.bf16.mxu0 %v7071
    %7634 = vmatpush1.bf16.msra.mxu0 %v7070
    %7635 = vmatprep.subr.bf16.mxu0 %v7078
    %7636 = vmatpush1.bf16.msra.mxu0 %v7077
    %7637 = vmatprep.subr.bf16.mxu0 %v7085
    %7638 = vmatpush1.bf16.msra.mxu0 %v7084
    %7639 = vmatprep.subr.bf16.mxu0 %v7092
    %7640 = vmatpush1.bf16.msra.mxu0 %v7091
    %7641 = vmatprep.subr.bf16.mxu0 %v7099
    %7642 = vmatpush1.bf16.msra.mxu0 %v7098
    %7643 = vmatprep.subr.bf16.mxu0 %v7106
    %7644 = vmatpush1.bf16.msra.mxu0 %v7105
    %7645 = vmatprep.subr.bf16.mxu0 %v7113
    %7646 = vmatpush1.bf16.msra.mxu0 %v7112
    %7647 = vmatprep.mubr.bf16.mxu0 %v6003
    %7648 = vmatmul.mubr.bf16.gmra.mrb[0].mxu0 %v6002
    %v7649 = vpop.f32.mrb[0].mxu0
    %v7650 = vadd.f32 %v6283, %v7649
    %v7651 = vpop.f32.mrb[0].mxu0
    %v7652 = vadd.f32 %v6287, %v7651
    %v7653 = vpop.f32.mrb[0].mxu0
    %v7654 = vpop.f32.mrb[0].mxu0
    %7655 = vdwg.mxu0
    %7656 = vmatprep.subr.bf16.mxu0 %v7120
    %7657 = vmatpush1.bf16.msra.mxu0 %v7119
    %7658 = vmatprep.subr.bf16.mxu0 %v7127
    %7659 = vmatpush1.bf16.msra.mxu0 %v7126
    %7660 = vmatprep.subr.bf16.mxu0 %v7134
    %7661 = vmatpush1.bf16.msra.mxu0 %v7133
    %7662 = vmatprep.subr.bf16.mxu0 %v7141
    %7663 = vmatpush1.bf16.msra.mxu0 %v7140
    %7664 = vmatprep.subr.bf16.mxu0 %v7148
    %7665 = vmatpush1.bf16.msra.mxu0 %v7147
    %7666 = vmatprep.subr.bf16.mxu0 %v7155
    %7667 = vmatpush1.bf16.msra.mxu0 %v7154
    %7668 = vmatprep.subr.bf16.mxu0 %v7162
    %7669 = vmatpush1.bf16.msra.mxu0 %v7161
    %7670 = vmatprep.subr.bf16.mxu0 %v7169
    %7671 = vmatpush1.bf16.msra.mxu0 %v7168
    %7672 = vmatprep.subr.bf16.mxu0 %v7176
    %7673 = vmatpush1.bf16.msra.mxu0 %v7175
    %7674 = vmatprep.subr.bf16.mxu0 %v7183
    %7675 = vmatpush1.bf16.msra.mxu0 %v7182
    %7676 = vmatprep.subr.bf16.mxu0 %v7190
    %7677 = vmatpush1.bf16.msra.mxu0 %v7189
    %7678 = vmatprep.subr.bf16.mxu0 %v7197
    %7679 = vmatpush1.bf16.msra.mxu0 %v7196
    %7680 = vmatprep.subr.bf16.mxu0 %v7204
    %7681 = vmatpush1.bf16.msra.mxu0 %v7203
    %7682 = vmatprep.subr.bf16.mxu0 %v7211
    %7683 = vmatpush1.bf16.msra.mxu0 %v7210
    %7684 = vmatprep.subr.bf16.mxu0 %v7218
    %7685 = vmatpush1.bf16.msra.mxu0 %v7217
    %7686 = vmatprep.subr.bf16.mxu0 %v7225
    %7687 = vmatpush1.bf16.msra.mxu0 %v7224
    %7688 = vmatprep.mubr.bf16.mxu0 %v6005
    %7689 = vmatmul.mubr.bf16.gmra.mrb[0].mxu0 %v6004
    %v7690 = vpop.f32.mrb[0].mxu0
    %v7691 = vadd.f32 %v7650, %v7690
    %v7692 = vpop.f32.mrb[0].mxu0
    %v7693 = vadd.f32 %v7652, %v7692
    %v7694 = vpop.f32.mrb[0].mxu0
    %v7695 = vpop.f32.mrb[0].mxu0
    %7696 = vdwg.mxu0
    %7697 = vmatprep.subr.bf16.mxu0 0
    %7698 = vmatpush1.bf16.msra.mxu0 %v7009
    %7699 = vmatprep.subr.bf16.mxu0 0
    %7700 = vmatpush1.bf16.msra.mxu0 %v7016
    %7701 = vmatprep.subr.bf16.mxu0 0
    %7702 = vmatpush1.bf16.msra.mxu0 %v7023
    %7703 = vmatprep.subr.bf16.mxu0 0
    %7704 = vmatpush1.bf16.msra.mxu0 %v7030
    %7705 = vmatprep.subr.bf16.mxu0 0
    %7706 = vmatpush1.bf16.msra.mxu0 %v7037
    %7707 = vmatprep.subr.bf16.mxu0 0
    %7708 = vmatpush1.bf16.msra.mxu0 %v7044
    %7709 = vmatprep.subr.bf16.mxu0 0
    %7710 = vmatpush1.bf16.msra.mxu0 %v7051
    %7711 = vmatprep.subr.bf16.mxu0 0
    %7712 = vmatpush1.bf16.msra.mxu0 %v7058
    %7713 = vmatprep.subr.bf16.mxu0 0
    %7714 = vmatpush1.bf16.msra.mxu0 %v7065
    %7715 = vmatprep.subr.bf16.mxu0 0
    %7716 = vmatpush1.bf16.msra.mxu0 %v7072
    %7717 = vmatprep.subr.bf16.mxu0 0
    %7718 = vmatpush1.bf16.msra.mxu0 %v7079
    %7719 = vmatprep.subr.bf16.mxu0 0
    %7720 = vmatpush1.bf16.msra.mxu0 %v7086
    %7721 = vmatprep.subr.bf16.mxu0 0
    %7722 = vmatpush1.bf16.msra.mxu0 %v7093
    %7723 = vmatprep.subr.bf16.mxu0 0
    %7724 = vmatpush1.bf16.msra.mxu0 %v7100
    %7725 = vmatprep.subr.bf16.mxu0 0
    %7726 = vmatpush1.bf16.msra.mxu0 %v7107
    %7727 = vmatprep.subr.bf16.mxu0 0
    %7728 = vmatpush1.bf16.msra.mxu0 %v7114
    %7729 = vmatprep.mubr.bf16.mxu0 %v6003
    %7730 = vmatmul.mubr.bf16.gmra.mrb[0].mxu0 %v6002
    %v7731 = vpop.f32.mrb[0].mxu0
    %v7732 = vadd.f32 %v6291, %v7731
    %v7733 = vpop.f32.mrb[0].mxu0
    %v7734 = vpop.f32.mrb[0].mxu0
    %v7735 = vpop.f32.mrb[0].mxu0
    %7736 = vdwg.mxu0
    %7737 = vmatprep.subr.bf16.mxu0 0
    %7738 = vmatpush1.bf16.msra.mxu0 %v7121
    %7739 = vmatprep.subr.bf16.mxu0 0
    %7740 = vmatpush1.bf16.msra.mxu0 %v7128
    %7741 = vmatprep.subr.bf16.mxu0 0
    %7742 = vmatpush1.bf16.msra.mxu0 %v7135
    %7743 = vmatprep.subr.bf16.mxu0 0
    %7744 = vmatpush1.bf16.msra.mxu0 %v7142
    %7745 = vmatprep.subr.bf16.mxu0 0
    %7746 = vmatpush1.bf16.msra.mxu0 %v7149
    %7747 = vmatprep.subr.bf16.mxu0 0
    %7748 = vmatpush1.bf16.msra.mxu0 %v7156
    %7749 = vmatprep.subr.bf16.mxu0 0
    %7750 = vmatpush1.bf16.msra.mxu0 %v7163
    %7751 = vmatprep.subr.bf16.mxu0 0
    %7752 = vmatpush1.bf16.msra.mxu0 %v7170
    %7753 = vmatprep.subr.bf16.mxu0 0
    %7754 = vmatpush1.bf16.msra.mxu0 %v7177
    %7755 = vmatprep.subr.bf16.mxu0 0
    %7756 = vmatpush1.bf16.msra.mxu0 %v7184
    %7757 = vmatprep.subr.bf16.mxu0 0
    %7758 = vmatpush1.bf16.msra.mxu0 %v7191
    %7759 = vmatprep.subr.bf16.mxu0 0
    %7760 = vmatpush1.bf16.msra.mxu0 %v7198
    %7761 = vmatprep.subr.bf16.mxu0 0
    %7762 = vmatpush1.bf16.msra.mxu0 %v7205
    %7763 = vmatprep.subr.bf16.mxu0 0
    %7764 = vmatpush1.bf16.msra.mxu0 %v7212
    %7765 = vmatprep.subr.bf16.mxu0 0
    %7766 = vmatpush1.bf16.msra.mxu0 %v7219
    %7767 = vmatprep.subr.bf16.mxu0 0
    %7768 = vmatpush1.bf16.msra.mxu0 %v7226
    %7769 = vmatprep.mubr.bf16.mxu0 %v6005
    %7770 = vmatmul.mubr.bf16.gmra.mrb[0].mxu0 %v6004
    %v7771 = vpop.f32.mrb[0].mxu0
    %v7772 = vadd.f32 %v7732, %v7771
    %v7773 = vpop.f32.mrb[0].mxu0
    %v7774 = vpop.f32.mrb[0].mxu0
    %v7775 = vpop.f32.mrb[0].mxu0
    %7776 = vdwg.mxu0
    %v7777 = vmax.f32 %v7527, 0.0
    %v7778 = vmax.f32 %v7529, 0.0
    %v7779 = vmax.f32 %v7609, 0.0
    %v7780 = vmax.f32 %v7611, 0.0
    %v7781 = vmax.f32 %v7691, 0.0
    %v7782 = vmax.f32 %v7693, 0.0
    %v7783 = vmax.f32 %v7772, 0.0
    %v7784 = vpack.c.bf16 %v7777, %v7777
    %v7785 = vpack.c.bf16 %v7778, %v7778
    %v7786 = vpack.c.bf16 %v7779, %v7779
    %v7787 = vpack.c.bf16 %v7780, %v7780
    %v7788 = vpack.c.bf16 %v7781, %v7781
    %v7789 = vpack.c.bf16 %v7782, %v7782
    %v7790 = vpack.c.bf16 %v7783, %v7783
    %v7791 = vld [vmem:[#allocation15] sm:$0xff]
    %v7792 = vld [vmem:[#allocation15 + $0x8] sm:$0xff]
    %v7793 = vld [vmem:[#allocation15 + $0x10] sm:$0xff]
    %v7794 = vld [vmem:[#allocation15 + $0x18] sm:$0xf]
    %v7795 = vld [vmem:[#allocation15 + $0x1c] sm:$0xff]
    %v7796 = vld [vmem:[#allocation15 + $0x24] sm:$0xff]
    %v7797 = vld [vmem:[#allocation15 + $0x2c] sm:$0xff]
    %v7798 = vld [vmem:[#allocation15 + $0x34] sm:$0xf]
    %v7799 = vld [vmem:[#allocation15 + $0x38] sm:$0xff]
    %v7800 = vld [vmem:[#allocation15 + $0x40] sm:$0xff]
    %v7801 = vld [vmem:[#allocation15 + $0x48] sm:$0xff]
    %v7802 = vld [vmem:[#allocation15 + $0x50] sm:$0xf]
    %v7803 = vld [vmem:[#allocation15 + $0x54] sm:$0xff]
    %v7804 = vld [vmem:[#allocation15 + $0x5c] sm:$0xff]
    %v7805 = vld [vmem:[#allocation15 + $0x64] sm:$0xff]
    %v7806 = vld [vmem:[#allocation15 + $0x6c] sm:$0xf]
    %v7807 = vld [vmem:[#allocation15 + $0x70] sm:$0xff]
    %v7808 = vld [vmem:[#allocation15 + $0x78] sm:$0xff]
    %v7809 = vld [vmem:[#allocation15 + $0x80] sm:$0xff]
    %v7810 = vld [vmem:[#allocation15 + $0x88] sm:$0xf]
    %v7811 = vld [vmem:[#allocation15 + $0x8c] sm:$0xff]
    %v7812 = vld [vmem:[#allocation15 + $0x94] sm:$0xff]
    %v7813 = vld [vmem:[#allocation15 + $0x9c] sm:$0xff]
    %v7814 = vld [vmem:[#allocation15 + $0xa4] sm:$0xf]
    %v7815 = vld [vmem:[#allocation15 + $0xa8] sm:$0xff]
    %v7816 = vld [vmem:[#allocation15 + $0xb0] sm:$0xff]
    %v7817 = vld [vmem:[#allocation15 + $0xb8] sm:$0xff]
    %v7818 = vld [vmem:[#allocation15 + $0xc0] sm:$0xf]
    %v7819 = vld [vmem:[#allocation15 + $0xc4] sm:$0xff]
    %v7820 = vld [vmem:[#allocation15 + $0xcc] sm:$0xff]
    %v7821 = vld [vmem:[#allocation15 + $0xd4] sm:$0xff]
    %v7822 = vld [vmem:[#allocation15 + $0xdc] sm:$0xf]
    %v7823 = vld [vmem:[#allocation15 + $0xe0] sm:$0xff]
    %v7824 = vld [vmem:[#allocation15 + $0xe8] sm:$0xff]
    %v7825 = vld [vmem:[#allocation15 + $0xf0] sm:$0xff]
    %v7826 = vld [vmem:[#allocation15 + $0xf8] sm:$0xf]
    %v7827 = vld [vmem:[#allocation15 + $0xfc] sm:$0xff]
    %v7828 = vld [vmem:[#allocation15 + $0x104] sm:$0xff]
    %v7829 = vld [vmem:[#allocation15 + $0x10c] sm:$0xff]
    %v7830 = vld [vmem:[#allocation15 + $0x114] sm:$0xf]
    %v7831 = vld [vmem:[#allocation15 + $0x118] sm:$0xff]
    %v7832 = vld [vmem:[#allocation15 + $0x120] sm:$0xff]
    %v7833 = vld [vmem:[#allocation15 + $0x128] sm:$0xff]
    %v7834 = vld [vmem:[#allocation15 + $0x130] sm:$0xf]
    %v7835 = vld [vmem:[#allocation15 + $0x134] sm:$0xff]
    %v7836 = vld [vmem:[#allocation15 + $0x13c] sm:$0xff]
    %v7837 = vld [vmem:[#allocation15 + $0x144] sm:$0xff]
    %v7838 = vld [vmem:[#allocation15 + $0x14c] sm:$0xf]
    %v7839 = vld [vmem:[#allocation15 + $0x150] sm:$0xff]
    %v7840 = vld [vmem:[#allocation15 + $0x158] sm:$0xff]
    %v7841 = vld [vmem:[#allocation15 + $0x160] sm:$0xff]
    %v7842 = vld [vmem:[#allocation15 + $0x168] sm:$0xf]
    %v7843 = vld [vmem:[#allocation15 + $0x16c] sm:$0xff]
    %v7844 = vld [vmem:[#allocation15 + $0x174] sm:$0xff]
    %v7845 = vld [vmem:[#allocation15 + $0x17c] sm:$0xff]
    %v7846 = vld [vmem:[#allocation15 + $0x184] sm:$0xf]
    %v7847 = vld [vmem:[#allocation15 + $0x188] sm:$0xff]
    %v7848 = vld [vmem:[#allocation15 + $0x190] sm:$0xff]
    %v7849 = vld [vmem:[#allocation15 + $0x198] sm:$0xff]
    %v7850 = vld [vmem:[#allocation15 + $0x1a0] sm:$0xf]
    %v7851 = vld [vmem:[#allocation15 + $0x1a4] sm:$0xff]
    %v7852 = vld [vmem:[#allocation15 + $0x1ac] sm:$0xff]
    %v7853 = vld [vmem:[#allocation15 + $0x1b4] sm:$0xff]
    %v7854 = vld [vmem:[#allocation15 + $0x1bc] sm:$0xf]
    %v7855 = vld [vmem:[#allocation15 + $0x1c0] sm:$0xff]
    %v7856 = vld [vmem:[#allocation15 + $0x1c8] sm:$0xff]
    %v7857 = vld [vmem:[#allocation15 + $0x1d0] sm:$0xff]
    %v7858 = vld [vmem:[#allocation15 + $0x1d8] sm:$0xf]
    %v7859 = vld [vmem:[#allocation15 + $0x1dc] sm:$0xff]
    %v7860 = vld [vmem:[#allocation15 + $0x1e4] sm:$0xff]
    %v7861 = vld [vmem:[#allocation15 + $0x1ec] sm:$0xff]
    %v7862 = vld [vmem:[#allocation15 + $0x1f4] sm:$0xf]
    %v7863 = vld [vmem:[#allocation15 + $0x1f8] sm:$0xff]
    %v7864 = vld [vmem:[#allocation15 + $0x200] sm:$0xff]
    %v7865 = vld [vmem:[#allocation15 + $0x208] sm:$0xff]
    %v7866 = vld [vmem:[#allocation15 + $0x210] sm:$0xf]
    %v7867 = vld [vmem:[#allocation15 + $0x214] sm:$0xff]
    %v7868 = vld [vmem:[#allocation15 + $0x21c] sm:$0xff]
    %v7869 = vld [vmem:[#allocation15 + $0x224] sm:$0xff]
    %v7870 = vld [vmem:[#allocation15 + $0x22c] sm:$0xf]
    %v7871 = vld [vmem:[#allocation15 + $0x230] sm:$0xff]
    %v7872 = vld [vmem:[#allocation15 + $0x238] sm:$0xff]
    %v7873 = vld [vmem:[#allocation15 + $0x240] sm:$0xff]
    %v7874 = vld [vmem:[#allocation15 + $0x248] sm:$0xf]
    %v7875 = vld [vmem:[#allocation15 + $0x24c] sm:$0xff]
    %v7876 = vld [vmem:[#allocation15 + $0x254] sm:$0xff]
    %v7877 = vld [vmem:[#allocation15 + $0x25c] sm:$0xff]
    %v7878 = vld [vmem:[#allocation15 + $0x264] sm:$0xf]
    %v7879 = vld [vmem:[#allocation15 + $0x268] sm:$0xff]
    %v7880 = vld [vmem:[#allocation15 + $0x270] sm:$0xff]
    %v7881 = vld [vmem:[#allocation15 + $0x278] sm:$0xff]
    %v7882 = vld [vmem:[#allocation15 + $0x280] sm:$0xf]
    %v7883 = vld [vmem:[#allocation15 + $0x284] sm:$0xff]
    %v7884 = vld [vmem:[#allocation15 + $0x28c] sm:$0xff]
    %v7885 = vld [vmem:[#allocation15 + $0x294] sm:$0xff]
    %v7886 = vld [vmem:[#allocation15 + $0x29c] sm:$0xf]
    %v7887 = vld [vmem:[#allocation15 + $0x2a0] sm:$0xff]
    %v7888 = vld [vmem:[#allocation15 + $0x2a8] sm:$0xff]
    %v7889 = vld [vmem:[#allocation15 + $0x2b0] sm:$0xff]
    %v7890 = vld [vmem:[#allocation15 + $0x2b8] sm:$0xf]
    %v7891 = vld [vmem:[#allocation15 + $0x2bc] sm:$0xff]
    %v7892 = vld [vmem:[#allocation15 + $0x2c4] sm:$0xff]
    %v7893 = vld [vmem:[#allocation15 + $0x2cc] sm:$0xff]
    %v7894 = vld [vmem:[#allocation15 + $0x2d4] sm:$0xf]
    %v7895 = vld [vmem:[#allocation15 + $0x2d8] sm:$0xff]
    %v7896 = vld [vmem:[#allocation15 + $0x2e0] sm:$0xff]
    %v7897 = vld [vmem:[#allocation15 + $0x2e8] sm:$0xff]
    %v7898 = vld [vmem:[#allocation15 + $0x2f0] sm:$0xf]
    %v7899 = vld [vmem:[#allocation15 + $0x2f4] sm:$0xff]
    %v7900 = vld [vmem:[#allocation15 + $0x2fc] sm:$0xff]
    %v7901 = vld [vmem:[#allocation15 + $0x304] sm:$0xff]
    %v7902 = vld [vmem:[#allocation15 + $0x30c] sm:$0xf]
    %v7903 = vld [vmem:[#allocation15 + $0x310] sm:$0xff]
    %v7904 = vld [vmem:[#allocation15 + $0x318] sm:$0xff]
    %v7905 = vld [vmem:[#allocation15 + $0x320] sm:$0xff]
    %v7906 = vld [vmem:[#allocation15 + $0x328] sm:$0xf]
    %v7907 = vld [vmem:[#allocation15 + $0x32c] sm:$0xff]
    %v7908 = vld [vmem:[#allocation15 + $0x334] sm:$0xff]
    %v7909 = vld [vmem:[#allocation15 + $0x33c] sm:$0xff]
    %v7910 = vld [vmem:[#allocation15 + $0x344] sm:$0xf]
    %v7911 = vld [vmem:[#allocation15 + $0x348] sm:$0xff]
    %v7912 = vld [vmem:[#allocation15 + $0x350] sm:$0xff]
    %v7913 = vld [vmem:[#allocation15 + $0x358] sm:$0xff]
    %v7914 = vld [vmem:[#allocation15 + $0x360] sm:$0xf]
    %v7915 = vld [vmem:[#allocation15 + $0x364] sm:$0xff]
    %v7916 = vld [vmem:[#allocation15 + $0x36c] sm:$0xff]
    %v7917 = vld [vmem:[#allocation15 + $0x374] sm:$0xff]
    %v7918 = vld [vmem:[#allocation15 + $0x37c] sm:$0xf]
    %v7919 = vld [vmem:[#allocation15 + $0x380] sm:$0xff]
    %v7920 = vld [vmem:[#allocation15 + $0x388] sm:$0xff]
    %v7921 = vld [vmem:[#allocation15 + $0x390] sm:$0xff]
    %v7922 = vld [vmem:[#allocation15 + $0x398] sm:$0xf]
    %v7923 = vld [vmem:[#allocation15 + $0x39c] sm:$0xff]
    %v7924 = vld [vmem:[#allocation15 + $0x3a4] sm:$0xff]
    %v7925 = vld [vmem:[#allocation15 + $0x3ac] sm:$0xff]
    %v7926 = vld [vmem:[#allocation15 + $0x3b4] sm:$0xf]
    %v7927 = vld [vmem:[#allocation15 + $0x3b8] sm:$0xff]
    %v7928 = vld [vmem:[#allocation15 + $0x3c0] sm:$0xff]
    %v7929 = vld [vmem:[#allocation15 + $0x3c8] sm:$0xff]
    %v7930 = vld [vmem:[#allocation15 + $0x3d0] sm:$0xf]
    %v7931 = vld [vmem:[#allocation15 + $0x3d4] sm:$0xff]
    %v7932 = vld [vmem:[#allocation15 + $0x3dc] sm:$0xff]
    %v7933 = vld [vmem:[#allocation15 + $0x3e4] sm:$0xff]
    %v7934 = vld [vmem:[#allocation15 + $0x3ec] sm:$0xf]
    %v7935 = vld [vmem:[#allocation15 + $0x3f0] sm:$0xff]
    %v7936 = vld [vmem:[#allocation15 + $0x3f8] sm:$0xff]
    %v7937 = vld [vmem:[#allocation15 + $0x400] sm:$0xff]
    %v7938 = vld [vmem:[#allocation15 + $0x408] sm:$0xf]
    %v7939 = vld [vmem:[#allocation15 + $0x40c] sm:$0xff]
    %v7940 = vld [vmem:[#allocation15 + $0x414] sm:$0xff]
    %v7941 = vld [vmem:[#allocation15 + $0x41c] sm:$0xff]
    %v7942 = vld [vmem:[#allocation15 + $0x424] sm:$0xf]
    %v7943 = vld [vmem:[#allocation15 + $0x428] sm:$0xff]
    %v7944 = vld [vmem:[#allocation15 + $0x430] sm:$0xff]
    %v7945 = vld [vmem:[#allocation15 + $0x438] sm:$0xff]
    %v7946 = vld [vmem:[#allocation15 + $0x440] sm:$0xf]
    %v7947 = vld [vmem:[#allocation15 + $0x444] sm:$0xff]
    %v7948 = vld [vmem:[#allocation15 + $0x44c] sm:$0xff]
    %v7949 = vld [vmem:[#allocation15 + $0x454] sm:$0xff]
    %v7950 = vld [vmem:[#allocation15 + $0x45c] sm:$0xf]
    %v7951 = vld [vmem:[#allocation15 + $0x460] sm:$0xff]
    %v7952 = vld [vmem:[#allocation15 + $0x468] sm:$0xff]
    %v7953 = vld [vmem:[#allocation15 + $0x470] sm:$0xff]
    %v7954 = vld [vmem:[#allocation15 + $0x478] sm:$0xf]
    %v7955 = vld [vmem:[#allocation15 + $0x47c] sm:$0xff]
    %v7956 = vld [vmem:[#allocation15 + $0x484] sm:$0xff]
    %v7957 = vld [vmem:[#allocation15 + $0x48c] sm:$0xff]
    %v7958 = vld [vmem:[#allocation15 + $0x494] sm:$0xf]
    %v7959 = vld [vmem:[#allocation15 + $0x498] sm:$0xff]
    %v7960 = vld [vmem:[#allocation15 + $0x4a0] sm:$0xff]
    %v7961 = vld [vmem:[#allocation15 + $0x4a8] sm:$0xff]
    %v7962 = vld [vmem:[#allocation15 + $0x4b0] sm:$0xf]
    %v7963 = vld [vmem:[#allocation15 + $0x4b4] sm:$0xff]
    %v7964 = vld [vmem:[#allocation15 + $0x4bc] sm:$0xff]
    %v7965 = vld [vmem:[#allocation15 + $0x4c4] sm:$0xff]
    %v7966 = vld [vmem:[#allocation15 + $0x4cc] sm:$0xf]
    %v7967 = vld [vmem:[#allocation15 + $0x4d0] sm:$0xff]
    %v7968 = vld [vmem:[#allocation15 + $0x4d8] sm:$0xff]
    %v7969 = vld [vmem:[#allocation15 + $0x4e0] sm:$0xff]
    %v7970 = vld [vmem:[#allocation15 + $0x4e8] sm:$0xf]
    %v7971 = vld [vmem:[#allocation15 + $0x4ec] sm:$0xff]
    %v7972 = vld [vmem:[#allocation15 + $0x4f4] sm:$0xff]
    %v7973 = vld [vmem:[#allocation15 + $0x4fc] sm:$0xff]
    %v7974 = vld [vmem:[#allocation15 + $0x504] sm:$0xf]
    %v7975 = vld [vmem:[#allocation15 + $0x508] sm:$0xff]
    %v7976 = vld [vmem:[#allocation15 + $0x510] sm:$0xff]
    %v7977 = vld [vmem:[#allocation15 + $0x518] sm:$0xff]
    %v7978 = vld [vmem:[#allocation15 + $0x520] sm:$0xf]
    %v7979 = vld [vmem:[#allocation15 + $0x524] sm:$0xff]
    %v7980 = vld [vmem:[#allocation15 + $0x52c] sm:$0xff]
    %v7981 = vld [vmem:[#allocation15 + $0x534] sm:$0xff]
    %v7982 = vld [vmem:[#allocation15 + $0x53c] sm:$0xf]
    %v7983 = vld [vmem:[#allocation15 + $0x540] sm:$0xff]
    %v7984 = vld [vmem:[#allocation15 + $0x548] sm:$0xff]
    %v7985 = vld [vmem:[#allocation15 + $0x550] sm:$0xff]
    %v7986 = vld [vmem:[#allocation15 + $0x558] sm:$0xf]
    %v7987 = vld [vmem:[#allocation15 + $0x55c] sm:$0xff]
    %v7988 = vld [vmem:[#allocation15 + $0x564] sm:$0xff]
    %v7989 = vld [vmem:[#allocation15 + $0x56c] sm:$0xff]
    %v7990 = vld [vmem:[#allocation15 + $0x574] sm:$0xf]
    %v7991 = vld [vmem:[#allocation15 + $0x578] sm:$0xff]
    %v7992 = vld [vmem:[#allocation15 + $0x580] sm:$0xff]
    %v7993 = vld [vmem:[#allocation15 + $0x588] sm:$0xff]
    %v7994 = vld [vmem:[#allocation15 + $0x590] sm:$0xf]
    %v7995 = vld [vmem:[#allocation15 + $0x594] sm:$0xff]
    %v7996 = vld [vmem:[#allocation15 + $0x59c] sm:$0xff]
    %v7997 = vld [vmem:[#allocation15 + $0x5a4] sm:$0xff]
    %v7998 = vld [vmem:[#allocation15 + $0x5ac] sm:$0xf]
    %v7999 = vld [vmem:[#allocation15 + $0x5b0] sm:$0xff]
    %v8000 = vld [vmem:[#allocation15 + $0x5b8] sm:$0xff]
    %v8001 = vld [vmem:[#allocation15 + $0x5c0] sm:$0xff]
    %v8002 = vld [vmem:[#allocation15 + $0x5c8] sm:$0xf]
    %v8003 = vld [vmem:[#allocation15 + $0x5cc] sm:$0xff]
    %v8004 = vld [vmem:[#allocation15 + $0x5d4] sm:$0xff]
    %v8005 = vld [vmem:[#allocation15 + $0x5dc] sm:$0xff]
    %v8006 = vld [vmem:[#allocation15 + $0x5e4] sm:$0xf]
    %v8007 = vld [vmem:[#allocation15 + $0x5e8] sm:$0xff]
    %v8008 = vld [vmem:[#allocation15 + $0x5f0] sm:$0xff]
    %v8009 = vld [vmem:[#allocation15 + $0x5f8] sm:$0xff]
    %v8010 = vld [vmem:[#allocation15 + $0x600] sm:$0xf]
    %v8011 = vld [vmem:[#allocation15 + $0x604] sm:$0xff]
    %v8012 = vld [vmem:[#allocation15 + $0x60c] sm:$0xff]
    %v8013 = vld [vmem:[#allocation15 + $0x614] sm:$0xff]
    %v8014 = vld [vmem:[#allocation15 + $0x61c] sm:$0xf]
    %v8015 = vld [vmem:[#allocation15 + $0x620] sm:$0xff]
    %v8016 = vld [vmem:[#allocation15 + $0x628] sm:$0xff]
    %v8017 = vld [vmem:[#allocation15 + $0x630] sm:$0xff]
    %v8018 = vld [vmem:[#allocation15 + $0x638] sm:$0xf]
    %v8019 = vld [vmem:[#allocation15 + $0x63c] sm:$0xff]
    %v8020 = vld [vmem:[#allocation15 + $0x644] sm:$0xff]
    %v8021 = vld [vmem:[#allocation15 + $0x64c] sm:$0xff]
    %v8022 = vld [vmem:[#allocation15 + $0x654] sm:$0xf]
    %v8023 = vld [vmem:[#allocation15 + $0x658] sm:$0xff]
    %v8024 = vld [vmem:[#allocation15 + $0x660] sm:$0xff]
    %v8025 = vld [vmem:[#allocation15 + $0x668] sm:$0xff]
    %v8026 = vld [vmem:[#allocation15 + $0x670] sm:$0xf]
    %v8027 = vld [vmem:[#allocation15 + $0x674] sm:$0xff]
    %v8028 = vld [vmem:[#allocation15 + $0x67c] sm:$0xff]
    %v8029 = vld [vmem:[#allocation15 + $0x684] sm:$0xff]
    %v8030 = vld [vmem:[#allocation15 + $0x68c] sm:$0xf]
    %v8031 = vld [vmem:[#allocation15 + $0x690] sm:$0xff]
    %v8032 = vld [vmem:[#allocation15 + $0x698] sm:$0xff]
    %v8033 = vld [vmem:[#allocation15 + $0x6a0] sm:$0xff]
    %v8034 = vld [vmem:[#allocation15 + $0x6a8] sm:$0xf]
    %v8035 = vld [vmem:[#allocation15 + $0x6ac] sm:$0xff]
    %v8036 = vld [vmem:[#allocation15 + $0x6b4] sm:$0xff]
    %v8037 = vld [vmem:[#allocation15 + $0x6bc] sm:$0xff]
    %v8038 = vld [vmem:[#allocation15 + $0x6c4] sm:$0xf]
    %v8039 = vld [vmem:[#allocation15 + $0x6c8] sm:$0xff]
    %v8040 = vld [vmem:[#allocation15 + $0x6d0] sm:$0xff]
    %v8041 = vld [vmem:[#allocation15 + $0x6d8] sm:$0xff]
    %v8042 = vld [vmem:[#allocation15 + $0x6e0] sm:$0xf]
    %v8043 = vld [vmem:[#allocation15 + $0x6e4] sm:$0xff]
    %v8044 = vld [vmem:[#allocation15 + $0x6ec] sm:$0xff]
    %v8045 = vld [vmem:[#allocation15 + $0x6f4] sm:$0xff]
    %v8046 = vld [vmem:[#allocation15 + $0x6fc] sm:$0xf]
    %v8047 = vld [vmem:[#allocation15 + $0x700] sm:$0xff]
    %v8048 = vld [vmem:[#allocation15 + $0x708] sm:$0xff]
    %v8049 = vld [vmem:[#allocation15 + $0x710] sm:$0xff]
    %v8050 = vld [vmem:[#allocation15 + $0x718] sm:$0xf]
    %v8051 = vld [vmem:[#allocation15 + $0x71c] sm:$0xff]
    %v8052 = vld [vmem:[#allocation15 + $0x724] sm:$0xff]
    %v8053 = vld [vmem:[#allocation15 + $0x72c] sm:$0xff]
    %v8054 = vld [vmem:[#allocation15 + $0x734] sm:$0xf]
    %v8055 = vld [vmem:[#allocation15 + $0x738] sm:$0xff]
    %v8056 = vld [vmem:[#allocation15 + $0x740] sm:$0xff]
    %v8057 = vld [vmem:[#allocation15 + $0x748] sm:$0xff]
    %v8058 = vld [vmem:[#allocation15 + $0x750] sm:$0xf]
    %v8059 = vld [vmem:[#allocation15 + $0x754] sm:$0xff]
    %v8060 = vld [vmem:[#allocation15 + $0x75c] sm:$0xff]
    %v8061 = vld [vmem:[#allocation15 + $0x764] sm:$0xff]
    %v8062 = vld [vmem:[#allocation15 + $0x76c] sm:$0xf]
    %v8063 = vld [vmem:[#allocation15 + $0x770] sm:$0xff]
    %v8064 = vld [vmem:[#allocation15 + $0x778] sm:$0xff]
    %v8065 = vld [vmem:[#allocation15 + $0x780] sm:$0xff]
    %v8066 = vld [vmem:[#allocation15 + $0x788] sm:$0xf]
    %v8067 = vld [vmem:[#allocation15 + $0x78c] sm:$0xff]
    %v8068 = vld [vmem:[#allocation15 + $0x794] sm:$0xff]
    %v8069 = vld [vmem:[#allocation15 + $0x79c] sm:$0xff]
    %v8070 = vld [vmem:[#allocation15 + $0x7a4] sm:$0xf]
    %v8071 = vld [vmem:[#allocation15 + $0x7a8] sm:$0xff]
    %v8072 = vld [vmem:[#allocation15 + $0x7b0] sm:$0xff]
    %v8073 = vld [vmem:[#allocation15 + $0x7b8] sm:$0xff]
    %v8074 = vld [vmem:[#allocation15 + $0x7c0] sm:$0xf]
    %v8075 = vld [vmem:[#allocation15 + $0x7c4] sm:$0xff]
    %v8076 = vld [vmem:[#allocation15 + $0x7cc] sm:$0xff]
    %v8077 = vld [vmem:[#allocation15 + $0x7d4] sm:$0xff]
    %v8078 = vld [vmem:[#allocation15 + $0x7dc] sm:$0xf]
    %v8079 = vld [vmem:[#allocation15 + $0x7e0] sm:$0xff]
    %v8080 = vld [vmem:[#allocation15 + $0x7e8] sm:$0xff]
    %v8081 = vld [vmem:[#allocation15 + $0x7f0] sm:$0xff]
    %v8082 = vld [vmem:[#allocation15 + $0x7f8] sm:$0xf]
    %v8083 = vld [vmem:[#allocation15 + $0x7fc] sm:$0xff]
    %v8084 = vld [vmem:[#allocation15 + $0x804] sm:$0xff]
    %v8085 = vld [vmem:[#allocation15 + $0x80c] sm:$0xff]
    %v8086 = vld [vmem:[#allocation15 + $0x814] sm:$0xf]
    %v8087 = vld [vmem:[#allocation15 + $0x818] sm:$0xff]
    %v8088 = vld [vmem:[#allocation15 + $0x820] sm:$0xff]
    %v8089 = vld [vmem:[#allocation15 + $0x828] sm:$0xff]
    %v8090 = vld [vmem:[#allocation15 + $0x830] sm:$0xf]
    %v8091 = vld [vmem:[#allocation15 + $0x834] sm:$0xff]
    %v8092 = vld [vmem:[#allocation15 + $0x83c] sm:$0xff]
    %v8093 = vld [vmem:[#allocation15 + $0x844] sm:$0xff]
    %v8094 = vld [vmem:[#allocation15 + $0x84c] sm:$0xf]
    %v8095 = vld [vmem:[#allocation15 + $0x850] sm:$0xff]
    %v8096 = vld [vmem:[#allocation15 + $0x858] sm:$0xff]
    %v8097 = vld [vmem:[#allocation15 + $0x860] sm:$0xff]
    %v8098 = vld [vmem:[#allocation15 + $0x868] sm:$0xf]
    %v8099 = vld [vmem:[#allocation15 + $0x86c] sm:$0xff]
    %v8100 = vld [vmem:[#allocation15 + $0x874] sm:$0xff]
    %v8101 = vld [vmem:[#allocation15 + $0x87c] sm:$0xff]
    %v8102 = vld [vmem:[#allocation15 + $0x884] sm:$0xf]
    %v8103 = vld [vmem:[#allocation15 + $0x888] sm:$0xff]
    %v8104 = vld [vmem:[#allocation15 + $0x890] sm:$0xff]
    %v8105 = vld [vmem:[#allocation15 + $0x898] sm:$0xff]
    %v8106 = vld [vmem:[#allocation15 + $0x8a0] sm:$0xf]
    %v8107 = vld [vmem:[#allocation15 + $0x8a4] sm:$0xff]
    %v8108 = vld [vmem:[#allocation15 + $0x8ac] sm:$0xff]
    %v8109 = vld [vmem:[#allocation15 + $0x8b4] sm:$0xff]
    %v8110 = vld [vmem:[#allocation15 + $0x8bc] sm:$0xf]
    %v8111 = vld [vmem:[#allocation15 + $0x8c0] sm:$0xff]
    %v8112 = vld [vmem:[#allocation15 + $0x8c8] sm:$0xff]
    %v8113 = vld [vmem:[#allocation15 + $0x8d0] sm:$0xff]
    %v8114 = vld [vmem:[#allocation15 + $0x8d8] sm:$0xf]
    %v8115 = vld [vmem:[#allocation15 + $0x8dc] sm:$0xff]
    %v8116 = vld [vmem:[#allocation15 + $0x8e4] sm:$0xff]
    %v8117 = vld [vmem:[#allocation15 + $0x8ec] sm:$0xff]
    %v8118 = vld [vmem:[#allocation15 + $0x8f4] sm:$0xf]
    %v8119 = vld [vmem:[#allocation15 + $0x8f8] sm:$0xff]
    %v8120 = vld [vmem:[#allocation15 + $0x900] sm:$0xff]
    %v8121 = vld [vmem:[#allocation15 + $0x908] sm:$0xff]
    %v8122 = vld [vmem:[#allocation15 + $0x910] sm:$0xf]
    %v8123 = vld [vmem:[#allocation15 + $0x914] sm:$0xff]
    %v8124 = vld [vmem:[#allocation15 + $0x91c] sm:$0xff]
    %v8125 = vld [vmem:[#allocation15 + $0x924] sm:$0xff]
    %v8126 = vld [vmem:[#allocation15 + $0x92c] sm:$0xf]
    %v8127 = vld [vmem:[#allocation15 + $0x930] sm:$0xff]
    %v8128 = vld [vmem:[#allocation15 + $0x938] sm:$0xff]
    %v8129 = vld [vmem:[#allocation15 + $0x940] sm:$0xff]
    %v8130 = vld [vmem:[#allocation15 + $0x948] sm:$0xf]
    %v8131 = vld [vmem:[#allocation15 + $0x94c] sm:$0xff]
    %v8132 = vld [vmem:[#allocation15 + $0x954] sm:$0xff]
    %v8133 = vld [vmem:[#allocation15 + $0x95c] sm:$0xff]
    %v8134 = vld [vmem:[#allocation15 + $0x964] sm:$0xf]
    %v8135 = vld [vmem:[#allocation15 + $0x968] sm:$0xff]
    %v8136 = vld [vmem:[#allocation15 + $0x970] sm:$0xff]
    %v8137 = vld [vmem:[#allocation15 + $0x978] sm:$0xff]
    %v8138 = vld [vmem:[#allocation15 + $0x980] sm:$0xf]
    %v8139 = vld [vmem:[#allocation15 + $0x984] sm:$0xff]
    %v8140 = vld [vmem:[#allocation15 + $0x98c] sm:$0xff]
    %v8141 = vld [vmem:[#allocation15 + $0x994] sm:$0xff]
    %v8142 = vld [vmem:[#allocation15 + $0x99c] sm:$0xf]
    %v8143 = vld [vmem:[#allocation15 + $0x9a0] sm:$0xff]
    %v8144 = vld [vmem:[#allocation15 + $0x9a8] sm:$0xff]
    %v8145 = vld [vmem:[#allocation15 + $0x9b0] sm:$0xff]
    %v8146 = vld [vmem:[#allocation15 + $0x9b8] sm:$0xf]
    %v8147 = vld [vmem:[#allocation15 + $0x9bc] sm:$0xff]
    %v8148 = vld [vmem:[#allocation15 + $0x9c4] sm:$0xff]
    %v8149 = vld [vmem:[#allocation15 + $0x9cc] sm:$0xff]
    %v8150 = vld [vmem:[#allocation15 + $0x9d4] sm:$0xf]
    %v8151 = vld [vmem:[#allocation15 + $0x9d8] sm:$0xff]
    %v8152 = vld [vmem:[#allocation15 + $0x9e0] sm:$0xff]
    %v8153 = vld [vmem:[#allocation15 + $0x9e8] sm:$0xff]
    %v8154 = vld [vmem:[#allocation15 + $0x9f0] sm:$0xf]
    %v8155 = vld [vmem:[#allocation15 + $0x9f4] sm:$0xff]
    %v8156 = vld [vmem:[#allocation15 + $0x9fc] sm:$0xff]
    %v8157 = vld [vmem:[#allocation15 + $0xa04] sm:$0xff]
    %v8158 = vld [vmem:[#allocation15 + $0xa0c] sm:$0xf]
    %v8159 = vld [vmem:[#allocation15 + $0xa10] sm:$0xff]
    %v8160 = vld [vmem:[#allocation15 + $0xa18] sm:$0xff]
    %v8161 = vld [vmem:[#allocation15 + $0xa20] sm:$0xff]
    %v8162 = vld [vmem:[#allocation15 + $0xa28] sm:$0xf]
    %v8163 = vld [vmem:[#allocation15 + $0xa2c] sm:$0xff]
    %v8164 = vld [vmem:[#allocation15 + $0xa34] sm:$0xff]
    %v8165 = vld [vmem:[#allocation15 + $0xa3c] sm:$0xff]
    %v8166 = vld [vmem:[#allocation15 + $0xa44] sm:$0xf]
    %v8167 = vld [vmem:[#allocation15 + $0xa48] sm:$0xff]
    %v8168 = vld [vmem:[#allocation15 + $0xa50] sm:$0xff]
    %v8169 = vld [vmem:[#allocation15 + $0xa58] sm:$0xff]
    %v8170 = vld [vmem:[#allocation15 + $0xa60] sm:$0xf]
    %v8171 = vld [vmem:[#allocation15 + $0xa64] sm:$0xff]
    %v8172 = vld [vmem:[#allocation15 + $0xa6c] sm:$0xff]
    %v8173 = vld [vmem:[#allocation15 + $0xa74] sm:$0xff]
    %v8174 = vld [vmem:[#allocation15 + $0xa7c] sm:$0xf]
    %v8175 = vld [vmem:[#allocation15 + $0xa80] sm:$0xff]
    %v8176 = vld [vmem:[#allocation15 + $0xa88] sm:$0xff]
    %v8177 = vld [vmem:[#allocation15 + $0xa90] sm:$0xff]
    %v8178 = vld [vmem:[#allocation15 + $0xa98] sm:$0xf]
    %v8179 = vld [vmem:[#allocation15 + $0xa9c] sm:$0xff]
    %v8180 = vld [vmem:[#allocation15 + $0xaa4] sm:$0xff]
    %v8181 = vld [vmem:[#allocation15 + $0xaac] sm:$0xff]
    %v8182 = vld [vmem:[#allocation15 + $0xab4] sm:$0xf]
    %v8183 = vld [vmem:[#allocation15 + $0xab8] sm:$0xff]
    %v8184 = vld [vmem:[#allocation15 + $0xac0] sm:$0xff]
    %v8185 = vld [vmem:[#allocation15 + $0xac8] sm:$0xff]
    %v8186 = vld [vmem:[#allocation15 + $0xad0] sm:$0xf]
    %v8187 = vld [vmem:[#allocation15 + $0xad4] sm:$0xff]
    %v8188 = vld [vmem:[#allocation15 + $0xadc] sm:$0xff]
    %v8189 = vld [vmem:[#allocation15 + $0xae4] sm:$0xff]
    %v8190 = vld [vmem:[#allocation15 + $0xaec] sm:$0xf]
    %v8191 = vld [vmem:[#allocation15 + $0xaf0] sm:$0xff]
    %v8192 = vld [vmem:[#allocation15 + $0xaf8] sm:$0xff]
    %v8193 = vld [vmem:[#allocation15 + $0xb00] sm:$0xff]
    %v8194 = vld [vmem:[#allocation15 + $0xb08] sm:$0xf]
    %v8195 = vld [vmem:[#allocation15 + $0xb0c] sm:$0xff]
    %v8196 = vld [vmem:[#allocation15 + $0xb14] sm:$0xff]
    %v8197 = vld [vmem:[#allocation15 + $0xb1c] sm:$0xff]
    %v8198 = vld [vmem:[#allocation15 + $0xb24] sm:$0xf]
    %v8199 = vld [vmem:[#allocation15 + $0xb28] sm:$0xff]
    %v8200 = vld [vmem:[#allocation15 + $0xb30] sm:$0xff]
    %v8201 = vld [vmem:[#allocation15 + $0xb38] sm:$0xff]
    %v8202 = vld [vmem:[#allocation15 + $0xb40] sm:$0xf]
    %v8203 = vld [vmem:[#allocation15 + $0xb44] sm:$0xff]
    %v8204 = vld [vmem:[#allocation15 + $0xb4c] sm:$0xff]
    %v8205 = vld [vmem:[#allocation15 + $0xb54] sm:$0xff]
    %v8206 = vld [vmem:[#allocation15 + $0xb5c] sm:$0xf]
    %v8207 = vld [vmem:[#allocation15 + $0xb60] sm:$0xff]
    %v8208 = vld [vmem:[#allocation15 + $0xb68] sm:$0xff]
    %v8209 = vld [vmem:[#allocation15 + $0xb70] sm:$0xff]
    %v8210 = vld [vmem:[#allocation15 + $0xb78] sm:$0xf]
    %v8211 = vld [vmem:[#allocation15 + $0xb7c] sm:$0xff]
    %v8212 = vld [vmem:[#allocation15 + $0xb84] sm:$0xff]
    %v8213 = vld [vmem:[#allocation15 + $0xb8c] sm:$0xff]
    %v8214 = vld [vmem:[#allocation15 + $0xb94] sm:$0xf]
    %v8215 = vld [vmem:[#allocation15 + $0xb98] sm:$0xff]
    %v8216 = vld [vmem:[#allocation15 + $0xba0] sm:$0xff]
    %v8217 = vld [vmem:[#allocation15 + $0xba8] sm:$0xff]
    %v8218 = vld [vmem:[#allocation15 + $0xbb0] sm:$0xf]
    %v8219 = vld [vmem:[#allocation15 + $0xbb4] sm:$0xff]
    %v8220 = vld [vmem:[#allocation15 + $0xbbc] sm:$0xff]
    %v8221 = vld [vmem:[#allocation15 + $0xbc4] sm:$0xff]
    %v8222 = vld [vmem:[#allocation15 + $0xbcc] sm:$0xf]
    %v8223 = vld [vmem:[#allocation15 + $0xbd0] sm:$0xff]
    %v8224 = vld [vmem:[#allocation15 + $0xbd8] sm:$0xff]
    %v8225 = vld [vmem:[#allocation15 + $0xbe0] sm:$0xff]
    %v8226 = vld [vmem:[#allocation15 + $0xbe8] sm:$0xf]
    %v8227 = vld [vmem:[#allocation15 + $0xbec] sm:$0xff]
    %v8228 = vld [vmem:[#allocation15 + $0xbf4] sm:$0xff]
    %v8229 = vld [vmem:[#allocation15 + $0xbfc] sm:$0xff]
    %v8230 = vld [vmem:[#allocation15 + $0xc04] sm:$0xf]
    %v8231 = vld [vmem:[#allocation15 + $0xc08] sm:$0xff]
    %v8232 = vld [vmem:[#allocation15 + $0xc10] sm:$0xff]
    %v8233 = vld [vmem:[#allocation15 + $0xc18] sm:$0xff]
    %v8234 = vld [vmem:[#allocation15 + $0xc20] sm:$0xf]
    %v8235 = vld [vmem:[#allocation15 + $0xc24] sm:$0xff]
    %v8236 = vld [vmem:[#allocation15 + $0xc2c] sm:$0xff]
    %v8237 = vld [vmem:[#allocation15 + $0xc34] sm:$0xff]
    %v8238 = vld [vmem:[#allocation15 + $0xc3c] sm:$0xf]
    %v8239 = vld [vmem:[#allocation16] sm:$0xff]
    %v8241 = vlaneseq
    %v8242 = vshrl.u32 %v8241, 7
    %v8243 = vsub.s32 0, %v8242
    %v8244 = vrot.slane %v8239, %v8243
    %v8245 = vlaneseq
    %v8246 = vshrl.u32 %v8245, 7
    %v8247 = vsub.s32 1, %v8246
    %v8248 = vrot.slane %v8239, %v8247
    %v8249 = vlaneseq
    %v8250 = vshrl.u32 %v8249, 7
    %v8251 = vsub.s32 2, %v8250
    %v8252 = vrot.slane %v8239, %v8251
    %v8253 = vlaneseq
    %v8254 = vshrl.u32 %v8253, 7
    %v8255 = vsub.s32 3, %v8254
    %v8256 = vrot.slane %v8239, %v8255
    %v8257 = vlaneseq
    %v8258 = vshrl.u32 %v8257, 7
    %v8259 = vsub.s32 4, %v8258
    %v8260 = vrot.slane %v8239, %v8259
    %v8261 = vlaneseq
    %v8262 = vshrl.u32 %v8261, 7
    %v8263 = vsub.s32 5, %v8262
    %v8264 = vrot.slane %v8239, %v8263
    %v8265 = vlaneseq
    %v8266 = vshrl.u32 %v8265, 7
    %v8267 = vsub.s32 6, %v8266
    %v8268 = vrot.slane %v8239, %v8267
    %v8724 = vunpack.c.l.b16 %v7791
    %v8725 = vunpack.c.h.b16 %v7791
    %v8726 = vunpack.c.l.b16 %v7792
    %v8727 = vunpack.c.h.b16 %v7792
    %v8728 = vunpack.c.l.b16 %v7793
    %v8729 = vunpack.c.h.b16 %v7793
    %v8730 = vunpack.c.l.b16 %v7794
    %v8731 = vunpack.c.l.b16 %v7795
    %v8732 = vunpack.c.h.b16 %v7795
    %v8733 = vunpack.c.l.b16 %v7796
    %v8734 = vunpack.c.h.b16 %v7796
    %v8735 = vunpack.c.l.b16 %v7797
    %v8736 = vunpack.c.h.b16 %v7797
    %v8737 = vunpack.c.l.b16 %v7798
    %v8738 = vunpack.c.l.b16 %v7799
    %v8739 = vunpack.c.h.b16 %v7799
    %v8740 = vunpack.c.l.b16 %v7800
    %v8741 = vunpack.c.h.b16 %v7800
    %v8742 = vunpack.c.l.b16 %v7801
    %v8743 = vunpack.c.h.b16 %v7801
    %v8744 = vunpack.c.l.b16 %v7802
    %v8745 = vunpack.c.l.b16 %v7803
    %v8746 = vunpack.c.h.b16 %v7803
    %v8747 = vunpack.c.l.b16 %v7804
    %v8748 = vunpack.c.h.b16 %v7804
    %v8749 = vunpack.c.l.b16 %v7805
    %v8750 = vunpack.c.h.b16 %v7805
    %v8751 = vunpack.c.l.b16 %v7806
    %v8752 = vunpack.c.l.b16 %v7807
    %v8753 = vunpack.c.h.b16 %v7807
    %v8754 = vunpack.c.l.b16 %v7808
    %v8755 = vunpack.c.h.b16 %v7808
    %v8756 = vunpack.c.l.b16 %v7809
    %v8757 = vunpack.c.h.b16 %v7809
    %v8758 = vunpack.c.l.b16 %v7810
    %v8759 = vunpack.c.l.b16 %v7811
    %v8760 = vunpack.c.h.b16 %v7811
    %v8761 = vunpack.c.l.b16 %v7812
    %v8762 = vunpack.c.h.b16 %v7812
    %v8763 = vunpack.c.l.b16 %v7813
    %v8764 = vunpack.c.h.b16 %v7813
    %v8765 = vunpack.c.l.b16 %v7814
    %v8766 = vunpack.c.l.b16 %v7815
    %v8767 = vunpack.c.h.b16 %v7815
    %v8768 = vunpack.c.l.b16 %v7816
    %v8769 = vunpack.c.h.b16 %v7816
    %v8770 = vunpack.c.l.b16 %v7817
    %v8771 = vunpack.c.h.b16 %v7817
    %v8772 = vunpack.c.l.b16 %v7818
    %v8773 = vunpack.c.l.b16 %v7819
    %v8774 = vunpack.c.h.b16 %v7819
    %v8775 = vunpack.c.l.b16 %v7820
    %v8776 = vunpack.c.h.b16 %v7820
    %v8777 = vunpack.c.l.b16 %v7821
    %v8778 = vunpack.c.h.b16 %v7821
    %v8779 = vunpack.c.l.b16 %v7822
    %v8780 = vunpack.c.l.b16 %v7823
    %v8781 = vunpack.c.h.b16 %v7823
    %v8782 = vunpack.c.l.b16 %v7824
    %v8783 = vunpack.c.h.b16 %v7824
    %v8784 = vunpack.c.l.b16 %v7825
    %v8785 = vunpack.c.h.b16 %v7825
    %v8786 = vunpack.c.l.b16 %v7826
    %v8787 = vunpack.c.l.b16 %v7827
    %v8788 = vunpack.c.h.b16 %v7827
    %v8789 = vunpack.c.l.b16 %v7828
    %v8790 = vunpack.c.h.b16 %v7828
    %v8791 = vunpack.c.l.b16 %v7829
    %v8792 = vunpack.c.h.b16 %v7829
    %v8793 = vunpack.c.l.b16 %v7830
    %v8794 = vunpack.c.l.b16 %v7831
    %v8795 = vunpack.c.h.b16 %v7831
    %v8796 = vunpack.c.l.b16 %v7832
    %v8797 = vunpack.c.h.b16 %v7832
    %v8798 = vunpack.c.l.b16 %v7833
    %v8799 = vunpack.c.h.b16 %v7833
    %v8800 = vunpack.c.l.b16 %v7834
    %v8801 = vunpack.c.l.b16 %v7835
    %v8802 = vunpack.c.h.b16 %v7835
    %v8803 = vunpack.c.l.b16 %v7836
    %v8804 = vunpack.c.h.b16 %v7836
    %v8805 = vunpack.c.l.b16 %v7837
    %v8806 = vunpack.c.h.b16 %v7837
    %v8807 = vunpack.c.l.b16 %v7838
    %v8808 = vunpack.c.l.b16 %v7839
    %v8809 = vunpack.c.h.b16 %v7839
    %v8810 = vunpack.c.l.b16 %v7840
    %v8811 = vunpack.c.h.b16 %v7840
    %v8812 = vunpack.c.l.b16 %v7841
    %v8813 = vunpack.c.h.b16 %v7841
    %v8814 = vunpack.c.l.b16 %v7842
    %v8815 = vunpack.c.l.b16 %v7843
    %v8816 = vunpack.c.h.b16 %v7843
    %v8817 = vunpack.c.l.b16 %v7844
    %v8818 = vunpack.c.h.b16 %v7844
    %v8819 = vunpack.c.l.b16 %v7845
    %v8820 = vunpack.c.h.b16 %v7845
    %v8821 = vunpack.c.l.b16 %v7846
    %v8822 = vunpack.c.l.b16 %v7847
    %v8823 = vunpack.c.h.b16 %v7847
    %v8824 = vunpack.c.l.b16 %v7848
    %v8825 = vunpack.c.h.b16 %v7848
    %v8826 = vunpack.c.l.b16 %v7849
    %v8827 = vunpack.c.h.b16 %v7849
    %v8828 = vunpack.c.l.b16 %v7850
    %v8829 = vunpack.c.l.b16 %v7851
    %v8830 = vunpack.c.h.b16 %v7851
    %v8831 = vunpack.c.l.b16 %v7852
    %v8832 = vunpack.c.h.b16 %v7852
    %v8833 = vunpack.c.l.b16 %v7853
    %v8834 = vunpack.c.h.b16 %v7853
    %v8835 = vunpack.c.l.b16 %v7854
    %v8836 = vunpack.c.l.b16 %v7855
    %v8837 = vunpack.c.h.b16 %v7855
    %v8838 = vunpack.c.l.b16 %v7856
    %v8839 = vunpack.c.h.b16 %v7856
    %v8840 = vunpack.c.l.b16 %v7857
    %v8841 = vunpack.c.h.b16 %v7857
    %v8842 = vunpack.c.l.b16 %v7858
    %v8843 = vunpack.c.l.b16 %v7859
    %v8844 = vunpack.c.h.b16 %v7859
    %v8845 = vunpack.c.l.b16 %v7860
    %v8846 = vunpack.c.h.b16 %v7860
    %v8847 = vunpack.c.l.b16 %v7861
    %v8848 = vunpack.c.h.b16 %v7861
    %v8849 = vunpack.c.l.b16 %v7862
    %v8850 = vunpack.c.l.b16 %v7863
    %v8851 = vunpack.c.h.b16 %v7863
    %v8852 = vunpack.c.l.b16 %v7864
    %v8853 = vunpack.c.h.b16 %v7864
    %v8854 = vunpack.c.l.b16 %v7865
    %v8855 = vunpack.c.h.b16 %v7865
    %v8856 = vunpack.c.l.b16 %v7866
    %v8857 = vunpack.c.l.b16 %v7867
    %v8858 = vunpack.c.h.b16 %v7867
    %v8859 = vunpack.c.l.b16 %v7868
    %v8860 = vunpack.c.h.b16 %v7868
    %v8861 = vunpack.c.l.b16 %v7869
    %v8862 = vunpack.c.h.b16 %v7869
    %v8863 = vunpack.c.l.b16 %v7870
    %v8864 = vunpack.c.l.b16 %v7871
    %v8865 = vunpack.c.h.b16 %v7871
    %v8866 = vunpack.c.l.b16 %v7872
    %v8867 = vunpack.c.h.b16 %v7872
    %v8868 = vunpack.c.l.b16 %v7873
    %v8869 = vunpack.c.h.b16 %v7873
    %v8870 = vunpack.c.l.b16 %v7874
    %v8871 = vunpack.c.l.b16 %v7875
    %v8872 = vunpack.c.h.b16 %v7875
    %v8873 = vunpack.c.l.b16 %v7876
    %v8874 = vunpack.c.h.b16 %v7876
    %v8875 = vunpack.c.l.b16 %v7877
    %v8876 = vunpack.c.h.b16 %v7877
    %v8877 = vunpack.c.l.b16 %v7878
    %v8878 = vunpack.c.l.b16 %v7879
    %v8879 = vunpack.c.h.b16 %v7879
    %v8880 = vunpack.c.l.b16 %v7880
    %v8881 = vunpack.c.h.b16 %v7880
    %v8882 = vunpack.c.l.b16 %v7881
    %v8883 = vunpack.c.h.b16 %v7881
    %v8884 = vunpack.c.l.b16 %v7882
    %v8885 = vunpack.c.l.b16 %v7883
    %v8886 = vunpack.c.h.b16 %v7883
    %v8887 = vunpack.c.l.b16 %v7884
    %v8888 = vunpack.c.h.b16 %v7884
    %v8889 = vunpack.c.l.b16 %v7885
    %v8890 = vunpack.c.h.b16 %v7885
    %v8891 = vunpack.c.l.b16 %v7886
    %v8892 = vunpack.c.l.b16 %v7887
    %v8893 = vunpack.c.h.b16 %v7887
    %v8894 = vunpack.c.l.b16 %v7888
    %v8895 = vunpack.c.h.b16 %v7888
    %v8896 = vunpack.c.l.b16 %v7889
    %v8897 = vunpack.c.h.b16 %v7889
    %v8898 = vunpack.c.l.b16 %v7890
    %v8899 = vunpack.c.l.b16 %v7891
    %v8900 = vunpack.c.h.b16 %v7891
    %v8901 = vunpack.c.l.b16 %v7892
    %v8902 = vunpack.c.h.b16 %v7892
    %v8903 = vunpack.c.l.b16 %v7893
    %v8904 = vunpack.c.h.b16 %v7893
    %v8905 = vunpack.c.l.b16 %v7894
    %v8906 = vunpack.c.l.b16 %v7895
    %v8907 = vunpack.c.h.b16 %v7895
    %v8908 = vunpack.c.l.b16 %v7896
    %v8909 = vunpack.c.h.b16 %v7896
    %v8910 = vunpack.c.l.b16 %v7897
    %v8911 = vunpack.c.h.b16 %v7897
    %v8912 = vunpack.c.l.b16 %v7898
    %v8913 = vunpack.c.l.b16 %v7899
    %v8914 = vunpack.c.h.b16 %v7899
    %v8915 = vunpack.c.l.b16 %v7900
    %v8916 = vunpack.c.h.b16 %v7900
    %v8917 = vunpack.c.l.b16 %v7901
    %v8918 = vunpack.c.h.b16 %v7901
    %v8919 = vunpack.c.l.b16 %v7902
    %v8920 = vunpack.c.l.b16 %v7903
    %v8921 = vunpack.c.h.b16 %v7903
    %v8922 = vunpack.c.l.b16 %v7904
    %v8923 = vunpack.c.h.b16 %v7904
    %v8924 = vunpack.c.l.b16 %v7905
    %v8925 = vunpack.c.h.b16 %v7905
    %v8926 = vunpack.c.l.b16 %v7906
    %v8927 = vunpack.c.l.b16 %v7907
    %v8928 = vunpack.c.h.b16 %v7907
    %v8929 = vunpack.c.l.b16 %v7908
    %v8930 = vunpack.c.h.b16 %v7908
    %v8931 = vunpack.c.l.b16 %v7909
    %v8932 = vunpack.c.h.b16 %v7909
    %v8933 = vunpack.c.l.b16 %v7910
    %v8934 = vunpack.c.l.b16 %v7911
    %v8935 = vunpack.c.h.b16 %v7911
    %v8936 = vunpack.c.l.b16 %v7912
    %v8937 = vunpack.c.h.b16 %v7912
    %v8938 = vunpack.c.l.b16 %v7913
    %v8939 = vunpack.c.h.b16 %v7913
    %v8940 = vunpack.c.l.b16 %v7914
    %v8941 = vunpack.c.l.b16 %v7915
    %v8942 = vunpack.c.h.b16 %v7915
    %v8943 = vunpack.c.l.b16 %v7916
    %v8944 = vunpack.c.h.b16 %v7916
    %v8945 = vunpack.c.l.b16 %v7917
    %v8946 = vunpack.c.h.b16 %v7917
    %v8947 = vunpack.c.l.b16 %v7918
    %v8948 = vunpack.c.l.b16 %v7919
    %v8949 = vunpack.c.h.b16 %v7919
    %v8950 = vunpack.c.l.b16 %v7920
    %v8951 = vunpack.c.h.b16 %v7920
    %v8952 = vunpack.c.l.b16 %v7921
    %v8953 = vunpack.c.h.b16 %v7921
    %v8954 = vunpack.c.l.b16 %v7922
    %v8955 = vunpack.c.l.b16 %v7923
    %v8956 = vunpack.c.h.b16 %v7923
    %v8957 = vunpack.c.l.b16 %v7924
    %v8958 = vunpack.c.h.b16 %v7924
    %v8959 = vunpack.c.l.b16 %v7925
    %v8960 = vunpack.c.h.b16 %v7925
    %v8961 = vunpack.c.l.b16 %v7926
    %v8962 = vunpack.c.l.b16 %v7927
    %v8963 = vunpack.c.h.b16 %v7927
    %v8964 = vunpack.c.l.b16 %v7928
    %v8965 = vunpack.c.h.b16 %v7928
    %v8966 = vunpack.c.l.b16 %v7929
    %v8967 = vunpack.c.h.b16 %v7929
    %v8968 = vunpack.c.l.b16 %v7930
    %v8969 = vunpack.c.l.b16 %v7931
    %v8970 = vunpack.c.h.b16 %v7931
    %v8971 = vunpack.c.l.b16 %v7932
    %v8972 = vunpack.c.h.b16 %v7932
    %v8973 = vunpack.c.l.b16 %v7933
    %v8974 = vunpack.c.h.b16 %v7933
    %v8975 = vunpack.c.l.b16 %v7934
    %v8976 = vunpack.c.l.b16 %v7935
    %v8977 = vunpack.c.h.b16 %v7935
    %v8978 = vunpack.c.l.b16 %v7936
    %v8979 = vunpack.c.h.b16 %v7936
    %v8980 = vunpack.c.l.b16 %v7937
    %v8981 = vunpack.c.h.b16 %v7937
    %v8982 = vunpack.c.l.b16 %v7938
    %v8983 = vunpack.c.l.b16 %v7939
    %v8984 = vunpack.c.h.b16 %v7939
    %v8985 = vunpack.c.l.b16 %v7940
    %v8986 = vunpack.c.h.b16 %v7940
    %v8987 = vunpack.c.l.b16 %v7941
    %v8988 = vunpack.c.h.b16 %v7941
    %v8989 = vunpack.c.l.b16 %v7942
    %v8990 = vunpack.c.l.b16 %v7943
    %v8991 = vunpack.c.h.b16 %v7943
    %v8992 = vunpack.c.l.b16 %v7944
    %v8993 = vunpack.c.h.b16 %v7944
    %v8994 = vunpack.c.l.b16 %v7945
    %v8995 = vunpack.c.h.b16 %v7945
    %v8996 = vunpack.c.l.b16 %v7946
    %v8997 = vunpack.c.l.b16 %v7947
    %v8998 = vunpack.c.h.b16 %v7947
    %v8999 = vunpack.c.l.b16 %v7948
    %v9000 = vunpack.c.h.b16 %v7948
    %v9001 = vunpack.c.l.b16 %v7949
    %v9002 = vunpack.c.h.b16 %v7949
    %v9003 = vunpack.c.l.b16 %v7950
    %v9004 = vunpack.c.l.b16 %v7951
    %v9005 = vunpack.c.h.b16 %v7951
    %v9006 = vunpack.c.l.b16 %v7952
    %v9007 = vunpack.c.h.b16 %v7952
    %v9008 = vunpack.c.l.b16 %v7953
    %v9009 = vunpack.c.h.b16 %v7953
    %v9010 = vunpack.c.l.b16 %v7954
    %v9011 = vunpack.c.l.b16 %v7955
    %v9012 = vunpack.c.h.b16 %v7955
    %v9013 = vunpack.c.l.b16 %v7956
    %v9014 = vunpack.c.h.b16 %v7956
    %v9015 = vunpack.c.l.b16 %v7957
    %v9016 = vunpack.c.h.b16 %v7957
    %v9017 = vunpack.c.l.b16 %v7958
    %v9018 = vunpack.c.l.b16 %v7959
    %v9019 = vunpack.c.h.b16 %v7959
    %v9020 = vunpack.c.l.b16 %v7960
    %v9021 = vunpack.c.h.b16 %v7960
    %v9022 = vunpack.c.l.b16 %v7961
    %v9023 = vunpack.c.h.b16 %v7961
    %v9024 = vunpack.c.l.b16 %v7962
    %v9025 = vunpack.c.l.b16 %v7963
    %v9026 = vunpack.c.h.b16 %v7963
    %v9027 = vunpack.c.l.b16 %v7964
    %v9028 = vunpack.c.h.b16 %v7964
    %v9029 = vunpack.c.l.b16 %v7965
    %v9030 = vunpack.c.h.b16 %v7965
    %v9031 = vunpack.c.l.b16 %v7966
    %v9032 = vunpack.c.l.b16 %v7967
    %v9033 = vunpack.c.h.b16 %v7967
    %v9034 = vunpack.c.l.b16 %v7968
    %v9035 = vunpack.c.h.b16 %v7968
    %v9036 = vunpack.c.l.b16 %v7969
    %v9037 = vunpack.c.h.b16 %v7969
    %v9038 = vunpack.c.l.b16 %v7970
    %v9039 = vunpack.c.l.b16 %v7971
    %v9040 = vunpack.c.h.b16 %v7971
    %v9041 = vunpack.c.l.b16 %v7972
    %v9042 = vunpack.c.h.b16 %v7972
    %v9043 = vunpack.c.l.b16 %v7973
    %v9044 = vunpack.c.h.b16 %v7973
    %v9045 = vunpack.c.l.b16 %v7974
    %v9046 = vunpack.c.l.b16 %v7975
    %v9047 = vunpack.c.h.b16 %v7975
    %v9048 = vunpack.c.l.b16 %v7976
    %v9049 = vunpack.c.h.b16 %v7976
    %v9050 = vunpack.c.l.b16 %v7977
    %v9051 = vunpack.c.h.b16 %v7977
    %v9052 = vunpack.c.l.b16 %v7978
    %v9053 = vunpack.c.l.b16 %v7979
    %v9054 = vunpack.c.h.b16 %v7979
    %v9055 = vunpack.c.l.b16 %v7980
    %v9056 = vunpack.c.h.b16 %v7980
    %v9057 = vunpack.c.l.b16 %v7981
    %v9058 = vunpack.c.h.b16 %v7981
    %v9059 = vunpack.c.l.b16 %v7982
    %v9060 = vunpack.c.l.b16 %v7983
    %v9061 = vunpack.c.h.b16 %v7983
    %v9062 = vunpack.c.l.b16 %v7984
    %v9063 = vunpack.c.h.b16 %v7984
    %v9064 = vunpack.c.l.b16 %v7985
    %v9065 = vunpack.c.h.b16 %v7985
    %v9066 = vunpack.c.l.b16 %v7986
    %v9067 = vunpack.c.l.b16 %v7987
    %v9068 = vunpack.c.h.b16 %v7987
    %v9069 = vunpack.c.l.b16 %v7988
    %v9070 = vunpack.c.h.b16 %v7988
    %v9071 = vunpack.c.l.b16 %v7989
    %v9072 = vunpack.c.h.b16 %v7989
    %v9073 = vunpack.c.l.b16 %v7990
    %v9074 = vunpack.c.l.b16 %v7991
    %v9075 = vunpack.c.h.b16 %v7991
    %v9076 = vunpack.c.l.b16 %v7992
    %v9077 = vunpack.c.h.b16 %v7992
    %v9078 = vunpack.c.l.b16 %v7993
    %v9079 = vunpack.c.h.b16 %v7993
    %v9080 = vunpack.c.l.b16 %v7994
    %v9081 = vunpack.c.l.b16 %v7995
    %v9082 = vunpack.c.h.b16 %v7995
    %v9083 = vunpack.c.l.b16 %v7996
    %v9084 = vunpack.c.h.b16 %v7996
    %v9085 = vunpack.c.l.b16 %v7997
    %v9086 = vunpack.c.h.b16 %v7997
    %v9087 = vunpack.c.l.b16 %v7998
    %v9088 = vunpack.c.l.b16 %v7999
    %v9089 = vunpack.c.h.b16 %v7999
    %v9090 = vunpack.c.l.b16 %v8000
    %v9091 = vunpack.c.h.b16 %v8000
    %v9092 = vunpack.c.l.b16 %v8001
    %v9093 = vunpack.c.h.b16 %v8001
    %v9094 = vunpack.c.l.b16 %v8002
    %v9095 = vunpack.c.l.b16 %v8003
    %v9096 = vunpack.c.h.b16 %v8003
    %v9097 = vunpack.c.l.b16 %v8004
    %v9098 = vunpack.c.h.b16 %v8004
    %v9099 = vunpack.c.l.b16 %v8005
    %v9100 = vunpack.c.h.b16 %v8005
    %v9101 = vunpack.c.l.b16 %v8006
    %v9102 = vunpack.c.l.b16 %v8007
    %v9103 = vunpack.c.h.b16 %v8007
    %v9104 = vunpack.c.l.b16 %v8008
    %v9105 = vunpack.c.h.b16 %v8008
    %v9106 = vunpack.c.l.b16 %v8009
    %v9107 = vunpack.c.h.b16 %v8009
    %v9108 = vunpack.c.l.b16 %v8010
    %v9109 = vunpack.c.l.b16 %v8011
    %v9110 = vunpack.c.h.b16 %v8011
    %v9111 = vunpack.c.l.b16 %v8012
    %v9112 = vunpack.c.h.b16 %v8012
    %v9113 = vunpack.c.l.b16 %v8013
    %v9114 = vunpack.c.h.b16 %v8013
    %v9115 = vunpack.c.l.b16 %v8014
    %v9116 = vunpack.c.l.b16 %v8015
    %v9117 = vunpack.c.h.b16 %v8015
    %v9118 = vunpack.c.l.b16 %v8016
    %v9119 = vunpack.c.h.b16 %v8016
    %v9120 = vunpack.c.l.b16 %v8017
    %v9121 = vunpack.c.h.b16 %v8017
    %v9122 = vunpack.c.l.b16 %v8018
    %v9123 = vunpack.c.l.b16 %v8019
    %v9124 = vunpack.c.h.b16 %v8019
    %v9125 = vunpack.c.l.b16 %v8020
    %v9126 = vunpack.c.h.b16 %v8020
    %v9127 = vunpack.c.l.b16 %v8021
    %v9128 = vunpack.c.h.b16 %v8021
    %v9129 = vunpack.c.l.b16 %v8022
    %v9130 = vunpack.c.l.b16 %v8023
    %v9131 = vunpack.c.h.b16 %v8023
    %v9132 = vunpack.c.l.b16 %v8024
    %v9133 = vunpack.c.h.b16 %v8024
    %v9134 = vunpack.c.l.b16 %v8025
    %v9135 = vunpack.c.h.b16 %v8025
    %v9136 = vunpack.c.l.b16 %v8026
    %v9137 = vunpack.c.l.b16 %v8027
    %v9138 = vunpack.c.h.b16 %v8027
    %v9139 = vunpack.c.l.b16 %v8028
    %v9140 = vunpack.c.h.b16 %v8028
    %v9141 = vunpack.c.l.b16 %v8029
    %v9142 = vunpack.c.h.b16 %v8029
    %v9143 = vunpack.c.l.b16 %v8030
    %v9144 = vunpack.c.l.b16 %v8031
    %v9145 = vunpack.c.h.b16 %v8031
    %v9146 = vunpack.c.l.b16 %v8032
    %v9147 = vunpack.c.h.b16 %v8032
    %v9148 = vunpack.c.l.b16 %v8033
    %v9149 = vunpack.c.h.b16 %v8033
    %v9150 = vunpack.c.l.b16 %v8034
    %v9151 = vunpack.c.l.b16 %v8035
    %v9152 = vunpack.c.h.b16 %v8035
    %v9153 = vunpack.c.l.b16 %v8036
    %v9154 = vunpack.c.h.b16 %v8036
    %v9155 = vunpack.c.l.b16 %v8037
    %v9156 = vunpack.c.h.b16 %v8037
    %v9157 = vunpack.c.l.b16 %v8038
    %v9158 = vunpack.c.l.b16 %v8039
    %v9159 = vunpack.c.h.b16 %v8039
    %v9160 = vunpack.c.l.b16 %v8040
    %v9161 = vunpack.c.h.b16 %v8040
    %v9162 = vunpack.c.l.b16 %v8041
    %v9163 = vunpack.c.h.b16 %v8041
    %v9164 = vunpack.c.l.b16 %v8042
    %v9165 = vunpack.c.l.b16 %v8043
    %v9166 = vunpack.c.h.b16 %v8043
    %v9167 = vunpack.c.l.b16 %v8044
    %v9168 = vunpack.c.h.b16 %v8044
    %v9169 = vunpack.c.l.b16 %v8045
    %v9170 = vunpack.c.h.b16 %v8045
    %v9171 = vunpack.c.l.b16 %v8046
    %v9172 = vunpack.c.l.b16 %v8047
    %v9173 = vunpack.c.h.b16 %v8047
    %v9174 = vunpack.c.l.b16 %v8048
    %v9175 = vunpack.c.h.b16 %v8048
    %v9176 = vunpack.c.l.b16 %v8049
    %v9177 = vunpack.c.h.b16 %v8049
    %v9178 = vunpack.c.l.b16 %v8050
    %v9179 = vunpack.c.l.b16 %v8051
    %v9180 = vunpack.c.h.b16 %v8051
    %v9181 = vunpack.c.l.b16 %v8052
    %v9182 = vunpack.c.h.b16 %v8052
    %v9183 = vunpack.c.l.b16 %v8053
    %v9184 = vunpack.c.h.b16 %v8053
    %v9185 = vunpack.c.l.b16 %v8054
    %v9186 = vunpack.c.l.b16 %v8055
    %v9187 = vunpack.c.h.b16 %v8055
    %v9188 = vunpack.c.l.b16 %v8056
    %v9189 = vunpack.c.h.b16 %v8056
    %v9190 = vunpack.c.l.b16 %v8057
    %v9191 = vunpack.c.h.b16 %v8057
    %v9192 = vunpack.c.l.b16 %v8058
    %v9193 = vunpack.c.l.b16 %v8059
    %v9194 = vunpack.c.h.b16 %v8059
    %v9195 = vunpack.c.l.b16 %v8060
    %v9196 = vunpack.c.h.b16 %v8060
    %v9197 = vunpack.c.l.b16 %v8061
    %v9198 = vunpack.c.h.b16 %v8061
    %v9199 = vunpack.c.l.b16 %v8062
    %v9200 = vunpack.c.l.b16 %v8063
    %v9201 = vunpack.c.h.b16 %v8063
    %v9202 = vunpack.c.l.b16 %v8064
    %v9203 = vunpack.c.h.b16 %v8064
    %v9204 = vunpack.c.l.b16 %v8065
    %v9205 = vunpack.c.h.b16 %v8065
    %v9206 = vunpack.c.l.b16 %v8066
    %v9207 = vunpack.c.l.b16 %v8067
    %v9208 = vunpack.c.h.b16 %v8067
    %v9209 = vunpack.c.l.b16 %v8068
    %v9210 = vunpack.c.h.b16 %v8068
    %v9211 = vunpack.c.l.b16 %v8069
    %v9212 = vunpack.c.h.b16 %v8069
    %v9213 = vunpack.c.l.b16 %v8070
    %v9214 = vunpack.c.l.b16 %v8071
    %v9215 = vunpack.c.h.b16 %v8071
    %v9216 = vunpack.c.l.b16 %v8072
    %v9217 = vunpack.c.h.b16 %v8072
    %v9218 = vunpack.c.l.b16 %v8073
    %v9219 = vunpack.c.h.b16 %v8073
    %v9220 = vunpack.c.l.b16 %v8074
    %v9221 = vunpack.c.l.b16 %v8075
    %v9222 = vunpack.c.h.b16 %v8075
    %v9223 = vunpack.c.l.b16 %v8076
    %v9224 = vunpack.c.h.b16 %v8076
    %v9225 = vunpack.c.l.b16 %v8077
    %v9226 = vunpack.c.h.b16 %v8077
    %v9227 = vunpack.c.l.b16 %v8078
    %v9228 = vunpack.c.l.b16 %v8079
    %v9229 = vunpack.c.h.b16 %v8079
    %v9230 = vunpack.c.l.b16 %v8080
    %v9231 = vunpack.c.h.b16 %v8080
    %v9232 = vunpack.c.l.b16 %v8081
    %v9233 = vunpack.c.h.b16 %v8081
    %v9234 = vunpack.c.l.b16 %v8082
    %v9235 = vunpack.c.l.b16 %v8083
    %v9236 = vunpack.c.h.b16 %v8083
    %v9237 = vunpack.c.l.b16 %v8084
    %v9238 = vunpack.c.h.b16 %v8084
    %v9239 = vunpack.c.l.b16 %v8085
    %v9240 = vunpack.c.h.b16 %v8085
    %v9241 = vunpack.c.l.b16 %v8086
    %v9242 = vunpack.c.l.b16 %v8087
    %v9243 = vunpack.c.h.b16 %v8087
    %v9244 = vunpack.c.l.b16 %v8088
    %v9245 = vunpack.c.h.b16 %v8088
    %v9246 = vunpack.c.l.b16 %v8089
    %v9247 = vunpack.c.h.b16 %v8089
    %v9248 = vunpack.c.l.b16 %v8090
    %v9249 = vunpack.c.l.b16 %v8091
    %v9250 = vunpack.c.h.b16 %v8091
    %v9251 = vunpack.c.l.b16 %v8092
    %v9252 = vunpack.c.h.b16 %v8092
    %v9253 = vunpack.c.l.b16 %v8093
    %v9254 = vunpack.c.h.b16 %v8093
    %v9255 = vunpack.c.l.b16 %v8094
    %v9256 = vunpack.c.l.b16 %v8095
    %v9257 = vunpack.c.h.b16 %v8095
    %v9258 = vunpack.c.l.b16 %v8096
    %v9259 = vunpack.c.h.b16 %v8096
    %v9260 = vunpack.c.l.b16 %v8097
    %v9261 = vunpack.c.h.b16 %v8097
    %v9262 = vunpack.c.l.b16 %v8098
    %v9263 = vunpack.c.l.b16 %v8099
    %v9264 = vunpack.c.h.b16 %v8099
    %v9265 = vunpack.c.l.b16 %v8100
    %v9266 = vunpack.c.h.b16 %v8100
    %v9267 = vunpack.c.l.b16 %v8101
    %v9268 = vunpack.c.h.b16 %v8101
    %v9269 = vunpack.c.l.b16 %v8102
    %v9270 = vunpack.c.l.b16 %v8103
    %v9271 = vunpack.c.h.b16 %v8103
    %v9272 = vunpack.c.l.b16 %v8104
    %v9273 = vunpack.c.h.b16 %v8104
    %v9274 = vunpack.c.l.b16 %v8105
    %v9275 = vunpack.c.h.b16 %v8105
    %v9276 = vunpack.c.l.b16 %v8106
    %v9277 = vunpack.c.l.b16 %v8107
    %v9278 = vunpack.c.h.b16 %v8107
    %v9279 = vunpack.c.l.b16 %v8108
    %v9280 = vunpack.c.h.b16 %v8108
    %v9281 = vunpack.c.l.b16 %v8109
    %v9282 = vunpack.c.h.b16 %v8109
    %v9283 = vunpack.c.l.b16 %v8110
    %v9284 = vunpack.c.l.b16 %v8111
    %v9285 = vunpack.c.h.b16 %v8111
    %v9286 = vunpack.c.l.b16 %v8112
    %v9287 = vunpack.c.h.b16 %v8112
    %v9288 = vunpack.c.l.b16 %v8113
    %v9289 = vunpack.c.h.b16 %v8113
    %v9290 = vunpack.c.l.b16 %v8114
    %v9291 = vunpack.c.l.b16 %v8115
    %v9292 = vunpack.c.h.b16 %v8115
    %v9293 = vunpack.c.l.b16 %v8116
    %v9294 = vunpack.c.h.b16 %v8116
    %v9295 = vunpack.c.l.b16 %v8117
    %v9296 = vunpack.c.h.b16 %v8117
    %v9297 = vunpack.c.l.b16 %v8118
    %v9298 = vunpack.c.l.b16 %v8119
    %v9299 = vunpack.c.h.b16 %v8119
    %v9300 = vunpack.c.l.b16 %v8120
    %v9301 = vunpack.c.h.b16 %v8120
    %v9302 = vunpack.c.l.b16 %v8121
    %v9303 = vunpack.c.h.b16 %v8121
    %v9304 = vunpack.c.l.b16 %v8122
    %v9305 = vunpack.c.l.b16 %v8123
    %v9306 = vunpack.c.h.b16 %v8123
    %v9307 = vunpack.c.l.b16 %v8124
    %v9308 = vunpack.c.h.b16 %v8124
    %v9309 = vunpack.c.l.b16 %v8125
    %v9310 = vunpack.c.h.b16 %v8125
    %v9311 = vunpack.c.l.b16 %v8126
    %v9312 = vunpack.c.l.b16 %v8127
    %v9313 = vunpack.c.h.b16 %v8127
    %v9314 = vunpack.c.l.b16 %v8128
    %v9315 = vunpack.c.h.b16 %v8128
    %v9316 = vunpack.c.l.b16 %v8129
    %v9317 = vunpack.c.h.b16 %v8129
    %v9318 = vunpack.c.l.b16 %v8130
    %v9319 = vunpack.c.l.b16 %v8131
    %v9320 = vunpack.c.h.b16 %v8131
    %v9321 = vunpack.c.l.b16 %v8132
    %v9322 = vunpack.c.h.b16 %v8132
    %v9323 = vunpack.c.l.b16 %v8133
    %v9324 = vunpack.c.h.b16 %v8133
    %v9325 = vunpack.c.l.b16 %v8134
    %v9326 = vunpack.c.l.b16 %v8135
    %v9327 = vunpack.c.h.b16 %v8135
    %v9328 = vunpack.c.l.b16 %v8136
    %v9329 = vunpack.c.h.b16 %v8136
    %v9330 = vunpack.c.l.b16 %v8137
    %v9331 = vunpack.c.h.b16 %v8137
    %v9332 = vunpack.c.l.b16 %v8138
    %v9333 = vunpack.c.l.b16 %v8139
    %v9334 = vunpack.c.h.b16 %v8139
    %v9335 = vunpack.c.l.b16 %v8140
    %v9336 = vunpack.c.h.b16 %v8140
    %v9337 = vunpack.c.l.b16 %v8141
    %v9338 = vunpack.c.h.b16 %v8141
    %v9339 = vunpack.c.l.b16 %v8142
    %v9340 = vunpack.c.l.b16 %v8143
    %v9341 = vunpack.c.h.b16 %v8143
    %v9342 = vunpack.c.l.b16 %v8144
    %v9343 = vunpack.c.h.b16 %v8144
    %v9344 = vunpack.c.l.b16 %v8145
    %v9345 = vunpack.c.h.b16 %v8145
    %v9346 = vunpack.c.l.b16 %v8146
    %v9347 = vunpack.c.l.b16 %v8147
    %v9348 = vunpack.c.h.b16 %v8147
    %v9349 = vunpack.c.l.b16 %v8148
    %v9350 = vunpack.c.h.b16 %v8148
    %v9351 = vunpack.c.l.b16 %v8149
    %v9352 = vunpack.c.h.b16 %v8149
    %v9353 = vunpack.c.l.b16 %v8150
    %v9354 = vunpack.c.l.b16 %v8151
    %v9355 = vunpack.c.h.b16 %v8151
    %v9356 = vunpack.c.l.b16 %v8152
    %v9357 = vunpack.c.h.b16 %v8152
    %v9358 = vunpack.c.l.b16 %v8153
    %v9359 = vunpack.c.h.b16 %v8153
    %v9360 = vunpack.c.l.b16 %v8154
    %v9361 = vunpack.c.l.b16 %v8155
    %v9362 = vunpack.c.h.b16 %v8155
    %v9363 = vunpack.c.l.b16 %v8156
    %v9364 = vunpack.c.h.b16 %v8156
    %v9365 = vunpack.c.l.b16 %v8157
    %v9366 = vunpack.c.h.b16 %v8157
    %v9367 = vunpack.c.l.b16 %v8158
    %v9368 = vunpack.c.l.b16 %v8159
    %v9369 = vunpack.c.h.b16 %v8159
    %v9370 = vunpack.c.l.b16 %v8160
    %v9371 = vunpack.c.h.b16 %v8160
    %v9372 = vunpack.c.l.b16 %v8161
    %v9373 = vunpack.c.h.b16 %v8161
    %v9374 = vunpack.c.l.b16 %v8162
    %v9375 = vunpack.c.l.b16 %v8163
    %v9376 = vunpack.c.h.b16 %v8163
    %v9377 = vunpack.c.l.b16 %v8164
    %v9378 = vunpack.c.h.b16 %v8164
    %v9379 = vunpack.c.l.b16 %v8165
    %v9380 = vunpack.c.h.b16 %v8165
    %v9381 = vunpack.c.l.b16 %v8166
    %v9382 = vunpack.c.l.b16 %v8167
    %v9383 = vunpack.c.h.b16 %v8167
    %v9384 = vunpack.c.l.b16 %v8168
    %v9385 = vunpack.c.h.b16 %v8168
    %v9386 = vunpack.c.l.b16 %v8169
    %v9387 = vunpack.c.h.b16 %v8169
    %v9388 = vunpack.c.l.b16 %v8170
    %v9389 = vunpack.c.l.b16 %v8171
    %v9390 = vunpack.c.h.b16 %v8171
    %v9391 = vunpack.c.l.b16 %v8172
    %v9392 = vunpack.c.h.b16 %v8172
    %v9393 = vunpack.c.l.b16 %v8173
    %v9394 = vunpack.c.h.b16 %v8173
    %v9395 = vunpack.c.l.b16 %v8174
    %v9396 = vunpack.c.l.b16 %v8175
    %v9397 = vunpack.c.h.b16 %v8175
    %v9398 = vunpack.c.l.b16 %v8176
    %v9399 = vunpack.c.h.b16 %v8176
    %v9400 = vunpack.c.l.b16 %v8177
    %v9401 = vunpack.c.h.b16 %v8177
    %v9402 = vunpack.c.l.b16 %v8178
    %v9403 = vunpack.c.l.b16 %v8179
    %v9404 = vunpack.c.h.b16 %v8179
    %v9405 = vunpack.c.l.b16 %v8180
    %v9406 = vunpack.c.h.b16 %v8180
    %v9407 = vunpack.c.l.b16 %v8181
    %v9408 = vunpack.c.h.b16 %v8181
    %v9409 = vunpack.c.l.b16 %v8182
    %v9410 = vunpack.c.l.b16 %v8183
    %v9411 = vunpack.c.h.b16 %v8183
    %v9412 = vunpack.c.l.b16 %v8184
    %v9413 = vunpack.c.h.b16 %v8184
    %v9414 = vunpack.c.l.b16 %v8185
    %v9415 = vunpack.c.h.b16 %v8185
    %v9416 = vunpack.c.l.b16 %v8186
    %v9417 = vunpack.c.l.b16 %v8187
    %v9418 = vunpack.c.h.b16 %v8187
    %v9419 = vunpack.c.l.b16 %v8188
    %v9420 = vunpack.c.h.b16 %v8188
    %v9421 = vunpack.c.l.b16 %v8189
    %v9422 = vunpack.c.h.b16 %v8189
    %v9423 = vunpack.c.l.b16 %v8190
    %v9424 = vunpack.c.l.b16 %v8191
    %v9425 = vunpack.c.h.b16 %v8191
    %v9426 = vunpack.c.l.b16 %v8192
    %v9427 = vunpack.c.h.b16 %v8192
    %v9428 = vunpack.c.l.b16 %v8193
    %v9429 = vunpack.c.h.b16 %v8193
    %v9430 = vunpack.c.l.b16 %v8194
    %v9431 = vunpack.c.l.b16 %v8195
    %v9432 = vunpack.c.h.b16 %v8195
    %v9433 = vunpack.c.l.b16 %v8196
    %v9434 = vunpack.c.h.b16 %v8196
    %v9435 = vunpack.c.l.b16 %v8197
    %v9436 = vunpack.c.h.b16 %v8197
    %v9437 = vunpack.c.l.b16 %v8198
    %v9438 = vunpack.c.l.b16 %v8199
    %v9439 = vunpack.c.h.b16 %v8199
    %v9440 = vunpack.c.l.b16 %v8200
    %v9441 = vunpack.c.h.b16 %v8200
    %v9442 = vunpack.c.l.b16 %v8201
    %v9443 = vunpack.c.h.b16 %v8201
    %v9444 = vunpack.c.l.b16 %v8202
    %v9445 = vunpack.c.l.b16 %v8203
    %v9446 = vunpack.c.h.b16 %v8203
    %v9447 = vunpack.c.l.b16 %v8204
    %v9448 = vunpack.c.h.b16 %v8204
    %v9449 = vunpack.c.l.b16 %v8205
    %v9450 = vunpack.c.h.b16 %v8205
    %v9451 = vunpack.c.l.b16 %v8206
    %v9452 = vunpack.c.l.b16 %v8207
    %v9453 = vunpack.c.h.b16 %v8207
    %v9454 = vunpack.c.l.b16 %v8208
    %v9455 = vunpack.c.h.b16 %v8208
    %v9456 = vunpack.c.l.b16 %v8209
    %v9457 = vunpack.c.h.b16 %v8209
    %v9458 = vunpack.c.l.b16 %v8210
    %v9459 = vunpack.c.l.b16 %v8211
    %v9460 = vunpack.c.h.b16 %v8211
    %v9461 = vunpack.c.l.b16 %v8212
    %v9462 = vunpack.c.h.b16 %v8212
    %v9463 = vunpack.c.l.b16 %v8213
    %v9464 = vunpack.c.h.b16 %v8213
    %v9465 = vunpack.c.l.b16 %v8214
    %v9466 = vunpack.c.l.b16 %v8215
    %v9467 = vunpack.c.h.b16 %v8215
    %v9468 = vunpack.c.l.b16 %v8216
    %v9469 = vunpack.c.h.b16 %v8216
    %v9470 = vunpack.c.l.b16 %v8217
    %v9471 = vunpack.c.h.b16 %v8217
    %v9472 = vunpack.c.l.b16 %v8218
    %v9473 = vunpack.c.l.b16 %v8219
    %v9474 = vunpack.c.h.b16 %v8219
    %v9475 = vunpack.c.l.b16 %v8220
    %v9476 = vunpack.c.h.b16 %v8220
    %v9477 = vunpack.c.l.b16 %v8221
    %v9478 = vunpack.c.h.b16 %v8221
    %v9479 = vunpack.c.l.b16 %v8222
    %v9480 = vunpack.c.l.b16 %v8223
    %v9481 = vunpack.c.h.b16 %v8223
    %v9482 = vunpack.c.l.b16 %v8224
    %v9483 = vunpack.c.h.b16 %v8224
    %v9484 = vunpack.c.l.b16 %v8225
    %v9485 = vunpack.c.h.b16 %v8225
    %v9486 = vunpack.c.l.b16 %v8226
    %v9487 = vunpack.c.l.b16 %v8227
    %v9488 = vunpack.c.h.b16 %v8227
    %v9489 = vunpack.c.l.b16 %v8228
    %v9490 = vunpack.c.h.b16 %v8228
    %v9491 = vunpack.c.l.b16 %v8229
    %v9492 = vunpack.c.h.b16 %v8229
    %v9493 = vunpack.c.l.b16 %v8230
    %v9494 = vunpack.c.l.b16 %v8231
    %v9495 = vunpack.c.h.b16 %v8231
    %v9496 = vunpack.c.l.b16 %v8232
    %v9497 = vunpack.c.h.b16 %v8232
    %v9498 = vunpack.c.l.b16 %v8233
    %v9499 = vunpack.c.h.b16 %v8233
    %v9500 = vunpack.c.l.b16 %v8234
    %v9501 = vunpack.c.l.b16 %v8235
    %v9502 = vunpack.c.h.b16 %v8235
    %v9503 = vunpack.c.l.b16 %v8236
    %v9504 = vunpack.c.h.b16 %v8236
    %v9505 = vunpack.c.l.b16 %v8237
    %v9506 = vunpack.c.h.b16 %v8237
    %v9507 = vunpack.c.l.b16 %v8238
    %v9508 = vpack.c.b16 %v8731, %v8724
    %v9509 = vpack.c.b16 %v8732, %v8725
    %v9510 = vpack.c.b16 %v8733, %v8726
    %v9511 = vpack.c.b16 %v8734, %v8727
    %v9512 = vpack.c.b16 %v8735, %v8728
    %v9513 = vpack.c.b16 %v8736, %v8729
    %v9514 = vpack.c.b16 %v8737, %v8730
    %v9515 = vpack.c.b16 %v8745, %v8738
    %v9516 = vpack.c.b16 %v8746, %v8739
    %v9517 = vpack.c.b16 %v8747, %v8740
    %v9518 = vpack.c.b16 %v8748, %v8741
    %v9519 = vpack.c.b16 %v8749, %v8742
    %v9520 = vpack.c.b16 %v8750, %v8743
    %v9521 = vpack.c.b16 %v8751, %v8744
    %v9522 = vpack.c.b16 %v8759, %v8752
    %v9523 = vpack.c.b16 %v8760, %v8753
    %v9524 = vpack.c.b16 %v8761, %v8754
    %v9525 = vpack.c.b16 %v8762, %v8755
    %v9526 = vpack.c.b16 %v8763, %v8756
    %v9527 = vpack.c.b16 %v8764, %v8757
    %v9528 = vpack.c.b16 %v8765, %v8758
    %v9529 = vpack.c.b16 %v8773, %v8766
    %v9530 = vpack.c.b16 %v8774, %v8767
    %v9531 = vpack.c.b16 %v8775, %v8768
    %v9532 = vpack.c.b16 %v8776, %v8769
    %v9533 = vpack.c.b16 %v8777, %v8770
    %v9534 = vpack.c.b16 %v8778, %v8771
    %v9535 = vpack.c.b16 %v8779, %v8772
    %v9536 = vpack.c.b16 %v8787, %v8780
    %v9537 = vpack.c.b16 %v8788, %v8781
    %v9538 = vpack.c.b16 %v8789, %v8782
    %v9539 = vpack.c.b16 %v8790, %v8783
    %v9540 = vpack.c.b16 %v8791, %v8784
    %v9541 = vpack.c.b16 %v8792, %v8785
    %v9542 = vpack.c.b16 %v8793, %v8786
    %v9543 = vpack.c.b16 %v8801, %v8794
    %v9544 = vpack.c.b16 %v8802, %v8795
    %v9545 = vpack.c.b16 %v8803, %v8796
    %v9546 = vpack.c.b16 %v8804, %v8797
    %v9547 = vpack.c.b16 %v8805, %v8798
    %v9548 = vpack.c.b16 %v8806, %v8799
    %v9549 = vpack.c.b16 %v8807, %v8800
    %v9550 = vpack.c.b16 %v8815, %v8808
    %v9551 = vpack.c.b16 %v8816, %v8809
    %v9552 = vpack.c.b16 %v8817, %v8810
    %v9553 = vpack.c.b16 %v8818, %v8811
    %v9554 = vpack.c.b16 %v8819, %v8812
    %v9555 = vpack.c.b16 %v8820, %v8813
    %v9556 = vpack.c.b16 %v8821, %v8814
    %v9557 = vpack.c.b16 %v8829, %v8822
    %v9558 = vpack.c.b16 %v8830, %v8823
    %v9559 = vpack.c.b16 %v8831, %v8824
    %v9560 = vpack.c.b16 %v8832, %v8825
    %v9561 = vpack.c.b16 %v8833, %v8826
    %v9562 = vpack.c.b16 %v8834, %v8827
    %v9563 = vpack.c.b16 %v8835, %v8828
    %v9564 = vpack.c.b16 %v8843, %v8836
    %v9565 = vpack.c.b16 %v8844, %v8837
    %v9566 = vpack.c.b16 %v8845, %v8838
    %v9567 = vpack.c.b16 %v8846, %v8839
    %v9568 = vpack.c.b16 %v8847, %v8840
    %v9569 = vpack.c.b16 %v8848, %v8841
    %v9570 = vpack.c.b16 %v8849, %v8842
    %v9571 = vpack.c.b16 %v8857, %v8850
    %v9572 = vpack.c.b16 %v8858, %v8851
    %v9573 = vpack.c.b16 %v8859, %v8852
    %v9574 = vpack.c.b16 %v8860, %v8853
    %v9575 = vpack.c.b16 %v8861, %v8854
    %v9576 = vpack.c.b16 %v8862, %v8855
    %v9577 = vpack.c.b16 %v8863, %v8856
    %v9578 = vpack.c.b16 %v8871, %v8864
    %v9579 = vpack.c.b16 %v8872, %v8865
    %v9580 = vpack.c.b16 %v8873, %v8866
    %v9581 = vpack.c.b16 %v8874, %v8867
    %v9582 = vpack.c.b16 %v8875, %v8868
    %v9583 = vpack.c.b16 %v8876, %v8869
    %v9584 = vpack.c.b16 %v8877, %v8870
    %v9585 = vpack.c.b16 %v8885, %v8878
    %v9586 = vpack.c.b16 %v8886, %v8879
    %v9587 = vpack.c.b16 %v8887, %v8880
    %v9588 = vpack.c.b16 %v8888, %v8881
    %v9589 = vpack.c.b16 %v8889, %v8882
    %v9590 = vpack.c.b16 %v8890, %v8883
    %v9591 = vpack.c.b16 %v8891, %v8884
    %v9592 = vpack.c.b16 %v8899, %v8892
    %v9593 = vpack.c.b16 %v8900, %v8893
    %v9594 = vpack.c.b16 %v8901, %v8894
    %v9595 = vpack.c.b16 %v8902, %v8895
    %v9596 = vpack.c.b16 %v8903, %v8896
    %v9597 = vpack.c.b16 %v8904, %v8897
    %v9598 = vpack.c.b16 %v8905, %v8898
    %v9599 = vpack.c.b16 %v8913, %v8906
    %v9600 = vpack.c.b16 %v8914, %v8907
    %v9601 = vpack.c.b16 %v8915, %v8908
    %v9602 = vpack.c.b16 %v8916, %v8909
    %v9603 = vpack.c.b16 %v8917, %v8910
    %v9604 = vpack.c.b16 %v8918, %v8911
    %v9605 = vpack.c.b16 %v8919, %v8912
    %v9606 = vpack.c.b16 %v8927, %v8920
    %v9607 = vpack.c.b16 %v8928, %v8921
    %v9608 = vpack.c.b16 %v8929, %v8922
    %v9609 = vpack.c.b16 %v8930, %v8923
    %v9610 = vpack.c.b16 %v8931, %v8924
    %v9611 = vpack.c.b16 %v8932, %v8925
    %v9612 = vpack.c.b16 %v8933, %v8926
    %v9613 = vpack.c.b16 %v8941, %v8934
    %v9614 = vpack.c.b16 %v8942, %v8935
    %v9615 = vpack.c.b16 %v8943, %v8936
    %v9616 = vpack.c.b16 %v8944, %v8937
    %v9617 = vpack.c.b16 %v8945, %v8938
    %v9618 = vpack.c.b16 %v8946, %v8939
    %v9619 = vpack.c.b16 %v8947, %v8940
    %v9620 = vpack.c.b16 %v8955, %v8948
    %v9621 = vpack.c.b16 %v8956, %v8949
    %v9622 = vpack.c.b16 %v8957, %v8950
    %v9623 = vpack.c.b16 %v8958, %v8951
    %v9624 = vpack.c.b16 %v8959, %v8952
    %v9625 = vpack.c.b16 %v8960, %v8953
    %v9626 = vpack.c.b16 %v8961, %v8954
    %v9627 = vpack.c.b16 %v8969, %v8962
    %v9628 = vpack.c.b16 %v8970, %v8963
    %v9629 = vpack.c.b16 %v8971, %v8964
    %v9630 = vpack.c.b16 %v8972, %v8965
    %v9631 = vpack.c.b16 %v8973, %v8966
    %v9632 = vpack.c.b16 %v8974, %v8967
    %v9633 = vpack.c.b16 %v8975, %v8968
    %v9634 = vpack.c.b16 %v8983, %v8976
    %v9635 = vpack.c.b16 %v8984, %v8977
    %v9636 = vpack.c.b16 %v8985, %v8978
    %v9637 = vpack.c.b16 %v8986, %v8979
    %v9638 = vpack.c.b16 %v8987, %v8980
    %v9639 = vpack.c.b16 %v8988, %v8981
    %v9640 = vpack.c.b16 %v8989, %v8982
    %v9641 = vpack.c.b16 %v8997, %v8990
    %v9642 = vpack.c.b16 %v8998, %v8991
    %v9643 = vpack.c.b16 %v8999, %v8992
    %v9644 = vpack.c.b16 %v9000, %v8993
    %v9645 = vpack.c.b16 %v9001, %v8994
    %v9646 = vpack.c.b16 %v9002, %v8995
    %v9647 = vpack.c.b16 %v9003, %v8996
    %v9648 = vpack.c.b16 %v9011, %v9004
    %v9649 = vpack.c.b16 %v9012, %v9005
    %v9650 = vpack.c.b16 %v9013, %v9006
    %v9651 = vpack.c.b16 %v9014, %v9007
    %v9652 = vpack.c.b16 %v9015, %v9008
    %v9653 = vpack.c.b16 %v9016, %v9009
    %v9654 = vpack.c.b16 %v9017, %v9010
    %v9655 = vpack.c.b16 %v9025, %v9018
    %v9656 = vpack.c.b16 %v9026, %v9019
    %v9657 = vpack.c.b16 %v9027, %v9020
    %v9658 = vpack.c.b16 %v9028, %v9021
    %v9659 = vpack.c.b16 %v9029, %v9022
    %v9660 = vpack.c.b16 %v9030, %v9023
    %v9661 = vpack.c.b16 %v9031, %v9024
    %v9662 = vpack.c.b16 %v9039, %v9032
    %v9663 = vpack.c.b16 %v9040, %v9033
    %v9664 = vpack.c.b16 %v9041, %v9034
    %v9665 = vpack.c.b16 %v9042, %v9035
    %v9666 = vpack.c.b16 %v9043, %v9036
    %v9667 = vpack.c.b16 %v9044, %v9037
    %v9668 = vpack.c.b16 %v9045, %v9038
    %v9669 = vpack.c.b16 %v9053, %v9046
    %v9670 = vpack.c.b16 %v9054, %v9047
    %v9671 = vpack.c.b16 %v9055, %v9048
    %v9672 = vpack.c.b16 %v9056, %v9049
    %v9673 = vpack.c.b16 %v9057, %v9050
    %v9674 = vpack.c.b16 %v9058, %v9051
    %v9675 = vpack.c.b16 %v9059, %v9052
    %v9676 = vpack.c.b16 %v9067, %v9060
    %v9677 = vpack.c.b16 %v9068, %v9061
    %v9678 = vpack.c.b16 %v9069, %v9062
    %v9679 = vpack.c.b16 %v9070, %v9063
    %v9680 = vpack.c.b16 %v9071, %v9064
    %v9681 = vpack.c.b16 %v9072, %v9065
    %v9682 = vpack.c.b16 %v9073, %v9066
    %v9683 = vpack.c.b16 %v9081, %v9074
    %v9684 = vpack.c.b16 %v9082, %v9075
    %v9685 = vpack.c.b16 %v9083, %v9076
    %v9686 = vpack.c.b16 %v9084, %v9077
    %v9687 = vpack.c.b16 %v9085, %v9078
    %v9688 = vpack.c.b16 %v9086, %v9079
    %v9689 = vpack.c.b16 %v9087, %v9080
    %v9690 = vpack.c.b16 %v9095, %v9088
    %v9691 = vpack.c.b16 %v9096, %v9089
    %v9692 = vpack.c.b16 %v9097, %v9090
    %v9693 = vpack.c.b16 %v9098, %v9091
    %v9694 = vpack.c.b16 %v9099, %v9092
    %v9695 = vpack.c.b16 %v9100, %v9093
    %v9696 = vpack.c.b16 %v9101, %v9094
    %v9697 = vpack.c.b16 %v9109, %v9102
    %v9698 = vpack.c.b16 %v9110, %v9103
    %v9699 = vpack.c.b16 %v9111, %v9104
    %v9700 = vpack.c.b16 %v9112, %v9105
    %v9701 = vpack.c.b16 %v9113, %v9106
    %v9702 = vpack.c.b16 %v9114, %v9107
    %v9703 = vpack.c.b16 %v9115, %v9108
    %v9704 = vpack.c.b16 %v9123, %v9116
    %v9705 = vpack.c.b16 %v9124, %v9117
    %v9706 = vpack.c.b16 %v9125, %v9118
    %v9707 = vpack.c.b16 %v9126, %v9119
    %v9708 = vpack.c.b16 %v9127, %v9120
    %v9709 = vpack.c.b16 %v9128, %v9121
    %v9710 = vpack.c.b16 %v9129, %v9122
    %v9711 = vpack.c.b16 %v9137, %v9130
    %v9712 = vpack.c.b16 %v9138, %v9131
    %v9713 = vpack.c.b16 %v9139, %v9132
    %v9714 = vpack.c.b16 %v9140, %v9133
    %v9715 = vpack.c.b16 %v9141, %v9134
    %v9716 = vpack.c.b16 %v9142, %v9135
    %v9717 = vpack.c.b16 %v9143, %v9136
    %v9718 = vpack.c.b16 %v9151, %v9144
    %v9719 = vpack.c.b16 %v9152, %v9145
    %v9720 = vpack.c.b16 %v9153, %v9146
    %v9721 = vpack.c.b16 %v9154, %v9147
    %v9722 = vpack.c.b16 %v9155, %v9148
    %v9723 = vpack.c.b16 %v9156, %v9149
    %v9724 = vpack.c.b16 %v9157, %v9150
    %v9725 = vpack.c.b16 %v9165, %v9158
    %v9726 = vpack.c.b16 %v9166, %v9159
    %v9727 = vpack.c.b16 %v9167, %v9160
    %v9728 = vpack.c.b16 %v9168, %v9161
    %v9729 = vpack.c.b16 %v9169, %v9162
    %v9730 = vpack.c.b16 %v9170, %v9163
    %v9731 = vpack.c.b16 %v9171, %v9164
    %v9732 = vpack.c.b16 %v9179, %v9172
    %v9733 = vpack.c.b16 %v9180, %v9173
    %v9734 = vpack.c.b16 %v9181, %v9174
    %v9735 = vpack.c.b16 %v9182, %v9175
    %v9736 = vpack.c.b16 %v9183, %v9176
    %v9737 = vpack.c.b16 %v9184, %v9177
    %v9738 = vpack.c.b16 %v9185, %v9178
    %v9739 = vpack.c.b16 %v9193, %v9186
    %v9740 = vpack.c.b16 %v9194, %v9187
    %v9741 = vpack.c.b16 %v9195, %v9188
    %v9742 = vpack.c.b16 %v9196, %v9189
    %v9743 = vpack.c.b16 %v9197, %v9190
    %v9744 = vpack.c.b16 %v9198, %v9191
    %v9745 = vpack.c.b16 %v9199, %v9192
    %v9746 = vpack.c.b16 %v9207, %v9200
    %v9747 = vpack.c.b16 %v9208, %v9201
    %v9748 = vpack.c.b16 %v9209, %v9202
    %v9749 = vpack.c.b16 %v9210, %v9203
    %v9750 = vpack.c.b16 %v9211, %v9204
    %v9751 = vpack.c.b16 %v9212, %v9205
    %v9752 = vpack.c.b16 %v9213, %v9206
    %v9753 = vpack.c.b16 %v9221, %v9214
    %v9754 = vpack.c.b16 %v9222, %v9215
    %v9755 = vpack.c.b16 %v9223, %v9216
    %v9756 = vpack.c.b16 %v9224, %v9217
    %v9757 = vpack.c.b16 %v9225, %v9218
    %v9758 = vpack.c.b16 %v9226, %v9219
    %v9759 = vpack.c.b16 %v9227, %v9220
    %v9760 = vpack.c.b16 %v9235, %v9228
    %v9761 = vpack.c.b16 %v9236, %v9229
    %v9762 = vpack.c.b16 %v9237, %v9230
    %v9763 = vpack.c.b16 %v9238, %v9231
    %v9764 = vpack.c.b16 %v9239, %v9232
    %v9765 = vpack.c.b16 %v9240, %v9233
    %v9766 = vpack.c.b16 %v9241, %v9234
    %v9767 = vpack.c.b16 %v9249, %v9242
    %v9768 = vpack.c.b16 %v9250, %v9243
    %v9769 = vpack.c.b16 %v9251, %v9244
    %v9770 = vpack.c.b16 %v9252, %v9245
    %v9771 = vpack.c.b16 %v9253, %v9246
    %v9772 = vpack.c.b16 %v9254, %v9247
    %v9773 = vpack.c.b16 %v9255, %v9248
    %v9774 = vpack.c.b16 %v9263, %v9256
    %v9775 = vpack.c.b16 %v9264, %v9257
    %v9776 = vpack.c.b16 %v9265, %v9258
    %v9777 = vpack.c.b16 %v9266, %v9259
    %v9778 = vpack.c.b16 %v9267, %v9260
    %v9779 = vpack.c.b16 %v9268, %v9261
    %v9780 = vpack.c.b16 %v9269, %v9262
    %v9781 = vpack.c.b16 %v9277, %v9270
    %v9782 = vpack.c.b16 %v9278, %v9271
    %v9783 = vpack.c.b16 %v9279, %v9272
    %v9784 = vpack.c.b16 %v9280, %v9273
    %v9785 = vpack.c.b16 %v9281, %v9274
    %v9786 = vpack.c.b16 %v9282, %v9275
    %v9787 = vpack.c.b16 %v9283, %v9276
    %v9788 = vpack.c.b16 %v9291, %v9284
    %v9789 = vpack.c.b16 %v9292, %v9285
    %v9790 = vpack.c.b16 %v9293, %v9286
    %v9791 = vpack.c.b16 %v9294, %v9287
    %v9792 = vpack.c.b16 %v9295, %v9288
    %v9793 = vpack.c.b16 %v9296, %v9289
    %v9794 = vpack.c.b16 %v9297, %v9290
    %v9795 = vpack.c.b16 %v9305, %v9298
    %v9796 = vpack.c.b16 %v9306, %v9299
    %v9797 = vpack.c.b16 %v9307, %v9300
    %v9798 = vpack.c.b16 %v9308, %v9301
    %v9799 = vpack.c.b16 %v9309, %v9302
    %v9800 = vpack.c.b16 %v9310, %v9303
    %v9801 = vpack.c.b16 %v9311, %v9304
    %v9802 = vpack.c.b16 %v9319, %v9312
    %v9803 = vpack.c.b16 %v9320, %v9313
    %v9804 = vpack.c.b16 %v9321, %v9314
    %v9805 = vpack.c.b16 %v9322, %v9315
    %v9806 = vpack.c.b16 %v9323, %v9316
    %v9807 = vpack.c.b16 %v9324, %v9317
    %v9808 = vpack.c.b16 %v9325, %v9318
    %v9809 = vpack.c.b16 %v9333, %v9326
    %v9810 = vpack.c.b16 %v9334, %v9327
    %v9811 = vpack.c.b16 %v9335, %v9328
    %v9812 = vpack.c.b16 %v9336, %v9329
    %v9813 = vpack.c.b16 %v9337, %v9330
    %v9814 = vpack.c.b16 %v9338, %v9331
    %v9815 = vpack.c.b16 %v9339, %v9332
    %v9816 = vpack.c.b16 %v9347, %v9340
    %v9817 = vpack.c.b16 %v9348, %v9341
    %v9818 = vpack.c.b16 %v9349, %v9342
    %v9819 = vpack.c.b16 %v9350, %v9343
    %v9820 = vpack.c.b16 %v9351, %v9344
    %v9821 = vpack.c.b16 %v9352, %v9345
    %v9822 = vpack.c.b16 %v9353, %v9346
    %v9823 = vpack.c.b16 %v9361, %v9354
    %v9824 = vpack.c.b16 %v9362, %v9355
    %v9825 = vpack.c.b16 %v9363, %v9356
    %v9826 = vpack.c.b16 %v9364, %v9357
    %v9827 = vpack.c.b16 %v9365, %v9358
    %v9828 = vpack.c.b16 %v9366, %v9359
    %v9829 = vpack.c.b16 %v9367, %v9360
    %v9830 = vpack.c.b16 %v9375, %v9368
    %v9831 = vpack.c.b16 %v9376, %v9369
    %v9832 = vpack.c.b16 %v9377, %v9370
    %v9833 = vpack.c.b16 %v9378, %v9371
    %v9834 = vpack.c.b16 %v9379, %v9372
    %v9835 = vpack.c.b16 %v9380, %v9373
    %v9836 = vpack.c.b16 %v9381, %v9374
    %v9837 = vpack.c.b16 %v9389, %v9382
    %v9838 = vpack.c.b16 %v9390, %v9383
    %v9839 = vpack.c.b16 %v9391, %v9384
    %v9840 = vpack.c.b16 %v9392, %v9385
    %v9841 = vpack.c.b16 %v9393, %v9386
    %v9842 = vpack.c.b16 %v9394, %v9387
    %v9843 = vpack.c.b16 %v9395, %v9388
    %v9844 = vpack.c.b16 %v9403, %v9396
    %v9845 = vpack.c.b16 %v9404, %v9397
    %v9846 = vpack.c.b16 %v9405, %v9398
    %v9847 = vpack.c.b16 %v9406, %v9399
    %v9848 = vpack.c.b16 %v9407, %v9400
    %v9849 = vpack.c.b16 %v9408, %v9401
    %v9850 = vpack.c.b16 %v9409, %v9402
    %v9851 = vpack.c.b16 %v9417, %v9410
    %v9852 = vpack.c.b16 %v9418, %v9411
    %v9853 = vpack.c.b16 %v9419, %v9412
    %v9854 = vpack.c.b16 %v9420, %v9413
    %v9855 = vpack.c.b16 %v9421, %v9414
    %v9856 = vpack.c.b16 %v9422, %v9415
    %v9857 = vpack.c.b16 %v9423, %v9416
    %v9858 = vpack.c.b16 %v9431, %v9424
    %v9859 = vpack.c.b16 %v9432, %v9425
    %v9860 = vpack.c.b16 %v9433, %v9426
    %v9861 = vpack.c.b16 %v9434, %v9427
    %v9862 = vpack.c.b16 %v9435, %v9428
    %v9863 = vpack.c.b16 %v9436, %v9429
    %v9864 = vpack.c.b16 %v9437, %v9430
    %v9865 = vpack.c.b16 %v9445, %v9438
    %v9866 = vpack.c.b16 %v9446, %v9439
    %v9867 = vpack.c.b16 %v9447, %v9440
    %v9868 = vpack.c.b16 %v9448, %v9441
    %v9869 = vpack.c.b16 %v9449, %v9442
    %v9870 = vpack.c.b16 %v9450, %v9443
    %v9871 = vpack.c.b16 %v9451, %v9444
    %v9872 = vpack.c.b16 %v9459, %v9452
    %v9873 = vpack.c.b16 %v9460, %v9453
    %v9874 = vpack.c.b16 %v9461, %v9454
    %v9875 = vpack.c.b16 %v9462, %v9455
    %v9876 = vpack.c.b16 %v9463, %v9456
    %v9877 = vpack.c.b16 %v9464, %v9457
    %v9878 = vpack.c.b16 %v9465, %v9458
    %v9879 = vpack.c.b16 %v9473, %v9466
    %v9880 = vpack.c.b16 %v9474, %v9467
    %v9881 = vpack.c.b16 %v9475, %v9468
    %v9882 = vpack.c.b16 %v9476, %v9469
    %v9883 = vpack.c.b16 %v9477, %v9470
    %v9884 = vpack.c.b16 %v9478, %v9471
    %v9885 = vpack.c.b16 %v9479, %v9472
    %v9886 = vpack.c.b16 %v9487, %v9480
    %v9887 = vpack.c.b16 %v9488, %v9481
    %v9888 = vpack.c.b16 %v9489, %v9482
    %v9889 = vpack.c.b16 %v9490, %v9483
    %v9890 = vpack.c.b16 %v9491, %v9484
    %v9891 = vpack.c.b16 %v9492, %v9485
    %v9892 = vpack.c.b16 %v9493, %v9486
    %v9893 = vpack.c.b16 %v9501, %v9494
    %v9894 = vpack.c.b16 %v9502, %v9495
    %v9895 = vpack.c.b16 %v9503, %v9496
    %v9896 = vpack.c.b16 %v9504, %v9497
    %v9897 = vpack.c.b16 %v9505, %v9498
    %v9898 = vpack.c.b16 %v9506, %v9499
    %v9899 = vpack.c.b16 %v9507, %v9500
    %10292 = vmatprep.subr.bf16.mxu0 %v9509
    %10293 = vmatpush1.bf16.msra.mxu0 %v9508
    %10294 = vmatprep.subr.bf16.mxu0 %v9516
    %10295 = vmatpush1.bf16.msra.mxu0 %v9515
    %10296 = vmatprep.subr.bf16.mxu0 %v9523
    %10297 = vmatpush1.bf16.msra.mxu0 %v9522
    %10298 = vmatprep.subr.bf16.mxu0 %v9530
    %10299 = vmatpush1.bf16.msra.mxu0 %v9529
    %10300 = vmatprep.subr.bf16.mxu0 %v9537
    %10301 = vmatpush1.bf16.msra.mxu0 %v9536
    %10302 = vmatprep.subr.bf16.mxu0 %v9544
    %10303 = vmatpush1.bf16.msra.mxu0 %v9543
    %10304 = vmatprep.subr.bf16.mxu0 %v9551
    %10305 = vmatpush1.bf16.msra.mxu0 %v9550
    %10306 = vmatprep.subr.bf16.mxu0 %v9558
    %10307 = vmatpush1.bf16.msra.mxu0 %v9557
    %10308 = vmatprep.subr.bf16.mxu0 %v9565
    %10309 = vmatpush1.bf16.msra.mxu0 %v9564
    %10310 = vmatprep.subr.bf16.mxu0 %v9572
    %10311 = vmatpush1.bf16.msra.mxu0 %v9571
    %10312 = vmatprep.subr.bf16.mxu0 %v9579
    %10313 = vmatpush1.bf16.msra.mxu0 %v9578
    %10314 = vmatprep.subr.bf16.mxu0 %v9586
    %10315 = vmatpush1.bf16.msra.mxu0 %v9585
    %10316 = vmatprep.subr.bf16.mxu0 %v9593
    %10317 = vmatpush1.bf16.msra.mxu0 %v9592
    %10318 = vmatprep.subr.bf16.mxu0 %v9600
    %10319 = vmatpush1.bf16.msra.mxu0 %v9599
    %10320 = vmatprep.subr.bf16.mxu0 %v9607
    %10321 = vmatpush1.bf16.msra.mxu0 %v9606
    %10322 = vmatprep.subr.bf16.mxu0 %v9614
    %10323 = vmatpush1.bf16.msra.mxu0 %v9613
    %10324 = vmatprep.mubr.bf16.mxu0 %v7785
    %10325 = vmatmul.mubr.bf16.gmra.mrb[0].mxu0 %v7784
    %v10326 = vpop.f32.mrb[0].mxu0
    %v10327 = vadd.f32 %v8244, %v10326
    %v10328 = vpop.f32.mrb[0].mxu0
    %v10329 = vadd.f32 %v8248, %v10328
    %v10330 = vpop.f32.mrb[0].mxu0
    %v10331 = vpop.f32.mrb[0].mxu0
    %10332 = vdwg.mxu0
    %10333 = vmatprep.subr.bf16.mxu0 %v9621
    %10334 = vmatpush1.bf16.msra.mxu0 %v9620
    %10335 = vmatprep.subr.bf16.mxu0 %v9628
    %10336 = vmatpush1.bf16.msra.mxu0 %v9627
    %10337 = vmatprep.subr.bf16.mxu0 %v9635
    %10338 = vmatpush1.bf16.msra.mxu0 %v9634
    %10339 = vmatprep.subr.bf16.mxu0 %v9642
    %10340 = vmatpush1.bf16.msra.mxu0 %v9641
    %10341 = vmatprep.subr.bf16.mxu0 %v9649
    %10342 = vmatpush1.bf16.msra.mxu0 %v9648
    %10343 = vmatprep.subr.bf16.mxu0 %v9656
    %10344 = vmatpush1.bf16.msra.mxu0 %v9655
    %10345 = vmatprep.subr.bf16.mxu0 %v9663
    %10346 = vmatpush1.bf16.msra.mxu0 %v9662
    %10347 = vmatprep.subr.bf16.mxu0 %v9670
    %10348 = vmatpush1.bf16.msra.mxu0 %v9669
    %10349 = vmatprep.subr.bf16.mxu0 %v9677
    %10350 = vmatpush1.bf16.msra.mxu0 %v9676
    %10351 = vmatprep.subr.bf16.mxu0 %v9684
    %10352 = vmatpush1.bf16.msra.mxu0 %v9683
    %10353 = vmatprep.subr.bf16.mxu0 %v9691
    %10354 = vmatpush1.bf16.msra.mxu0 %v9690
    %10355 = vmatprep.subr.bf16.mxu0 %v9698
    %10356 = vmatpush1.bf16.msra.mxu0 %v9697
    %10357 = vmatprep.subr.bf16.mxu0 %v9705
    %10358 = vmatpush1.bf16.msra.mxu0 %v9704
    %10359 = vmatprep.subr.bf16.mxu0 %v9712
    %10360 = vmatpush1.bf16.msra.mxu0 %v9711
    %10361 = vmatprep.subr.bf16.mxu0 %v9719
    %10362 = vmatpush1.bf16.msra.mxu0 %v9718
    %10363 = vmatprep.subr.bf16.mxu0 %v9726
    %10364 = vmatpush1.bf16.msra.mxu0 %v9725
    %10365 = vmatprep.mubr.bf16.mxu0 %v7787
    %10366 = vmatmul.mubr.bf16.gmra.mrb[0].mxu0 %v7786
    %v10367 = vpop.f32.mrb[0].mxu0
    %v10368 = vadd.f32 %v10327, %v10367
    %v10369 = vpop.f32.mrb[0].mxu0
    %v10370 = vadd.f32 %v10329, %v10369
    %v10371 = vpop.f32.mrb[0].mxu0
    %v10372 = vpop.f32.mrb[0].mxu0
    %10373 = vdwg.mxu0
    %10374 = vmatprep.subr.bf16.mxu0 %v9733
    %10375 = vmatpush1.bf16.msra.mxu0 %v9732
    %10376 = vmatprep.subr.bf16.mxu0 %v9740
    %10377 = vmatpush1.bf16.msra.mxu0 %v9739
    %10378 = vmatprep.subr.bf16.mxu0 %v9747
    %10379 = vmatpush1.bf16.msra.mxu0 %v9746
    %10380 = vmatprep.subr.bf16.mxu0 %v9754
    %10381 = vmatpush1.bf16.msra.mxu0 %v9753
    %10382 = vmatprep.subr.bf16.mxu0 %v9761
    %10383 = vmatpush1.bf16.msra.mxu0 %v9760
    %10384 = vmatprep.subr.bf16.mxu0 %v9768
    %10385 = vmatpush1.bf16.msra.mxu0 %v9767
    %10386 = vmatprep.subr.bf16.mxu0 %v9775
    %10387 = vmatpush1.bf16.msra.mxu0 %v9774
    %10388 = vmatprep.subr.bf16.mxu0 %v9782
    %10389 = vmatpush1.bf16.msra.mxu0 %v9781
    %10390 = vmatprep.subr.bf16.mxu0 %v9789
    %10391 = vmatpush1.bf16.msra.mxu0 %v9788
    %10392 = vmatprep.subr.bf16.mxu0 %v9796
    %10393 = vmatpush1.bf16.msra.mxu0 %v9795
    %10394 = vmatprep.subr.bf16.mxu0 %v9803
    %10395 = vmatpush1.bf16.msra.mxu0 %v9802
    %10396 = vmatprep.subr.bf16.mxu0 %v9810
    %10397 = vmatpush1.bf16.msra.mxu0 %v9809
    %10398 = vmatprep.subr.bf16.mxu0 %v9817
    %10399 = vmatpush1.bf16.msra.mxu0 %v9816
    %10400 = vmatprep.subr.bf16.mxu0 %v9824
    %10401 = vmatpush1.bf16.msra.mxu0 %v9823
    %10402 = vmatprep.subr.bf16.mxu0 %v9831
    %10403 = vmatpush1.bf16.msra.mxu0 %v9830
    %10404 = vmatprep.subr.bf16.mxu0 %v9838
    %10405 = vmatpush1.bf16.msra.mxu0 %v9837
    %10406 = vmatprep.mubr.bf16.mxu0 %v7789
    %10407 = vmatmul.mubr.bf16.gmra.mrb[0].mxu0 %v7788
    %v10408 = vpop.f32.mrb[0].mxu0
    %v10409 = vadd.f32 %v10368, %v10408
    %v10410 = vpop.f32.mrb[0].mxu0
    %v10411 = vadd.f32 %v10370, %v10410
    %v10412 = vpop.f32.mrb[0].mxu0
    %v10413 = vpop.f32.mrb[0].mxu0
    %10414 = vdwg.mxu0
    %10415 = vmatprep.subr.bf16.mxu0 %v9845
    %10416 = vmatpush1.bf16.msra.mxu0 %v9844
    %10417 = vmatprep.subr.bf16.mxu0 %v9852
    %10418 = vmatpush1.bf16.msra.mxu0 %v9851
    %10419 = vmatprep.subr.bf16.mxu0 %v9859
    %10420 = vmatpush1.bf16.msra.mxu0 %v9858
    %10421 = vmatprep.subr.bf16.mxu0 %v9866
    %10422 = vmatpush1.bf16.msra.mxu0 %v9865
    %10423 = vmatprep.subr.bf16.mxu0 %v9873
    %10424 = vmatpush1.bf16.msra.mxu0 %v9872
    %10425 = vmatprep.subr.bf16.mxu0 %v9880
    %10426 = vmatpush1.bf16.msra.mxu0 %v9879
    %10427 = vmatprep.subr.bf16.mxu0 %v9887
    %10428 = vmatpush1.bf16.msra.mxu0 %v9886
    %10429 = vmatprep.subr.bf16.mxu0 %v9894
    %10430 = vmatpush1.bf16.msra.mxu0 %v9893
    %10431 = vmatprep.subr.bf16.mxu0 0
    %10432 = vmatpush1.bf16.msra.mxu0 0
    %10433 = vmatprep.subr.bf16.mxu0 0
    %10434 = vmatpush1.bf16.msra.mxu0 0
    %10435 = vmatprep.subr.bf16.mxu0 0
    %10436 = vmatpush1.bf16.msra.mxu0 0
    %10437 = vmatprep.subr.bf16.mxu0 0
    %10438 = vmatpush1.bf16.msra.mxu0 0
    %10439 = vmatprep.subr.bf16.mxu0 0
    %10440 = vmatpush1.bf16.msra.mxu0 0
    %10441 = vmatprep.subr.bf16.mxu0 0
    %10442 = vmatpush1.bf16.msra.mxu0 0
    %10443 = vmatprep.subr.bf16.mxu0 0
    %10444 = vmatpush1.bf16.msra.mxu0 0
    %10445 = vmatprep.subr.bf16.mxu0 0
    %10446 = vmatpush1.bf16.msra.mxu0 0
    %10447 = vmatprep.mubr.bf16.mxu0 0
    %10448 = vmatmul.mubr.bf16.gmra.mrb[0].mxu0 %v7790
    %v10449 = vpop.f32.mrb[0].mxu0
    %v10450 = vadd.f32 %v10409, %v10449
    %v10451 = vpop.f32.mrb[0].mxu0
    %v10452 = vadd.f32 %v10411, %v10451
    %v10453 = vpop.f32.mrb[0].mxu0
    %v10454 = vpop.f32.mrb[0].mxu0
    %10455 = vdwg.mxu0
    %10456 = vmatprep.subr.bf16.mxu0 %v9511
    %10457 = vmatpush1.bf16.msra.mxu0 %v9510
    %10458 = vmatprep.subr.bf16.mxu0 %v9518
    %10459 = vmatpush1.bf16.msra.mxu0 %v9517
    %10460 = vmatprep.subr.bf16.mxu0 %v9525
    %10461 = vmatpush1.bf16.msra.mxu0 %v9524
    %10462 = vmatprep.subr.bf16.mxu0 %v9532
    %10463 = vmatpush1.bf16.msra.mxu0 %v9531
    %10464 = vmatprep.subr.bf16.mxu0 %v9539
    %10465 = vmatpush1.bf16.msra.mxu0 %v9538
    %10466 = vmatprep.subr.bf16.mxu0 %v9546
    %10467 = vmatpush1.bf16.msra.mxu0 %v9545
    %10468 = vmatprep.subr.bf16.mxu0 %v9553
    %10469 = vmatpush1.bf16.msra.mxu0 %v9552
    %10470 = vmatprep.subr.bf16.mxu0 %v9560
    %10471 = vmatpush1.bf16.msra.mxu0 %v9559
    %10472 = vmatprep.subr.bf16.mxu0 %v9567
    %10473 = vmatpush1.bf16.msra.mxu0 %v9566
    %10474 = vmatprep.subr.bf16.mxu0 %v9574
    %10475 = vmatpush1.bf16.msra.mxu0 %v9573
    %10476 = vmatprep.subr.bf16.mxu0 %v9581
    %10477 = vmatpush1.bf16.msra.mxu0 %v9580
    %10478 = vmatprep.subr.bf16.mxu0 %v9588
    %10479 = vmatpush1.bf16.msra.mxu0 %v9587
    %10480 = vmatprep.subr.bf16.mxu0 %v9595
    %10481 = vmatpush1.bf16.msra.mxu0 %v9594
    %10482 = vmatprep.subr.bf16.mxu0 %v9602
    %10483 = vmatpush1.bf16.msra.mxu0 %v9601
    %10484 = vmatprep.subr.bf16.mxu0 %v9609
    %10485 = vmatpush1.bf16.msra.mxu0 %v9608
    %10486 = vmatprep.subr.bf16.mxu0 %v9616
    %10487 = vmatpush1.bf16.msra.mxu0 %v9615
    %10488 = vmatprep.mubr.bf16.mxu0 %v7785
    %10489 = vmatmul.mubr.bf16.gmra.mrb[0].mxu0 %v7784
    %v10490 = vpop.f32.mrb[0].mxu0
    %v10491 = vadd.f32 %v8252, %v10490
    %v10492 = vpop.f32.mrb[0].mxu0
    %v10493 = vadd.f32 %v8256, %v10492
    %v10494 = vpop.f32.mrb[0].mxu0
    %v10495 = vpop.f32.mrb[0].mxu0
    %10496 = vdwg.mxu0
    %10497 = vmatprep.subr.bf16.mxu0 %v9623
    %10498 = vmatpush1.bf16.msra.mxu0 %v9622
    %10499 = vmatprep.subr.bf16.mxu0 %v9630
    %10500 = vmatpush1.bf16.msra.mxu0 %v9629
    %10501 = vmatprep.subr.bf16.mxu0 %v9637
    %10502 = vmatpush1.bf16.msra.mxu0 %v9636
    %10503 = vmatprep.subr.bf16.mxu0 %v9644
    %10504 = vmatpush1.bf16.msra.mxu0 %v9643
    %10505 = vmatprep.subr.bf16.mxu0 %v9651
    %10506 = vmatpush1.bf16.msra.mxu0 %v9650
    %10507 = vmatprep.subr.bf16.mxu0 %v9658
    %10508 = vmatpush1.bf16.msra.mxu0 %v9657
    %10509 = vmatprep.subr.bf16.mxu0 %v9665
    %10510 = vmatpush1.bf16.msra.mxu0 %v9664
    %10511 = vmatprep.subr.bf16.mxu0 %v9672
    %10512 = vmatpush1.bf16.msra.mxu0 %v9671
    %10513 = vmatprep.subr.bf16.mxu0 %v9679
    %10514 = vmatpush1.bf16.msra.mxu0 %v9678
    %10515 = vmatprep.subr.bf16.mxu0 %v9686
    %10516 = vmatpush1.bf16.msra.mxu0 %v9685
    %10517 = vmatprep.subr.bf16.mxu0 %v9693
    %10518 = vmatpush1.bf16.msra.mxu0 %v9692
    %10519 = vmatprep.subr.bf16.mxu0 %v9700
    %10520 = vmatpush1.bf16.msra.mxu0 %v9699
    %10521 = vmatprep.subr.bf16.mxu0 %v9707
    %10522 = vmatpush1.bf16.msra.mxu0 %v9706
    %10523 = vmatprep.subr.bf16.mxu0 %v9714
    %10524 = vmatpush1.bf16.msra.mxu0 %v9713
    %10525 = vmatprep.subr.bf16.mxu0 %v9721
    %10526 = vmatpush1.bf16.msra.mxu0 %v9720
    %10527 = vmatprep.subr.bf16.mxu0 %v9728
    %10528 = vmatpush1.bf16.msra.mxu0 %v9727
    %10529 = vmatprep.mubr.bf16.mxu0 %v7787
    %10530 = vmatmul.mubr.bf16.gmra.mrb[0].mxu0 %v7786
    %v10531 = vpop.f32.mrb[0].mxu0
    %v10532 = vadd.f32 %v10491, %v10531
    %v10533 = vpop.f32.mrb[0].mxu0
    %v10534 = vadd.f32 %v10493, %v10533
    %v10535 = vpop.f32.mrb[0].mxu0
    %v10536 = vpop.f32.mrb[0].mxu0
    %10537 = vdwg.mxu0
    %10538 = vmatprep.subr.bf16.mxu0 %v9735
    %10539 = vmatpush1.bf16.msra.mxu0 %v9734
    %10540 = vmatprep.subr.bf16.mxu0 %v9742
    %10541 = vmatpush1.bf16.msra.mxu0 %v9741
    %10542 = vmatprep.subr.bf16.mxu0 %v9749
    %10543 = vmatpush1.bf16.msra.mxu0 %v9748
    %10544 = vmatprep.subr.bf16.mxu0 %v9756
    %10545 = vmatpush1.bf16.msra.mxu0 %v9755
    %10546 = vmatprep.subr.bf16.mxu0 %v9763
    %10547 = vmatpush1.bf16.msra.mxu0 %v9762
    %10548 = vmatprep.subr.bf16.mxu0 %v9770
    %10549 = vmatpush1.bf16.msra.mxu0 %v9769
    %10550 = vmatprep.subr.bf16.mxu0 %v9777
    %10551 = vmatpush1.bf16.msra.mxu0 %v9776
    %10552 = vmatprep.subr.bf16.mxu0 %v9784
    %10553 = vmatpush1.bf16.msra.mxu0 %v9783
    %10554 = vmatprep.subr.bf16.mxu0 %v9791
    %10555 = vmatpush1.bf16.msra.mxu0 %v9790
    %10556 = vmatprep.subr.bf16.mxu0 %v9798
    %10557 = vmatpush1.bf16.msra.mxu0 %v9797
    %10558 = vmatprep.subr.bf16.mxu0 %v9805
    %10559 = vmatpush1.bf16.msra.mxu0 %v9804
    %10560 = vmatprep.subr.bf16.mxu0 %v9812
    %10561 = vmatpush1.bf16.msra.mxu0 %v9811
    %10562 = vmatprep.subr.bf16.mxu0 %v9819
    %10563 = vmatpush1.bf16.msra.mxu0 %v9818
    %10564 = vmatprep.subr.bf16.mxu0 %v9826
    %10565 = vmatpush1.bf16.msra.mxu0 %v9825
    %10566 = vmatprep.subr.bf16.mxu0 %v9833
    %10567 = vmatpush1.bf16.msra.mxu0 %v9832
    %10568 = vmatprep.subr.bf16.mxu0 %v9840
    %10569 = vmatpush1.bf16.msra.mxu0 %v9839
    %10570 = vmatprep.mubr.bf16.mxu0 %v7789
    %10571 = vmatmul.mubr.bf16.gmra.mrb[0].mxu0 %v7788
    %v10572 = vpop.f32.mrb[0].mxu0
    %v10573 = vadd.f32 %v10532, %v10572
    %v10574 = vpop.f32.mrb[0].mxu0
    %v10575 = vadd.f32 %v10534, %v10574
    %v10576 = vpop.f32.mrb[0].mxu0
    %v10577 = vpop.f32.mrb[0].mxu0
    %10578 = vdwg.mxu0
    %10579 = vmatprep.subr.bf16.mxu0 %v9847
    %10580 = vmatpush1.bf16.msra.mxu0 %v9846
    %10581 = vmatprep.subr.bf16.mxu0 %v9854
    %10582 = vmatpush1.bf16.msra.mxu0 %v9853
    %10583 = vmatprep.subr.bf16.mxu0 %v9861
    %10584 = vmatpush1.bf16.msra.mxu0 %v9860
    %10585 = vmatprep.subr.bf16.mxu0 %v9868
    %10586 = vmatpush1.bf16.msra.mxu0 %v9867
    %10587 = vmatprep.subr.bf16.mxu0 %v9875
    %10588 = vmatpush1.bf16.msra.mxu0 %v9874
    %10589 = vmatprep.subr.bf16.mxu0 %v9882
    %10590 = vmatpush1.bf16.msra.mxu0 %v9881
    %10591 = vmatprep.subr.bf16.mxu0 %v9889
    %10592 = vmatpush1.bf16.msra.mxu0 %v9888
    %10593 = vmatprep.subr.bf16.mxu0 %v9896
    %10594 = vmatpush1.bf16.msra.mxu0 %v9895
    %10595 = vmatprep.subr.bf16.mxu0 0
    %10596 = vmatpush1.bf16.msra.mxu0 0
    %10597 = vmatprep.subr.bf16.mxu0 0
    %10598 = vmatpush1.bf16.msra.mxu0 0
    %10599 = vmatprep.subr.bf16.mxu0 0
    %10600 = vmatpush1.bf16.msra.mxu0 0
    %10601 = vmatprep.subr.bf16.mxu0 0
    %10602 = vmatpush1.bf16.msra.mxu0 0
    %10603 = vmatprep.subr.bf16.mxu0 0
    %10604 = vmatpush1.bf16.msra.mxu0 0
    %10605 = vmatprep.subr.bf16.mxu0 0
    %10606 = vmatpush1.bf16.msra.mxu0 0
    %10607 = vmatprep.subr.bf16.mxu0 0
    %10608 = vmatpush1.bf16.msra.mxu0 0
    %10609 = vmatprep.subr.bf16.mxu0 0
    %10610 = vmatpush1.bf16.msra.mxu0 0
    %10611 = vmatprep.mubr.bf16.mxu0 0
    %10612 = vmatmul.mubr.bf16.gmra.mrb[0].mxu0 %v7790
    %v10613 = vpop.f32.mrb[0].mxu0
    %v10614 = vadd.f32 %v10573, %v10613
    %v10615 = vpop.f32.mrb[0].mxu0
    %v10616 = vadd.f32 %v10575, %v10615
    %v10617 = vpop.f32.mrb[0].mxu0
    %v10618 = vpop.f32.mrb[0].mxu0
    %10619 = vdwg.mxu0
    %10620 = vmatprep.subr.bf16.mxu0 %v9513
    %10621 = vmatpush1.bf16.msra.mxu0 %v9512
    %10622 = vmatprep.subr.bf16.mxu0 %v9520
    %10623 = vmatpush1.bf16.msra.mxu0 %v9519
    %10624 = vmatprep.subr.bf16.mxu0 %v9527
    %10625 = vmatpush1.bf16.msra.mxu0 %v9526
    %10626 = vmatprep.subr.bf16.mxu0 %v9534
    %10627 = vmatpush1.bf16.msra.mxu0 %v9533
    %10628 = vmatprep.subr.bf16.mxu0 %v9541
    %10629 = vmatpush1.bf16.msra.mxu0 %v9540
    %10630 = vmatprep.subr.bf16.mxu0 %v9548
    %10631 = vmatpush1.bf16.msra.mxu0 %v9547
    %10632 = vmatprep.subr.bf16.mxu0 %v9555
    %10633 = vmatpush1.bf16.msra.mxu0 %v9554
    %10634 = vmatprep.subr.bf16.mxu0 %v9562
    %10635 = vmatpush1.bf16.msra.mxu0 %v9561
    %10636 = vmatprep.subr.bf16.mxu0 %v9569
    %10637 = vmatpush1.bf16.msra.mxu0 %v9568
    %10638 = vmatprep.subr.bf16.mxu0 %v9576
    %10639 = vmatpush1.bf16.msra.mxu0 %v9575
    %10640 = vmatprep.subr.bf16.mxu0 %v9583
    %10641 = vmatpush1.bf16.msra.mxu0 %v9582
    %10642 = vmatprep.subr.bf16.mxu0 %v9590
    %10643 = vmatpush1.bf16.msra.mxu0 %v9589
    %10644 = vmatprep.subr.bf16.mxu0 %v9597
    %10645 = vmatpush1.bf16.msra.mxu0 %v9596
    %10646 = vmatprep.subr.bf16.mxu0 %v9604
    %10647 = vmatpush1.bf16.msra.mxu0 %v9603
    %10648 = vmatprep.subr.bf16.mxu0 %v9611
    %10649 = vmatpush1.bf16.msra.mxu0 %v9610
    %10650 = vmatprep.subr.bf16.mxu0 %v9618
    %10651 = vmatpush1.bf16.msra.mxu0 %v9617
    %10652 = vmatprep.mubr.bf16.mxu0 %v7785
    %10653 = vmatmul.mubr.bf16.gmra.mrb[0].mxu0 %v7784
    %v10654 = vpop.f32.mrb[0].mxu0
    %v10655 = vadd.f32 %v8260, %v10654
    %v10656 = vpop.f32.mrb[0].mxu0
    %v10657 = vadd.f32 %v8264, %v10656
    %v10658 = vpop.f32.mrb[0].mxu0
    %v10659 = vpop.f32.mrb[0].mxu0
    %10660 = vdwg.mxu0
    %10661 = vmatprep.subr.bf16.mxu0 %v9625
    %10662 = vmatpush1.bf16.msra.mxu0 %v9624
    %10663 = vmatprep.subr.bf16.mxu0 %v9632
    %10664 = vmatpush1.bf16.msra.mxu0 %v9631
    %10665 = vmatprep.subr.bf16.mxu0 %v9639
    %10666 = vmatpush1.bf16.msra.mxu0 %v9638
    %10667 = vmatprep.subr.bf16.mxu0 %v9646
    %10668 = vmatpush1.bf16.msra.mxu0 %v9645
    %10669 = vmatprep.subr.bf16.mxu0 %v9653
    %10670 = vmatpush1.bf16.msra.mxu0 %v9652
    %10671 = vmatprep.subr.bf16.mxu0 %v9660
    %10672 = vmatpush1.bf16.msra.mxu0 %v9659
    %10673 = vmatprep.subr.bf16.mxu0 %v9667
    %10674 = vmatpush1.bf16.msra.mxu0 %v9666
    %10675 = vmatprep.subr.bf16.mxu0 %v9674
    %10676 = vmatpush1.bf16.msra.mxu0 %v9673
    %10677 = vmatprep.subr.bf16.mxu0 %v9681
    %10678 = vmatpush1.bf16.msra.mxu0 %v9680
    %10679 = vmatprep.subr.bf16.mxu0 %v9688
    %10680 = vmatpush1.bf16.msra.mxu0 %v9687
    %10681 = vmatprep.subr.bf16.mxu0 %v9695
    %10682 = vmatpush1.bf16.msra.mxu0 %v9694
    %10683 = vmatprep.subr.bf16.mxu0 %v9702
    %10684 = vmatpush1.bf16.msra.mxu0 %v9701
    %10685 = vmatprep.subr.bf16.mxu0 %v9709
    %10686 = vmatpush1.bf16.msra.mxu0 %v9708
    %10687 = vmatprep.subr.bf16.mxu0 %v9716
    %10688 = vmatpush1.bf16.msra.mxu0 %v9715
    %10689 = vmatprep.subr.bf16.mxu0 %v9723
    %10690 = vmatpush1.bf16.msra.mxu0 %v9722
    %10691 = vmatprep.subr.bf16.mxu0 %v9730
    %10692 = vmatpush1.bf16.msra.mxu0 %v9729
    %10693 = vmatprep.mubr.bf16.mxu0 %v7787
    %10694 = vmatmul.mubr.bf16.gmra.mrb[0].mxu0 %v7786
    %v10695 = vpop.f32.mrb[0].mxu0
    %v10696 = vadd.f32 %v10655, %v10695
    %v10697 = vpop.f32.mrb[0].mxu0
    %v10698 = vadd.f32 %v10657, %v10697
    %v10699 = vpop.f32.mrb[0].mxu0
    %v10700 = vpop.f32.mrb[0].mxu0
    %10701 = vdwg.mxu0
    %10702 = vmatprep.subr.bf16.mxu0 %v9737
    %10703 = vmatpush1.bf16.msra.mxu0 %v9736
    %10704 = vmatprep.subr.bf16.mxu0 %v9744
    %10705 = vmatpush1.bf16.msra.mxu0 %v9743
    %10706 = vmatprep.subr.bf16.mxu0 %v9751
    %10707 = vmatpush1.bf16.msra.mxu0 %v9750
    %10708 = vmatprep.subr.bf16.mxu0 %v9758
    %10709 = vmatpush1.bf16.msra.mxu0 %v9757
    %10710 = vmatprep.subr.bf16.mxu0 %v9765
    %10711 = vmatpush1.bf16.msra.mxu0 %v9764
    %10712 = vmatprep.subr.bf16.mxu0 %v9772
    %10713 = vmatpush1.bf16.msra.mxu0 %v9771
    %10714 = vmatprep.subr.bf16.mxu0 %v9779
    %10715 = vmatpush1.bf16.msra.mxu0 %v9778
    %10716 = vmatprep.subr.bf16.mxu0 %v9786
    %10717 = vmatpush1.bf16.msra.mxu0 %v9785
    %10718 = vmatprep.subr.bf16.mxu0 %v9793
    %10719 = vmatpush1.bf16.msra.mxu0 %v9792
    %10720 = vmatprep.subr.bf16.mxu0 %v9800
    %10721 = vmatpush1.bf16.msra.mxu0 %v9799
    %10722 = vmatprep.subr.bf16.mxu0 %v9807
    %10723 = vmatpush1.bf16.msra.mxu0 %v9806
    %10724 = vmatprep.subr.bf16.mxu0 %v9814
    %10725 = vmatpush1.bf16.msra.mxu0 %v9813
    %10726 = vmatprep.subr.bf16.mxu0 %v9821
    %10727 = vmatpush1.bf16.msra.mxu0 %v9820
    %10728 = vmatprep.subr.bf16.mxu0 %v9828
    %10729 = vmatpush1.bf16.msra.mxu0 %v9827
    %10730 = vmatprep.subr.bf16.mxu0 %v9835
    %10731 = vmatpush1.bf16.msra.mxu0 %v9834
    %10732 = vmatprep.subr.bf16.mxu0 %v9842
    %10733 = vmatpush1.bf16.msra.mxu0 %v9841
    %10734 = vmatprep.mubr.bf16.mxu0 %v7789
    %10735 = vmatmul.mubr.bf16.gmra.mrb[0].mxu0 %v7788
    %v10736 = vpop.f32.mrb[0].mxu0
    %v10737 = vadd.f32 %v10696, %v10736
    %v10738 = vpop.f32.mrb[0].mxu0
    %v10739 = vadd.f32 %v10698, %v10738
    %v10740 = vpop.f32.mrb[0].mxu0
    %v10741 = vpop.f32.mrb[0].mxu0
    %10742 = vdwg.mxu0
    %10743 = vmatprep.subr.bf16.mxu0 %v9849
    %10744 = vmatpush1.bf16.msra.mxu0 %v9848
    %10745 = vmatprep.subr.bf16.mxu0 %v9856
    %10746 = vmatpush1.bf16.msra.mxu0 %v9855
    %10747 = vmatprep.subr.bf16.mxu0 %v9863
    %10748 = vmatpush1.bf16.msra.mxu0 %v9862
    %10749 = vmatprep.subr.bf16.mxu0 %v9870
    %10750 = vmatpush1.bf16.msra.mxu0 %v9869
    %10751 = vmatprep.subr.bf16.mxu0 %v9877
    %10752 = vmatpush1.bf16.msra.mxu0 %v9876
    %10753 = vmatprep.subr.bf16.mxu0 %v9884
    %10754 = vmatpush1.bf16.msra.mxu0 %v9883
    %10755 = vmatprep.subr.bf16.mxu0 %v9891
    %10756 = vmatpush1.bf16.msra.mxu0 %v9890
    %10757 = vmatprep.subr.bf16.mxu0 %v9898
    %10758 = vmatpush1.bf16.msra.mxu0 %v9897
    %10759 = vmatprep.subr.bf16.mxu0 0
    %10760 = vmatpush1.bf16.msra.mxu0 0
    %10761 = vmatprep.subr.bf16.mxu0 0
    %10762 = vmatpush1.bf16.msra.mxu0 0
    %10763 = vmatprep.subr.bf16.mxu0 0
    %10764 = vmatpush1.bf16.msra.mxu0 0
    %10765 = vmatprep.subr.bf16.mxu0 0
    %10766 = vmatpush1.bf16.msra.mxu0 0
    %10767 = vmatprep.subr.bf16.mxu0 0
    %10768 = vmatpush1.bf16.msra.mxu0 0
    %10769 = vmatprep.subr.bf16.mxu0 0
    %10770 = vmatpush1.bf16.msra.mxu0 0
    %10771 = vmatprep.subr.bf16.mxu0 0
    %10772 = vmatpush1.bf16.msra.mxu0 0
    %10773 = vmatprep.subr.bf16.mxu0 0
    %10774 = vmatpush1.bf16.msra.mxu0 0
    %10775 = vmatprep.mubr.bf16.mxu0 0
    %10776 = vmatmul.mubr.bf16.gmra.mrb[0].mxu0 %v7790
    %v10777 = vpop.f32.mrb[0].mxu0
    %v10778 = vadd.f32 %v10737, %v10777
    %v10779 = vpop.f32.mrb[0].mxu0
    %v10780 = vadd.f32 %v10739, %v10779
    %v10781 = vpop.f32.mrb[0].mxu0
    %v10782 = vpop.f32.mrb[0].mxu0
    %10783 = vdwg.mxu0
    %10784 = vmatprep.subr.bf16.mxu0 0
    %10785 = vmatpush1.bf16.msra.mxu0 %v9514
    %10786 = vmatprep.subr.bf16.mxu0 0
    %10787 = vmatpush1.bf16.msra.mxu0 %v9521
    %10788 = vmatprep.subr.bf16.mxu0 0
    %10789 = vmatpush1.bf16.msra.mxu0 %v9528
    %10790 = vmatprep.subr.bf16.mxu0 0
    %10791 = vmatpush1.bf16.msra.mxu0 %v9535
    %10792 = vmatprep.subr.bf16.mxu0 0
    %10793 = vmatpush1.bf16.msra.mxu0 %v9542
    %10794 = vmatprep.subr.bf16.mxu0 0
    %10795 = vmatpush1.bf16.msra.mxu0 %v9549
    %10796 = vmatprep.subr.bf16.mxu0 0
    %10797 = vmatpush1.bf16.msra.mxu0 %v9556
    %10798 = vmatprep.subr.bf16.mxu0 0
    %10799 = vmatpush1.bf16.msra.mxu0 %v9563
    %10800 = vmatprep.subr.bf16.mxu0 0
    %10801 = vmatpush1.bf16.msra.mxu0 %v9570
    %10802 = vmatprep.subr.bf16.mxu0 0
    %10803 = vmatpush1.bf16.msra.mxu0 %v9577
    %10804 = vmatprep.subr.bf16.mxu0 0
    %10805 = vmatpush1.bf16.msra.mxu0 %v9584
    %10806 = vmatprep.subr.bf16.mxu0 0
    %10807 = vmatpush1.bf16.msra.mxu0 %v9591
    %10808 = vmatprep.subr.bf16.mxu0 0
    %10809 = vmatpush1.bf16.msra.mxu0 %v9598
    %10810 = vmatprep.subr.bf16.mxu0 0
    %10811 = vmatpush1.bf16.msra.mxu0 %v9605
    %10812 = vmatprep.subr.bf16.mxu0 0
    %10813 = vmatpush1.bf16.msra.mxu0 %v9612
    %10814 = vmatprep.subr.bf16.mxu0 0
    %10815 = vmatpush1.bf16.msra.mxu0 %v9619
    %10816 = vmatprep.mubr.bf16.mxu0 %v7785
    %10817 = vmatmul.mubr.bf16.gmra.mrb[0].mxu0 %v7784
    %v10818 = vpop.f32.mrb[0].mxu0
    %v10819 = vadd.f32 %v8268, %v10818
    %v10820 = vpop.f32.mrb[0].mxu0
    %v10821 = vpop.f32.mrb[0].mxu0
    %v10822 = vpop.f32.mrb[0].mxu0
    %10823 = vdwg.mxu0
    %10824 = vmatprep.subr.bf16.mxu0 0
    %10825 = vmatpush1.bf16.msra.mxu0 %v9626
    %10826 = vmatprep.subr.bf16.mxu0 0
    %10827 = vmatpush1.bf16.msra.mxu0 %v9633
    %10828 = vmatprep.subr.bf16.mxu0 0
    %10829 = vmatpush1.bf16.msra.mxu0 %v9640
    %10830 = vmatprep.subr.bf16.mxu0 0
    %10831 = vmatpush1.bf16.msra.mxu0 %v9647
    %10832 = vmatprep.subr.bf16.mxu0 0
    %10833 = vmatpush1.bf16.msra.mxu0 %v9654
    %10834 = vmatprep.subr.bf16.mxu0 0
    %10835 = vmatpush1.bf16.msra.mxu0 %v9661
    %10836 = vmatprep.subr.bf16.mxu0 0
    %10837 = vmatpush1.bf16.msra.mxu0 %v9668
    %10838 = vmatprep.subr.bf16.mxu0 0
    %10839 = vmatpush1.bf16.msra.mxu0 %v9675
    %10840 = vmatprep.subr.bf16.mxu0 0
    %10841 = vmatpush1.bf16.msra.mxu0 %v9682
    %10842 = vmatprep.subr.bf16.mxu0 0
    %10843 = vmatpush1.bf16.msra.mxu0 %v9689
    %10844 = vmatprep.subr.bf16.mxu0 0
    %10845 = vmatpush1.bf16.msra.mxu0 %v9696
    %10846 = vmatprep.subr.bf16.mxu0 0
    %10847 = vmatpush1.bf16.msra.mxu0 %v9703
    %10848 = vmatprep.subr.bf16.mxu0 0
    %10849 = vmatpush1.bf16.msra.mxu0 %v9710
    %10850 = vmatprep.subr.bf16.mxu0 0
    %10851 = vmatpush1.bf16.msra.mxu0 %v9717
    %10852 = vmatprep.subr.bf16.mxu0 0
    %10853 = vmatpush1.bf16.msra.mxu0 %v9724
    %10854 = vmatprep.subr.bf16.mxu0 0
    %10855 = vmatpush1.bf16.msra.mxu0 %v9731
    %10856 = vmatprep.mubr.bf16.mxu0 %v7787
    %10857 = vmatmul.mubr.bf16.gmra.mrb[0].mxu0 %v7786
    %v10858 = vpop.f32.mrb[0].mxu0
    %v10859 = vadd.f32 %v10819, %v10858
    %v10860 = vpop.f32.mrb[0].mxu0
    %v10861 = vpop.f32.mrb[0].mxu0
    %v10862 = vpop.f32.mrb[0].mxu0
    %10863 = vdwg.mxu0
    %10864 = vmatprep.subr.bf16.mxu0 0
    %10865 = vmatpush1.bf16.msra.mxu0 %v9738
    %10866 = vmatprep.subr.bf16.mxu0 0
    %10867 = vmatpush1.bf16.msra.mxu0 %v9745
    %10868 = vmatprep.subr.bf16.mxu0 0
    %10869 = vmatpush1.bf16.msra.mxu0 %v9752
    %10870 = vmatprep.subr.bf16.mxu0 0
    %10871 = vmatpush1.bf16.msra.mxu0 %v9759
    %10872 = vmatprep.subr.bf16.mxu0 0
    %10873 = vmatpush1.bf16.msra.mxu0 %v9766
    %10874 = vmatprep.subr.bf16.mxu0 0
    %10875 = vmatpush1.bf16.msra.mxu0 %v9773
    %10876 = vmatprep.subr.bf16.mxu0 0
    %10877 = vmatpush1.bf16.msra.mxu0 %v9780
    %10878 = vmatprep.subr.bf16.mxu0 0
    %10879 = vmatpush1.bf16.msra.mxu0 %v9787
    %10880 = vmatprep.subr.bf16.mxu0 0
    %10881 = vmatpush1.bf16.msra.mxu0 %v9794
    %10882 = vmatprep.subr.bf16.mxu0 0
    %10883 = vmatpush1.bf16.msra.mxu0 %v9801
    %10884 = vmatprep.subr.bf16.mxu0 0
    %10885 = vmatpush1.bf16.msra.mxu0 %v9808
    %10886 = vmatprep.subr.bf16.mxu0 0
    %10887 = vmatpush1.bf16.msra.mxu0 %v9815
    %10888 = vmatprep.subr.bf16.mxu0 0
    %10889 = vmatpush1.bf16.msra.mxu0 %v9822
    %10890 = vmatprep.subr.bf16.mxu0 0
    %10891 = vmatpush1.bf16.msra.mxu0 %v9829
    %10892 = vmatprep.subr.bf16.mxu0 0
    %10893 = vmatpush1.bf16.msra.mxu0 %v9836
    %10894 = vmatprep.subr.bf16.mxu0 0
    %10895 = vmatpush1.bf16.msra.mxu0 %v9843
    %10896 = vmatprep.mubr.bf16.mxu0 %v7789
    %10897 = vmatmul.mubr.bf16.gmra.mrb[0].mxu0 %v7788
    %v10898 = vpop.f32.mrb[0].mxu0
    %v10899 = vadd.f32 %v10859, %v10898
    %v10900 = vpop.f32.mrb[0].mxu0
    %v10901 = vpop.f32.mrb[0].mxu0
    %v10902 = vpop.f32.mrb[0].mxu0
    %10903 = vdwg.mxu0
    %10904 = vmatprep.subr.bf16.mxu0 0
    %10905 = vmatpush1.bf16.msra.mxu0 %v9850
    %10906 = vmatprep.subr.bf16.mxu0 0
    %10907 = vmatpush1.bf16.msra.mxu0 %v9857
    %10908 = vmatprep.subr.bf16.mxu0 0
    %10909 = vmatpush1.bf16.msra.mxu0 %v9864
    %10910 = vmatprep.subr.bf16.mxu0 0
    %10911 = vmatpush1.bf16.msra.mxu0 %v9871
    %10912 = vmatprep.subr.bf16.mxu0 0
    %10913 = vmatpush1.bf16.msra.mxu0 %v9878
    %10914 = vmatprep.subr.bf16.mxu0 0
    %10915 = vmatpush1.bf16.msra.mxu0 %v9885
    %10916 = vmatprep.subr.bf16.mxu0 0
    %10917 = vmatpush1.bf16.msra.mxu0 %v9892
    %10918 = vmatprep.subr.bf16.mxu0 0
    %10919 = vmatpush1.bf16.msra.mxu0 %v9899
    %10920 = vmatprep.subr.bf16.mxu0 0
    %10921 = vmatpush1.bf16.msra.mxu0 0
    %10922 = vmatprep.subr.bf16.mxu0 0
    %10923 = vmatpush1.bf16.msra.mxu0 0
    %10924 = vmatprep.subr.bf16.mxu0 0
    %10925 = vmatpush1.bf16.msra.mxu0 0
    %10926 = vmatprep.subr.bf16.mxu0 0
    %10927 = vmatpush1.bf16.msra.mxu0 0
    %10928 = vmatprep.subr.bf16.mxu0 0
    %10929 = vmatpush1.bf16.msra.mxu0 0
    %10930 = vmatprep.subr.bf16.mxu0 0
    %10931 = vmatpush1.bf16.msra.mxu0 0
    %10932 = vmatprep.subr.bf16.mxu0 0
    %10933 = vmatpush1.bf16.msra.mxu0 0
    %10934 = vmatprep.subr.bf16.mxu0 0
    %10935 = vmatpush1.bf16.msra.mxu0 0
    %10936 = vmatprep.mubr.bf16.mxu0 0
    %10937 = vmatmul.mubr.bf16.gmra.mrb[0].mxu0 %v7790
    %v10938 = vpop.f32.mrb[0].mxu0
    %v10939 = vadd.f32 %v10899, %v10938
    %v10940 = vpop.f32.mrb[0].mxu0
    %v10941 = vpop.f32.mrb[0].mxu0
    %v10942 = vpop.f32.mrb[0].mxu0
    %10943 = vdwg.mxu0
    %v10944 = vtanh.pop %v10450
    %v10945 = vtanh.pop %v10452
    %v10946 = vtanh.pop %v10614
    %v10947 = vtanh.pop %v10616
    %v10948 = vtanh.pop %v10778
    %v10949 = vtanh.pop %v10780
    %v10950 = vtanh.pop %v10939
    %10951 = vst [vmem:[%s11] sm:$0xff] %v10944
    %10952 = vst [vmem:[%s11 + $0x8] sm:$0xff] %v10945
    %10953 = vst [vmem:[%s11 + $0x10] sm:$0xff] %v10946
    %10954 = vst [vmem:[%s11 + $0x18] sm:$0xff] %v10947
    %10955 = vst [vmem:[%s11 + $0x20] sm:$0xff] %v10948
    %10956 = vst [vmem:[%s11 + $0x28] sm:$0xff] %v10949
    %10957 = vst [vmem:[%s11 + $0x30] sm:$0xff] %v10950
    // Predicated region
    $region86: #{autoencoder_cnn_forward.1} parent=1 // pred_check
      _
    $region87: #{autoencoder_cnn_forward.1} parent=1 // pred_check_branch
      %10959 = sbr.rel (0) target = $region89
    $region88: #{autoencoder_cnn_forward.1} parent=1 // pred_region
      _
    $region89: #{autoencoder_cnn_forward.1} parent=1 // pred_fallthru
      _
    // Predicated region
    $region90: #{autoencoder_cnn_forward.1} parent=1 // pred_check
      _
    $region91: #{autoencoder_cnn_forward.1} parent=1 // pred_check_branch
      %10961 = sbr.rel (0) target = $region93
    $region92: #{autoencoder_cnn_forward.1} parent=1 // pred_region
      _
    $region93: #{autoencoder_cnn_forward.1} parent=1 // pred_fallthru
      _
    %10962 = vsyncpa [#allocation3], 1
    %10963 = vsyncpa [#allocation5], 1
    %10964 = vsyncpa [#allocation8], 1
    %10965 = vsyncpa [#allocation11], 1
    %10966 = vsyncpa [#allocation14], 1
    %10967 = vsyncpa [#allocation17], 1

</llo_original>
